<compile_context>
chip_gen: v7x
topology: tpu7x:2x2x1
jax: 0.10.0
libtpu: 0.0.40
codegen_flags: <defaults>
</compile_context>

<pallas_src>
import functools

import numpy as np
import jax
import jax.numpy as jnp
from jax.experimental import pallas as pl
from jax.experimental.pallas import tpu as pltpu

LANE = 128                     # TPU lane width
BN_EPS = 1e-5
VMEM_LIMIT = 32 * 1024 * 1024
TILE_M = 256                   # M tile for the parallel grid (non-BN calls)

# (phase parity, padded 3x3 row/col offset) -> ConvTranspose2d kernel index
_KY_T = {(0, 0): 3, (0, 1): 1, (1, 1): 2, (1, 2): 0}


# ------------------------------- Pallas kernel -------------------------------

def _mm_epilogue_kernel(*refs, relu, bn, eps, inv_m):
    """One MXU matmul plus a fused epilogue.

    y = x @ w + b                      (K packs all conv taps densely)
    [y = relu(y)]
    [y = (y - mean) * gamma * rsqrt(var + eps) + beta]   training-mode BN over
                                                         all rows, single pass
                                                         sum / sum-of-squares.
    """
    if bn:
        x_ref, w_ref, b_ref, g_ref, bt_ref, o_ref = refs
    else:
        x_ref, w_ref, b_ref, o_ref = refs

    acc = jnp.dot(x_ref[...], w_ref[...], preferred_element_type=jnp.float32)
    acc = acc + b_ref[...]
    if relu:
        acc = jnp.maximum(acc, 0.0)
    if bn:
        mean = jnp.sum(acc, axis=0, keepdims=True) * inv_m
        msq = jnp.sum(acc * acc, axis=0, keepdims=True) * inv_m
        var = msq - mean * mean                    # biased var (PyTorch training)
        scale = jax.lax.rsqrt(var + eps) * g_ref[...]
        acc = (acc - mean) * scale + bt_ref[...]
    o_ref[...] = acc.astype(o_ref.dtype)


def matmul_epilogue(lhs, w, b, *, relu=False, gamma=None, beta=None,
                    out_dtype=jnp.bfloat16):
    """(M, K) @ (K, 128) + fused epilogue -> (M, 128)."""
    m, k = lhs.shape
    bn = gamma is not None
    # BN needs all rows in one program; otherwise tile M so a "parallel" grid
    # axis spreads work over both v7x TensorCores (no-op on v5e/v6e).
    tm = TILE_M if (not bn and m % TILE_M == 0 and m > TILE_M) else m
    grid = (m // tm,)
    kern = functools.partial(_mm_epilogue_kernel, relu=relu, bn=bn,
                             eps=BN_EPS, inv_m=1.0 / m)
    in_specs = [pl.BlockSpec((tm, k), lambda i: (i, 0)),
                pl.BlockSpec((k, LANE), lambda i: (0, 0)),
                pl.BlockSpec((1, LANE), lambda i: (0, 0))]
    args = [lhs, w, b]
    if bn:
        in_specs += [pl.BlockSpec((1, LANE), lambda i: (0, 0)),
                     pl.BlockSpec((1, LANE), lambda i: (0, 0))]
        args += [gamma, beta]
    return pl.pallas_call(
        kern,
        out_shape=jax.ShapeDtypeStruct((m, LANE), out_dtype),
        grid=grid,
        in_specs=in_specs,
        out_specs=pl.BlockSpec((tm, LANE), lambda i: (i, 0)),
        compiler_params=pltpu.CompilerParams(
            dimension_semantics=("parallel",),
            vmem_limit_bytes=VMEM_LIMIT),
    )(*args)


# ----------------------------- wrapper-side glue ------------------------------

def _round_up(x, m=LANE):
    return -(-x // m) * m


def _pad_k(slab):
    m, k = slab.shape
    kp = _round_up(k)
    if kp != k:
        slab = jnp.pad(slab, ((0, 0), (0, kp - k)))
    return slab


def _im2col(x, k, stride=1):
    """(N,H,W,C) -> (N*Ho*Wo, k*k*C) K-packed window slab (zero padded).

    Zero padding is materialised here so the kernel needs no boundary masks;
    channels of all k*k taps are packed densely along K, so the MXU
    contraction has no zero lanes beyond the final 128-multiple pad.
    """
    n, h, w, c = x.shape
    pad = (k - 1) // 2
    xp = jnp.pad(x, ((0, 0), (pad, pad), (pad, pad), (0, 0)))
    ho = (h + 2 * pad - k) // stride + 1
    wo = (w + 2 * pad - k) // stride + 1
    cols = [xp[:, dh:dh + stride * (ho - 1) + 1:stride,
               dw:dw + stride * (wo - 1) + 1:stride, :]
            for dh in range(k) for dw in range(k)]
    slab = jnp.concatenate(cols, axis=-1)
    return slab.reshape(n * ho * wo, k * k * c), (n, ho, wo)


def conv2d(x, w_packed, b_packed, *, k, cout, stride=1, relu=False,
           gamma=None, beta=None, out_dtype=jnp.bfloat16):
    slab, (n, ho, wo) = _im2col(x, k, stride)
    y = matmul_epilogue(_pad_k(slab), w_packed, b_packed, relu=relu,
                        gamma=gamma, beta=beta, out_dtype=out_dtype)
    return y[:, :cout].reshape(n, ho, wo, cout)


def resblock_bn(x, p, *, cout):
    """ResidualBlock + BatchNorm2d as two fused matmul kernels.

    conv1+bias+ReLU is kernel 1.  conv2, the 1x1/identity skip, the residual
    add and BN share kernel 2: the skip input's channels are appended to
    conv2's packed K axis (identity rows for nn.Identity) and BN runs in the
    epilogue, so the residual/norm never make an extra HBM round trip.
    """
    n, h, w, cin = x.shape
    m = n * h * w
    hid = conv2d(x, p['w1'], p['b1'], k=5, cout=cout, relu=True)
    slab2, _ = _im2col(hid, 5)
    lhs = jnp.concatenate([slab2, x.reshape(m, cin)], axis=-1)
    y = matmul_epilogue(_pad_k(lhs), p['w2sk'], p['b2sk'],
                        gamma=p['gamma'], beta=p['beta'])
    return y[:, :cout].reshape(n, h, w, cout)


def conv_transpose2d(x, w_packed, b_packed, *, cout):
    """ConvTranspose2d(k=4, s=2, p=1) as ONE matmul.

    Output-phase decomposition: the 4 output phases all read the same 3x3
    neighbourhood of the zero-padded input, so one 9-tap K-packed slab feeds a
    (K, 4*cout) weight; phases land in disjoint lane ranges of the 128-wide
    output and a cheap XLA reshape/transpose interleaves them spatially.
    """
    n, h, w, _ = x.shape
    slab, _ = _im2col(x, 3)
    y = matmul_epilogue(_pad_k(slab), w_packed, b_packed)
    y = y[:, :4 * cout].reshape(n, h, w, 2, 2, cout)
    return jnp.transpose(y, (0, 1, 3, 2, 4, 5)).reshape(n, 2 * h, 2 * w, cout)


# ------------------------------ parameter init --------------------------------

def init_params(key, base_channels, embedding_dim, n_residual_blocks):
    keys = iter(jax.random.split(key, 256))
    nk = lambda: next(keys)

    def unif(shape, bound):
        return jax.random.uniform(nk(), shape, jnp.float32, -bound, bound)

    def conv_wb(cout, cin, k):
        s = 1.0 / float(np.sqrt(cin * k * k))
        return unif((cout, cin, k, k), s), unif((cout,), s)

    def convT_wb(cin, cout, k):
        s = 1.0 / float(np.sqrt(cout * k * k))
        return unif((cin, cout, k, k), s), unif((cout,), s)

    def tap_rows(w):                      # (cout,cin,kh,kw) -> (kh*kw*cin, cout)
        return jnp.transpose(w, (2, 3, 1, 0)).reshape(-1, w.shape[0])

    def pack_w(mat):                      # (Kreal, cout) -> (Kpad, 128) bf16
        kreal, cout = mat.shape
        out = jnp.zeros((_round_up(kreal), LANE), jnp.float32)
        return out.at[:kreal, :cout].set(mat).astype(jnp.bfloat16)

    def pack_b(v):
        return jnp.zeros((1, LANE), jnp.float32).at[0, :v.shape[0]].set(v)

    def res_params(cin, cout):
        w1, b1 = conv_wb(cout, cin, 5)
        w2, b2 = conv_wb(cout, cout, 5)
        if cin != cout:
            wsk, bsk = conv_wb(cout, cin, 1)
            sk_rows = wsk[:, :, 0, 0].T                    # (cin, cout)
        else:                                              # nn.Identity skip
            sk_rows = jnp.eye(cin, dtype=jnp.float32)
            bsk = jnp.zeros((cout,), jnp.float32)
        return {'w1': pack_w(tap_rows(w1)), 'b1': pack_b(b1),
                'w2sk': pack_w(jnp.concatenate([tap_rows(w2), sk_rows], 0)),
                'b2sk': pack_b(b2 + bsk),
                'gamma': pack_b(jnp.ones((cout,), jnp.float32)),
                'beta': pack_b(jnp.zeros((cout,), jnp.float32))}

    def pack_upconv(w):                   # ConvTranspose2d weight (cin,cout,4,4)
        cin, cout = w.shape[0], w.shape[1]
        assert 4 * cout <= LANE           # all 4 phases fit one 128-lane output
        mat = jnp.zeros((_round_up(9 * cin), LANE), jnp.float32)
        for r in range(2):
            for s in range(2):
                ph = r * 2 + s
                for a in range(3):
                    if (r, a) not in _KY_T:
                        continue
                    for c in range(3):
                        if (s, c) not in _KY_T:
                            continue
                        row0 = (a * 3 + c) * cin
                        mat = mat.at[row0:row0 + cin,
                                     ph * cout:(ph + 1) * cout].set(
                                         w[:, :, _KY_T[(r, a)], _KY_T[(s, c)]])
        return mat.astype(jnp.bfloat16)

    def pack_up_bias(b):
        cout = b.shape[0]
        row = jnp.zeros((1, LANE), jnp.float32)
        for ph in range(4):
            row = row.at[0, ph * cout:(ph + 1) * cout].set(b)
        return row

    s = 1.0 / float(np.sqrt(embedding_dim))
    P = {'time_w': unif((embedding_dim, embedding_dim), s),
         'time_b': unif((embedding_dim,), s)}
    iw, ib = conv_wb(base_channels, 2, 5)
    P['init_w'], P['init_b'] = pack_w(tap_rows(iw)), pack_b(ib)

    enc, ch = [], base_channels
    for i in range(n_residual_blocks):
        nc = ch * 2 if i % 2 == 1 else ch
        blk = res_params(ch, nc)
        dw, db = conv_wb(nc, nc, 4)
        blk['down_w'], blk['down_b'] = pack_w(tap_rows(dw)), pack_b(db)
        enc.append(blk)
        ch = nc
    P['enc'] = enc

    P['bot'] = res_params(ch, ch)

    dec = []
    for i in range(n_residual_blocks):
        nc = ch // 2 if i % 2 == 0 else ch
        uw, ub = convT_wb(ch, ch, 4)
        blk = res_params(ch * 2, nc)
        blk['up_w'], blk['up_b'] = pack_upconv(uw), pack_up_bias(ub)
        dec.append(blk)
        ch = nc
    P['dec'] = dec

    fw, fb = conv_wb(2, base_channels, 5)
    P['final_w'], P['final_b'] = pack_w(tap_rows(fw)), pack_b(fb)
    return P


# ---------------------------------- forward -----------------------------------

def network_forward(P, x_nchw, t, *, base_channels, embedding_dim,
                    n_residual_blocks):
    # Static channel schedule (mirrors the PyTorch constructor).
    enc_ch, ch = [], base_channels
    for i in range(n_residual_blocks):
        ch = ch * 2 if i % 2 == 1 else ch
        enc_ch.append(ch)
    dec_ch, dch = [], ch
    for i in range(n_residual_blocks):
        dch = dch // 2 if i % 2 == 0 else dch
        dec_ch.append(dch)

    x = jnp.transpose(x_nchw, (0, 2, 3, 1)).astype(jnp.bfloat16)    # NCHW->NHWC

    # Time-embedding branch: the reference forward computes it but never
    # injects it into the feature maps; computed here in plain JAX (no kernel
    # launch spent on it) and DCE'd under jit.
    t2 = t.reshape(-1, 1).astype(jnp.float32)
    i_emb = jnp.arange(embedding_dim // 2, dtype=jnp.float32)
    ang = 2.0 * jnp.pi * t2 / (10000.0 ** (2.0 * i_emb / embedding_dim))
    emb = jnp.concatenate([jnp.sin(ang), jnp.cos(ang)], axis=1)
    _ = jax.nn.relu(emb @ P['time_w'].T + P['time_b'])

    x = conv2d(x, P['init_w'], P['init_b'], k=5, cout=base_channels)

    skips = []
    for i, blk in enumerate(P['enc']):
        x = resblock_bn(x, blk, cout=enc_ch[i])   # block + BN (2 fused kernels)
        skips.append(x)                           # n_att_blocks = 0: no attention
        x = conv2d(x, blk['down_w'], blk['down_b'], k=4, stride=2,
                   cout=enc_ch[i])

    # TODO(synk): torch.utils.checkpoint only changes backward-pass memory;
    # forward semantics are the plain bottleneck call.
    x = resblock_bn(x, P['bot'], cout=ch)

    cur = ch
    for i, blk in enumerate(P['dec']):
        x = conv_transpose2d(x, blk['up_w'], blk['up_b'], cout=cur)
        x = jnp.concatenate([x, skips[n_residual_blocks - 1 - i]], axis=-1)
        x = resblock_bn(x, blk, cout=dec_ch[i])
        cur = dec_ch[i]

    y = conv2d(x, P['final_w'], P['final_b'], k=5, cout=2,
               out_dtype=jnp.float32)
    return jnp.transpose(y, (0, 3, 1, 2))                           # NHWC->NCHW


# ------------------------------------ main -------------------------------------

if __name__ == "__main__":
    base_channels, embedding_dim, n_residual_blocks = 8, 32, 2
    key = jax.random.PRNGKey(0)
    pkey, xkey, tkey = jax.random.split(key, 3)

    params = init_params(pkey, base_channels, embedding_dim, n_residual_blocks)
    x = jax.random.normal(xkey, (2, 2, 16, 16), jnp.float32)   # NCHW, 2 in-chans
    t = jax.random.uniform(tkey, (2,), jnp.float32)

    fwd = jax.jit(functools.partial(network_forward,
                                    base_channels=base_channels,
                                    embedding_dim=embedding_dim,
                                    n_residual_blocks=n_residual_blocks))
    out = fwd(params, x, t)
    jax.block_until_ready(out)
    assert out.shape == (2, 2, 16, 16) and out.dtype == jnp.float32
    print("KERNEL_OK")
</pallas_src>

<mosaic_0001>
module attributes {stable_mosaic.version = 11 : i64} {
  func.func @_mm_epilogue_kernel(%arg0: i32, %arg1: memref<256x128xbf16, #tpu.memory_space<vmem>>, %arg2: memref<128x128xbf16, #tpu.memory_space<vmem>>, %arg3: memref<1x128xf32, #tpu.memory_space<vmem>>, %arg4: memref<256x128xbf16, #tpu.memory_space<vmem>>) attributes {dimension_semantics = [#tpu.dimension_semantics<parallel>], iteration_bounds = array<i64: 2>, scalar_prefetch = 0 : i64, scratch_operands = 0 : i64, tpu.core_type = #tpu.core_type<tc>, window_params = [{transform_indices = @transform_0, window_bounds = array<i64: 256, 128>}, {pipeline_mode = #tpu.pipeline_mode<synchronous>, transform_indices = @transform_1, window_bounds = array<i64: 128, 128>}, {pipeline_mode = #tpu.pipeline_mode<synchronous>, transform_indices = @transform_2, window_bounds = array<i64: 1, 128>}, {transform_indices = @transform_3, window_bounds = array<i64: 256, 128>}]} {
    %c0 = arith.constant 0 : index
    %c0_0 = arith.constant 0 : index
    %0 = vector.load %arg1[%c0, %c0_0] : memref<256x128xbf16, #tpu.memory_space<vmem>>, vector<256x128xbf16>
    %c0_1 = arith.constant 0 : index
    %c0_2 = arith.constant 0 : index
    %1 = vector.load %arg2[%c0_1, %c0_2] : memref<128x128xbf16, #tpu.memory_space<vmem>>, vector<128x128xbf16>
    %cst = arith.constant dense<0.000000e+00> : vector<256x128xf32>
    %2 = tpu.matmul %0, %1, %cst {dimension_numbers = #tpu.dot_dimension_numbers<[1], [0], [0], [1], [0, 0, 1, 1], [], []>} : vector<256x128xbf16>, vector<128x128xbf16>, vector<256x128xf32> -> vector<256x128xf32>
    %c0_3 = arith.constant 0 : index
    %c0_4 = arith.constant 0 : index
    %3 = vector.load %arg3[%c0_3, %c0_4] : memref<1x128xf32, #tpu.memory_space<vmem>>, vector<1x128xf32>
    %4 = vector.broadcast %3 : vector<1x128xf32> to vector<256x128xf32>
    %5 = arith.addf %2, %4 : vector<256x128xf32>
    %6 = arith.truncf %5 : vector<256x128xf32> to vector<256x128xbf16>
    %c0_5 = arith.constant 0 : index
    %c0_6 = arith.constant 0 : index
    %7 = vector.load %arg4[%c0_5, %c0_6] : memref<256x128xbf16, #tpu.memory_space<vmem>>, vector<256x128xbf16>
    tpu.vector_store %arg4[%c0_5, %c0_6], %6 {strides = array<i32>} : memref<256x128xbf16, #tpu.memory_space<vmem>>, vector<256x128xbf16>,
    return
  }
  func.func @transform_0(%arg0: i32) -> (i32, i32) {
    %c0_i32 = arith.constant 0 : i32
    %c0_i32_0 = arith.constant 0 : i32
    return %arg0, %c0_i32 : i32, i32
  }
  func.func @transform_1(%arg0: i32) -> (i32, i32) {
    %c0_i32 = arith.constant 0 : i32
    %c0_i32_0 = arith.constant 0 : i32
    %c0_i32_1 = arith.constant 0 : i32
    return %c0_i32, %c0_i32_0 : i32, i32
  }
  func.func @transform_2(%arg0: i32) -> (i32, i32) {
    %c0_i32 = arith.constant 0 : i32
    %c0_i32_0 = arith.constant 0 : i32
    %c0_i32_1 = arith.constant 0 : i32
    return %c0_i32, %c0_i32_0 : i32, i32
  }
  func.func @transform_3(%arg0: i32) -> (i32, i32) {
    %c0_i32 = arith.constant 0 : i32
    %c0_i32_0 = arith.constant 0 : i32
    return %arg0, %c0_i32 : i32, i32
  }
}

module attributes {stable_mosaic.version = 11 : i64} {
  func.func @_mm_epilogue_kernel(%arg0: i32, %arg1: memref<256x256xbf16, #tpu.memory_space<vmem>>, %arg2: memref<256x128xbf16, #tpu.memory_space<vmem>>, %arg3: memref<1x128xf32, #tpu.memory_space<vmem>>, %arg4: memref<256x128xbf16, #tpu.memory_space<vmem>>) attributes {dimension_semantics = [#tpu.dimension_semantics<parallel>], iteration_bounds = array<i64: 2>, scalar_prefetch = 0 : i64, scratch_operands = 0 : i64, tpu.core_type = #tpu.core_type<tc>, window_params = [{transform_indices = @transform_0, window_bounds = array<i64: 256, 256>}, {pipeline_mode = #tpu.pipeline_mode<synchronous>, transform_indices = @transform_1, window_bounds = array<i64: 256, 128>}, {pipeline_mode = #tpu.pipeline_mode<synchronous>, transform_indices = @transform_2, window_bounds = array<i64: 1, 128>}, {transform_indices = @transform_3, window_bounds = array<i64: 256, 128>}]} {
    %c0 = arith.constant 0 : index
    %c0_0 = arith.constant 0 : index
    %0 = vector.load %arg1[%c0, %c0_0] : memref<256x256xbf16, #tpu.memory_space<vmem>>, vector<256x256xbf16>
    %c0_1 = arith.constant 0 : index
    %c0_2 = arith.constant 0 : index
    %1 = vector.load %arg2[%c0_1, %c0_2] : memref<256x128xbf16, #tpu.memory_space<vmem>>, vector<256x128xbf16>
    %cst = arith.constant dense<0.000000e+00> : vector<256x128xf32>
    %2 = tpu.matmul %0, %1, %cst {dimension_numbers = #tpu.dot_dimension_numbers<[1], [0], [0], [1], [0, 0, 1, 1], [], []>} : vector<256x256xbf16>, vector<256x128xbf16>, vector<256x128xf32> -> vector<256x128xf32>
    %c0_3 = arith.constant 0 : index
    %c0_4 = arith.constant 0 : index
    %3 = vector.load %arg3[%c0_3, %c0_4] : memref<1x128xf32, #tpu.memory_space<vmem>>, vector<1x128xf32>
    %4 = vector.broadcast %3 : vector<1x128xf32> to vector<256x128xf32>
    %5 = arith.addf %2, %4 : vector<256x128xf32>
    %cst_5 = arith.constant 0.000000e+00 : f32
    %6 = vector.broadcast %cst_5 : f32 to vector<256x128xf32>
    %7 = arith.maximumf %5, %6 : vector<256x128xf32>
    %8 = arith.truncf %7 : vector<256x128xf32> to vector<256x128xbf16>
    %c0_6 = arith.constant 0 : index
    %c0_7 = arith.constant 0 : index
    %9 = vector.load %arg4[%c0_6, %c0_7] : memref<256x128xbf16, #tpu.memory_space<vmem>>, vector<256x128xbf16>
    tpu.vector_store %arg4[%c0_6, %c0_7], %8 {strides = array<i32>} : memref<256x128xbf16, #tpu.memory_space<vmem>>, vector<256x128xbf16>,
    return
  }
  func.func @transform_0(%arg0: i32) -> (i32, i32) {
    %c0_i32 = arith.constant 0 : i32
    %c0_i32_0 = arith.constant 0 : i32
    return %arg0, %c0_i32 : i32, i32
  }
  func.func @transform_1(%arg0: i32) -> (i32, i32) {
    %c0_i32 = arith.constant 0 : i32
    %c0_i32_0 = arith.constant 0 : i32
    %c0_i32_1 = arith.constant 0 : i32
    return %c0_i32, %c0_i32_0 : i32, i32
  }
  func.func @transform_2(%arg0: i32) -> (i32, i32) {
    %c0_i32 = arith.constant 0 : i32
    %c0_i32_0 = arith.constant 0 : i32
    %c0_i32_1 = arith.constant 0 : i32
    return %c0_i32, %c0_i32_0 : i32, i32
  }
  func.func @transform_3(%arg0: i32) -> (i32, i32) {
    %c0_i32 = arith.constant 0 : i32
    %c0_i32_0 = arith.constant 0 : i32
    return %arg0, %c0_i32 : i32, i32
  }
}

module attributes {stable_mosaic.version = 11 : i64} {
  func.func @_mm_epilogue_kernel(%arg0: i32, %arg1: memref<512x256xbf16, #tpu.memory_space<vmem>>, %arg2: memref<256x128xbf16, #tpu.memory_space<vmem>>, %arg3: memref<1x128xf32, #tpu.memory_space<vmem>>, %arg4: memref<1x128xf32, #tpu.memory_space<vmem>>, %arg5: memref<1x128xf32, #tpu.memory_space<vmem>>, %arg6: memref<512x128xbf16, #tpu.memory_space<vmem>>) attributes {dimension_semantics = [#tpu.dimension_semantics<parallel>], iteration_bounds = array<i64: 1>, scalar_prefetch = 0 : i64, scratch_operands = 0 : i64, tpu.core_type = #tpu.core_type<tc>, window_params = [{transform_indices = @transform_0, window_bounds = array<i64: 512, 256>}, {pipeline_mode = #tpu.pipeline_mode<synchronous>, transform_indices = @transform_1, window_bounds = array<i64: 256, 128>}, {pipeline_mode = #tpu.pipeline_mode<synchronous>, transform_indices = @transform_2, window_bounds = array<i64: 1, 128>}, {pipeline_mode = #tpu.pipeline_mode<synchronous>, transform_indices = @transform_3, window_bounds = array<i64: 1, 128>}, {pipeline_mode = #tpu.pipeline_mode<synchronous>, transform_indices = @transform_4, window_bounds = array<i64: 1, 128>}, {transform_indices = @transform_5, window_bounds = array<i64: 512, 128>}]} {
    %c0 = arith.constant 0 : index
    %c0_0 = arith.constant 0 : index
    %0 = vector.load %arg1[%c0, %c0_0] : memref<512x256xbf16, #tpu.memory_space<vmem>>, vector<512x256xbf16>
    %c0_1 = arith.constant 0 : index
    %c0_2 = arith.constant 0 : index
    %1 = vector.load %arg2[%c0_1, %c0_2] : memref<256x128xbf16, #tpu.memory_space<vmem>>, vector<256x128xbf16>
    %cst = arith.constant dense<0.000000e+00> : vector<512x128xf32>
    %2 = tpu.matmul %0, %1, %cst {dimension_numbers = #tpu.dot_dimension_numbers<[1], [0], [0], [1], [0, 0, 1, 1], [], []>} : vector<512x256xbf16>, vector<256x128xbf16>, vector<512x128xf32> -> vector<512x128xf32>
    %c0_3 = arith.constant 0 : index
    %c0_4 = arith.constant 0 : index
    %3 = vector.load %arg3[%c0_3, %c0_4] : memref<1x128xf32, #tpu.memory_space<vmem>>, vector<1x128xf32>
    %4 = vector.broadcast %3 : vector<1x128xf32> to vector<512x128xf32>
    %5 = arith.addf %2, %4 : vector<512x128xf32>
    %cst_5 = arith.constant dense<0.000000e+00> : vector<128xf32>
    %6 = vector.multi_reduction <add>, %5, %cst_5 [0] : vector<512x128xf32> to vector<128xf32>
    %7 = vector.shape_cast %6 : vector<128xf32> to vector<1x128xf32>
    %cst_6 = arith.constant 0.001953125 : f32
    %8 = vector.broadcast %cst_6 : f32 to vector<1x128xf32>
    %9 = arith.mulf %7, %8 : vector<1x128xf32>
    %10 = arith.mulf %5, %5 : vector<512x128xf32>
    %cst_7 = arith.constant dense<0.000000e+00> : vector<128xf32>
    %11 = vector.multi_reduction <add>, %10, %cst_7 [0] : vector<512x128xf32> to vector<128xf32>
    %12 = vector.shape_cast %11 : vector<128xf32> to vector<1x128xf32>
    %cst_8 = arith.constant 0.001953125 : f32
    %13 = vector.broadcast %cst_8 : f32 to vector<1x128xf32>
    %14 = arith.mulf %12, %13 : vector<1x128xf32>
    %15 = arith.mulf %9, %9 : vector<1x128xf32>
    %16 = arith.subf %14, %15 : vector<1x128xf32>
    %cst_9 = arith.constant 9.99999974E-6 : f32
    %17 = vector.broadcast %cst_9 : f32 to vector<1x128xf32>
    %18 = arith.addf %16, %17 : vector<1x128xf32>
    %19 = math.rsqrt %18 : vector<1x128xf32>
    %c0_10 = arith.constant 0 : index
    %c0_11 = arith.constant 0 : index
    %20 = vector.load %arg4[%c0_10, %c0_11] : memref<1x128xf32, #tpu.memory_space<vmem>>, vector<1x128xf32>
    %21 = arith.mulf %19, %20 : vector<1x128xf32>
    %22 = vector.broadcast %9 : vector<1x128xf32> to vector<512x128xf32>
    %23 = arith.subf %5, %22 : vector<512x128xf32>
    %24 = vector.broadcast %21 : vector<1x128xf32> to vector<512x128xf32>
    %25 = arith.mulf %23, %24 : vector<512x128xf32>
    %c0_12 = arith.constant 0 : index
    %c0_13 = arith.constant 0 : index
    %26 = vector.load %arg5[%c0_12, %c0_13] : memref<1x128xf32, #tpu.memory_space<vmem>>, vector<1x128xf32>
    %27 = vector.broadcast %26 : vector<1x128xf32> to vector<512x128xf32>
    %28 = arith.addf %25, %27 : vector<512x128xf32>
    %29 = arith.truncf %28 : vector<512x128xf32> to vector<512x128xbf16>
    %c0_14 = arith.constant 0 : index
    %c0_15 = arith.constant 0 : index
    %30 = vector.load %arg6[%c0_14, %c0_15] : memref<512x128xbf16, #tpu.memory_space<vmem>>, vector<512x128xbf16>
    tpu.vector_store %arg6[%c0_14, %c0_15], %29 {strides = array<i32>} : memref<512x128xbf16, #tpu.memory_space<vmem>>, vector<512x128xbf16>,
    return
  }
  func.func @transform_0(%arg0: i32) -> (i32, i32) {
    %c0_i32 = arith.constant 0 : i32
    %c0_i32_0 = arith.constant 0 : i32
    return %arg0, %c0_i32 : i32, i32
  }
  func.func @transform_1(%arg0: i32) -> (i32, i32) {
    %c0_i32 = arith.constant 0 : i32
    %c0_i32_0 = arith.constant 0 : i32
    %c0_i32_1 = arith.constant 0 : i32
    return %c0_i32, %c0_i32_0 : i32, i32
  }
  func.func @transform_2(%arg0: i32) -> (i32, i32) {
    %c0_i32 = arith.constant 0 : i32
    %c0_i32_0 = arith.constant 0 : i32
    %c0_i32_1 = arith.constant 0 : i32
    return %c0_i32, %c0_i32_0 : i32, i32
  }
  func.func @transform_3(%arg0: i32) -> (i32, i32) {
    %c0_i32 = arith.constant 0 : i32
    %c0_i32_0 = arith.constant 0 : i32
    %c0_i32_1 = arith.constant 0 : i32
    return %c0_i32, %c0_i32_0 : i32, i32
  }
  func.func @transform_4(%arg0: i32) -> (i32, i32) {
    %c0_i32 = arith.constant 0 : i32
    %c0_i32_0 = arith.constant 0 : i32
    %c0_i32_1 = arith.constant 0 : i32
    return %c0_i32, %c0_i32_0 : i32, i32
  }
  func.func @transform_5(%arg0: i32) -> (i32, i32) {
    %c0_i32 = arith.constant 0 : i32
    %c0_i32_0 = arith.constant 0 : i32
    return %arg0, %c0_i32 : i32, i32
  }
}

module attributes {stable_mosaic.version = 11 : i64} {
  func.func @_mm_epilogue_kernel(%arg0: i32, %arg1: memref<128x128xbf16, #tpu.memory_space<vmem>>, %arg2: memref<128x128xbf16, #tpu.memory_space<vmem>>, %arg3: memref<1x128xf32, #tpu.memory_space<vmem>>, %arg4: memref<128x128xbf16, #tpu.memory_space<vmem>>) attributes {dimension_semantics = [#tpu.dimension_semantics<parallel>], iteration_bounds = array<i64: 1>, scalar_prefetch = 0 : i64, scratch_operands = 0 : i64, tpu.core_type = #tpu.core_type<tc>, window_params = [{transform_indices = @transform_0, window_bounds = array<i64: 128, 128>}, {pipeline_mode = #tpu.pipeline_mode<synchronous>, transform_indices = @transform_1, window_bounds = array<i64: 128, 128>}, {pipeline_mode = #tpu.pipeline_mode<synchronous>, transform_indices = @transform_2, window_bounds = array<i64: 1, 128>}, {transform_indices = @transform_3, window_bounds = array<i64: 128, 128>}]} {
    %c0 = arith.constant 0 : index
    %c0_0 = arith.constant 0 : index
    %0 = vector.load %arg1[%c0, %c0_0] : memref<128x128xbf16, #tpu.memory_space<vmem>>, vector<128x128xbf16>
    %c0_1 = arith.constant 0 : index
    %c0_2 = arith.constant 0 : index
    %1 = vector.load %arg2[%c0_1, %c0_2] : memref<128x128xbf16, #tpu.memory_space<vmem>>, vector<128x128xbf16>
    %cst = arith.constant dense<0.000000e+00> : vector<128x128xf32>
    %2 = tpu.matmul %0, %1, %cst {dimension_numbers = #tpu.dot_dimension_numbers<[1], [0], [0], [1], [0, 0, 1, 1], [], []>} : vector<128x128xbf16>, vector<128x128xbf16>, vector<128x128xf32> -> vector<128x128xf32>
    %c0_3 = arith.constant 0 : index
    %c0_4 = arith.constant 0 : index
    %3 = vector.load %arg3[%c0_3, %c0_4] : memref<1x128xf32, #tpu.memory_space<vmem>>, vector<1x128xf32>
    %4 = vector.broadcast %3 : vector<1x128xf32> to vector<128x128xf32>
    %5 = arith.addf %2, %4 : vector<128x128xf32>
    %6 = arith.truncf %5 : vector<128x128xf32> to vector<128x128xbf16>
    %c0_5 = arith.constant 0 : index
    %c0_6 = arith.constant 0 : index
    %7 = vector.load %arg4[%c0_5, %c0_6] : memref<128x128xbf16, #tpu.memory_space<vmem>>, vector<128x128xbf16>
    tpu.vector_store %arg4[%c0_5, %c0_6], %6 {strides = array<i32>} : memref<128x128xbf16, #tpu.memory_space<vmem>>, vector<128x128xbf16>,
    return
  }
  func.func @transform_0(%arg0: i32) -> (i32, i32) {
    %c0_i32 = arith.constant 0 : i32
    %c0_i32_0 = arith.constant 0 : i32
    return %arg0, %c0_i32 : i32, i32
  }
  func.func @transform_1(%arg0: i32) -> (i32, i32) {
    %c0_i32 = arith.constant 0 : i32
    %c0_i32_0 = arith.constant 0 : i32
    %c0_i32_1 = arith.constant 0 : i32
    return %c0_i32, %c0_i32_0 : i32, i32
  }
  func.func @transform_2(%arg0: i32) -> (i32, i32) {
    %c0_i32 = arith.constant 0 : i32
    %c0_i32_0 = arith.constant 0 : i32
    %c0_i32_1 = arith.constant 0 : i32
    return %c0_i32, %c0_i32_0 : i32, i32
  }
  func.func @transform_3(%arg0: i32) -> (i32, i32) {
    %c0_i32 = arith.constant 0 : i32
    %c0_i32_0 = arith.constant 0 : i32
    return %arg0, %c0_i32 : i32, i32
  }
}

module attributes {stable_mosaic.version = 11 : i64} {
  func.func @_mm_epilogue_kernel(%arg0: i32, %arg1: memref<128x256xbf16, #tpu.memory_space<vmem>>, %arg2: memref<256x128xbf16, #tpu.memory_space<vmem>>, %arg3: memref<1x128xf32, #tpu.memory_space<vmem>>, %arg4: memref<128x128xbf16, #tpu.memory_space<vmem>>) attributes {dimension_semantics = [#tpu.dimension_semantics<parallel>], iteration_bounds = array<i64: 1>, scalar_prefetch = 0 : i64, scratch_operands = 0 : i64, tpu.core_type = #tpu.core_type<tc>, window_params = [{transform_indices = @transform_0, window_bounds = array<i64: 128, 256>}, {pipeline_mode = #tpu.pipeline_mode<synchronous>, transform_indices = @transform_1, window_bounds = array<i64: 256, 128>}, {pipeline_mode = #tpu.pipeline_mode<synchronous>, transform_indices = @transform_2, window_bounds = array<i64: 1, 128>}, {transform_indices = @transform_3, window_bounds = array<i64: 128, 128>}]} {
    %c0 = arith.constant 0 : index
    %c0_0 = arith.constant 0 : index
    %0 = vector.load %arg1[%c0, %c0_0] : memref<128x256xbf16, #tpu.memory_space<vmem>>, vector<128x256xbf16>
    %c0_1 = arith.constant 0 : index
    %c0_2 = arith.constant 0 : index
    %1 = vector.load %arg2[%c0_1, %c0_2] : memref<256x128xbf16, #tpu.memory_space<vmem>>, vector<256x128xbf16>
    %cst = arith.constant dense<0.000000e+00> : vector<128x128xf32>
    %2 = tpu.matmul %0, %1, %cst {dimension_numbers = #tpu.dot_dimension_numbers<[1], [0], [0], [1], [0, 0, 1, 1], [], []>} : vector<128x256xbf16>, vector<256x128xbf16>, vector<128x128xf32> -> vector<128x128xf32>
    %c0_3 = arith.constant 0 : index
    %c0_4 = arith.constant 0 : index
    %3 = vector.load %arg3[%c0_3, %c0_4] : memref<1x128xf32, #tpu.memory_space<vmem>>, vector<1x128xf32>
    %4 = vector.broadcast %3 : vector<1x128xf32> to vector<128x128xf32>
    %5 = arith.addf %2, %4 : vector<128x128xf32>
    %cst_5 = arith.constant 0.000000e+00 : f32
    %6 = vector.broadcast %cst_5 : f32 to vector<128x128xf32>
    %7 = arith.maximumf %5, %6 : vector<128x128xf32>
    %8 = arith.truncf %7 : vector<128x128xf32> to vector<128x128xbf16>
    %c0_6 = arith.constant 0 : index
    %c0_7 = arith.constant 0 : index
    %9 = vector.load %arg4[%c0_6, %c0_7] : memref<128x128xbf16, #tpu.memory_space<vmem>>, vector<128x128xbf16>
    tpu.vector_store %arg4[%c0_6, %c0_7], %8 {strides = array<i32>} : memref<128x128xbf16, #tpu.memory_space<vmem>>, vector<128x128xbf16>,
    return
  }
  func.func @transform_0(%arg0: i32) -> (i32, i32) {
    %c0_i32 = arith.constant 0 : i32
    %c0_i32_0 = arith.constant 0 : i32
    return %arg0, %c0_i32 : i32, i32
  }
  func.func @transform_1(%arg0: i32) -> (i32, i32) {
    %c0_i32 = arith.constant 0 : i32
    %c0_i32_0 = arith.constant 0 : i32
    %c0_i32_1 = arith.constant 0 : i32
    return %c0_i32, %c0_i32_0 : i32, i32
  }
  func.func @transform_2(%arg0: i32) -> (i32, i32) {
    %c0_i32 = arith.constant 0 : i32
    %c0_i32_0 = arith.constant 0 : i32
    %c0_i32_1 = arith.constant 0 : i32
    return %c0_i32, %c0_i32_0 : i32, i32
  }
  func.func @transform_3(%arg0: i32) -> (i32, i32) {
    %c0_i32 = arith.constant 0 : i32
    %c0_i32_0 = arith.constant 0 : i32
    return %arg0, %c0_i32 : i32, i32
  }
}

module attributes {stable_mosaic.version = 11 : i64} {
  func.func @_mm_epilogue_kernel(%arg0: i32, %arg1: memref<128x512xbf16, #tpu.memory_space<vmem>>, %arg2: memref<512x128xbf16, #tpu.memory_space<vmem>>, %arg3: memref<1x128xf32, #tpu.memory_space<vmem>>, %arg4: memref<1x128xf32, #tpu.memory_space<vmem>>, %arg5: memref<1x128xf32, #tpu.memory_space<vmem>>, %arg6: memref<128x128xbf16, #tpu.memory_space<vmem>>) attributes {dimension_semantics = [#tpu.dimension_semantics<parallel>], iteration_bounds = array<i64: 1>, scalar_prefetch = 0 : i64, scratch_operands = 0 : i64, tpu.core_type = #tpu.core_type<tc>, window_params = [{transform_indices = @transform_0, window_bounds = array<i64: 128, 512>}, {pipeline_mode = #tpu.pipeline_mode<synchronous>, transform_indices = @transform_1, window_bounds = array<i64: 512, 128>}, {pipeline_mode = #tpu.pipeline_mode<synchronous>, transform_indices = @transform_2, window_bounds = array<i64: 1, 128>}, {pipeline_mode = #tpu.pipeline_mode<synchronous>, transform_indices = @transform_3, window_bounds = array<i64: 1, 128>}, {pipeline_mode = #tpu.pipeline_mode<synchronous>, transform_indices = @transform_4, window_bounds = array<i64: 1, 128>}, {transform_indices = @transform_5, window_bounds = array<i64: 128, 128>}]} {
    %c0 = arith.constant 0 : index
    %c0_0 = arith.constant 0 : index
    %0 = vector.load %arg1[%c0, %c0_0] : memref<128x512xbf16, #tpu.memory_space<vmem>>, vector<128x512xbf16>
    %c0_1 = arith.constant 0 : index
    %c0_2 = arith.constant 0 : index
    %1 = vector.load %arg2[%c0_1, %c0_2] : memref<512x128xbf16, #tpu.memory_space<vmem>>, vector<512x128xbf16>
    %cst = arith.constant dense<0.000000e+00> : vector<128x128xf32>
    %2 = tpu.matmul %0, %1, %cst {dimension_numbers = #tpu.dot_dimension_numbers<[1], [0], [0], [1], [0, 0, 1, 1], [], []>} : vector<128x512xbf16>, vector<512x128xbf16>, vector<128x128xf32> -> vector<128x128xf32>
    %c0_3 = arith.constant 0 : index
    %c0_4 = arith.constant 0 : index
    %3 = vector.load %arg3[%c0_3, %c0_4] : memref<1x128xf32, #tpu.memory_space<vmem>>, vector<1x128xf32>
    %4 = vector.broadcast %3 : vector<1x128xf32> to vector<128x128xf32>
    %5 = arith.addf %2, %4 : vector<128x128xf32>
    %cst_5 = arith.constant dense<0.000000e+00> : vector<128xf32>
    %6 = vector.multi_reduction <add>, %5, %cst_5 [0] : vector<128x128xf32> to vector<128xf32>
    %7 = vector.shape_cast %6 : vector<128xf32> to vector<1x128xf32>
    %cst_6 = arith.constant 7.812500e-03 : f32
    %8 = vector.broadcast %cst_6 : f32 to vector<1x128xf32>
    %9 = arith.mulf %7, %8 : vector<1x128xf32>
    %10 = arith.mulf %5, %5 : vector<128x128xf32>
    %cst_7 = arith.constant dense<0.000000e+00> : vector<128xf32>
    %11 = vector.multi_reduction <add>, %10, %cst_7 [0] : vector<128x128xf32> to vector<128xf32>
    %12 = vector.shape_cast %11 : vector<128xf32> to vector<1x128xf32>
    %cst_8 = arith.constant 7.812500e-03 : f32
    %13 = vector.broadcast %cst_8 : f32 to vector<1x128xf32>
    %14 = arith.mulf %12, %13 : vector<1x128xf32>
    %15 = arith.mulf %9, %9 : vector<1x128xf32>
    %16 = arith.subf %14, %15 : vector<1x128xf32>
    %cst_9 = arith.constant 9.99999974E-6 : f32
    %17 = vector.broadcast %cst_9 : f32 to vector<1x128xf32>
    %18 = arith.addf %16, %17 : vector<1x128xf32>
    %19 = math.rsqrt %18 : vector<1x128xf32>
    %c0_10 = arith.constant 0 : index
    %c0_11 = arith.constant 0 : index
    %20 = vector.load %arg4[%c0_10, %c0_11] : memref<1x128xf32, #tpu.memory_space<vmem>>, vector<1x128xf32>
    %21 = arith.mulf %19, %20 : vector<1x128xf32>
    %22 = vector.broadcast %9 : vector<1x128xf32> to vector<128x128xf32>
    %23 = arith.subf %5, %22 : vector<128x128xf32>
    %24 = vector.broadcast %21 : vector<1x128xf32> to vector<128x128xf32>
    %25 = arith.mulf %23, %24 : vector<128x128xf32>
    %c0_12 = arith.constant 0 : index
    %c0_13 = arith.constant 0 : index
    %26 = vector.load %arg5[%c0_12, %c0_13] : memref<1x128xf32, #tpu.memory_space<vmem>>, vector<1x128xf32>
    %27 = vector.broadcast %26 : vector<1x128xf32> to vector<128x128xf32>
    %28 = arith.addf %25, %27 : vector<128x128xf32>
    %29 = arith.truncf %28 : vector<128x128xf32> to vector<128x128xbf16>
    %c0_14 = arith.constant 0 : index
    %c0_15 = arith.constant 0 : index
    %30 = vector.load %arg6[%c0_14, %c0_15] : memref<128x128xbf16, #tpu.memory_space<vmem>>, vector<128x128xbf16>
    tpu.vector_store %arg6[%c0_14, %c0_15], %29 {strides = array<i32>} : memref<128x128xbf16, #tpu.memory_space<vmem>>, vector<128x128xbf16>,
    return
  }
  func.func @transform_0(%arg0: i32) -> (i32, i32) {
    %c0_i32 = arith.constant 0 : i32
    %c0_i32_0 = arith.constant 0 : i32
    return %arg0, %c0_i32 : i32, i32
  }
  func.func @transform_1(%arg0: i32) -> (i32, i32) {
    %c0_i32 = arith.constant 0 : i32
    %c0_i32_0 = arith.constant 0 : i32
    %c0_i32_1 = arith.constant 0 : i32
    return %c0_i32, %c0_i32_0 : i32, i32
  }
  func.func @transform_2(%arg0: i32) -> (i32, i32) {
    %c0_i32 = arith.constant 0 : i32
    %c0_i32_0 = arith.constant 0 : i32
    %c0_i32_1 = arith.constant 0 : i32
    return %c0_i32, %c0_i32_0 : i32, i32
  }
  func.func @transform_3(%arg0: i32) -> (i32, i32) {
    %c0_i32 = arith.constant 0 : i32
    %c0_i32_0 = arith.constant 0 : i32
    %c0_i32_1 = arith.constant 0 : i32
    return %c0_i32, %c0_i32_0 : i32, i32
  }
  func.func @transform_4(%arg0: i32) -> (i32, i32) {
    %c0_i32 = arith.constant 0 : i32
    %c0_i32_0 = arith.constant 0 : i32
    %c0_i32_1 = arith.constant 0 : i32
    return %c0_i32, %c0_i32_0 : i32, i32
  }
  func.func @transform_5(%arg0: i32) -> (i32, i32) {
    %c0_i32 = arith.constant 0 : i32
    %c0_i32_0 = arith.constant 0 : i32
    return %arg0, %c0_i32 : i32, i32
  }
}

module attributes {stable_mosaic.version = 11 : i64} {
  func.func @_mm_epilogue_kernel(%arg0: i32, %arg1: memref<32x256xbf16, #tpu.memory_space<vmem>>, %arg2: memref<256x128xbf16, #tpu.memory_space<vmem>>, %arg3: memref<1x128xf32, #tpu.memory_space<vmem>>, %arg4: memref<32x128xbf16, #tpu.memory_space<vmem>>) attributes {dimension_semantics = [#tpu.dimension_semantics<parallel>], iteration_bounds = array<i64: 1>, scalar_prefetch = 0 : i64, scratch_operands = 0 : i64, tpu.core_type = #tpu.core_type<tc>, window_params = [{transform_indices = @transform_0, window_bounds = array<i64: 32, 256>}, {pipeline_mode = #tpu.pipeline_mode<synchronous>, transform_indices = @transform_1, window_bounds = array<i64: 256, 128>}, {pipeline_mode = #tpu.pipeline_mode<synchronous>, transform_indices = @transform_2, window_bounds = array<i64: 1, 128>}, {transform_indices = @transform_3, window_bounds = array<i64: 32, 128>}]} {
    %c0 = arith.constant 0 : index
    %c0_0 = arith.constant 0 : index
    %0 = vector.load %arg1[%c0, %c0_0] : memref<32x256xbf16, #tpu.memory_space<vmem>>, vector<32x256xbf16>
    %c0_1 = arith.constant 0 : index
    %c0_2 = arith.constant 0 : index
    %1 = vector.load %arg2[%c0_1, %c0_2] : memref<256x128xbf16, #tpu.memory_space<vmem>>, vector<256x128xbf16>
    %cst = arith.constant dense<0.000000e+00> : vector<32x128xf32>
    %2 = tpu.matmul %0, %1, %cst {dimension_numbers = #tpu.dot_dimension_numbers<[1], [0], [0], [1], [0, 0, 1, 1], [], []>} : vector<32x256xbf16>, vector<256x128xbf16>, vector<32x128xf32> -> vector<32x128xf32>
    %c0_3 = arith.constant 0 : index
    %c0_4 = arith.constant 0 : index
    %3 = vector.load %arg3[%c0_3, %c0_4] : memref<1x128xf32, #tpu.memory_space<vmem>>, vector<1x128xf32>
    %4 = vector.broadcast %3 : vector<1x128xf32> to vector<32x128xf32>
    %5 = arith.addf %2, %4 : vector<32x128xf32>
    %6 = arith.truncf %5 : vector<32x128xf32> to vector<32x128xbf16>
    %c0_5 = arith.constant 0 : index
    %c0_6 = arith.constant 0 : index
    %7 = vector.load %arg4[%c0_5, %c0_6] : memref<32x128xbf16, #tpu.memory_space<vmem>>, vector<32x128xbf16>
    tpu.vector_store %arg4[%c0_5, %c0_6], %6 {strides = array<i32>} : memref<32x128xbf16, #tpu.memory_space<vmem>>, vector<32x128xbf16>,
    return
  }
  func.func @transform_0(%arg0: i32) -> (i32, i32) {
    %c0_i32 = arith.constant 0 : i32
    %c0_i32_0 = arith.constant 0 : i32
    return %arg0, %c0_i32 : i32, i32
  }
  func.func @transform_1(%arg0: i32) -> (i32, i32) {
    %c0_i32 = arith.constant 0 : i32
    %c0_i32_0 = arith.constant 0 : i32
    %c0_i32_1 = arith.constant 0 : i32
    return %c0_i32, %c0_i32_0 : i32, i32
  }
  func.func @transform_2(%arg0: i32) -> (i32, i32) {
    %c0_i32 = arith.constant 0 : i32
    %c0_i32_0 = arith.constant 0 : i32
    %c0_i32_1 = arith.constant 0 : i32
    return %c0_i32, %c0_i32_0 : i32, i32
  }
  func.func @transform_3(%arg0: i32) -> (i32, i32) {
    %c0_i32 = arith.constant 0 : i32
    %c0_i32_0 = arith.constant 0 : i32
    return %arg0, %c0_i32 : i32, i32
  }
}

module attributes {stable_mosaic.version = 11 : i64} {
  func.func @_mm_epilogue_kernel(%arg0: i32, %arg1: memref<32x512xbf16, #tpu.memory_space<vmem>>, %arg2: memref<512x128xbf16, #tpu.memory_space<vmem>>, %arg3: memref<1x128xf32, #tpu.memory_space<vmem>>, %arg4: memref<32x128xbf16, #tpu.memory_space<vmem>>) attributes {dimension_semantics = [#tpu.dimension_semantics<parallel>], iteration_bounds = array<i64: 1>, scalar_prefetch = 0 : i64, scratch_operands = 0 : i64, tpu.core_type = #tpu.core_type<tc>, window_params = [{transform_indices = @transform_0, window_bounds = array<i64: 32, 512>}, {pipeline_mode = #tpu.pipeline_mode<synchronous>, transform_indices = @transform_1, window_bounds = array<i64: 512, 128>}, {pipeline_mode = #tpu.pipeline_mode<synchronous>, transform_indices = @transform_2, window_bounds = array<i64: 1, 128>}, {transform_indices = @transform_3, window_bounds = array<i64: 32, 128>}]} {
    %c0 = arith.constant 0 : index
    %c0_0 = arith.constant 0 : index
    %0 = vector.load %arg1[%c0, %c0_0] : memref<32x512xbf16, #tpu.memory_space<vmem>>, vector<32x512xbf16>
    %c0_1 = arith.constant 0 : index
    %c0_2 = arith.constant 0 : index
    %1 = vector.load %arg2[%c0_1, %c0_2] : memref<512x128xbf16, #tpu.memory_space<vmem>>, vector<512x128xbf16>
    %cst = arith.constant dense<0.000000e+00> : vector<32x128xf32>
    %2 = tpu.matmul %0, %1, %cst {dimension_numbers = #tpu.dot_dimension_numbers<[1], [0], [0], [1], [0, 0, 1, 1], [], []>} : vector<32x512xbf16>, vector<512x128xbf16>, vector<32x128xf32> -> vector<32x128xf32>
    %c0_3 = arith.constant 0 : index
    %c0_4 = arith.constant 0 : index
    %3 = vector.load %arg3[%c0_3, %c0_4] : memref<1x128xf32, #tpu.memory_space<vmem>>, vector<1x128xf32>
    %4 = vector.broadcast %3 : vector<1x128xf32> to vector<32x128xf32>
    %5 = arith.addf %2, %4 : vector<32x128xf32>
    %cst_5 = arith.constant 0.000000e+00 : f32
    %6 = vector.broadcast %cst_5 : f32 to vector<32x128xf32>
    %7 = arith.maximumf %5, %6 : vector<32x128xf32>
    %8 = arith.truncf %7 : vector<32x128xf32> to vector<32x128xbf16>
    %c0_6 = arith.constant 0 : index
    %c0_7 = arith.constant 0 : index
    %9 = vector.load %arg4[%c0_6, %c0_7] : memref<32x128xbf16, #tpu.memory_space<vmem>>, vector<32x128xbf16>
    tpu.vector_store %arg4[%c0_6, %c0_7], %8 {strides = array<i32>} : memref<32x128xbf16, #tpu.memory_space<vmem>>, vector<32x128xbf16>,
    return
  }
  func.func @transform_0(%arg0: i32) -> (i32, i32) {
    %c0_i32 = arith.constant 0 : i32
    %c0_i32_0 = arith.constant 0 : i32
    return %arg0, %c0_i32 : i32, i32
  }
  func.func @transform_1(%arg0: i32) -> (i32, i32) {
    %c0_i32 = arith.constant 0 : i32
    %c0_i32_0 = arith.constant 0 : i32
    %c0_i32_1 = arith.constant 0 : i32
    return %c0_i32, %c0_i32_0 : i32, i32
  }
  func.func @transform_2(%arg0: i32) -> (i32, i32) {
    %c0_i32 = arith.constant 0 : i32
    %c0_i32_0 = arith.constant 0 : i32
    %c0_i32_1 = arith.constant 0 : i32
    return %c0_i32, %c0_i32_0 : i32, i32
  }
  func.func @transform_3(%arg0: i32) -> (i32, i32) {
    %c0_i32 = arith.constant 0 : i32
    %c0_i32_0 = arith.constant 0 : i32
    return %arg0, %c0_i32 : i32, i32
  }
}

module attributes {stable_mosaic.version = 11 : i64} {
  func.func @_mm_epilogue_kernel(%arg0: i32, %arg1: memref<32x512xbf16, #tpu.memory_space<vmem>>, %arg2: memref<512x128xbf16, #tpu.memory_space<vmem>>, %arg3: memref<1x128xf32, #tpu.memory_space<vmem>>, %arg4: memref<1x128xf32, #tpu.memory_space<vmem>>, %arg5: memref<1x128xf32, #tpu.memory_space<vmem>>, %arg6: memref<32x128xbf16, #tpu.memory_space<vmem>>) attributes {dimension_semantics = [#tpu.dimension_semantics<parallel>], iteration_bounds = array<i64: 1>, scalar_prefetch = 0 : i64, scratch_operands = 0 : i64, tpu.core_type = #tpu.core_type<tc>, window_params = [{transform_indices = @transform_0, window_bounds = array<i64: 32, 512>}, {pipeline_mode = #tpu.pipeline_mode<synchronous>, transform_indices = @transform_1, window_bounds = array<i64: 512, 128>}, {pipeline_mode = #tpu.pipeline_mode<synchronous>, transform_indices = @transform_2, window_bounds = array<i64: 1, 128>}, {pipeline_mode = #tpu.pipeline_mode<synchronous>, transform_indices = @transform_3, window_bounds = array<i64: 1, 128>}, {pipeline_mode = #tpu.pipeline_mode<synchronous>, transform_indices = @transform_4, window_bounds = array<i64: 1, 128>}, {transform_indices = @transform_5, window_bounds = array<i64: 32, 128>}]} {
    %c0 = arith.constant 0 : index
    %c0_0 = arith.constant 0 : index
    %0 = vector.load %arg1[%c0, %c0_0] : memref<32x512xbf16, #tpu.memory_space<vmem>>, vector<32x512xbf16>
    %c0_1 = arith.constant 0 : index
    %c0_2 = arith.constant 0 : index
    %1 = vector.load %arg2[%c0_1, %c0_2] : memref<512x128xbf16, #tpu.memory_space<vmem>>, vector<512x128xbf16>
    %cst = arith.constant dense<0.000000e+00> : vector<32x128xf32>
    %2 = tpu.matmul %0, %1, %cst {dimension_numbers = #tpu.dot_dimension_numbers<[1], [0], [0], [1], [0, 0, 1, 1], [], []>} : vector<32x512xbf16>, vector<512x128xbf16>, vector<32x128xf32> -> vector<32x128xf32>
    %c0_3 = arith.constant 0 : index
    %c0_4 = arith.constant 0 : index
    %3 = vector.load %arg3[%c0_3, %c0_4] : memref<1x128xf32, #tpu.memory_space<vmem>>, vector<1x128xf32>
    %4 = vector.broadcast %3 : vector<1x128xf32> to vector<32x128xf32>
    %5 = arith.addf %2, %4 : vector<32x128xf32>
    %cst_5 = arith.constant dense<0.000000e+00> : vector<128xf32>
    %6 = vector.multi_reduction <add>, %5, %cst_5 [0] : vector<32x128xf32> to vector<128xf32>
    %7 = vector.shape_cast %6 : vector<128xf32> to vector<1x128xf32>
    %cst_6 = arith.constant 3.125000e-02 : f32
    %8 = vector.broadcast %cst_6 : f32 to vector<1x128xf32>
    %9 = arith.mulf %7, %8 : vector<1x128xf32>
    %10 = arith.mulf %5, %5 : vector<32x128xf32>
    %cst_7 = arith.constant dense<0.000000e+00> : vector<128xf32>
    %11 = vector.multi_reduction <add>, %10, %cst_7 [0] : vector<32x128xf32> to vector<128xf32>
    %12 = vector.shape_cast %11 : vector<128xf32> to vector<1x128xf32>
    %cst_8 = arith.constant 3.125000e-02 : f32
    %13 = vector.broadcast %cst_8 : f32 to vector<1x128xf32>
    %14 = arith.mulf %12, %13 : vector<1x128xf32>
    %15 = arith.mulf %9, %9 : vector<1x128xf32>
    %16 = arith.subf %14, %15 : vector<1x128xf32>
    %cst_9 = arith.constant 9.99999974E-6 : f32
    %17 = vector.broadcast %cst_9 : f32 to vector<1x128xf32>
    %18 = arith.addf %16, %17 : vector<1x128xf32>
    %19 = math.rsqrt %18 : vector<1x128xf32>
    %c0_10 = arith.constant 0 : index
    %c0_11 = arith.constant 0 : index
    %20 = vector.load %arg4[%c0_10, %c0_11] : memref<1x128xf32, #tpu.memory_space<vmem>>, vector<1x128xf32>
    %21 = arith.mulf %19, %20 : vector<1x128xf32>
    %22 = vector.broadcast %9 : vector<1x128xf32> to vector<32x128xf32>
    %23 = arith.subf %5, %22 : vector<32x128xf32>
    %24 = vector.broadcast %21 : vector<1x128xf32> to vector<32x128xf32>
    %25 = arith.mulf %23, %24 : vector<32x128xf32>
    %c0_12 = arith.constant 0 : index
    %c0_13 = arith.constant 0 : index
    %26 = vector.load %arg5[%c0_12, %c0_13] : memref<1x128xf32, #tpu.memory_space<vmem>>, vector<1x128xf32>
    %27 = vector.broadcast %26 : vector<1x128xf32> to vector<32x128xf32>
    %28 = arith.addf %25, %27 : vector<32x128xf32>
    %29 = arith.truncf %28 : vector<32x128xf32> to vector<32x128xbf16>
    %c0_14 = arith.constant 0 : index
    %c0_15 = arith.constant 0 : index
    %30 = vector.load %arg6[%c0_14, %c0_15] : memref<32x128xbf16, #tpu.memory_space<vmem>>, vector<32x128xbf16>
    tpu.vector_store %arg6[%c0_14, %c0_15], %29 {strides = array<i32>} : memref<32x128xbf16, #tpu.memory_space<vmem>>, vector<32x128xbf16>,
    return
  }
  func.func @transform_0(%arg0: i32) -> (i32, i32) {
    %c0_i32 = arith.constant 0 : i32
    %c0_i32_0 = arith.constant 0 : i32
    return %arg0, %c0_i32 : i32, i32
  }
  func.func @transform_1(%arg0: i32) -> (i32, i32) {
    %c0_i32 = arith.constant 0 : i32
    %c0_i32_0 = arith.constant 0 : i32
    %c0_i32_1 = arith.constant 0 : i32
    return %c0_i32, %c0_i32_0 : i32, i32
  }
  func.func @transform_2(%arg0: i32) -> (i32, i32) {
    %c0_i32 = arith.constant 0 : i32
    %c0_i32_0 = arith.constant 0 : i32
    %c0_i32_1 = arith.constant 0 : i32
    return %c0_i32, %c0_i32_0 : i32, i32
  }
  func.func @transform_3(%arg0: i32) -> (i32, i32) {
    %c0_i32 = arith.constant 0 : i32
    %c0_i32_0 = arith.constant 0 : i32
    %c0_i32_1 = arith.constant 0 : i32
    return %c0_i32, %c0_i32_0 : i32, i32
  }
  func.func @transform_4(%arg0: i32) -> (i32, i32) {
    %c0_i32 = arith.constant 0 : i32
    %c0_i32_0 = arith.constant 0 : i32
    %c0_i32_1 = arith.constant 0 : i32
    return %c0_i32, %c0_i32_0 : i32, i32
  }
  func.func @transform_5(%arg0: i32) -> (i32, i32) {
    %c0_i32 = arith.constant 0 : i32
    %c0_i32_0 = arith.constant 0 : i32
    return %arg0, %c0_i32 : i32, i32
  }
}

module attributes {stable_mosaic.version = 11 : i64} {
  func.func @_mm_epilogue_kernel(%arg0: i32, %arg1: memref<128x896xbf16, #tpu.memory_space<vmem>>, %arg2: memref<896x128xbf16, #tpu.memory_space<vmem>>, %arg3: memref<1x128xf32, #tpu.memory_space<vmem>>, %arg4: memref<128x128xbf16, #tpu.memory_space<vmem>>) attributes {dimension_semantics = [#tpu.dimension_semantics<parallel>], iteration_bounds = array<i64: 1>, scalar_prefetch = 0 : i64, scratch_operands = 0 : i64, tpu.core_type = #tpu.core_type<tc>, window_params = [{transform_indices = @transform_0, window_bounds = array<i64: 128, 896>}, {pipeline_mode = #tpu.pipeline_mode<synchronous>, transform_indices = @transform_1, window_bounds = array<i64: 896, 128>}, {pipeline_mode = #tpu.pipeline_mode<synchronous>, transform_indices = @transform_2, window_bounds = array<i64: 1, 128>}, {transform_indices = @transform_3, window_bounds = array<i64: 128, 128>}]} {
    %c0 = arith.constant 0 : index
    %c0_0 = arith.constant 0 : index
    %0 = vector.load %arg1[%c0, %c0_0] : memref<128x896xbf16, #tpu.memory_space<vmem>>, vector<128x896xbf16>
    %c0_1 = arith.constant 0 : index
    %c0_2 = arith.constant 0 : index
    %1 = vector.load %arg2[%c0_1, %c0_2] : memref<896x128xbf16, #tpu.memory_space<vmem>>, vector<896x128xbf16>
    %cst = arith.constant dense<0.000000e+00> : vector<128x128xf32>
    %2 = tpu.matmul %0, %1, %cst {dimension_numbers = #tpu.dot_dimension_numbers<[1], [0], [0], [1], [0, 0, 1, 1], [], []>} : vector<128x896xbf16>, vector<896x128xbf16>, vector<128x128xf32> -> vector<128x128xf32>
    %c0_3 = arith.constant 0 : index
    %c0_4 = arith.constant 0 : index
    %3 = vector.load %arg3[%c0_3, %c0_4] : memref<1x128xf32, #tpu.memory_space<vmem>>, vector<1x128xf32>
    %4 = vector.broadcast %3 : vector<1x128xf32> to vector<128x128xf32>
    %5 = arith.addf %2, %4 : vector<128x128xf32>
    %cst_5 = arith.constant 0.000000e+00 : f32
    %6 = vector.broadcast %cst_5 : f32 to vector<128x128xf32>
    %7 = arith.maximumf %5, %6 : vector<128x128xf32>
    %8 = arith.truncf %7 : vector<128x128xf32> to vector<128x128xbf16>
    %c0_6 = arith.constant 0 : index
    %c0_7 = arith.constant 0 : index
    %9 = vector.load %arg4[%c0_6, %c0_7] : memref<128x128xbf16, #tpu.memory_space<vmem>>, vector<128x128xbf16>
    tpu.vector_store %arg4[%c0_6, %c0_7], %8 {strides = array<i32>} : memref<128x128xbf16, #tpu.memory_space<vmem>>, vector<128x128xbf16>,
    return
  }
  func.func @transform_0(%arg0: i32) -> (i32, i32) {
    %c0_i32 = arith.constant 0 : i32
    %c0_i32_0 = arith.constant 0 : i32
    return %arg0, %c0_i32 : i32, i32
  }
  func.func @transform_1(%arg0: i32) -> (i32, i32) {
    %c0_i32 = arith.constant 0 : i32
    %c0_i32_0 = arith.constant 0 : i32
    %c0_i32_1 = arith.constant 0 : i32
    return %c0_i32, %c0_i32_0 : i32, i32
  }
  func.func @transform_2(%arg0: i32) -> (i32, i32) {
    %c0_i32 = arith.constant 0 : i32
    %c0_i32_0 = arith.constant 0 : i32
    %c0_i32_1 = arith.constant 0 : i32
    return %c0_i32, %c0_i32_0 : i32, i32
  }
  func.func @transform_3(%arg0: i32) -> (i32, i32) {
    %c0_i32 = arith.constant 0 : i32
    %c0_i32_0 = arith.constant 0 : i32
    return %arg0, %c0_i32 : i32, i32
  }
}

module attributes {stable_mosaic.version = 11 : i64} {
  func.func @_mm_epilogue_kernel(%arg0: i32, %arg1: memref<128x256xbf16, #tpu.memory_space<vmem>>, %arg2: memref<256x128xbf16, #tpu.memory_space<vmem>>, %arg3: memref<1x128xf32, #tpu.memory_space<vmem>>, %arg4: memref<1x128xf32, #tpu.memory_space<vmem>>, %arg5: memref<1x128xf32, #tpu.memory_space<vmem>>, %arg6: memref<128x128xbf16, #tpu.memory_space<vmem>>) attributes {dimension_semantics = [#tpu.dimension_semantics<parallel>], iteration_bounds = array<i64: 1>, scalar_prefetch = 0 : i64, scratch_operands = 0 : i64, tpu.core_type = #tpu.core_type<tc>, window_params = [{transform_indices = @transform_0, window_bounds = array<i64: 128, 256>}, {pipeline_mode = #tpu.pipeline_mode<synchronous>, transform_indices = @transform_1, window_bounds = array<i64: 256, 128>}, {pipeline_mode = #tpu.pipeline_mode<synchronous>, transform_indices = @transform_2, window_bounds = array<i64: 1, 128>}, {pipeline_mode = #tpu.pipeline_mode<synchronous>, transform_indices = @transform_3, window_bounds = array<i64: 1, 128>}, {pipeline_mode = #tpu.pipeline_mode<synchronous>, transform_indices = @transform_4, window_bounds = array<i64: 1, 128>}, {transform_indices = @transform_5, window_bounds = array<i64: 128, 128>}]} {
    %c0 = arith.constant 0 : index
    %c0_0 = arith.constant 0 : index
    %0 = vector.load %arg1[%c0, %c0_0] : memref<128x256xbf16, #tpu.memory_space<vmem>>, vector<128x256xbf16>
    %c0_1 = arith.constant 0 : index
    %c0_2 = arith.constant 0 : index
    %1 = vector.load %arg2[%c0_1, %c0_2] : memref<256x128xbf16, #tpu.memory_space<vmem>>, vector<256x128xbf16>
    %cst = arith.constant dense<0.000000e+00> : vector<128x128xf32>
    %2 = tpu.matmul %0, %1, %cst {dimension_numbers = #tpu.dot_dimension_numbers<[1], [0], [0], [1], [0, 0, 1, 1], [], []>} : vector<128x256xbf16>, vector<256x128xbf16>, vector<128x128xf32> -> vector<128x128xf32>
    %c0_3 = arith.constant 0 : index
    %c0_4 = arith.constant 0 : index
    %3 = vector.load %arg3[%c0_3, %c0_4] : memref<1x128xf32, #tpu.memory_space<vmem>>, vector<1x128xf32>
    %4 = vector.broadcast %3 : vector<1x128xf32> to vector<128x128xf32>
    %5 = arith.addf %2, %4 : vector<128x128xf32>
    %cst_5 = arith.constant dense<0.000000e+00> : vector<128xf32>
    %6 = vector.multi_reduction <add>, %5, %cst_5 [0] : vector<128x128xf32> to vector<128xf32>
    %7 = vector.shape_cast %6 : vector<128xf32> to vector<1x128xf32>
    %cst_6 = arith.constant 7.812500e-03 : f32
    %8 = vector.broadcast %cst_6 : f32 to vector<1x128xf32>
    %9 = arith.mulf %7, %8 : vector<1x128xf32>
    %10 = arith.mulf %5, %5 : vector<128x128xf32>
    %cst_7 = arith.constant dense<0.000000e+00> : vector<128xf32>
    %11 = vector.multi_reduction <add>, %10, %cst_7 [0] : vector<128x128xf32> to vector<128xf32>
    %12 = vector.shape_cast %11 : vector<128xf32> to vector<1x128xf32>
    %cst_8 = arith.constant 7.812500e-03 : f32
    %13 = vector.broadcast %cst_8 : f32 to vector<1x128xf32>
    %14 = arith.mulf %12, %13 : vector<1x128xf32>
    %15 = arith.mulf %9, %9 : vector<1x128xf32>
    %16 = arith.subf %14, %15 : vector<1x128xf32>
    %cst_9 = arith.constant 9.99999974E-6 : f32
    %17 = vector.broadcast %cst_9 : f32 to vector<1x128xf32>
    %18 = arith.addf %16, %17 : vector<1x128xf32>
    %19 = math.rsqrt %18 : vector<1x128xf32>
    %c0_10 = arith.constant 0 : index
    %c0_11 = arith.constant 0 : index
    %20 = vector.load %arg4[%c0_10, %c0_11] : memref<1x128xf32, #tpu.memory_space<vmem>>, vector<1x128xf32>
    %21 = arith.mulf %19, %20 : vector<1x128xf32>
    %22 = vector.broadcast %9 : vector<1x128xf32> to vector<128x128xf32>
    %23 = arith.subf %5, %22 : vector<128x128xf32>
    %24 = vector.broadcast %21 : vector<1x128xf32> to vector<128x128xf32>
    %25 = arith.mulf %23, %24 : vector<128x128xf32>
    %c0_12 = arith.constant 0 : index
    %c0_13 = arith.constant 0 : index
    %26 = vector.load %arg5[%c0_12, %c0_13] : memref<1x128xf32, #tpu.memory_space<vmem>>, vector<1x128xf32>
    %27 = vector.broadcast %26 : vector<1x128xf32> to vector<128x128xf32>
    %28 = arith.addf %25, %27 : vector<128x128xf32>
    %29 = arith.truncf %28 : vector<128x128xf32> to vector<128x128xbf16>
    %c0_14 = arith.constant 0 : index
    %c0_15 = arith.constant 0 : index
    %30 = vector.load %arg6[%c0_14, %c0_15] : memref<128x128xbf16, #tpu.memory_space<vmem>>, vector<128x128xbf16>
    tpu.vector_store %arg6[%c0_14, %c0_15], %29 {strides = array<i32>} : memref<128x128xbf16, #tpu.memory_space<vmem>>, vector<128x128xbf16>,
    return
  }
  func.func @transform_0(%arg0: i32) -> (i32, i32) {
    %c0_i32 = arith.constant 0 : i32
    %c0_i32_0 = arith.constant 0 : i32
    return %arg0, %c0_i32 : i32, i32
  }
  func.func @transform_1(%arg0: i32) -> (i32, i32) {
    %c0_i32 = arith.constant 0 : i32
    %c0_i32_0 = arith.constant 0 : i32
    %c0_i32_1 = arith.constant 0 : i32
    return %c0_i32, %c0_i32_0 : i32, i32
  }
  func.func @transform_2(%arg0: i32) -> (i32, i32) {
    %c0_i32 = arith.constant 0 : i32
    %c0_i32_0 = arith.constant 0 : i32
    %c0_i32_1 = arith.constant 0 : i32
    return %c0_i32, %c0_i32_0 : i32, i32
  }
  func.func @transform_3(%arg0: i32) -> (i32, i32) {
    %c0_i32 = arith.constant 0 : i32
    %c0_i32_0 = arith.constant 0 : i32
    %c0_i32_1 = arith.constant 0 : i32
    return %c0_i32, %c0_i32_0 : i32, i32
  }
  func.func @transform_4(%arg0: i32) -> (i32, i32) {
    %c0_i32 = arith.constant 0 : i32
    %c0_i32_0 = arith.constant 0 : i32
    %c0_i32_1 = arith.constant 0 : i32
    return %c0_i32, %c0_i32_0 : i32, i32
  }
  func.func @transform_5(%arg0: i32) -> (i32, i32) {
    %c0_i32 = arith.constant 0 : i32
    %c0_i32_0 = arith.constant 0 : i32
    return %arg0, %c0_i32 : i32, i32
  }
}

module attributes {stable_mosaic.version = 11 : i64} {
  func.func @_mm_epilogue_kernel(%arg0: i32, %arg1: memref<256x512xbf16, #tpu.memory_space<vmem>>, %arg2: memref<512x128xbf16, #tpu.memory_space<vmem>>, %arg3: memref<1x128xf32, #tpu.memory_space<vmem>>, %arg4: memref<256x128xbf16, #tpu.memory_space<vmem>>) attributes {dimension_semantics = [#tpu.dimension_semantics<parallel>], iteration_bounds = array<i64: 2>, scalar_prefetch = 0 : i64, scratch_operands = 0 : i64, tpu.core_type = #tpu.core_type<tc>, window_params = [{transform_indices = @transform_0, window_bounds = array<i64: 256, 512>}, {pipeline_mode = #tpu.pipeline_mode<synchronous>, transform_indices = @transform_1, window_bounds = array<i64: 512, 128>}, {pipeline_mode = #tpu.pipeline_mode<synchronous>, transform_indices = @transform_2, window_bounds = array<i64: 1, 128>}, {transform_indices = @transform_3, window_bounds = array<i64: 256, 128>}]} {
    %c0 = arith.constant 0 : index
    %c0_0 = arith.constant 0 : index
    %0 = vector.load %arg1[%c0, %c0_0] : memref<256x512xbf16, #tpu.memory_space<vmem>>, vector<256x512xbf16>
    %c0_1 = arith.constant 0 : index
    %c0_2 = arith.constant 0 : index
    %1 = vector.load %arg2[%c0_1, %c0_2] : memref<512x128xbf16, #tpu.memory_space<vmem>>, vector<512x128xbf16>
    %cst = arith.constant dense<0.000000e+00> : vector<256x128xf32>
    %2 = tpu.matmul %0, %1, %cst {dimension_numbers = #tpu.dot_dimension_numbers<[1], [0], [0], [1], [0, 0, 1, 1], [], []>} : vector<256x512xbf16>, vector<512x128xbf16>, vector<256x128xf32> -> vector<256x128xf32>
    %c0_3 = arith.constant 0 : index
    %c0_4 = arith.constant 0 : index
    %3 = vector.load %arg3[%c0_3, %c0_4] : memref<1x128xf32, #tpu.memory_space<vmem>>, vector<1x128xf32>
    %4 = vector.broadcast %3 : vector<1x128xf32> to vector<256x128xf32>
    %5 = arith.addf %2, %4 : vector<256x128xf32>
    %cst_5 = arith.constant 0.000000e+00 : f32
    %6 = vector.broadcast %cst_5 : f32 to vector<256x128xf32>
    %7 = arith.maximumf %5, %6 : vector<256x128xf32>
    %8 = arith.truncf %7 : vector<256x128xf32> to vector<256x128xbf16>
    %c0_6 = arith.constant 0 : index
    %c0_7 = arith.constant 0 : index
    %9 = vector.load %arg4[%c0_6, %c0_7] : memref<256x128xbf16, #tpu.memory_space<vmem>>, vector<256x128xbf16>
    tpu.vector_store %arg4[%c0_6, %c0_7], %8 {strides = array<i32>} : memref<256x128xbf16, #tpu.memory_space<vmem>>, vector<256x128xbf16>,
    return
  }
  func.func @transform_0(%arg0: i32) -> (i32, i32) {
    %c0_i32 = arith.constant 0 : i32
    %c0_i32_0 = arith.constant 0 : i32
    return %arg0, %c0_i32 : i32, i32
  }
  func.func @transform_1(%arg0: i32) -> (i32, i32) {
    %c0_i32 = arith.constant 0 : i32
    %c0_i32_0 = arith.constant 0 : i32
    %c0_i32_1 = arith.constant 0 : i32
    return %c0_i32, %c0_i32_0 : i32, i32
  }
  func.func @transform_2(%arg0: i32) -> (i32, i32) {
    %c0_i32 = arith.constant 0 : i32
    %c0_i32_0 = arith.constant 0 : i32
    %c0_i32_1 = arith.constant 0 : i32
    return %c0_i32, %c0_i32_0 : i32, i32
  }
  func.func @transform_3(%arg0: i32) -> (i32, i32) {
    %c0_i32 = arith.constant 0 : i32
    %c0_i32_0 = arith.constant 0 : i32
    return %arg0, %c0_i32 : i32, i32
  }
}

module attributes {stable_mosaic.version = 11 : i64} {
  func.func @_mm_epilogue_kernel(%arg0: i32, %arg1: memref<256x256xbf16, #tpu.memory_space<vmem>>, %arg2: memref<256x128xbf16, #tpu.memory_space<vmem>>, %arg3: memref<1x128xf32, #tpu.memory_space<vmem>>, %arg4: memref<256x128xf32, #tpu.memory_space<vmem>>) attributes {dimension_semantics = [#tpu.dimension_semantics<parallel>], iteration_bounds = array<i64: 2>, scalar_prefetch = 0 : i64, scratch_operands = 0 : i64, tpu.core_type = #tpu.core_type<tc>, window_params = [{transform_indices = @transform_0, window_bounds = array<i64: 256, 256>}, {pipeline_mode = #tpu.pipeline_mode<synchronous>, transform_indices = @transform_1, window_bounds = array<i64: 256, 128>}, {pipeline_mode = #tpu.pipeline_mode<synchronous>, transform_indices = @transform_2, window_bounds = array<i64: 1, 128>}, {transform_indices = @transform_3, window_bounds = array<i64: 256, 128>}]} {
    %c0 = arith.constant 0 : index
    %c0_0 = arith.constant 0 : index
    %0 = vector.load %arg1[%c0, %c0_0] : memref<256x256xbf16, #tpu.memory_space<vmem>>, vector<256x256xbf16>
    %c0_1 = arith.constant 0 : index
    %c0_2 = arith.constant 0 : index
    %1 = vector.load %arg2[%c0_1, %c0_2] : memref<256x128xbf16, #tpu.memory_space<vmem>>, vector<256x128xbf16>
    %cst = arith.constant dense<0.000000e+00> : vector<256x128xf32>
    %2 = tpu.matmul %0, %1, %cst {dimension_numbers = #tpu.dot_dimension_numbers<[1], [0], [0], [1], [0, 0, 1, 1], [], []>} : vector<256x256xbf16>, vector<256x128xbf16>, vector<256x128xf32> -> vector<256x128xf32>
    %c0_3 = arith.constant 0 : index
    %c0_4 = arith.constant 0 : index
    %3 = vector.load %arg3[%c0_3, %c0_4] : memref<1x128xf32, #tpu.memory_space<vmem>>, vector<1x128xf32>
    %4 = vector.broadcast %3 : vector<1x128xf32> to vector<256x128xf32>
    %5 = arith.addf %2, %4 : vector<256x128xf32>
    %c0_5 = arith.constant 0 : index
    %c0_6 = arith.constant 0 : index
    %6 = vector.load %arg4[%c0_5, %c0_6] : memref<256x128xf32, #tpu.memory_space<vmem>>, vector<256x128xf32>
    tpu.vector_store %arg4[%c0_5, %c0_6], %5 {strides = array<i32>} : memref<256x128xf32, #tpu.memory_space<vmem>>, vector<256x128xf32>,
    return
  }
  func.func @transform_0(%arg0: i32) -> (i32, i32) {
    %c0_i32 = arith.constant 0 : i32
    %c0_i32_0 = arith.constant 0 : i32
    return %arg0, %c0_i32 : i32, i32
  }
  func.func @transform_1(%arg0: i32) -> (i32, i32) {
    %c0_i32 = arith.constant 0 : i32
    %c0_i32_0 = arith.constant 0 : i32
    %c0_i32_1 = arith.constant 0 : i32
    return %c0_i32, %c0_i32_0 : i32, i32
  }
  func.func @transform_2(%arg0: i32) -> (i32, i32) {
    %c0_i32 = arith.constant 0 : i32
    %c0_i32_0 = arith.constant 0 : i32
    %c0_i32_1 = arith.constant 0 : i32
    return %c0_i32, %c0_i32_0 : i32, i32
  }
  func.func @transform_3(%arg0: i32) -> (i32, i32) {
    %c0_i32 = arith.constant 0 : i32
    %c0_i32_0 = arith.constant 0 : i32
    return %arg0, %c0_i32 : i32, i32
  }
}

</mosaic_0001>

<llo_original>
// kernel: network_forward.16
$region0: #{network_forward.16}
  #allocation0 [shape = 'u32[]', space=smem, size = 0x4, offset = 0x4, fixed_abs, tag = 'smem constant byte address 0x4 - core index']
  #allocation1 [shape = 'u32[144,128]{1,0:T(1,128)}', space=vmem, size = 0x12000, scoped, tag = 'internal scratch']
  %s0 = inlined_call_operand.vmem [shape: bf16[512,128], index: 0, kind: input, shape index: {}]
  %s1 = inlined_call_operand.vmem [shape: bf16[128,128], index: 1, kind: input, shape index: {}]
  %s2 = inlined_call_operand.vmem [shape: f32[1,128], index: 2, kind: input, shape index: {}]
  %s3 = inlined_call_operand.vmem [shape: bf16[512,128], index: 3, kind: output, shape index: {}]
  %s4 = sld [smem:[#allocation0]]
  $region45: #{network_forward.16} parent=0
    _
  %s6 = ssub.s32 1, %s4
  %s7 = scalar_select 0, %s6, %s4
  loop: start=0, step=1, limit=4
  $region2: #{network_forward.16} parent=0 // loop_pre_header
    _
  $region3: #{network_forward.16} parent=0 // loop_header
    %s9 = sphi 0, %s13
    %p10 = scmp.ge.s32.totalorder %s9, 4
    %s19 = sphi 0, %s21
    %s22 = sphi 0, %s19
    %s23 = sphi 0, %s22
    %s39 = sphi 0, %s23
    %s43 = sphi 0, %s43
    %s45 = sphi 0, %s43
    %s46 = sphi 0, %s45
    %s60 = sphi 0, %s46
    %s64 = sphi 0, %s64
    %s66 = sphi 0, %s64
    %s67 = sphi 0, %s66
    %s81 = sphi 0, %s67
    %s87 = sphi 0, %s89
    %s90 = sphi 0, %s87
    %s91 = sphi 0, %s90
    %s107 = sphi 0, %s91
  $region4: #{network_forward.16} parent=0 // loop_header_branch
    %12 = sbr.rel (%p10) target = $region8
  $region5: #{network_forward.16} parent=0 // loop_body
    %s14 = ssub.s32 %s9, 1
    %s15 = ssub.s32 %s9, 2
    %s16 = sadd.s32 %s9, 1
    %s17 = ssub.s32 %s9, %s16
    %p18 = scmp.eq.s32.totalorder %s17, 0
    %s20 = sadd.s32 %s19, 1
    %s21 = scalar_select %p18, %s19, %s20
    %p24 = pneg %p18
    %p25 = scmp.eq.s32.totalorder %s9, 1
    %p26 = por %p24, %p25
    %p27 = scmp.ne.s32.totalorder %s19, %s22
    %p28 = scmp.eq.s32.totalorder %s9, 0
    %p29 = por %p27, %p28
    %p30 = scmp.ne.s32.totalorder %s19, %s22
    %p31 = scmp.eq.s32.totalorder %s14, 1
    %p32 = por %p30, %p31
    %p33 = scmp.ne.s32.totalorder %s22, %s23
    %p34 = scmp.eq.s32.totalorder %s14, 0
    %p35 = por %p33, %p34
    %p36 = scmp.ne.s32.totalorder %s22, %s23
    %p37 = scmp.eq.s32.totalorder %s15, 1
    %p38 = por %p36, %p37
    %p40 = scmp.ne.s32.totalorder %s23, %s39
    %p41 = scmp.eq.s32.totalorder %s15, 0
    %p42 = por %p40, %p41
    %s44 = sadd.s32 %s43, 1
    %p47 = scmp.eq.s32.totalorder %s9, 1
    %p48 = scmp.ne.s32.totalorder %s43, %s45
    %p49 = scmp.eq.s32.totalorder %s9, 0
    %p50 = por %p48, %p49
    %p51 = scmp.ne.s32.totalorder %s43, %s45
    %p52 = scmp.eq.s32.totalorder %s14, 1
    %p53 = por %p51, %p52
    %p54 = scmp.ne.s32.totalorder %s45, %s46
    %p55 = scmp.eq.s32.totalorder %s14, 0
    %p56 = por %p54, %p55
    %p57 = scmp.ne.s32.totalorder %s45, %s46
    %p58 = scmp.eq.s32.totalorder %s15, 1
    %p59 = por %p57, %p58
    %p61 = scmp.ne.s32.totalorder %s46, %s60
    %p62 = scmp.eq.s32.totalorder %s15, 0
    %p63 = por %p61, %p62
    %s65 = sadd.s32 %s64, 1
    %p68 = scmp.eq.s32.totalorder %s9, 1
    %p69 = scmp.ne.s32.totalorder %s64, %s66
    %p70 = scmp.eq.s32.totalorder %s9, 0
    %p71 = por %p69, %p70
    %p72 = scmp.ne.s32.totalorder %s64, %s66
    %p73 = scmp.eq.s32.totalorder %s14, 1
    %p74 = por %p72, %p73
    %p75 = scmp.ne.s32.totalorder %s66, %s67
    %p76 = scmp.eq.s32.totalorder %s14, 0
    %p77 = por %p75, %p76
    %p78 = scmp.ne.s32.totalorder %s66, %s67
    %p79 = scmp.eq.s32.totalorder %s15, 1
    %p80 = por %p78, %p79
    %p82 = scmp.ne.s32.totalorder %s67, %s81
    %p83 = scmp.eq.s32.totalorder %s15, 0
    %p84 = por %p82, %p83
    %s85 = ssub.s32 %s9, %s16
    %p86 = scmp.eq.s32.totalorder %s85, 0
    %s88 = sadd.s32 %s87, 1
    %s89 = scalar_select %p86, %s87, %s88
    %p92 = pneg %p86
    %p93 = scmp.eq.s32.totalorder %s9, 1
    %p94 = por %p92, %p93
    %p95 = scmp.ne.s32.totalorder %s87, %s90
    %p96 = scmp.eq.s32.totalorder %s9, 0
    %p97 = por %p95, %p96
    %p98 = scmp.ne.s32.totalorder %s87, %s90
    %p99 = scmp.eq.s32.totalorder %s14, 1
    %p100 = por %p98, %p99
    %p101 = scmp.ne.s32.totalorder %s90, %s91
    %p102 = scmp.eq.s32.totalorder %s14, 0
    %p103 = por %p101, %p102
    %p104 = scmp.ne.s32.totalorder %s90, %s91
    %p105 = scmp.eq.s32.totalorder %s15, 1
    %p106 = por %p104, %p105
    %p108 = scmp.ne.s32.totalorder %s91, %s107
    %p109 = scmp.eq.s32.totalorder %s15, 0
    %p110 = por %p108, %p109
    %p111 = scmp.le.s32.totalorder 1, %s9
    %p112 = scmp.lt.s32.totalorder %s9, 3
    %p113 = pnand %p111, %p112
    %p114 = pneg %p113
    // Predicated region
    $region9: #{network_forward.16} parent=5 // pred_check
      _
    $region10: #{network_forward.16} parent=5 // pred_check_branch
      %116 = sbr.rel (%p113) target = $region12
    $region11: #{network_forward.16} parent=5 // pred_region
      %s117 = ssub.s32 %s9, 1
      // Predicated region
      $region13: #{network_forward.16} parent=11 // pred_check
        %p118 = pneg %p56
      $region14: #{network_forward.16} parent=11 // pred_check_branch
        %120 = sbr.rel (%p118) target = $region16
      $region15: #{network_forward.16} parent=11 // pred_region
        _
      $region16: #{network_forward.16} parent=11 // pred_fallthru
        _
      // Predicated region
      $region17: #{network_forward.16} parent=11 // pred_check
        %p121 = pneg %p77
      $region18: #{network_forward.16} parent=11 // pred_check_branch
        %123 = sbr.rel (%p121) target = $region20
      $region19: #{network_forward.16} parent=11 // pred_region
        _
      $region20: #{network_forward.16} parent=11 // pred_fallthru
        _
    $region12: #{network_forward.16} parent=5 // pred_fallthru
      _
    %p124 = scmp.lt.s32.totalorder %s9, 2
    // Predicated region
    $region21: #{network_forward.16} parent=5 // pred_check
      %p125 = pneg %p124
    $region22: #{network_forward.16} parent=5 // pred_check_branch
      %127 = sbr.rel (%p125) target = $region24
    $region23: #{network_forward.16} parent=5 // pred_region
      // Predicated region
      $region25: #{network_forward.16} parent=23 // pred_check
        %p128 = pneg %p29
      $region26: #{network_forward.16} parent=23 // pred_check_branch
        %130 = sbr.rel (%p128) target = $region28
      $region27: #{network_forward.16} parent=23 // pred_region
        %s131 = smul.u32 32, %s9
        %p132 = scmp.lt.s32.totalorder %s131, 63
        %s133 = scalar_select %p132, %s131, 63
        %s134 = smul.addr %s133, 4
        %s135 = scalar_lea.vmem %s0, %s134
        %s136 = smul.u32 32, %s9
      $region28: #{network_forward.16} parent=23 // pred_fallthru
        _
    $region24: #{network_forward.16} parent=5 // pred_fallthru
      _
    %p137 = scmp.le.s32.totalorder 1, %s9
    %p138 = scmp.lt.s32.totalorder %s9, 3
    %p139 = pnand %p137, %p138
    %p140 = pneg %p139
    // Predicated region
    $region29: #{network_forward.16} parent=5 // pred_check
      _
    $region30: #{network_forward.16} parent=5 // pred_check_branch
      %142 = sbr.rel (%p139) target = $region32
    $region31: #{network_forward.16} parent=5 // pred_region
      %s143 = ssub.s32 %s9, 1
      %s144 = smul.u32 32, %s14
      %p145 = scmp.lt.s32.totalorder %s144, 63
      %s146 = scalar_select %p145, %s144, 63
      %s147 = smul.addr %s146, 4
      %s148 = scalar_lea.vmem %s0, %s147
      %p149 = pneg %p35
      %p150 = pneg %p32
      %p151 = pneg %p56
      %p152 = pneg %p53
      %p153 = pneg %p77
      %p154 = pneg %p74
      %p155 = pneg %p103
      %p156 = pneg %p100
      %s157 = smul.u32 32, %s14
      %p158 = scmp.lt.s32.totalorder %s157, 63
      %s159 = scalar_select %p158, %s157, 63
      %s160 = smul.addr %s159, 4
      %s161 = scalar_lea.vmem %s3, %s160
      %s162 = smul.u32 32, %s14
      %p163 = scmp.lt.s32.totalorder %s162, 63
      %s164 = scalar_select %p163, %s162, 63
      %s165 = smul.addr %s164, 4
      %s166 = scalar_lea.vmem %s0, %s165
      %s167 = smul.u32 32, %s14
      %s168 = smul.u32 32, %s14
      %p169 = scmp.lt.s32.totalorder %s168, 63
      %s170 = scalar_select %p169, %s168, 63
      %s171 = smul.addr %s170, 4
      %s172 = scalar_lea.vmem %s3, %s171
      %s173 = smul.u32 32, %s14
      %v175 = vld [vmem:[%s166] sm:$0xf]
      %v176 = vld [vmem:[%s166 + $0x4] sm:$0xf]
      %v177 = vld [vmem:[%s166 + $0x8] sm:$0xf]
      %v178 = vld [vmem:[%s166 + $0xc] sm:$0xf]
      %v179 = vld [vmem:[%s166 + $0x10] sm:$0xf]
      %v180 = vld [vmem:[%s166 + $0x14] sm:$0xf]
      %v181 = vld [vmem:[%s166 + $0x18] sm:$0xf]
      %v182 = vld [vmem:[%s166 + $0x1c] sm:$0xf]
      %v183 = vld [vmem:[%s166 + $0x20] sm:$0xf]
      %v184 = vld [vmem:[%s166 + $0x24] sm:$0xf]
      %v185 = vld [vmem:[%s166 + $0x28] sm:$0xf]
      %v186 = vld [vmem:[%s166 + $0x2c] sm:$0xf]
      %v187 = vld [vmem:[%s166 + $0x30] sm:$0xf]
      %v188 = vld [vmem:[%s166 + $0x34] sm:$0xf]
      %v189 = vld [vmem:[%s166 + $0x38] sm:$0xf]
      %v190 = vld [vmem:[%s166 + $0x3c] sm:$0xf]
      %v191 = vld [vmem:[%s166 + $0x40] sm:$0xf]
      %v192 = vld [vmem:[%s166 + $0x44] sm:$0xf]
      %v193 = vld [vmem:[%s166 + $0x48] sm:$0xf]
      %v194 = vld [vmem:[%s166 + $0x4c] sm:$0xf]
      %v195 = vld [vmem:[%s166 + $0x50] sm:$0xf]
      %v196 = vld [vmem:[%s166 + $0x54] sm:$0xf]
      %v197 = vld [vmem:[%s166 + $0x58] sm:$0xf]
      %v198 = vld [vmem:[%s166 + $0x5c] sm:$0xf]
      %v199 = vld [vmem:[%s166 + $0x60] sm:$0xf]
      %v200 = vld [vmem:[%s166 + $0x64] sm:$0xf]
      %v201 = vld [vmem:[%s166 + $0x68] sm:$0xf]
      %v202 = vld [vmem:[%s166 + $0x6c] sm:$0xf]
      %v203 = vld [vmem:[%s166 + $0x70] sm:$0xf]
      %v204 = vld [vmem:[%s166 + $0x74] sm:$0xf]
      %v205 = vld [vmem:[%s166 + $0x78] sm:$0xf]
      %v206 = vld [vmem:[%s166 + $0x7c] sm:$0xf]
      %v207 = vld [vmem:[%s1] sm:$0xf]
      %v208 = vld [vmem:[%s1 + $0x4] sm:$0xf]
      %v209 = vld [vmem:[%s1 + $0x8] sm:$0xf]
      %v210 = vld [vmem:[%s1 + $0xc] sm:$0xf]
      %v211 = vld [vmem:[%s1 + $0x10] sm:$0xf]
      %v212 = vld [vmem:[%s1 + $0x14] sm:$0xf]
      %v213 = vld [vmem:[%s1 + $0x18] sm:$0xf]
      %v214 = vld [vmem:[%s1 + $0x1c] sm:$0xf]
      %v215 = vld [vmem:[%s1 + $0x20] sm:$0xf]
      %v216 = vld [vmem:[%s1 + $0x24] sm:$0xf]
      %v217 = vld [vmem:[%s1 + $0x28] sm:$0xf]
      %v218 = vld [vmem:[%s1 + $0x2c] sm:$0xf]
      %v219 = vld [vmem:[%s1 + $0x30] sm:$0xf]
      %v220 = vld [vmem:[%s1 + $0x34] sm:$0xf]
      %v221 = vld [vmem:[%s1 + $0x38] sm:$0xf]
      %v222 = vld [vmem:[%s1 + $0x3c] sm:$0xf]
      %v223 = vld [vmem:[%s2] sm:$0x1]
      %v225 = vlaneseq
      %v226 = vshrl.u32 %v225, 7
      %v227 = vsub.s32 0, %v226
      %v228 = vrot.slane %v223, %v227
      %v262 = vunpack.c.l.b16 %v175
      %v263 = vunpack.c.l.b16 %v176
      %v264 = vunpack.c.l.b16 %v177
      %v265 = vunpack.c.l.b16 %v178
      %v266 = vunpack.c.l.b16 %v179
      %v267 = vunpack.c.l.b16 %v180
      %v268 = vunpack.c.l.b16 %v181
      %v269 = vunpack.c.l.b16 %v182
      %v270 = vunpack.c.l.b16 %v183
      %v271 = vunpack.c.l.b16 %v184
      %v272 = vunpack.c.l.b16 %v185
      %v273 = vunpack.c.l.b16 %v186
      %v274 = vunpack.c.l.b16 %v187
      %v275 = vunpack.c.l.b16 %v188
      %v276 = vunpack.c.l.b16 %v189
      %v277 = vunpack.c.l.b16 %v190
      %v278 = vunpack.c.l.b16 %v191
      %v279 = vunpack.c.l.b16 %v192
      %v280 = vunpack.c.l.b16 %v193
      %v281 = vunpack.c.l.b16 %v194
      %v282 = vunpack.c.l.b16 %v195
      %v283 = vunpack.c.l.b16 %v196
      %v284 = vunpack.c.l.b16 %v197
      %v285 = vunpack.c.l.b16 %v198
      %v286 = vunpack.c.l.b16 %v199
      %v287 = vunpack.c.l.b16 %v200
      %v288 = vunpack.c.l.b16 %v201
      %v289 = vunpack.c.l.b16 %v202
      %v290 = vunpack.c.l.b16 %v203
      %v291 = vunpack.c.l.b16 %v204
      %v292 = vunpack.c.l.b16 %v205
      %v293 = vunpack.c.l.b16 %v206
      %v294 = vpack.c.b16 %v263, %v262
      %v295 = vpack.c.b16 %v265, %v264
      %v296 = vpack.c.b16 %v267, %v266
      %v297 = vpack.c.b16 %v269, %v268
      %v298 = vpack.c.b16 %v271, %v270
      %v299 = vpack.c.b16 %v273, %v272
      %v300 = vpack.c.b16 %v275, %v274
      %v301 = vpack.c.b16 %v277, %v276
      %v302 = vpack.c.b16 %v279, %v278
      %v303 = vpack.c.b16 %v281, %v280
      %v304 = vpack.c.b16 %v283, %v282
      %v305 = vpack.c.b16 %v285, %v284
      %v306 = vpack.c.b16 %v287, %v286
      %v307 = vpack.c.b16 %v289, %v288
      %v308 = vpack.c.b16 %v291, %v290
      %v309 = vpack.c.b16 %v293, %v292
      %v342 = vunpack.c.l.b16 %v207
      %v343 = vunpack.c.l.b16 %v208
      %v344 = vunpack.c.l.b16 %v209
      %v345 = vunpack.c.l.b16 %v210
      %v346 = vunpack.c.l.b16 %v211
      %v347 = vunpack.c.l.b16 %v212
      %v348 = vunpack.c.l.b16 %v213
      %v349 = vunpack.c.l.b16 %v214
      %v350 = vunpack.c.l.b16 %v215
      %v351 = vunpack.c.l.b16 %v216
      %v352 = vunpack.c.l.b16 %v217
      %v353 = vunpack.c.l.b16 %v218
      %v354 = vunpack.c.l.b16 %v219
      %v355 = vunpack.c.l.b16 %v220
      %v356 = vunpack.c.l.b16 %v221
      %v357 = vunpack.c.l.b16 %v222
      %v358 = vpack.c.b16 %v343, %v342
      %v359 = vpack.c.b16 %v345, %v344
      %v360 = vpack.c.b16 %v347, %v346
      %v361 = vpack.c.b16 %v349, %v348
      %v362 = vpack.c.b16 %v351, %v350
      %v363 = vpack.c.b16 %v353, %v352
      %v364 = vpack.c.b16 %v355, %v354
      %v365 = vpack.c.b16 %v357, %v356
      %374 = vmatprep.subr.bf16.mxu0 0
      %375 = vmatpush1.bf16.msra.mxu0 %v358
      %376 = vmatprep.subr.bf16.mxu0 0
      %377 = vmatpush1.bf16.msra.mxu0 %v359
      %378 = vmatprep.subr.bf16.mxu0 0
      %379 = vmatpush1.bf16.msra.mxu0 %v360
      %380 = vmatprep.subr.bf16.mxu0 0
      %381 = vmatpush1.bf16.msra.mxu0 %v361
      %382 = vmatprep.subr.bf16.mxu0 0
      %383 = vmatpush1.bf16.msra.mxu0 %v362
      %384 = vmatprep.subr.bf16.mxu0 0
      %385 = vmatpush1.bf16.msra.mxu0 %v363
      %386 = vmatprep.subr.bf16.mxu0 0
      %387 = vmatpush1.bf16.msra.mxu0 %v364
      %388 = vmatprep.subr.bf16.mxu0 0
      %389 = vmatpush1.bf16.msra.mxu0 %v365
      %390 = vmatprep.subr.bf16.mxu0 0
      %391 = vmatpush1.bf16.msra.mxu0 0
      %392 = vmatprep.subr.bf16.mxu0 0
      %393 = vmatpush1.bf16.msra.mxu0 0
      %394 = vmatprep.subr.bf16.mxu0 0
      %395 = vmatpush1.bf16.msra.mxu0 0
      %396 = vmatprep.subr.bf16.mxu0 0
      %397 = vmatpush1.bf16.msra.mxu0 0
      %398 = vmatprep.subr.bf16.mxu0 0
      %399 = vmatpush1.bf16.msra.mxu0 0
      %400 = vmatprep.subr.bf16.mxu0 0
      %401 = vmatpush1.bf16.msra.mxu0 0
      %402 = vmatprep.subr.bf16.mxu0 0
      %403 = vmatpush1.bf16.msra.mxu0 0
      %404 = vmatprep.subr.bf16.mxu0 0
      %405 = vmatpush1.bf16.msra.mxu0 0
      %406 = vmatprep.mubr.bf16.mxu0 0
      %407 = vmatmul.mubr.bf16.gmra.mrb[0].mxu0 %v294
      %v408 = vpop.f32.mrb[0].mxu0
      %v409 = vadd.f32 %v228, %v408
      %v410 = vpop.f32.mrb[0].mxu0
      %v411 = vpop.f32.mrb[0].mxu0
      %v412 = vadd.f32 %v228, %v411
      %v413 = vpop.f32.mrb[0].mxu0
      %414 = vmatprep.mubr.bf16.mxu0 0
      %415 = vmatmul.mubr.bf16.gmra.mrb[0].mxu0 %v295
      %v416 = vpop.f32.mrb[0].mxu0
      %v417 = vadd.f32 %v228, %v416
      %v418 = vpop.f32.mrb[0].mxu0
      %v419 = vpop.f32.mrb[0].mxu0
      %v420 = vadd.f32 %v228, %v419
      %v421 = vpop.f32.mrb[0].mxu0
      %422 = vmatprep.mubr.bf16.mxu0 0
      %423 = vmatmul.mubr.bf16.gmra.mrb[0].mxu0 %v296
      %v424 = vpop.f32.mrb[0].mxu0
      %v425 = vadd.f32 %v228, %v424
      %v426 = vpop.f32.mrb[0].mxu0
      %v427 = vpop.f32.mrb[0].mxu0
      %v428 = vadd.f32 %v228, %v427
      %v429 = vpop.f32.mrb[0].mxu0
      %430 = vmatprep.mubr.bf16.mxu0 0
      %431 = vmatmul.mubr.bf16.gmra.mrb[0].mxu0 %v297
      %v432 = vpop.f32.mrb[0].mxu0
      %v433 = vadd.f32 %v228, %v432
      %v434 = vpop.f32.mrb[0].mxu0
      %v435 = vpop.f32.mrb[0].mxu0
      %v436 = vadd.f32 %v228, %v435
      %v437 = vpop.f32.mrb[0].mxu0
      %438 = vmatprep.mubr.bf16.mxu0 0
      %439 = vmatmul.mubr.bf16.gmra.mrb[0].mxu0 %v298
      %v440 = vpop.f32.mrb[0].mxu0
      %v441 = vadd.f32 %v228, %v440
      %v442 = vpop.f32.mrb[0].mxu0
      %v443 = vpop.f32.mrb[0].mxu0
      %v444 = vadd.f32 %v228, %v443
      %v445 = vpop.f32.mrb[0].mxu0
      %446 = vmatprep.mubr.bf16.mxu0 0
      %447 = vmatmul.mubr.bf16.gmra.mrb[0].mxu0 %v299
      %v448 = vpop.f32.mrb[0].mxu0
      %v449 = vadd.f32 %v228, %v448
      %v450 = vpop.f32.mrb[0].mxu0
      %v451 = vpop.f32.mrb[0].mxu0
      %v452 = vadd.f32 %v228, %v451
      %v453 = vpop.f32.mrb[0].mxu0
      %454 = vmatprep.mubr.bf16.mxu0 0
      %455 = vmatmul.mubr.bf16.gmra.mrb[0].mxu0 %v300
      %v456 = vpop.f32.mrb[0].mxu0
      %v457 = vadd.f32 %v228, %v456
      %v458 = vpop.f32.mrb[0].mxu0
      %v459 = vpop.f32.mrb[0].mxu0
      %v460 = vadd.f32 %v228, %v459
      %v461 = vpop.f32.mrb[0].mxu0
      %462 = vmatprep.mubr.bf16.mxu0 0
      %463 = vmatmul.mubr.bf16.gmra.mrb[0].mxu0 %v301
      %v464 = vpop.f32.mrb[0].mxu0
      %v465 = vadd.f32 %v228, %v464
      %v466 = vpop.f32.mrb[0].mxu0
      %v467 = vpop.f32.mrb[0].mxu0
      %v468 = vadd.f32 %v228, %v467
      %v469 = vpop.f32.mrb[0].mxu0
      %470 = vmatprep.mubr.bf16.mxu0 0
      %471 = vmatmul.mubr.bf16.gmra.mrb[0].mxu0 %v302
      %v472 = vpop.f32.mrb[0].mxu0
      %v473 = vadd.f32 %v228, %v472
      %v474 = vpop.f32.mrb[0].mxu0
      %v475 = vpop.f32.mrb[0].mxu0
      %v476 = vadd.f32 %v228, %v475
      %v477 = vpop.f32.mrb[0].mxu0
      %478 = vmatprep.mubr.bf16.mxu0 0
      %479 = vmatmul.mubr.bf16.gmra.mrb[0].mxu0 %v303
      %v480 = vpop.f32.mrb[0].mxu0
      %v481 = vadd.f32 %v228, %v480
      %v482 = vpop.f32.mrb[0].mxu0
      %v483 = vpop.f32.mrb[0].mxu0
      %v484 = vadd.f32 %v228, %v483
      %v485 = vpop.f32.mrb[0].mxu0
      %486 = vmatprep.mubr.bf16.mxu0 0
      %487 = vmatmul.mubr.bf16.gmra.mrb[0].mxu0 %v304
      %v488 = vpop.f32.mrb[0].mxu0
      %v489 = vadd.f32 %v228, %v488
      %v490 = vpop.f32.mrb[0].mxu0
      %v491 = vpop.f32.mrb[0].mxu0
      %v492 = vadd.f32 %v228, %v491
      %v493 = vpop.f32.mrb[0].mxu0
      %494 = vmatprep.mubr.bf16.mxu0 0
      %495 = vmatmul.mubr.bf16.gmra.mrb[0].mxu0 %v305
      %v496 = vpop.f32.mrb[0].mxu0
      %v497 = vadd.f32 %v228, %v496
      %v498 = vpop.f32.mrb[0].mxu0
      %v499 = vpop.f32.mrb[0].mxu0
      %v500 = vadd.f32 %v228, %v499
      %v501 = vpop.f32.mrb[0].mxu0
      %502 = vmatprep.mubr.bf16.mxu0 0
      %503 = vmatmul.mubr.bf16.gmra.mrb[0].mxu0 %v306
      %v504 = vpop.f32.mrb[0].mxu0
      %v505 = vadd.f32 %v228, %v504
      %v506 = vpop.f32.mrb[0].mxu0
      %v507 = vpop.f32.mrb[0].mxu0
      %v508 = vadd.f32 %v228, %v507
      %v509 = vpop.f32.mrb[0].mxu0
      %510 = vmatprep.mubr.bf16.mxu0 0
      %511 = vmatmul.mubr.bf16.gmra.mrb[0].mxu0 %v307
      %v512 = vpop.f32.mrb[0].mxu0
      %v513 = vadd.f32 %v228, %v512
      %v514 = vpop.f32.mrb[0].mxu0
      %v515 = vpop.f32.mrb[0].mxu0
      %v516 = vadd.f32 %v228, %v515
      %v517 = vpop.f32.mrb[0].mxu0
      %518 = vmatprep.mubr.bf16.mxu0 0
      %519 = vmatmul.mubr.bf16.gmra.mrb[0].mxu0 %v308
      %v520 = vpop.f32.mrb[0].mxu0
      %v521 = vadd.f32 %v228, %v520
      %v522 = vpop.f32.mrb[0].mxu0
      %v523 = vpop.f32.mrb[0].mxu0
      %v524 = vadd.f32 %v228, %v523
      %v525 = vpop.f32.mrb[0].mxu0
      %526 = vmatprep.mubr.bf16.mxu0 0
      %527 = vmatmul.mubr.bf16.gmra.mrb[0].mxu0 %v309
      %v528 = vpop.f32.mrb[0].mxu0
      %v529 = vadd.f32 %v228, %v528
      %v530 = vpop.f32.mrb[0].mxu0
      %v531 = vpop.f32.mrb[0].mxu0
      %v532 = vadd.f32 %v228, %v531
      %v533 = vpop.f32.mrb[0].mxu0
      %534 = vdwg.mxu0
      %v535 = vpack.c.bf16 %v412, %v409
      %v536 = vpack.c.bf16 %v420, %v417
      %v537 = vpack.c.bf16 %v428, %v425
      %v538 = vpack.c.bf16 %v436, %v433
      %v539 = vpack.c.bf16 %v444, %v441
      %v540 = vpack.c.bf16 %v452, %v449
      %v541 = vpack.c.bf16 %v460, %v457
      %v542 = vpack.c.bf16 %v468, %v465
      %v543 = vpack.c.bf16 %v476, %v473
      %v544 = vpack.c.bf16 %v484, %v481
      %v545 = vpack.c.bf16 %v492, %v489
      %v546 = vpack.c.bf16 %v500, %v497
      %v547 = vpack.c.bf16 %v508, %v505
      %v548 = vpack.c.bf16 %v516, %v513
      %v549 = vpack.c.bf16 %v524, %v521
      %v550 = vpack.c.bf16 %v532, %v529
      %v567 = vunpack.c.l.b16 %v535
      %v568 = vunpack.c.h.b16 %v535
      %v569 = vunpack.c.l.b16 %v536
      %v570 = vunpack.c.h.b16 %v536
      %v571 = vunpack.c.l.b16 %v537
      %v572 = vunpack.c.h.b16 %v537
      %v573 = vunpack.c.l.b16 %v538
      %v574 = vunpack.c.h.b16 %v538
      %v575 = vunpack.c.l.b16 %v539
      %v576 = vunpack.c.h.b16 %v539
      %v577 = vunpack.c.l.b16 %v540
      %v578 = vunpack.c.h.b16 %v540
      %v579 = vunpack.c.l.b16 %v541
      %v580 = vunpack.c.h.b16 %v541
      %v581 = vunpack.c.l.b16 %v542
      %v582 = vunpack.c.h.b16 %v542
      %v583 = vunpack.c.l.b16 %v543
      %v584 = vunpack.c.h.b16 %v543
      %v585 = vunpack.c.l.b16 %v544
      %v586 = vunpack.c.h.b16 %v544
      %v587 = vunpack.c.l.b16 %v545
      %v588 = vunpack.c.h.b16 %v545
      %v589 = vunpack.c.l.b16 %v546
      %v590 = vunpack.c.h.b16 %v546
      %v591 = vunpack.c.l.b16 %v547
      %v592 = vunpack.c.h.b16 %v547
      %v593 = vunpack.c.l.b16 %v548
      %v594 = vunpack.c.h.b16 %v548
      %v595 = vunpack.c.l.b16 %v549
      %v596 = vunpack.c.h.b16 %v549
      %v597 = vunpack.c.l.b16 %v550
      %v598 = vunpack.c.h.b16 %v550
      %v599 = vpack.c.b16 %v567, %v567
      %v600 = vpack.c.b16 %v568, %v568
      %v601 = vpack.c.b16 %v569, %v569
      %v602 = vpack.c.b16 %v570, %v570
      %v603 = vpack.c.b16 %v571, %v571
      %v604 = vpack.c.b16 %v572, %v572
      %v605 = vpack.c.b16 %v573, %v573
      %v606 = vpack.c.b16 %v574, %v574
      %v607 = vpack.c.b16 %v575, %v575
      %v608 = vpack.c.b16 %v576, %v576
      %v609 = vpack.c.b16 %v577, %v577
      %v610 = vpack.c.b16 %v578, %v578
      %v611 = vpack.c.b16 %v579, %v579
      %v612 = vpack.c.b16 %v580, %v580
      %v613 = vpack.c.b16 %v581, %v581
      %v614 = vpack.c.b16 %v582, %v582
      %v615 = vpack.c.b16 %v583, %v583
      %v616 = vpack.c.b16 %v584, %v584
      %v617 = vpack.c.b16 %v585, %v585
      %v618 = vpack.c.b16 %v586, %v586
      %v619 = vpack.c.b16 %v587, %v587
      %v620 = vpack.c.b16 %v588, %v588
      %v621 = vpack.c.b16 %v589, %v589
      %v622 = vpack.c.b16 %v590, %v590
      %v623 = vpack.c.b16 %v591, %v591
      %v624 = vpack.c.b16 %v592, %v592
      %v625 = vpack.c.b16 %v593, %v593
      %v626 = vpack.c.b16 %v594, %v594
      %v627 = vpack.c.b16 %v595, %v595
      %v628 = vpack.c.b16 %v596, %v596
      %v629 = vpack.c.b16 %v597, %v597
      %v630 = vpack.c.b16 %v598, %v598
      %663 = vst [vmem:[%s172] sm:$0xf] %v599
      %664 = vst [vmem:[%s172 + $0x4] sm:$0xf] %v600
      %665 = vst [vmem:[%s172 + $0x8] sm:$0xf] %v601
      %666 = vst [vmem:[%s172 + $0xc] sm:$0xf] %v602
      %667 = vst [vmem:[%s172 + $0x10] sm:$0xf] %v603
      %668 = vst [vmem:[%s172 + $0x14] sm:$0xf] %v604
      %669 = vst [vmem:[%s172 + $0x18] sm:$0xf] %v605
      %670 = vst [vmem:[%s172 + $0x1c] sm:$0xf] %v606
      %671 = vst [vmem:[%s172 + $0x20] sm:$0xf] %v607
      %672 = vst [vmem:[%s172 + $0x24] sm:$0xf] %v608
      %673 = vst [vmem:[%s172 + $0x28] sm:$0xf] %v609
      %674 = vst [vmem:[%s172 + $0x2c] sm:$0xf] %v610
      %675 = vst [vmem:[%s172 + $0x30] sm:$0xf] %v611
      %676 = vst [vmem:[%s172 + $0x34] sm:$0xf] %v612
      %677 = vst [vmem:[%s172 + $0x38] sm:$0xf] %v613
      %678 = vst [vmem:[%s172 + $0x3c] sm:$0xf] %v614
      %679 = vst [vmem:[%s172 + $0x40] sm:$0xf] %v615
      %680 = vst [vmem:[%s172 + $0x44] sm:$0xf] %v616
      %681 = vst [vmem:[%s172 + $0x48] sm:$0xf] %v617
      %682 = vst [vmem:[%s172 + $0x4c] sm:$0xf] %v618
      %683 = vst [vmem:[%s172 + $0x50] sm:$0xf] %v619
      %684 = vst [vmem:[%s172 + $0x54] sm:$0xf] %v620
      %685 = vst [vmem:[%s172 + $0x58] sm:$0xf] %v621
      %686 = vst [vmem:[%s172 + $0x5c] sm:$0xf] %v622
      %687 = vst [vmem:[%s172 + $0x60] sm:$0xf] %v623
      %688 = vst [vmem:[%s172 + $0x64] sm:$0xf] %v624
      %689 = vst [vmem:[%s172 + $0x68] sm:$0xf] %v625
      %690 = vst [vmem:[%s172 + $0x6c] sm:$0xf] %v626
      %691 = vst [vmem:[%s172 + $0x70] sm:$0xf] %v627
      %692 = vst [vmem:[%s172 + $0x74] sm:$0xf] %v628
      %693 = vst [vmem:[%s172 + $0x78] sm:$0xf] %v629
      %694 = vst [vmem:[%s172 + $0x7c] sm:$0xf] %v630
      %s695 = smul.u32 32, %s14
      %p696 = scmp.lt.s32.totalorder %s695, 63
      %s697 = scalar_select %p696, %s695, 63
      %s698 = smul.addr %s697, 4
      %s699 = scalar_lea.vmem %s3, %s698
      // Predicated region
      $region33: #{network_forward.16} parent=31 // pred_check
        %p700 = pneg %p100
      $region34: #{network_forward.16} parent=31 // pred_check_branch
        %702 = sbr.rel (%p700) target = $region36
      $region35: #{network_forward.16} parent=31 // pred_region
        %s703 = smul.u32 32, %s14
      $region36: #{network_forward.16} parent=31 // pred_fallthru
        _
    $region32: #{network_forward.16} parent=5 // pred_fallthru
      _
    %p704 = scmp.le.s32.totalorder 2, %s9
    // Predicated region
    $region37: #{network_forward.16} parent=5 // pred_check
      %p705 = pneg %p704
    $region38: #{network_forward.16} parent=5 // pred_check_branch
      %707 = sbr.rel (%p705) target = $region40
    $region39: #{network_forward.16} parent=5 // pred_region
      %s708 = ssub.s32 %s9, 2
      // Predicated region
      $region41: #{network_forward.16} parent=39 // pred_check
        %p709 = pneg %p106
      $region42: #{network_forward.16} parent=39 // pred_check_branch
        %711 = sbr.rel (%p709) target = $region44
      $region43: #{network_forward.16} parent=39 // pred_region
        %s712 = smul.u32 32, %s15
        %p713 = scmp.lt.s32.totalorder %s712, 63
        %s714 = scalar_select %p713, %s712, 63
        %s715 = smul.addr %s714, 4
        %s716 = scalar_lea.vmem %s3, %s715
      $region44: #{network_forward.16} parent=39 // pred_fallthru
        _
    $region40: #{network_forward.16} parent=5 // pred_fallthru
      _
  $region6: #{network_forward.16} parent=0 // loop_footer
    %s13 = sadd.s32 1, %s9
  $region7: #{network_forward.16} parent=0 // loop_footer_branch
    %8 = sbr.rel target = $region3
  $region8: #{network_forward.16} parent=0 // loop_exit
    _

// kernel: network_forward.17
$region0: #{network_forward.17}
  #allocation0 [shape = 'u32[]', space=smem, size = 0x4, offset = 0x4, fixed_abs, tag = 'smem constant byte address 0x4 - core index']
  #allocation1 [shape = 'u32[144,128]{1,0:T(1,128)}', space=vmem, size = 0x12000, scoped, tag = 'internal scratch']
  %s0 = inlined_call_operand.vmem [shape: bf16[512,256], index: 0, kind: input, shape index: {}]
  %s1 = inlined_call_operand.vmem [shape: bf16[256,128], index: 1, kind: input, shape index: {}]
  %s2 = inlined_call_operand.vmem [shape: f32[1,128], index: 2, kind: input, shape index: {}]
  %s3 = inlined_call_operand.vmem [shape: bf16[512,128], index: 3, kind: output, shape index: {}]
  %s4 = sld [smem:[#allocation0]]
  $region45: #{network_forward.17} parent=0
    _
  %s6 = ssub.s32 1, %s4
  %s7 = scalar_select 0, %s6, %s4
  loop: start=0, step=1, limit=4
  $region2: #{network_forward.17} parent=0 // loop_pre_header
    _
  $region3: #{network_forward.17} parent=0 // loop_header
    %s9 = sphi 0, %s13
    %p10 = scmp.ge.s32.totalorder %s9, 4
    %s19 = sphi 0, %s21
    %s22 = sphi 0, %s19
    %s23 = sphi 0, %s22
    %s39 = sphi 0, %s23
    %s43 = sphi 0, %s43
    %s45 = sphi 0, %s43
    %s46 = sphi 0, %s45
    %s60 = sphi 0, %s46
    %s64 = sphi 0, %s64
    %s66 = sphi 0, %s64
    %s67 = sphi 0, %s66
    %s81 = sphi 0, %s67
    %s87 = sphi 0, %s89
    %s90 = sphi 0, %s87
    %s91 = sphi 0, %s90
    %s107 = sphi 0, %s91
  $region4: #{network_forward.17} parent=0 // loop_header_branch
    %12 = sbr.rel (%p10) target = $region8
  $region5: #{network_forward.17} parent=0 // loop_body
    %s14 = ssub.s32 %s9, 1
    %s15 = ssub.s32 %s9, 2
    %s16 = sadd.s32 %s9, 1
    %s17 = ssub.s32 %s9, %s16
    %p18 = scmp.eq.s32.totalorder %s17, 0
    %s20 = sadd.s32 %s19, 1
    %s21 = scalar_select %p18, %s19, %s20
    %p24 = pneg %p18
    %p25 = scmp.eq.s32.totalorder %s9, 1
    %p26 = por %p24, %p25
    %p27 = scmp.ne.s32.totalorder %s19, %s22
    %p28 = scmp.eq.s32.totalorder %s9, 0
    %p29 = por %p27, %p28
    %p30 = scmp.ne.s32.totalorder %s19, %s22
    %p31 = scmp.eq.s32.totalorder %s14, 1
    %p32 = por %p30, %p31
    %p33 = scmp.ne.s32.totalorder %s22, %s23
    %p34 = scmp.eq.s32.totalorder %s14, 0
    %p35 = por %p33, %p34
    %p36 = scmp.ne.s32.totalorder %s22, %s23
    %p37 = scmp.eq.s32.totalorder %s15, 1
    %p38 = por %p36, %p37
    %p40 = scmp.ne.s32.totalorder %s23, %s39
    %p41 = scmp.eq.s32.totalorder %s15, 0
    %p42 = por %p40, %p41
    %s44 = sadd.s32 %s43, 1
    %p47 = scmp.eq.s32.totalorder %s9, 1
    %p48 = scmp.ne.s32.totalorder %s43, %s45
    %p49 = scmp.eq.s32.totalorder %s9, 0
    %p50 = por %p48, %p49
    %p51 = scmp.ne.s32.totalorder %s43, %s45
    %p52 = scmp.eq.s32.totalorder %s14, 1
    %p53 = por %p51, %p52
    %p54 = scmp.ne.s32.totalorder %s45, %s46
    %p55 = scmp.eq.s32.totalorder %s14, 0
    %p56 = por %p54, %p55
    %p57 = scmp.ne.s32.totalorder %s45, %s46
    %p58 = scmp.eq.s32.totalorder %s15, 1
    %p59 = por %p57, %p58
    %p61 = scmp.ne.s32.totalorder %s46, %s60
    %p62 = scmp.eq.s32.totalorder %s15, 0
    %p63 = por %p61, %p62
    %s65 = sadd.s32 %s64, 1
    %p68 = scmp.eq.s32.totalorder %s9, 1
    %p69 = scmp.ne.s32.totalorder %s64, %s66
    %p70 = scmp.eq.s32.totalorder %s9, 0
    %p71 = por %p69, %p70
    %p72 = scmp.ne.s32.totalorder %s64, %s66
    %p73 = scmp.eq.s32.totalorder %s14, 1
    %p74 = por %p72, %p73
    %p75 = scmp.ne.s32.totalorder %s66, %s67
    %p76 = scmp.eq.s32.totalorder %s14, 0
    %p77 = por %p75, %p76
    %p78 = scmp.ne.s32.totalorder %s66, %s67
    %p79 = scmp.eq.s32.totalorder %s15, 1
    %p80 = por %p78, %p79
    %p82 = scmp.ne.s32.totalorder %s67, %s81
    %p83 = scmp.eq.s32.totalorder %s15, 0
    %p84 = por %p82, %p83
    %s85 = ssub.s32 %s9, %s16
    %p86 = scmp.eq.s32.totalorder %s85, 0
    %s88 = sadd.s32 %s87, 1
    %s89 = scalar_select %p86, %s87, %s88
    %p92 = pneg %p86
    %p93 = scmp.eq.s32.totalorder %s9, 1
    %p94 = por %p92, %p93
    %p95 = scmp.ne.s32.totalorder %s87, %s90
    %p96 = scmp.eq.s32.totalorder %s9, 0
    %p97 = por %p95, %p96
    %p98 = scmp.ne.s32.totalorder %s87, %s90
    %p99 = scmp.eq.s32.totalorder %s14, 1
    %p100 = por %p98, %p99
    %p101 = scmp.ne.s32.totalorder %s90, %s91
    %p102 = scmp.eq.s32.totalorder %s14, 0
    %p103 = por %p101, %p102
    %p104 = scmp.ne.s32.totalorder %s90, %s91
    %p105 = scmp.eq.s32.totalorder %s15, 1
    %p106 = por %p104, %p105
    %p108 = scmp.ne.s32.totalorder %s91, %s107
    %p109 = scmp.eq.s32.totalorder %s15, 0
    %p110 = por %p108, %p109
    %p111 = scmp.le.s32.totalorder 1, %s9
    %p112 = scmp.lt.s32.totalorder %s9, 3
    %p113 = pnand %p111, %p112
    %p114 = pneg %p113
    // Predicated region
    $region9: #{network_forward.17} parent=5 // pred_check
      _
    $region10: #{network_forward.17} parent=5 // pred_check_branch
      %116 = sbr.rel (%p113) target = $region12
    $region11: #{network_forward.17} parent=5 // pred_region
      %s117 = ssub.s32 %s9, 1
      // Predicated region
      $region13: #{network_forward.17} parent=11 // pred_check
        %p118 = pneg %p56
      $region14: #{network_forward.17} parent=11 // pred_check_branch
        %120 = sbr.rel (%p118) target = $region16
      $region15: #{network_forward.17} parent=11 // pred_region
        _
      $region16: #{network_forward.17} parent=11 // pred_fallthru
        _
      // Predicated region
      $region17: #{network_forward.17} parent=11 // pred_check
        %p121 = pneg %p77
      $region18: #{network_forward.17} parent=11 // pred_check_branch
        %123 = sbr.rel (%p121) target = $region20
      $region19: #{network_forward.17} parent=11 // pred_region
        _
      $region20: #{network_forward.17} parent=11 // pred_fallthru
        _
    $region12: #{network_forward.17} parent=5 // pred_fallthru
      _
    %p124 = scmp.lt.s32.totalorder %s9, 2
    // Predicated region
    $region21: #{network_forward.17} parent=5 // pred_check
      %p125 = pneg %p124
    $region22: #{network_forward.17} parent=5 // pred_check_branch
      %127 = sbr.rel (%p125) target = $region24
    $region23: #{network_forward.17} parent=5 // pred_region
      // Predicated region
      $region25: #{network_forward.17} parent=23 // pred_check
        %p128 = pneg %p29
      $region26: #{network_forward.17} parent=23 // pred_check_branch
        %130 = sbr.rel (%p128) target = $region28
      $region27: #{network_forward.17} parent=23 // pred_region
        %s131 = smul.u32 32, %s9
        %p132 = scmp.lt.s32.totalorder %s131, 63
        %s133 = scalar_select %p132, %s131, 63
        %s134 = smul.addr %s133, 2
        %s135 = smul.addr %s134, 4
        %s136 = scalar_lea.vmem %s0, %s135
        %s137 = smul.u32 32, %s9
      $region28: #{network_forward.17} parent=23 // pred_fallthru
        _
    $region24: #{network_forward.17} parent=5 // pred_fallthru
      _
    %p138 = scmp.le.s32.totalorder 1, %s9
    %p139 = scmp.lt.s32.totalorder %s9, 3
    %p140 = pnand %p138, %p139
    %p141 = pneg %p140
    // Predicated region
    $region29: #{network_forward.17} parent=5 // pred_check
      _
    $region30: #{network_forward.17} parent=5 // pred_check_branch
      %143 = sbr.rel (%p140) target = $region32
    $region31: #{network_forward.17} parent=5 // pred_region
      %s144 = ssub.s32 %s9, 1
      %s145 = smul.u32 32, %s14
      %p146 = scmp.lt.s32.totalorder %s145, 63
      %s147 = scalar_select %p146, %s145, 63
      %s148 = smul.addr %s147, 2
      %s149 = smul.addr %s148, 4
      %s150 = scalar_lea.vmem %s0, %s149
      %p151 = pneg %p35
      %p152 = pneg %p32
      %p153 = pneg %p56
      %p154 = pneg %p53
      %p155 = pneg %p77
      %p156 = pneg %p74
      %p157 = pneg %p103
      %p158 = pneg %p100
      %s159 = smul.u32 32, %s14
      %p160 = scmp.lt.s32.totalorder %s159, 63
      %s161 = scalar_select %p160, %s159, 63
      %s162 = smul.addr %s161, 4
      %s163 = scalar_lea.vmem %s3, %s162
      %s164 = smul.u32 32, %s14
      %p165 = scmp.lt.s32.totalorder %s164, 63
      %s166 = scalar_select %p165, %s164, 63
      %s167 = smul.addr %s166, 2
      %s168 = smul.addr %s167, 4
      %s169 = scalar_lea.vmem %s0, %s168
      %s170 = smul.u32 32, %s14
      %s171 = smul.u32 32, %s14
      %p172 = scmp.lt.s32.totalorder %s171, 63
      %s173 = scalar_select %p172, %s171, 63
      %s174 = smul.addr %s173, 4
      %s175 = scalar_lea.vmem %s3, %s174
      %s176 = smul.u32 32, %s14
      %v178 = vld [vmem:[%s169] sm:$0xff]
      %v179 = vld [vmem:[%s169 + $0x8] sm:$0xff]
      %v180 = vld [vmem:[%s169 + $0x10] sm:$0xff]
      %v181 = vld [vmem:[%s169 + $0x18] sm:$0xff]
      %v182 = vld [vmem:[%s169 + $0x20] sm:$0xff]
      %v183 = vld [vmem:[%s169 + $0x28] sm:$0xff]
      %v184 = vld [vmem:[%s169 + $0x30] sm:$0xff]
      %v185 = vld [vmem:[%s169 + $0x38] sm:$0xff]
      %v186 = vld [vmem:[%s169 + $0x40] sm:$0xff]
      %v187 = vld [vmem:[%s169 + $0x48] sm:$0xff]
      %v188 = vld [vmem:[%s169 + $0x50] sm:$0xff]
      %v189 = vld [vmem:[%s169 + $0x58] sm:$0xff]
      %v190 = vld [vmem:[%s169 + $0x60] sm:$0xff]
      %v191 = vld [vmem:[%s169 + $0x68] sm:$0xff]
      %v192 = vld [vmem:[%s169 + $0x70] sm:$0xff]
      %v193 = vld [vmem:[%s169 + $0x78] sm:$0xff]
      %v194 = vld [vmem:[%s169 + $0x80] sm:$0xff]
      %v195 = vld [vmem:[%s169 + $0x88] sm:$0xff]
      %v196 = vld [vmem:[%s169 + $0x90] sm:$0xff]
      %v197 = vld [vmem:[%s169 + $0x98] sm:$0xff]
      %v198 = vld [vmem:[%s169 + $0xa0] sm:$0xff]
      %v199 = vld [vmem:[%s169 + $0xa8] sm:$0xff]
      %v200 = vld [vmem:[%s169 + $0xb0] sm:$0xff]
      %v201 = vld [vmem:[%s169 + $0xb8] sm:$0xff]
      %v202 = vld [vmem:[%s169 + $0xc0] sm:$0xff]
      %v203 = vld [vmem:[%s169 + $0xc8] sm:$0xff]
      %v204 = vld [vmem:[%s169 + $0xd0] sm:$0xff]
      %v205 = vld [vmem:[%s169 + $0xd8] sm:$0xff]
      %v206 = vld [vmem:[%s169 + $0xe0] sm:$0xff]
      %v207 = vld [vmem:[%s169 + $0xe8] sm:$0xff]
      %v208 = vld [vmem:[%s169 + $0xf0] sm:$0xff]
      %v209 = vld [vmem:[%s169 + $0xf8] sm:$0xff]
      %v210 = vld [vmem:[%s1] sm:$0xf]
      %v211 = vld [vmem:[%s1 + $0x4] sm:$0xf]
      %v212 = vld [vmem:[%s1 + $0x8] sm:$0xf]
      %v213 = vld [vmem:[%s1 + $0xc] sm:$0xf]
      %v214 = vld [vmem:[%s1 + $0x10] sm:$0xf]
      %v215 = vld [vmem:[%s1 + $0x14] sm:$0xf]
      %v216 = vld [vmem:[%s1 + $0x18] sm:$0xf]
      %v217 = vld [vmem:[%s1 + $0x1c] sm:$0xf]
      %v218 = vld [vmem:[%s1 + $0x20] sm:$0xf]
      %v219 = vld [vmem:[%s1 + $0x24] sm:$0xf]
      %v220 = vld [vmem:[%s1 + $0x28] sm:$0xf]
      %v221 = vld [vmem:[%s1 + $0x2c] sm:$0xf]
      %v222 = vld [vmem:[%s1 + $0x30] sm:$0xf]
      %v223 = vld [vmem:[%s1 + $0x34] sm:$0xf]
      %v224 = vld [vmem:[%s1 + $0x38] sm:$0xf]
      %v225 = vld [vmem:[%s1 + $0x3c] sm:$0xf]
      %v226 = vld [vmem:[%s1 + $0x40] sm:$0xf]
      %v227 = vld [vmem:[%s1 + $0x44] sm:$0xf]
      %v228 = vld [vmem:[%s1 + $0x48] sm:$0xf]
      %v229 = vld [vmem:[%s1 + $0x4c] sm:$0xf]
      %v230 = vld [vmem:[%s1 + $0x50] sm:$0xf]
      %v231 = vld [vmem:[%s1 + $0x54] sm:$0xf]
      %v232 = vld [vmem:[%s1 + $0x58] sm:$0xf]
      %v233 = vld [vmem:[%s1 + $0x5c] sm:$0xf]
      %v234 = vld [vmem:[%s1 + $0x60] sm:$0xf]
      %v235 = vld [vmem:[%s1 + $0x64] sm:$0xf]
      %v236 = vld [vmem:[%s1 + $0x68] sm:$0xf]
      %v237 = vld [vmem:[%s1 + $0x6c] sm:$0xf]
      %v238 = vld [vmem:[%s1 + $0x70] sm:$0xf]
      %v239 = vld [vmem:[%s1 + $0x74] sm:$0xf]
      %v240 = vld [vmem:[%s1 + $0x78] sm:$0xf]
      %v241 = vld [vmem:[%s1 + $0x7c] sm:$0xf]
      %v242 = vld [vmem:[%s2] sm:$0x1]
      %v244 = vlaneseq
      %v245 = vshrl.u32 %v244, 7
      %v246 = vsub.s32 0, %v245
      %v247 = vrot.slane %v242, %v246
      %v281 = vunpack.c.l.b16 %v178
      %v282 = vunpack.c.h.b16 %v178
      %v283 = vunpack.c.l.b16 %v179
      %v284 = vunpack.c.h.b16 %v179
      %v285 = vunpack.c.l.b16 %v180
      %v286 = vunpack.c.h.b16 %v180
      %v287 = vunpack.c.l.b16 %v181
      %v288 = vunpack.c.h.b16 %v181
      %v289 = vunpack.c.l.b16 %v182
      %v290 = vunpack.c.h.b16 %v182
      %v291 = vunpack.c.l.b16 %v183
      %v292 = vunpack.c.h.b16 %v183
      %v293 = vunpack.c.l.b16 %v184
      %v294 = vunpack.c.h.b16 %v184
      %v295 = vunpack.c.l.b16 %v185
      %v296 = vunpack.c.h.b16 %v185
      %v297 = vunpack.c.l.b16 %v186
      %v298 = vunpack.c.h.b16 %v186
      %v299 = vunpack.c.l.b16 %v187
      %v300 = vunpack.c.h.b16 %v187
      %v301 = vunpack.c.l.b16 %v188
      %v302 = vunpack.c.h.b16 %v188
      %v303 = vunpack.c.l.b16 %v189
      %v304 = vunpack.c.h.b16 %v189
      %v305 = vunpack.c.l.b16 %v190
      %v306 = vunpack.c.h.b16 %v190
      %v307 = vunpack.c.l.b16 %v191
      %v308 = vunpack.c.h.b16 %v191
      %v309 = vunpack.c.l.b16 %v192
      %v310 = vunpack.c.h.b16 %v192
      %v311 = vunpack.c.l.b16 %v193
      %v312 = vunpack.c.h.b16 %v193
      %v313 = vunpack.c.l.b16 %v194
      %v314 = vunpack.c.h.b16 %v194
      %v315 = vunpack.c.l.b16 %v195
      %v316 = vunpack.c.h.b16 %v195
      %v317 = vunpack.c.l.b16 %v196
      %v318 = vunpack.c.h.b16 %v196
      %v319 = vunpack.c.l.b16 %v197
      %v320 = vunpack.c.h.b16 %v197
      %v321 = vunpack.c.l.b16 %v198
      %v322 = vunpack.c.h.b16 %v198
      %v323 = vunpack.c.l.b16 %v199
      %v324 = vunpack.c.h.b16 %v199
      %v325 = vunpack.c.l.b16 %v200
      %v326 = vunpack.c.h.b16 %v200
      %v327 = vunpack.c.l.b16 %v201
      %v328 = vunpack.c.h.b16 %v201
      %v329 = vunpack.c.l.b16 %v202
      %v330 = vunpack.c.h.b16 %v202
      %v331 = vunpack.c.l.b16 %v203
      %v332 = vunpack.c.h.b16 %v203
      %v333 = vunpack.c.l.b16 %v204
      %v334 = vunpack.c.h.b16 %v204
      %v335 = vunpack.c.l.b16 %v205
      %v336 = vunpack.c.h.b16 %v205
      %v337 = vunpack.c.l.b16 %v206
      %v338 = vunpack.c.h.b16 %v206
      %v339 = vunpack.c.l.b16 %v207
      %v340 = vunpack.c.h.b16 %v207
      %v341 = vunpack.c.l.b16 %v208
      %v342 = vunpack.c.h.b16 %v208
      %v343 = vunpack.c.l.b16 %v209
      %v344 = vunpack.c.h.b16 %v209
      %v345 = vpack.c.b16 %v283, %v281
      %v346 = vpack.c.b16 %v284, %v282
      %v347 = vpack.c.b16 %v287, %v285
      %v348 = vpack.c.b16 %v288, %v286
      %v349 = vpack.c.b16 %v291, %v289
      %v350 = vpack.c.b16 %v292, %v290
      %v351 = vpack.c.b16 %v295, %v293
      %v352 = vpack.c.b16 %v296, %v294
      %v353 = vpack.c.b16 %v299, %v297
      %v354 = vpack.c.b16 %v300, %v298
      %v355 = vpack.c.b16 %v303, %v301
      %v356 = vpack.c.b16 %v304, %v302
      %v357 = vpack.c.b16 %v307, %v305
      %v358 = vpack.c.b16 %v308, %v306
      %v359 = vpack.c.b16 %v311, %v309
      %v360 = vpack.c.b16 %v312, %v310
      %v361 = vpack.c.b16 %v315, %v313
      %v362 = vpack.c.b16 %v316, %v314
      %v363 = vpack.c.b16 %v319, %v317
      %v364 = vpack.c.b16 %v320, %v318
      %v365 = vpack.c.b16 %v323, %v321
      %v366 = vpack.c.b16 %v324, %v322
      %v367 = vpack.c.b16 %v327, %v325
      %v368 = vpack.c.b16 %v328, %v326
      %v369 = vpack.c.b16 %v331, %v329
      %v370 = vpack.c.b16 %v332, %v330
      %v371 = vpack.c.b16 %v335, %v333
      %v372 = vpack.c.b16 %v336, %v334
      %v373 = vpack.c.b16 %v339, %v337
      %v374 = vpack.c.b16 %v340, %v338
      %v375 = vpack.c.b16 %v343, %v341
      %v376 = vpack.c.b16 %v344, %v342
      %v441 = vunpack.c.l.b16 %v210
      %v442 = vunpack.c.l.b16 %v211
      %v443 = vunpack.c.l.b16 %v212
      %v444 = vunpack.c.l.b16 %v213
      %v445 = vunpack.c.l.b16 %v214
      %v446 = vunpack.c.l.b16 %v215
      %v447 = vunpack.c.l.b16 %v216
      %v448 = vunpack.c.l.b16 %v217
      %v449 = vunpack.c.l.b16 %v218
      %v450 = vunpack.c.l.b16 %v219
      %v451 = vunpack.c.l.b16 %v220
      %v452 = vunpack.c.l.b16 %v221
      %v453 = vunpack.c.l.b16 %v222
      %v454 = vunpack.c.l.b16 %v223
      %v455 = vunpack.c.l.b16 %v224
      %v456 = vunpack.c.l.b16 %v225
      %v457 = vunpack.c.l.b16 %v226
      %v458 = vunpack.c.l.b16 %v227
      %v459 = vunpack.c.l.b16 %v228
      %v460 = vunpack.c.l.b16 %v229
      %v461 = vunpack.c.l.b16 %v230
      %v462 = vunpack.c.l.b16 %v231
      %v463 = vunpack.c.l.b16 %v232
      %v464 = vunpack.c.l.b16 %v233
      %v465 = vunpack.c.l.b16 %v234
      %v466 = vunpack.c.l.b16 %v235
      %v467 = vunpack.c.l.b16 %v236
      %v468 = vunpack.c.l.b16 %v237
      %v469 = vunpack.c.l.b16 %v238
      %v470 = vunpack.c.l.b16 %v239
      %v471 = vunpack.c.l.b16 %v240
      %v472 = vunpack.c.l.b16 %v241
      %v473 = vpack.c.b16 %v442, %v441
      %v474 = vpack.c.b16 %v444, %v443
      %v475 = vpack.c.b16 %v446, %v445
      %v476 = vpack.c.b16 %v448, %v447
      %v477 = vpack.c.b16 %v450, %v449
      %v478 = vpack.c.b16 %v452, %v451
      %v479 = vpack.c.b16 %v454, %v453
      %v480 = vpack.c.b16 %v456, %v455
      %v481 = vpack.c.b16 %v458, %v457
      %v482 = vpack.c.b16 %v460, %v459
      %v483 = vpack.c.b16 %v462, %v461
      %v484 = vpack.c.b16 %v464, %v463
      %v485 = vpack.c.b16 %v466, %v465
      %v486 = vpack.c.b16 %v468, %v467
      %v487 = vpack.c.b16 %v470, %v469
      %v488 = vpack.c.b16 %v472, %v471
      %505 = vmatprep.subr.bf16.mxu0 0
      %506 = vmatpush1.bf16.msra.mxu0 %v473
      %507 = vmatprep.subr.bf16.mxu0 0
      %508 = vmatpush1.bf16.msra.mxu0 %v474
      %509 = vmatprep.subr.bf16.mxu0 0
      %510 = vmatpush1.bf16.msra.mxu0 %v475
      %511 = vmatprep.subr.bf16.mxu0 0
      %512 = vmatpush1.bf16.msra.mxu0 %v476
      %513 = vmatprep.subr.bf16.mxu0 0
      %514 = vmatpush1.bf16.msra.mxu0 %v477
      %515 = vmatprep.subr.bf16.mxu0 0
      %516 = vmatpush1.bf16.msra.mxu0 %v478
      %517 = vmatprep.subr.bf16.mxu0 0
      %518 = vmatpush1.bf16.msra.mxu0 %v479
      %519 = vmatprep.subr.bf16.mxu0 0
      %520 = vmatpush1.bf16.msra.mxu0 %v480
      %521 = vmatprep.subr.bf16.mxu0 0
      %522 = vmatpush1.bf16.msra.mxu0 %v481
      %523 = vmatprep.subr.bf16.mxu0 0
      %524 = vmatpush1.bf16.msra.mxu0 %v482
      %525 = vmatprep.subr.bf16.mxu0 0
      %526 = vmatpush1.bf16.msra.mxu0 %v483
      %527 = vmatprep.subr.bf16.mxu0 0
      %528 = vmatpush1.bf16.msra.mxu0 %v484
      %529 = vmatprep.subr.bf16.mxu0 0
      %530 = vmatpush1.bf16.msra.mxu0 %v485
      %531 = vmatprep.subr.bf16.mxu0 0
      %532 = vmatpush1.bf16.msra.mxu0 %v486
      %533 = vmatprep.subr.bf16.mxu0 0
      %534 = vmatpush1.bf16.msra.mxu0 %v487
      %535 = vmatprep.subr.bf16.mxu0 0
      %536 = vmatpush1.bf16.msra.mxu0 %v488
      %537 = vmatprep.mubr.bf16.mxu0 %v346
      %538 = vmatmul.mubr.bf16.gmra.mrb[0].mxu0 %v345
      %v539 = vpop.f32.mrb[0].mxu0
      %v540 = vadd.f32 %v247, %v539
      %v541 = vpop.f32.mrb[0].mxu0
      %v542 = vpop.f32.mrb[0].mxu0
      %v543 = vadd.f32 %v247, %v542
      %v544 = vpop.f32.mrb[0].mxu0
      %545 = vmatprep.mubr.bf16.mxu0 %v348
      %546 = vmatmul.mubr.bf16.gmra.mrb[0].mxu0 %v347
      %v547 = vpop.f32.mrb[0].mxu0
      %v548 = vadd.f32 %v247, %v547
      %v549 = vpop.f32.mrb[0].mxu0
      %v550 = vpop.f32.mrb[0].mxu0
      %v551 = vadd.f32 %v247, %v550
      %v552 = vpop.f32.mrb[0].mxu0
      %553 = vmatprep.mubr.bf16.mxu0 %v350
      %554 = vmatmul.mubr.bf16.gmra.mrb[0].mxu0 %v349
      %v555 = vpop.f32.mrb[0].mxu0
      %v556 = vadd.f32 %v247, %v555
      %v557 = vpop.f32.mrb[0].mxu0
      %v558 = vpop.f32.mrb[0].mxu0
      %v559 = vadd.f32 %v247, %v558
      %v560 = vpop.f32.mrb[0].mxu0
      %561 = vmatprep.mubr.bf16.mxu0 %v352
      %562 = vmatmul.mubr.bf16.gmra.mrb[0].mxu0 %v351
      %v563 = vpop.f32.mrb[0].mxu0
      %v564 = vadd.f32 %v247, %v563
      %v565 = vpop.f32.mrb[0].mxu0
      %v566 = vpop.f32.mrb[0].mxu0
      %v567 = vadd.f32 %v247, %v566
      %v568 = vpop.f32.mrb[0].mxu0
      %569 = vmatprep.mubr.bf16.mxu0 %v354
      %570 = vmatmul.mubr.bf16.gmra.mrb[0].mxu0 %v353
      %v571 = vpop.f32.mrb[0].mxu0
      %v572 = vadd.f32 %v247, %v571
      %v573 = vpop.f32.mrb[0].mxu0
      %v574 = vpop.f32.mrb[0].mxu0
      %v575 = vadd.f32 %v247, %v574
      %v576 = vpop.f32.mrb[0].mxu0
      %577 = vmatprep.mubr.bf16.mxu0 %v356
      %578 = vmatmul.mubr.bf16.gmra.mrb[0].mxu0 %v355
      %v579 = vpop.f32.mrb[0].mxu0
      %v580 = vadd.f32 %v247, %v579
      %v581 = vpop.f32.mrb[0].mxu0
      %v582 = vpop.f32.mrb[0].mxu0
      %v583 = vadd.f32 %v247, %v582
      %v584 = vpop.f32.mrb[0].mxu0
      %585 = vmatprep.mubr.bf16.mxu0 %v358
      %586 = vmatmul.mubr.bf16.gmra.mrb[0].mxu0 %v357
      %v587 = vpop.f32.mrb[0].mxu0
      %v588 = vadd.f32 %v247, %v587
      %v589 = vpop.f32.mrb[0].mxu0
      %v590 = vpop.f32.mrb[0].mxu0
      %v591 = vadd.f32 %v247, %v590
      %v592 = vpop.f32.mrb[0].mxu0
      %593 = vmatprep.mubr.bf16.mxu0 %v360
      %594 = vmatmul.mubr.bf16.gmra.mrb[0].mxu0 %v359
      %v595 = vpop.f32.mrb[0].mxu0
      %v596 = vadd.f32 %v247, %v595
      %v597 = vpop.f32.mrb[0].mxu0
      %v598 = vpop.f32.mrb[0].mxu0
      %v599 = vadd.f32 %v247, %v598
      %v600 = vpop.f32.mrb[0].mxu0
      %601 = vmatprep.mubr.bf16.mxu0 %v362
      %602 = vmatmul.mubr.bf16.gmra.mrb[0].mxu0 %v361
      %v603 = vpop.f32.mrb[0].mxu0
      %v604 = vadd.f32 %v247, %v603
      %v605 = vpop.f32.mrb[0].mxu0
      %v606 = vpop.f32.mrb[0].mxu0
      %v607 = vadd.f32 %v247, %v606
      %v608 = vpop.f32.mrb[0].mxu0
      %609 = vmatprep.mubr.bf16.mxu0 %v364
      %610 = vmatmul.mubr.bf16.gmra.mrb[0].mxu0 %v363
      %v611 = vpop.f32.mrb[0].mxu0
      %v612 = vadd.f32 %v247, %v611
      %v613 = vpop.f32.mrb[0].mxu0
      %v614 = vpop.f32.mrb[0].mxu0
      %v615 = vadd.f32 %v247, %v614
      %v616 = vpop.f32.mrb[0].mxu0
      %617 = vmatprep.mubr.bf16.mxu0 %v366
      %618 = vmatmul.mubr.bf16.gmra.mrb[0].mxu0 %v365
      %v619 = vpop.f32.mrb[0].mxu0
      %v620 = vadd.f32 %v247, %v619
      %v621 = vpop.f32.mrb[0].mxu0
      %v622 = vpop.f32.mrb[0].mxu0
      %v623 = vadd.f32 %v247, %v622
      %v624 = vpop.f32.mrb[0].mxu0
      %625 = vmatprep.mubr.bf16.mxu0 %v368
      %626 = vmatmul.mubr.bf16.gmra.mrb[0].mxu0 %v367
      %v627 = vpop.f32.mrb[0].mxu0
      %v628 = vadd.f32 %v247, %v627
      %v629 = vpop.f32.mrb[0].mxu0
      %v630 = vpop.f32.mrb[0].mxu0
      %v631 = vadd.f32 %v247, %v630
      %v632 = vpop.f32.mrb[0].mxu0
      %633 = vmatprep.mubr.bf16.mxu0 %v370
      %634 = vmatmul.mubr.bf16.gmra.mrb[0].mxu0 %v369
      %v635 = vpop.f32.mrb[0].mxu0
      %v636 = vadd.f32 %v247, %v635
      %v637 = vpop.f32.mrb[0].mxu0
      %v638 = vpop.f32.mrb[0].mxu0
      %v639 = vadd.f32 %v247, %v638
      %v640 = vpop.f32.mrb[0].mxu0
      %641 = vmatprep.mubr.bf16.mxu0 %v372
      %642 = vmatmul.mubr.bf16.gmra.mrb[0].mxu0 %v371
      %v643 = vpop.f32.mrb[0].mxu0
      %v644 = vadd.f32 %v247, %v643
      %v645 = vpop.f32.mrb[0].mxu0
      %v646 = vpop.f32.mrb[0].mxu0
      %v647 = vadd.f32 %v247, %v646
      %v648 = vpop.f32.mrb[0].mxu0
      %649 = vmatprep.mubr.bf16.mxu0 %v374
      %650 = vmatmul.mubr.bf16.gmra.mrb[0].mxu0 %v373
      %v651 = vpop.f32.mrb[0].mxu0
      %v652 = vadd.f32 %v247, %v651
      %v653 = vpop.f32.mrb[0].mxu0
      %v654 = vpop.f32.mrb[0].mxu0
      %v655 = vadd.f32 %v247, %v654
      %v656 = vpop.f32.mrb[0].mxu0
      %657 = vmatprep.mubr.bf16.mxu0 %v376
      %658 = vmatmul.mubr.bf16.gmra.mrb[0].mxu0 %v375
      %v659 = vpop.f32.mrb[0].mxu0
      %v660 = vadd.f32 %v247, %v659
      %v661 = vpop.f32.mrb[0].mxu0
      %v662 = vpop.f32.mrb[0].mxu0
      %v663 = vadd.f32 %v247, %v662
      %v664 = vpop.f32.mrb[0].mxu0
      %665 = vdwg.mxu0
      %v666 = vmax.f32 %v540, 0.0
      %v667 = vmax.f32 %v543, 0.0
      %v668 = vmax.f32 %v548, 0.0
      %v669 = vmax.f32 %v551, 0.0
      %v670 = vmax.f32 %v556, 0.0
      %v671 = vmax.f32 %v559, 0.0
      %v672 = vmax.f32 %v564, 0.0
      %v673 = vmax.f32 %v567, 0.0
      %v674 = vmax.f32 %v572, 0.0
      %v675 = vmax.f32 %v575, 0.0
      %v676 = vmax.f32 %v580, 0.0
      %v677 = vmax.f32 %v583, 0.0
      %v678 = vmax.f32 %v588, 0.0
      %v679 = vmax.f32 %v591, 0.0
      %v680 = vmax.f32 %v596, 0.0
      %v681 = vmax.f32 %v599, 0.0
      %v682 = vmax.f32 %v604, 0.0
      %v683 = vmax.f32 %v607, 0.0
      %v684 = vmax.f32 %v612, 0.0
      %v685 = vmax.f32 %v615, 0.0
      %v686 = vmax.f32 %v620, 0.0
      %v687 = vmax.f32 %v623, 0.0
      %v688 = vmax.f32 %v628, 0.0
      %v689 = vmax.f32 %v631, 0.0
      %v690 = vmax.f32 %v636, 0.0
      %v691 = vmax.f32 %v639, 0.0
      %v692 = vmax.f32 %v644, 0.0
      %v693 = vmax.f32 %v647, 0.0
      %v694 = vmax.f32 %v652, 0.0
      %v695 = vmax.f32 %v655, 0.0
      %v696 = vmax.f32 %v660, 0.0
      %v697 = vmax.f32 %v663, 0.0
      %v698 = vpack.c.bf16 %v667, %v666
      %v699 = vpack.c.bf16 %v669, %v668
      %v700 = vpack.c.bf16 %v671, %v670
      %v701 = vpack.c.bf16 %v673, %v672
      %v702 = vpack.c.bf16 %v675, %v674
      %v703 = vpack.c.bf16 %v677, %v676
      %v704 = vpack.c.bf16 %v679, %v678
      %v705 = vpack.c.bf16 %v681, %v680
      %v706 = vpack.c.bf16 %v683, %v682
      %v707 = vpack.c.bf16 %v685, %v684
      %v708 = vpack.c.bf16 %v687, %v686
      %v709 = vpack.c.bf16 %v689, %v688
      %v710 = vpack.c.bf16 %v691, %v690
      %v711 = vpack.c.bf16 %v693, %v692
      %v712 = vpack.c.bf16 %v695, %v694
      %v713 = vpack.c.bf16 %v697, %v696
      %v730 = vunpack.c.l.b16 %v698
      %v731 = vunpack.c.h.b16 %v698
      %v732 = vunpack.c.l.b16 %v699
      %v733 = vunpack.c.h.b16 %v699
      %v734 = vunpack.c.l.b16 %v700
      %v735 = vunpack.c.h.b16 %v700
      %v736 = vunpack.c.l.b16 %v701
      %v737 = vunpack.c.h.b16 %v701
      %v738 = vunpack.c.l.b16 %v702
      %v739 = vunpack.c.h.b16 %v702
      %v740 = vunpack.c.l.b16 %v703
      %v741 = vunpack.c.h.b16 %v703
      %v742 = vunpack.c.l.b16 %v704
      %v743 = vunpack.c.h.b16 %v704
      %v744 = vunpack.c.l.b16 %v705
      %v745 = vunpack.c.h.b16 %v705
      %v746 = vunpack.c.l.b16 %v706
      %v747 = vunpack.c.h.b16 %v706
      %v748 = vunpack.c.l.b16 %v707
      %v749 = vunpack.c.h.b16 %v707
      %v750 = vunpack.c.l.b16 %v708
      %v751 = vunpack.c.h.b16 %v708
      %v752 = vunpack.c.l.b16 %v709
      %v753 = vunpack.c.h.b16 %v709
      %v754 = vunpack.c.l.b16 %v710
      %v755 = vunpack.c.h.b16 %v710
      %v756 = vunpack.c.l.b16 %v711
      %v757 = vunpack.c.h.b16 %v711
      %v758 = vunpack.c.l.b16 %v712
      %v759 = vunpack.c.h.b16 %v712
      %v760 = vunpack.c.l.b16 %v713
      %v761 = vunpack.c.h.b16 %v713
      %v762 = vpack.c.b16 %v730, %v730
      %v763 = vpack.c.b16 %v731, %v731
      %v764 = vpack.c.b16 %v732, %v732
      %v765 = vpack.c.b16 %v733, %v733
      %v766 = vpack.c.b16 %v734, %v734
      %v767 = vpack.c.b16 %v735, %v735
      %v768 = vpack.c.b16 %v736, %v736
      %v769 = vpack.c.b16 %v737, %v737
      %v770 = vpack.c.b16 %v738, %v738
      %v771 = vpack.c.b16 %v739, %v739
      %v772 = vpack.c.b16 %v740, %v740
      %v773 = vpack.c.b16 %v741, %v741
      %v774 = vpack.c.b16 %v742, %v742
      %v775 = vpack.c.b16 %v743, %v743
      %v776 = vpack.c.b16 %v744, %v744
      %v777 = vpack.c.b16 %v745, %v745
      %v778 = vpack.c.b16 %v746, %v746
      %v779 = vpack.c.b16 %v747, %v747
      %v780 = vpack.c.b16 %v748, %v748
      %v781 = vpack.c.b16 %v749, %v749
      %v782 = vpack.c.b16 %v750, %v750
      %v783 = vpack.c.b16 %v751, %v751
      %v784 = vpack.c.b16 %v752, %v752
      %v785 = vpack.c.b16 %v753, %v753
      %v786 = vpack.c.b16 %v754, %v754
      %v787 = vpack.c.b16 %v755, %v755
      %v788 = vpack.c.b16 %v756, %v756
      %v789 = vpack.c.b16 %v757, %v757
      %v790 = vpack.c.b16 %v758, %v758
      %v791 = vpack.c.b16 %v759, %v759
      %v792 = vpack.c.b16 %v760, %v760
      %v793 = vpack.c.b16 %v761, %v761
      %826 = vst [vmem:[%s175] sm:$0xf] %v762
      %827 = vst [vmem:[%s175 + $0x4] sm:$0xf] %v763
      %828 = vst [vmem:[%s175 + $0x8] sm:$0xf] %v764
      %829 = vst [vmem:[%s175 + $0xc] sm:$0xf] %v765
      %830 = vst [vmem:[%s175 + $0x10] sm:$0xf] %v766
      %831 = vst [vmem:[%s175 + $0x14] sm:$0xf] %v767
      %832 = vst [vmem:[%s175 + $0x18] sm:$0xf] %v768
      %833 = vst [vmem:[%s175 + $0x1c] sm:$0xf] %v769
      %834 = vst [vmem:[%s175 + $0x20] sm:$0xf] %v770
      %835 = vst [vmem:[%s175 + $0x24] sm:$0xf] %v771
      %836 = vst [vmem:[%s175 + $0x28] sm:$0xf] %v772
      %837 = vst [vmem:[%s175 + $0x2c] sm:$0xf] %v773
      %838 = vst [vmem:[%s175 + $0x30] sm:$0xf] %v774
      %839 = vst [vmem:[%s175 + $0x34] sm:$0xf] %v775
      %840 = vst [vmem:[%s175 + $0x38] sm:$0xf] %v776
      %841 = vst [vmem:[%s175 + $0x3c] sm:$0xf] %v777
      %842 = vst [vmem:[%s175 + $0x40] sm:$0xf] %v778
      %843 = vst [vmem:[%s175 + $0x44] sm:$0xf] %v779
      %844 = vst [vmem:[%s175 + $0x48] sm:$0xf] %v780
      %845 = vst [vmem:[%s175 + $0x4c] sm:$0xf] %v781
      %846 = vst [vmem:[%s175 + $0x50] sm:$0xf] %v782
      %847 = vst [vmem:[%s175 + $0x54] sm:$0xf] %v783
      %848 = vst [vmem:[%s175 + $0x58] sm:$0xf] %v784
      %849 = vst [vmem:[%s175 + $0x5c] sm:$0xf] %v785
      %850 = vst [vmem:[%s175 + $0x60] sm:$0xf] %v786
      %851 = vst [vmem:[%s175 + $0x64] sm:$0xf] %v787
      %852 = vst [vmem:[%s175 + $0x68] sm:$0xf] %v788
      %853 = vst [vmem:[%s175 + $0x6c] sm:$0xf] %v789
      %854 = vst [vmem:[%s175 + $0x70] sm:$0xf] %v790
      %855 = vst [vmem:[%s175 + $0x74] sm:$0xf] %v791
      %856 = vst [vmem:[%s175 + $0x78] sm:$0xf] %v792
      %857 = vst [vmem:[%s175 + $0x7c] sm:$0xf] %v793
      %s858 = smul.u32 32, %s14
      %p859 = scmp.lt.s32.totalorder %s858, 63
      %s860 = scalar_select %p859, %s858, 63
      %s861 = smul.addr %s860, 4
      %s862 = scalar_lea.vmem %s3, %s861
      // Predicated region
      $region33: #{network_forward.17} parent=31 // pred_check
        %p863 = pneg %p100
      $region34: #{network_forward.17} parent=31 // pred_check_branch
        %865 = sbr.rel (%p863) target = $region36
      $region35: #{network_forward.17} parent=31 // pred_region
        %s866 = smul.u32 32, %s14
      $region36: #{network_forward.17} parent=31 // pred_fallthru
        _
    $region32: #{network_forward.17} parent=5 // pred_fallthru
      _
    %p867 = scmp.le.s32.totalorder 2, %s9
    // Predicated region
    $region37: #{network_forward.17} parent=5 // pred_check
      %p868 = pneg %p867
    $region38: #{network_forward.17} parent=5 // pred_check_branch
      %870 = sbr.rel (%p868) target = $region40
    $region39: #{network_forward.17} parent=5 // pred_region
      %s871 = ssub.s32 %s9, 2
      // Predicated region
      $region41: #{network_forward.17} parent=39 // pred_check
        %p872 = pneg %p106
      $region42: #{network_forward.17} parent=39 // pred_check_branch
        %874 = sbr.rel (%p872) target = $region44
      $region43: #{network_forward.17} parent=39 // pred_region
        %s875 = smul.u32 32, %s15
        %p876 = scmp.lt.s32.totalorder %s875, 63
        %s877 = scalar_select %p876, %s875, 63
        %s878 = smul.addr %s877, 4
        %s879 = scalar_lea.vmem %s3, %s878
      $region44: #{network_forward.17} parent=39 // pred_fallthru
        _
    $region40: #{network_forward.17} parent=5 // pred_fallthru
      _
  $region6: #{network_forward.17} parent=0 // loop_footer
    %s13 = sadd.s32 1, %s9
  $region7: #{network_forward.17} parent=0 // loop_footer_branch
    %8 = sbr.rel target = $region3
  $region8: #{network_forward.17} parent=0 // loop_exit
    _

// kernel: network_forward.18
$region0: #{network_forward.18}
  #allocation0 [shape = 'u32[]', space=smem, size = 0x4, offset = 0x4, fixed_abs, tag = 'smem constant byte address 0x4 - core index']
  #allocation1 [shape = 'u32[144,128]{1,0:T(1,128)}', space=vmem, size = 0x12000, scoped, tag = 'internal scratch']
  %s0 = inlined_call_operand.vmem [shape: bf16[512,256], index: 0, kind: input, shape index: {}]
  %s1 = inlined_call_operand.vmem [shape: bf16[256,128], index: 1, kind: input, shape index: {}]
  %s2 = inlined_call_operand.vmem [shape: f32[1,128], index: 2, kind: input, shape index: {}]
  %s3 = inlined_call_operand.vmem [shape: f32[1,128], index: 3, kind: input, shape index: {}]
  %s4 = inlined_call_operand.vmem [shape: f32[1,128], index: 4, kind: input, shape index: {}]
  %s5 = inlined_call_operand.vmem [shape: bf16[512,128], index: 5, kind: output, shape index: {}]
  %s6 = sld [smem:[#allocation0]]
  $region30: #{network_forward.18} parent=0
    _
  %s8 = ssub.s32 1, %s6
  %s9 = scalar_select 0, %s8, %s6
  // Predicated region
  $region2: #{network_forward.18} parent=0 // pred_check
    _
  $region3: #{network_forward.18} parent=0 // pred_check_branch
    %11 = sbr.rel (0) target = $region5
  $region4: #{network_forward.18} parent=0 // pred_region
    _
  $region5: #{network_forward.18} parent=0 // pred_fallthru
    _
  // Predicated region
  $region6: #{network_forward.18} parent=0 // pred_check
    _
  $region7: #{network_forward.18} parent=0 // pred_check_branch
    %13 = sbr.rel (0) target = $region9
  $region8: #{network_forward.18} parent=0 // pred_region
    _
  $region9: #{network_forward.18} parent=0 // pred_fallthru
    _
  // Predicated region
  $region10: #{network_forward.18} parent=0 // pred_check
    _
  $region11: #{network_forward.18} parent=0 // pred_check_branch
    %15 = sbr.rel (0) target = $region13
  $region12: #{network_forward.18} parent=0 // pred_region
    _
  $region13: #{network_forward.18} parent=0 // pred_fallthru
    _
  // Predicated region
  $region14: #{network_forward.18} parent=0 // pred_check
    _
  $region15: #{network_forward.18} parent=0 // pred_check_branch
    %17 = sbr.rel (0) target = $region17
  $region16: #{network_forward.18} parent=0 // pred_region
    _
  $region17: #{network_forward.18} parent=0 // pred_fallthru
    _
  // Predicated region
  $region18: #{network_forward.18} parent=0 // pred_check
    _
  $region19: #{network_forward.18} parent=0 // pred_check_branch
    %19 = sbr.rel (0) target = $region21
  $region20: #{network_forward.18} parent=0 // pred_region
    _
  $region21: #{network_forward.18} parent=0 // pred_fallthru
    _
  %v21 = vld [vmem:[%s0] sm:$0xff]
  %v22 = vld [vmem:[%s0 + $0x8] sm:$0xff]
  %v23 = vld [vmem:[%s0 + $0x10] sm:$0xff]
  %v24 = vld [vmem:[%s0 + $0x18] sm:$0xff]
  %v25 = vld [vmem:[%s0 + $0x20] sm:$0xff]
  %v26 = vld [vmem:[%s0 + $0x28] sm:$0xff]
  %v27 = vld [vmem:[%s0 + $0x30] sm:$0xff]
  %v28 = vld [vmem:[%s0 + $0x38] sm:$0xff]
  %v29 = vld [vmem:[%s0 + $0x40] sm:$0xff]
  %v30 = vld [vmem:[%s0 + $0x48] sm:$0xff]
  %v31 = vld [vmem:[%s0 + $0x50] sm:$0xff]
  %v32 = vld [vmem:[%s0 + $0x58] sm:$0xff]
  %v33 = vld [vmem:[%s0 + $0x60] sm:$0xff]
  %v34 = vld [vmem:[%s0 + $0x68] sm:$0xff]
  %v35 = vld [vmem:[%s0 + $0x70] sm:$0xff]
  %v36 = vld [vmem:[%s0 + $0x78] sm:$0xff]
  %v37 = vld [vmem:[%s0 + $0x80] sm:$0xff]
  %v38 = vld [vmem:[%s0 + $0x88] sm:$0xff]
  %v39 = vld [vmem:[%s0 + $0x90] sm:$0xff]
  %v40 = vld [vmem:[%s0 + $0x98] sm:$0xff]
  %v41 = vld [vmem:[%s0 + $0xa0] sm:$0xff]
  %v42 = vld [vmem:[%s0 + $0xa8] sm:$0xff]
  %v43 = vld [vmem:[%s0 + $0xb0] sm:$0xff]
  %v44 = vld [vmem:[%s0 + $0xb8] sm:$0xff]
  %v45 = vld [vmem:[%s0 + $0xc0] sm:$0xff]
  %v46 = vld [vmem:[%s0 + $0xc8] sm:$0xff]
  %v47 = vld [vmem:[%s0 + $0xd0] sm:$0xff]
  %v48 = vld [vmem:[%s0 + $0xd8] sm:$0xff]
  %v49 = vld [vmem:[%s0 + $0xe0] sm:$0xff]
  %v50 = vld [vmem:[%s0 + $0xe8] sm:$0xff]
  %v51 = vld [vmem:[%s0 + $0xf0] sm:$0xff]
  %v52 = vld [vmem:[%s0 + $0xf8] sm:$0xff]
  %v53 = vld [vmem:[%s0 + $0x100] sm:$0xff]
  %v54 = vld [vmem:[%s0 + $0x108] sm:$0xff]
  %v55 = vld [vmem:[%s0 + $0x110] sm:$0xff]
  %v56 = vld [vmem:[%s0 + $0x118] sm:$0xff]
  %v57 = vld [vmem:[%s0 + $0x120] sm:$0xff]
  %v58 = vld [vmem:[%s0 + $0x128] sm:$0xff]
  %v59 = vld [vmem:[%s0 + $0x130] sm:$0xff]
  %v60 = vld [vmem:[%s0 + $0x138] sm:$0xff]
  %v61 = vld [vmem:[%s0 + $0x140] sm:$0xff]
  %v62 = vld [vmem:[%s0 + $0x148] sm:$0xff]
  %v63 = vld [vmem:[%s0 + $0x150] sm:$0xff]
  %v64 = vld [vmem:[%s0 + $0x158] sm:$0xff]
  %v65 = vld [vmem:[%s0 + $0x160] sm:$0xff]
  %v66 = vld [vmem:[%s0 + $0x168] sm:$0xff]
  %v67 = vld [vmem:[%s0 + $0x170] sm:$0xff]
  %v68 = vld [vmem:[%s0 + $0x178] sm:$0xff]
  %v69 = vld [vmem:[%s0 + $0x180] sm:$0xff]
  %v70 = vld [vmem:[%s0 + $0x188] sm:$0xff]
  %v71 = vld [vmem:[%s0 + $0x190] sm:$0xff]
  %v72 = vld [vmem:[%s0 + $0x198] sm:$0xff]
  %v73 = vld [vmem:[%s0 + $0x1a0] sm:$0xff]
  %v74 = vld [vmem:[%s0 + $0x1a8] sm:$0xff]
  %v75 = vld [vmem:[%s0 + $0x1b0] sm:$0xff]
  %v76 = vld [vmem:[%s0 + $0x1b8] sm:$0xff]
  %v77 = vld [vmem:[%s0 + $0x1c0] sm:$0xff]
  %v78 = vld [vmem:[%s0 + $0x1c8] sm:$0xff]
  %v79 = vld [vmem:[%s0 + $0x1d0] sm:$0xff]
  %v80 = vld [vmem:[%s0 + $0x1d8] sm:$0xff]
  %v81 = vld [vmem:[%s0 + $0x1e0] sm:$0xff]
  %v82 = vld [vmem:[%s0 + $0x1e8] sm:$0xff]
  %v83 = vld [vmem:[%s0 + $0x1f0] sm:$0xff]
  %v84 = vld [vmem:[%s0 + $0x1f8] sm:$0xff]
  %v85 = vld [vmem:[%s1] sm:$0xf]
  %v86 = vld [vmem:[%s1 + $0x4] sm:$0xf]
  %v87 = vld [vmem:[%s1 + $0x8] sm:$0xf]
  %v88 = vld [vmem:[%s1 + $0xc] sm:$0xf]
  %v89 = vld [vmem:[%s1 + $0x10] sm:$0xf]
  %v90 = vld [vmem:[%s1 + $0x14] sm:$0xf]
  %v91 = vld [vmem:[%s1 + $0x18] sm:$0xf]
  %v92 = vld [vmem:[%s1 + $0x1c] sm:$0xf]
  %v93 = vld [vmem:[%s1 + $0x20] sm:$0xf]
  %v94 = vld [vmem:[%s1 + $0x24] sm:$0xf]
  %v95 = vld [vmem:[%s1 + $0x28] sm:$0xf]
  %v96 = vld [vmem:[%s1 + $0x2c] sm:$0xf]
  %v97 = vld [vmem:[%s1 + $0x30] sm:$0xf]
  %v98 = vld [vmem:[%s1 + $0x34] sm:$0xf]
  %v99 = vld [vmem:[%s1 + $0x38] sm:$0xf]
  %v100 = vld [vmem:[%s1 + $0x3c] sm:$0xf]
  %v101 = vld [vmem:[%s1 + $0x40] sm:$0xf]
  %v102 = vld [vmem:[%s1 + $0x44] sm:$0xf]
  %v103 = vld [vmem:[%s1 + $0x48] sm:$0xf]
  %v104 = vld [vmem:[%s1 + $0x4c] sm:$0xf]
  %v105 = vld [vmem:[%s1 + $0x50] sm:$0xf]
  %v106 = vld [vmem:[%s1 + $0x54] sm:$0xf]
  %v107 = vld [vmem:[%s1 + $0x58] sm:$0xf]
  %v108 = vld [vmem:[%s1 + $0x5c] sm:$0xf]
  %v109 = vld [vmem:[%s1 + $0x60] sm:$0xf]
  %v110 = vld [vmem:[%s1 + $0x64] sm:$0xf]
  %v111 = vld [vmem:[%s1 + $0x68] sm:$0xf]
  %v112 = vld [vmem:[%s1 + $0x6c] sm:$0xf]
  %v113 = vld [vmem:[%s1 + $0x70] sm:$0xf]
  %v114 = vld [vmem:[%s1 + $0x74] sm:$0xf]
  %v115 = vld [vmem:[%s1 + $0x78] sm:$0xf]
  %v116 = vld [vmem:[%s1 + $0x7c] sm:$0xf]
  %v117 = vld [vmem:[%s2] sm:$0x1]
  %v119 = vlaneseq
  %v120 = vshrl.u32 %v119, 7
  %v121 = vsub.s32 0, %v120
  %v122 = vrot.slane %v117, %v121
  %v188 = vunpack.c.l.b16 %v21
  %v189 = vunpack.c.h.b16 %v21
  %v190 = vunpack.c.l.b16 %v22
  %v191 = vunpack.c.h.b16 %v22
  %v192 = vunpack.c.l.b16 %v23
  %v193 = vunpack.c.h.b16 %v23
  %v194 = vunpack.c.l.b16 %v24
  %v195 = vunpack.c.h.b16 %v24
  %v196 = vunpack.c.l.b16 %v25
  %v197 = vunpack.c.h.b16 %v25
  %v198 = vunpack.c.l.b16 %v26
  %v199 = vunpack.c.h.b16 %v26
  %v200 = vunpack.c.l.b16 %v27
  %v201 = vunpack.c.h.b16 %v27
  %v202 = vunpack.c.l.b16 %v28
  %v203 = vunpack.c.h.b16 %v28
  %v204 = vunpack.c.l.b16 %v29
  %v205 = vunpack.c.h.b16 %v29
  %v206 = vunpack.c.l.b16 %v30
  %v207 = vunpack.c.h.b16 %v30
  %v208 = vunpack.c.l.b16 %v31
  %v209 = vunpack.c.h.b16 %v31
  %v210 = vunpack.c.l.b16 %v32
  %v211 = vunpack.c.h.b16 %v32
  %v212 = vunpack.c.l.b16 %v33
  %v213 = vunpack.c.h.b16 %v33
  %v214 = vunpack.c.l.b16 %v34
  %v215 = vunpack.c.h.b16 %v34
  %v216 = vunpack.c.l.b16 %v35
  %v217 = vunpack.c.h.b16 %v35
  %v218 = vunpack.c.l.b16 %v36
  %v219 = vunpack.c.h.b16 %v36
  %v220 = vunpack.c.l.b16 %v37
  %v221 = vunpack.c.h.b16 %v37
  %v222 = vunpack.c.l.b16 %v38
  %v223 = vunpack.c.h.b16 %v38
  %v224 = vunpack.c.l.b16 %v39
  %v225 = vunpack.c.h.b16 %v39
  %v226 = vunpack.c.l.b16 %v40
  %v227 = vunpack.c.h.b16 %v40
  %v228 = vunpack.c.l.b16 %v41
  %v229 = vunpack.c.h.b16 %v41
  %v230 = vunpack.c.l.b16 %v42
  %v231 = vunpack.c.h.b16 %v42
  %v232 = vunpack.c.l.b16 %v43
  %v233 = vunpack.c.h.b16 %v43
  %v234 = vunpack.c.l.b16 %v44
  %v235 = vunpack.c.h.b16 %v44
  %v236 = vunpack.c.l.b16 %v45
  %v237 = vunpack.c.h.b16 %v45
  %v238 = vunpack.c.l.b16 %v46
  %v239 = vunpack.c.h.b16 %v46
  %v240 = vunpack.c.l.b16 %v47
  %v241 = vunpack.c.h.b16 %v47
  %v242 = vunpack.c.l.b16 %v48
  %v243 = vunpack.c.h.b16 %v48
  %v244 = vunpack.c.l.b16 %v49
  %v245 = vunpack.c.h.b16 %v49
  %v246 = vunpack.c.l.b16 %v50
  %v247 = vunpack.c.h.b16 %v50
  %v248 = vunpack.c.l.b16 %v51
  %v249 = vunpack.c.h.b16 %v51
  %v250 = vunpack.c.l.b16 %v52
  %v251 = vunpack.c.h.b16 %v52
  %v252 = vunpack.c.l.b16 %v53
  %v253 = vunpack.c.h.b16 %v53
  %v254 = vunpack.c.l.b16 %v54
  %v255 = vunpack.c.h.b16 %v54
  %v256 = vunpack.c.l.b16 %v55
  %v257 = vunpack.c.h.b16 %v55
  %v258 = vunpack.c.l.b16 %v56
  %v259 = vunpack.c.h.b16 %v56
  %v260 = vunpack.c.l.b16 %v57
  %v261 = vunpack.c.h.b16 %v57
  %v262 = vunpack.c.l.b16 %v58
  %v263 = vunpack.c.h.b16 %v58
  %v264 = vunpack.c.l.b16 %v59
  %v265 = vunpack.c.h.b16 %v59
  %v266 = vunpack.c.l.b16 %v60
  %v267 = vunpack.c.h.b16 %v60
  %v268 = vunpack.c.l.b16 %v61
  %v269 = vunpack.c.h.b16 %v61
  %v270 = vunpack.c.l.b16 %v62
  %v271 = vunpack.c.h.b16 %v62
  %v272 = vunpack.c.l.b16 %v63
  %v273 = vunpack.c.h.b16 %v63
  %v274 = vunpack.c.l.b16 %v64
  %v275 = vunpack.c.h.b16 %v64
  %v276 = vunpack.c.l.b16 %v65
  %v277 = vunpack.c.h.b16 %v65
  %v278 = vunpack.c.l.b16 %v66
  %v279 = vunpack.c.h.b16 %v66
  %v280 = vunpack.c.l.b16 %v67
  %v281 = vunpack.c.h.b16 %v67
  %v282 = vunpack.c.l.b16 %v68
  %v283 = vunpack.c.h.b16 %v68
  %v284 = vunpack.c.l.b16 %v69
  %v285 = vunpack.c.h.b16 %v69
  %v286 = vunpack.c.l.b16 %v70
  %v287 = vunpack.c.h.b16 %v70
  %v288 = vunpack.c.l.b16 %v71
  %v289 = vunpack.c.h.b16 %v71
  %v290 = vunpack.c.l.b16 %v72
  %v291 = vunpack.c.h.b16 %v72
  %v292 = vunpack.c.l.b16 %v73
  %v293 = vunpack.c.h.b16 %v73
  %v294 = vunpack.c.l.b16 %v74
  %v295 = vunpack.c.h.b16 %v74
  %v296 = vunpack.c.l.b16 %v75
  %v297 = vunpack.c.h.b16 %v75
  %v298 = vunpack.c.l.b16 %v76
  %v299 = vunpack.c.h.b16 %v76
  %v300 = vunpack.c.l.b16 %v77
  %v301 = vunpack.c.h.b16 %v77
  %v302 = vunpack.c.l.b16 %v78
  %v303 = vunpack.c.h.b16 %v78
  %v304 = vunpack.c.l.b16 %v79
  %v305 = vunpack.c.h.b16 %v79
  %v306 = vunpack.c.l.b16 %v80
  %v307 = vunpack.c.h.b16 %v80
  %v308 = vunpack.c.l.b16 %v81
  %v309 = vunpack.c.h.b16 %v81
  %v310 = vunpack.c.l.b16 %v82
  %v311 = vunpack.c.h.b16 %v82
  %v312 = vunpack.c.l.b16 %v83
  %v313 = vunpack.c.h.b16 %v83
  %v314 = vunpack.c.l.b16 %v84
  %v315 = vunpack.c.h.b16 %v84
  %v316 = vpack.c.b16 %v190, %v188
  %v317 = vpack.c.b16 %v191, %v189
  %v318 = vpack.c.b16 %v194, %v192
  %v319 = vpack.c.b16 %v195, %v193
  %v320 = vpack.c.b16 %v198, %v196
  %v321 = vpack.c.b16 %v199, %v197
  %v322 = vpack.c.b16 %v202, %v200
  %v323 = vpack.c.b16 %v203, %v201
  %v324 = vpack.c.b16 %v206, %v204
  %v325 = vpack.c.b16 %v207, %v205
  %v326 = vpack.c.b16 %v210, %v208
  %v327 = vpack.c.b16 %v211, %v209
  %v328 = vpack.c.b16 %v214, %v212
  %v329 = vpack.c.b16 %v215, %v213
  %v330 = vpack.c.b16 %v218, %v216
  %v331 = vpack.c.b16 %v219, %v217
  %v332 = vpack.c.b16 %v222, %v220
  %v333 = vpack.c.b16 %v223, %v221
  %v334 = vpack.c.b16 %v226, %v224
  %v335 = vpack.c.b16 %v227, %v225
  %v336 = vpack.c.b16 %v230, %v228
  %v337 = vpack.c.b16 %v231, %v229
  %v338 = vpack.c.b16 %v234, %v232
  %v339 = vpack.c.b16 %v235, %v233
  %v340 = vpack.c.b16 %v238, %v236
  %v341 = vpack.c.b16 %v239, %v237
  %v342 = vpack.c.b16 %v242, %v240
  %v343 = vpack.c.b16 %v243, %v241
  %v344 = vpack.c.b16 %v246, %v244
  %v345 = vpack.c.b16 %v247, %v245
  %v346 = vpack.c.b16 %v250, %v248
  %v347 = vpack.c.b16 %v251, %v249
  %v348 = vpack.c.b16 %v254, %v252
  %v349 = vpack.c.b16 %v255, %v253
  %v350 = vpack.c.b16 %v258, %v256
  %v351 = vpack.c.b16 %v259, %v257
  %v352 = vpack.c.b16 %v262, %v260
  %v353 = vpack.c.b16 %v263, %v261
  %v354 = vpack.c.b16 %v266, %v264
  %v355 = vpack.c.b16 %v267, %v265
  %v356 = vpack.c.b16 %v270, %v268
  %v357 = vpack.c.b16 %v271, %v269
  %v358 = vpack.c.b16 %v274, %v272
  %v359 = vpack.c.b16 %v275, %v273
  %v360 = vpack.c.b16 %v278, %v276
  %v361 = vpack.c.b16 %v279, %v277
  %v362 = vpack.c.b16 %v282, %v280
  %v363 = vpack.c.b16 %v283, %v281
  %v364 = vpack.c.b16 %v286, %v284
  %v365 = vpack.c.b16 %v287, %v285
  %v366 = vpack.c.b16 %v290, %v288
  %v367 = vpack.c.b16 %v291, %v289
  %v368 = vpack.c.b16 %v294, %v292
  %v369 = vpack.c.b16 %v295, %v293
  %v370 = vpack.c.b16 %v298, %v296
  %v371 = vpack.c.b16 %v299, %v297
  %v372 = vpack.c.b16 %v302, %v300
  %v373 = vpack.c.b16 %v303, %v301
  %v374 = vpack.c.b16 %v306, %v304
  %v375 = vpack.c.b16 %v307, %v305
  %v376 = vpack.c.b16 %v310, %v308
  %v377 = vpack.c.b16 %v311, %v309
  %v378 = vpack.c.b16 %v314, %v312
  %v379 = vpack.c.b16 %v315, %v313
  %v476 = vunpack.c.l.b16 %v85
  %v477 = vunpack.c.l.b16 %v86
  %v478 = vunpack.c.l.b16 %v87
  %v479 = vunpack.c.l.b16 %v88
  %v480 = vunpack.c.l.b16 %v89
  %v481 = vunpack.c.l.b16 %v90
  %v482 = vunpack.c.l.b16 %v91
  %v483 = vunpack.c.l.b16 %v92
  %v484 = vunpack.c.l.b16 %v93
  %v485 = vunpack.c.l.b16 %v94
  %v486 = vunpack.c.l.b16 %v95
  %v487 = vunpack.c.l.b16 %v96
  %v488 = vunpack.c.l.b16 %v97
  %v489 = vunpack.c.l.b16 %v98
  %v490 = vunpack.c.l.b16 %v99
  %v491 = vunpack.c.l.b16 %v100
  %v492 = vunpack.c.l.b16 %v101
  %v493 = vunpack.c.l.b16 %v102
  %v494 = vunpack.c.l.b16 %v103
  %v495 = vunpack.c.l.b16 %v104
  %v496 = vunpack.c.l.b16 %v105
  %v497 = vunpack.c.l.b16 %v106
  %v498 = vunpack.c.l.b16 %v107
  %v499 = vunpack.c.l.b16 %v108
  %v500 = vunpack.c.l.b16 %v109
  %v501 = vunpack.c.l.b16 %v110
  %v502 = vunpack.c.l.b16 %v111
  %v503 = vunpack.c.l.b16 %v112
  %v504 = vunpack.c.l.b16 %v113
  %v505 = vunpack.c.l.b16 %v114
  %v506 = vunpack.c.l.b16 %v115
  %v507 = vunpack.c.l.b16 %v116
  %v508 = vpack.c.b16 %v477, %v476
  %v509 = vpack.c.b16 %v479, %v478
  %v510 = vpack.c.b16 %v481, %v480
  %v511 = vpack.c.b16 %v483, %v482
  %v512 = vpack.c.b16 %v485, %v484
  %v513 = vpack.c.b16 %v487, %v486
  %v514 = vpack.c.b16 %v489, %v488
  %v515 = vpack.c.b16 %v491, %v490
  %v516 = vpack.c.b16 %v493, %v492
  %v517 = vpack.c.b16 %v495, %v494
  %v518 = vpack.c.b16 %v497, %v496
  %v519 = vpack.c.b16 %v499, %v498
  %v520 = vpack.c.b16 %v501, %v500
  %v521 = vpack.c.b16 %v503, %v502
  %v522 = vpack.c.b16 %v505, %v504
  %v523 = vpack.c.b16 %v507, %v506
  %540 = vmatprep.subr.bf16.mxu0 0
  %541 = vmatpush1.bf16.msra.mxu0 %v508
  %542 = vmatprep.subr.bf16.mxu0 0
  %543 = vmatpush1.bf16.msra.mxu0 %v509
  %544 = vmatprep.subr.bf16.mxu0 0
  %545 = vmatpush1.bf16.msra.mxu0 %v510
  %546 = vmatprep.subr.bf16.mxu0 0
  %547 = vmatpush1.bf16.msra.mxu0 %v511
  %548 = vmatprep.subr.bf16.mxu0 0
  %549 = vmatpush1.bf16.msra.mxu0 %v512
  %550 = vmatprep.subr.bf16.mxu0 0
  %551 = vmatpush1.bf16.msra.mxu0 %v513
  %552 = vmatprep.subr.bf16.mxu0 0
  %553 = vmatpush1.bf16.msra.mxu0 %v514
  %554 = vmatprep.subr.bf16.mxu0 0
  %555 = vmatpush1.bf16.msra.mxu0 %v515
  %556 = vmatprep.subr.bf16.mxu0 0
  %557 = vmatpush1.bf16.msra.mxu0 %v516
  %558 = vmatprep.subr.bf16.mxu0 0
  %559 = vmatpush1.bf16.msra.mxu0 %v517
  %560 = vmatprep.subr.bf16.mxu0 0
  %561 = vmatpush1.bf16.msra.mxu0 %v518
  %562 = vmatprep.subr.bf16.mxu0 0
  %563 = vmatpush1.bf16.msra.mxu0 %v519
  %564 = vmatprep.subr.bf16.mxu0 0
  %565 = vmatpush1.bf16.msra.mxu0 %v520
  %566 = vmatprep.subr.bf16.mxu0 0
  %567 = vmatpush1.bf16.msra.mxu0 %v521
  %568 = vmatprep.subr.bf16.mxu0 0
  %569 = vmatpush1.bf16.msra.mxu0 %v522
  %570 = vmatprep.subr.bf16.mxu0 0
  %571 = vmatpush1.bf16.msra.mxu0 %v523
  %572 = vmatprep.mubr.bf16.mxu0 %v317
  %573 = vmatmul.mubr.bf16.gmra.mrb[0].mxu0 %v316
  %v574 = vpop.f32.mrb[0].mxu0
  %v575 = vadd.f32 %v122, %v574
  %v576 = vpop.f32.mrb[0].mxu0
  %v577 = vpop.f32.mrb[0].mxu0
  %v578 = vadd.f32 %v122, %v577
  %v579 = vpop.f32.mrb[0].mxu0
  %580 = vmatprep.mubr.bf16.mxu0 %v319
  %581 = vmatmul.mubr.bf16.gmra.mrb[0].mxu0 %v318
  %v582 = vpop.f32.mrb[0].mxu0
  %v583 = vadd.f32 %v122, %v582
  %v584 = vpop.f32.mrb[0].mxu0
  %v585 = vpop.f32.mrb[0].mxu0
  %v586 = vadd.f32 %v122, %v585
  %v587 = vpop.f32.mrb[0].mxu0
  %588 = vmatprep.mubr.bf16.mxu0 %v321
  %589 = vmatmul.mubr.bf16.gmra.mrb[0].mxu0 %v320
  %v590 = vpop.f32.mrb[0].mxu0
  %v591 = vadd.f32 %v122, %v590
  %v592 = vpop.f32.mrb[0].mxu0
  %v593 = vpop.f32.mrb[0].mxu0
  %v594 = vadd.f32 %v122, %v593
  %v595 = vpop.f32.mrb[0].mxu0
  %596 = vmatprep.mubr.bf16.mxu0 %v323
  %597 = vmatmul.mubr.bf16.gmra.mrb[0].mxu0 %v322
  %v598 = vpop.f32.mrb[0].mxu0
  %v599 = vadd.f32 %v122, %v598
  %v600 = vpop.f32.mrb[0].mxu0
  %v601 = vpop.f32.mrb[0].mxu0
  %v602 = vadd.f32 %v122, %v601
  %v603 = vpop.f32.mrb[0].mxu0
  %604 = vmatprep.mubr.bf16.mxu0 %v325
  %605 = vmatmul.mubr.bf16.gmra.mrb[0].mxu0 %v324
  %v606 = vpop.f32.mrb[0].mxu0
  %v607 = vadd.f32 %v122, %v606
  %v608 = vpop.f32.mrb[0].mxu0
  %v609 = vpop.f32.mrb[0].mxu0
  %v610 = vadd.f32 %v122, %v609
  %v611 = vpop.f32.mrb[0].mxu0
  %612 = vmatprep.mubr.bf16.mxu0 %v327
  %613 = vmatmul.mubr.bf16.gmra.mrb[0].mxu0 %v326
  %v614 = vpop.f32.mrb[0].mxu0
  %v615 = vadd.f32 %v122, %v614
  %v616 = vpop.f32.mrb[0].mxu0
  %v617 = vpop.f32.mrb[0].mxu0
  %v618 = vadd.f32 %v122, %v617
  %v619 = vpop.f32.mrb[0].mxu0
  %620 = vmatprep.mubr.bf16.mxu0 %v329
  %621 = vmatmul.mubr.bf16.gmra.mrb[0].mxu0 %v328
  %v622 = vpop.f32.mrb[0].mxu0
  %v623 = vadd.f32 %v122, %v622
  %v624 = vpop.f32.mrb[0].mxu0
  %v625 = vpop.f32.mrb[0].mxu0
  %v626 = vadd.f32 %v122, %v625
  %v627 = vpop.f32.mrb[0].mxu0
  %628 = vmatprep.mubr.bf16.mxu0 %v331
  %629 = vmatmul.mubr.bf16.gmra.mrb[0].mxu0 %v330
  %v630 = vpop.f32.mrb[0].mxu0
  %v631 = vadd.f32 %v122, %v630
  %v632 = vpop.f32.mrb[0].mxu0
  %v633 = vpop.f32.mrb[0].mxu0
  %v634 = vadd.f32 %v122, %v633
  %v635 = vpop.f32.mrb[0].mxu0
  %636 = vmatprep.mubr.bf16.mxu0 %v333
  %637 = vmatmul.mubr.bf16.gmra.mrb[0].mxu0 %v332
  %v638 = vpop.f32.mrb[0].mxu0
  %v639 = vadd.f32 %v122, %v638
  %v640 = vpop.f32.mrb[0].mxu0
  %v641 = vpop.f32.mrb[0].mxu0
  %v642 = vadd.f32 %v122, %v641
  %v643 = vpop.f32.mrb[0].mxu0
  %644 = vmatprep.mubr.bf16.mxu0 %v335
  %645 = vmatmul.mubr.bf16.gmra.mrb[0].mxu0 %v334
  %v646 = vpop.f32.mrb[0].mxu0
  %v647 = vadd.f32 %v122, %v646
  %v648 = vpop.f32.mrb[0].mxu0
  %v649 = vpop.f32.mrb[0].mxu0
  %v650 = vadd.f32 %v122, %v649
  %v651 = vpop.f32.mrb[0].mxu0
  %652 = vmatprep.mubr.bf16.mxu0 %v337
  %653 = vmatmul.mubr.bf16.gmra.mrb[0].mxu0 %v336
  %v654 = vpop.f32.mrb[0].mxu0
  %v655 = vadd.f32 %v122, %v654
  %v656 = vpop.f32.mrb[0].mxu0
  %v657 = vpop.f32.mrb[0].mxu0
  %v658 = vadd.f32 %v122, %v657
  %v659 = vpop.f32.mrb[0].mxu0
  %660 = vmatprep.mubr.bf16.mxu0 %v339
  %661 = vmatmul.mubr.bf16.gmra.mrb[0].mxu0 %v338
  %v662 = vpop.f32.mrb[0].mxu0
  %v663 = vadd.f32 %v122, %v662
  %v664 = vpop.f32.mrb[0].mxu0
  %v665 = vpop.f32.mrb[0].mxu0
  %v666 = vadd.f32 %v122, %v665
  %v667 = vpop.f32.mrb[0].mxu0
  %668 = vmatprep.mubr.bf16.mxu0 %v341
  %669 = vmatmul.mubr.bf16.gmra.mrb[0].mxu0 %v340
  %v670 = vpop.f32.mrb[0].mxu0
  %v671 = vadd.f32 %v122, %v670
  %v672 = vpop.f32.mrb[0].mxu0
  %v673 = vpop.f32.mrb[0].mxu0
  %v674 = vadd.f32 %v122, %v673
  %v675 = vpop.f32.mrb[0].mxu0
  %676 = vmatprep.mubr.bf16.mxu0 %v343
  %677 = vmatmul.mubr.bf16.gmra.mrb[0].mxu0 %v342
  %v678 = vpop.f32.mrb[0].mxu0
  %v679 = vadd.f32 %v122, %v678
  %v680 = vpop.f32.mrb[0].mxu0
  %v681 = vpop.f32.mrb[0].mxu0
  %v682 = vadd.f32 %v122, %v681
  %v683 = vpop.f32.mrb[0].mxu0
  %684 = vmatprep.mubr.bf16.mxu0 %v345
  %685 = vmatmul.mubr.bf16.gmra.mrb[0].mxu0 %v344
  %v686 = vpop.f32.mrb[0].mxu0
  %v687 = vadd.f32 %v122, %v686
  %v688 = vpop.f32.mrb[0].mxu0
  %v689 = vpop.f32.mrb[0].mxu0
  %v690 = vadd.f32 %v122, %v689
  %v691 = vpop.f32.mrb[0].mxu0
  %692 = vmatprep.mubr.bf16.mxu0 %v347
  %693 = vmatmul.mubr.bf16.gmra.mrb[0].mxu0 %v346
  %v694 = vpop.f32.mrb[0].mxu0
  %v695 = vadd.f32 %v122, %v694
  %v696 = vpop.f32.mrb[0].mxu0
  %v697 = vpop.f32.mrb[0].mxu0
  %v698 = vadd.f32 %v122, %v697
  %v699 = vpop.f32.mrb[0].mxu0
  %700 = vmatprep.mubr.bf16.mxu0 %v349
  %701 = vmatmul.mubr.bf16.gmra.mrb[0].mxu0 %v348
  %v702 = vpop.f32.mrb[0].mxu0
  %v703 = vadd.f32 %v122, %v702
  %v704 = vpop.f32.mrb[0].mxu0
  %v705 = vpop.f32.mrb[0].mxu0
  %v706 = vadd.f32 %v122, %v705
  %v707 = vpop.f32.mrb[0].mxu0
  %708 = vmatprep.mubr.bf16.mxu0 %v351
  %709 = vmatmul.mubr.bf16.gmra.mrb[0].mxu0 %v350
  %v710 = vpop.f32.mrb[0].mxu0
  %v711 = vadd.f32 %v122, %v710
  %v712 = vpop.f32.mrb[0].mxu0
  %v713 = vpop.f32.mrb[0].mxu0
  %v714 = vadd.f32 %v122, %v713
  %v715 = vpop.f32.mrb[0].mxu0
  %716 = vmatprep.mubr.bf16.mxu0 %v353
  %717 = vmatmul.mubr.bf16.gmra.mrb[0].mxu0 %v352
  %v718 = vpop.f32.mrb[0].mxu0
  %v719 = vadd.f32 %v122, %v718
  %v720 = vpop.f32.mrb[0].mxu0
  %v721 = vpop.f32.mrb[0].mxu0
  %v722 = vadd.f32 %v122, %v721
  %v723 = vpop.f32.mrb[0].mxu0
  %724 = vmatprep.mubr.bf16.mxu0 %v355
  %725 = vmatmul.mubr.bf16.gmra.mrb[0].mxu0 %v354
  %v726 = vpop.f32.mrb[0].mxu0
  %v727 = vadd.f32 %v122, %v726
  %v728 = vpop.f32.mrb[0].mxu0
  %v729 = vpop.f32.mrb[0].mxu0
  %v730 = vadd.f32 %v122, %v729
  %v731 = vpop.f32.mrb[0].mxu0
  %732 = vmatprep.mubr.bf16.mxu0 %v357
  %733 = vmatmul.mubr.bf16.gmra.mrb[0].mxu0 %v356
  %v734 = vpop.f32.mrb[0].mxu0
  %v735 = vadd.f32 %v122, %v734
  %v736 = vpop.f32.mrb[0].mxu0
  %v737 = vpop.f32.mrb[0].mxu0
  %v738 = vadd.f32 %v122, %v737
  %v739 = vpop.f32.mrb[0].mxu0
  %740 = vmatprep.mubr.bf16.mxu0 %v359
  %741 = vmatmul.mubr.bf16.gmra.mrb[0].mxu0 %v358
  %v742 = vpop.f32.mrb[0].mxu0
  %v743 = vadd.f32 %v122, %v742
  %v744 = vpop.f32.mrb[0].mxu0
  %v745 = vpop.f32.mrb[0].mxu0
  %v746 = vadd.f32 %v122, %v745
  %v747 = vpop.f32.mrb[0].mxu0
  %748 = vmatprep.mubr.bf16.mxu0 %v361
  %749 = vmatmul.mubr.bf16.gmra.mrb[0].mxu0 %v360
  %v750 = vpop.f32.mrb[0].mxu0
  %v751 = vadd.f32 %v122, %v750
  %v752 = vpop.f32.mrb[0].mxu0
  %v753 = vpop.f32.mrb[0].mxu0
  %v754 = vadd.f32 %v122, %v753
  %v755 = vpop.f32.mrb[0].mxu0
  %756 = vmatprep.mubr.bf16.mxu0 %v363
  %757 = vmatmul.mubr.bf16.gmra.mrb[0].mxu0 %v362
  %v758 = vpop.f32.mrb[0].mxu0
  %v759 = vadd.f32 %v122, %v758
  %v760 = vpop.f32.mrb[0].mxu0
  %v761 = vpop.f32.mrb[0].mxu0
  %v762 = vadd.f32 %v122, %v761
  %v763 = vpop.f32.mrb[0].mxu0
  %764 = vmatprep.mubr.bf16.mxu0 %v365
  %765 = vmatmul.mubr.bf16.gmra.mrb[0].mxu0 %v364
  %v766 = vpop.f32.mrb[0].mxu0
  %v767 = vadd.f32 %v122, %v766
  %v768 = vpop.f32.mrb[0].mxu0
  %v769 = vpop.f32.mrb[0].mxu0
  %v770 = vadd.f32 %v122, %v769
  %v771 = vpop.f32.mrb[0].mxu0
  %772 = vmatprep.mubr.bf16.mxu0 %v367
  %773 = vmatmul.mubr.bf16.gmra.mrb[0].mxu0 %v366
  %v774 = vpop.f32.mrb[0].mxu0
  %v775 = vadd.f32 %v122, %v774
  %v776 = vpop.f32.mrb[0].mxu0
  %v777 = vpop.f32.mrb[0].mxu0
  %v778 = vadd.f32 %v122, %v777
  %v779 = vpop.f32.mrb[0].mxu0
  %780 = vmatprep.mubr.bf16.mxu0 %v369
  %781 = vmatmul.mubr.bf16.gmra.mrb[0].mxu0 %v368
  %v782 = vpop.f32.mrb[0].mxu0
  %v783 = vadd.f32 %v122, %v782
  %v784 = vpop.f32.mrb[0].mxu0
  %v785 = vpop.f32.mrb[0].mxu0
  %v786 = vadd.f32 %v122, %v785
  %v787 = vpop.f32.mrb[0].mxu0
  %788 = vmatprep.mubr.bf16.mxu0 %v371
  %789 = vmatmul.mubr.bf16.gmra.mrb[0].mxu0 %v370
  %v790 = vpop.f32.mrb[0].mxu0
  %v791 = vadd.f32 %v122, %v790
  %v792 = vpop.f32.mrb[0].mxu0
  %v793 = vpop.f32.mrb[0].mxu0
  %v794 = vadd.f32 %v122, %v793
  %v795 = vpop.f32.mrb[0].mxu0
  %796 = vmatprep.mubr.bf16.mxu0 %v373
  %797 = vmatmul.mubr.bf16.gmra.mrb[0].mxu0 %v372
  %v798 = vpop.f32.mrb[0].mxu0
  %v799 = vadd.f32 %v122, %v798
  %v800 = vpop.f32.mrb[0].mxu0
  %v801 = vpop.f32.mrb[0].mxu0
  %v802 = vadd.f32 %v122, %v801
  %v803 = vpop.f32.mrb[0].mxu0
  %804 = vmatprep.mubr.bf16.mxu0 %v375
  %805 = vmatmul.mubr.bf16.gmra.mrb[0].mxu0 %v374
  %v806 = vpop.f32.mrb[0].mxu0
  %v807 = vadd.f32 %v122, %v806
  %v808 = vpop.f32.mrb[0].mxu0
  %v809 = vpop.f32.mrb[0].mxu0
  %v810 = vadd.f32 %v122, %v809
  %v811 = vpop.f32.mrb[0].mxu0
  %812 = vmatprep.mubr.bf16.mxu0 %v377
  %813 = vmatmul.mubr.bf16.gmra.mrb[0].mxu0 %v376
  %v814 = vpop.f32.mrb[0].mxu0
  %v815 = vadd.f32 %v122, %v814
  %v816 = vpop.f32.mrb[0].mxu0
  %v817 = vpop.f32.mrb[0].mxu0
  %v818 = vadd.f32 %v122, %v817
  %v819 = vpop.f32.mrb[0].mxu0
  %820 = vmatprep.mubr.bf16.mxu0 %v379
  %821 = vmatmul.mubr.bf16.gmra.mrb[0].mxu0 %v378
  %v822 = vpop.f32.mrb[0].mxu0
  %v823 = vadd.f32 %v122, %v822
  %v824 = vpop.f32.mrb[0].mxu0
  %v825 = vpop.f32.mrb[0].mxu0
  %v826 = vadd.f32 %v122, %v825
  %v827 = vpop.f32.mrb[0].mxu0
  %828 = vdwg.mxu0
  %v829 = vadd.f32 %v575, %v578
  %v830 = vadd.f32 %v829, %v583
  %v831 = vadd.f32 %v830, %v586
  %v832 = vadd.f32 %v831, %v591
  %v833 = vadd.f32 %v832, %v594
  %v834 = vadd.f32 %v833, %v599
  %v835 = vadd.f32 %v834, %v602
  %v836 = vadd.f32 %v835, %v607
  %v837 = vadd.f32 %v836, %v610
  %v838 = vadd.f32 %v837, %v615
  %v839 = vadd.f32 %v838, %v618
  %v840 = vadd.f32 %v839, %v623
  %v841 = vadd.f32 %v840, %v626
  %v842 = vadd.f32 %v841, %v631
  %v843 = vadd.f32 %v842, %v634
  %v844 = vadd.f32 %v843, %v639
  %v845 = vadd.f32 %v844, %v642
  %v846 = vadd.f32 %v845, %v647
  %v847 = vadd.f32 %v846, %v650
  %v848 = vadd.f32 %v847, %v655
  %v849 = vadd.f32 %v848, %v658
  %v850 = vadd.f32 %v849, %v663
  %v851 = vadd.f32 %v850, %v666
  %v852 = vadd.f32 %v851, %v671
  %v853 = vadd.f32 %v852, %v674
  %v854 = vadd.f32 %v853, %v679
  %v855 = vadd.f32 %v854, %v682
  %v856 = vadd.f32 %v855, %v687
  %v857 = vadd.f32 %v856, %v690
  %v858 = vadd.f32 %v857, %v695
  %v859 = vadd.f32 %v858, %v698
  %v860 = vadd.f32 %v859, %v703
  %v861 = vadd.f32 %v860, %v706
  %v862 = vadd.f32 %v861, %v711
  %v863 = vadd.f32 %v862, %v714
  %v864 = vadd.f32 %v863, %v719
  %v865 = vadd.f32 %v864, %v722
  %v866 = vadd.f32 %v865, %v727
  %v867 = vadd.f32 %v866, %v730
  %v868 = vadd.f32 %v867, %v735
  %v869 = vadd.f32 %v868, %v738
  %v870 = vadd.f32 %v869, %v743
  %v871 = vadd.f32 %v870, %v746
  %v872 = vadd.f32 %v871, %v751
  %v873 = vadd.f32 %v872, %v754
  %v874 = vadd.f32 %v873, %v759
  %v875 = vadd.f32 %v874, %v762
  %v876 = vadd.f32 %v875, %v767
  %v877 = vadd.f32 %v876, %v770
  %v878 = vadd.f32 %v877, %v775
  %v879 = vadd.f32 %v878, %v778
  %v880 = vadd.f32 %v879, %v783
  %v881 = vadd.f32 %v880, %v786
  %v882 = vadd.f32 %v881, %v791
  %v883 = vadd.f32 %v882, %v794
  %v884 = vadd.f32 %v883, %v799
  %v885 = vadd.f32 %v884, %v802
  %v886 = vadd.f32 %v885, %v807
  %v887 = vadd.f32 %v886, %v810
  %v888 = vadd.f32 %v887, %v815
  %v889 = vadd.f32 %v888, %v818
  %v890 = vadd.f32 %v889, %v823
  %v891 = vadd.f32 %v890, %v826
  %v892 = vrot.slane %v891, 4
  %v893 = vadd.f32 %v891, %v892
  %v894 = vrot.slane %v893, 2
  %v895 = vadd.f32 %v893, %v894
  %v896 = vrot.slane %v895, 1
  %v897 = vadd.f32 %v895, %v896
  %v898 = vmul.f32 %v897, 0.001953125
  %v899 = vmul.f32 %v575, %v575
  %v900 = vmul.f32 %v578, %v578
  %v901 = vmul.f32 %v583, %v583
  %v902 = vmul.f32 %v586, %v586
  %v903 = vmul.f32 %v591, %v591
  %v904 = vmul.f32 %v594, %v594
  %v905 = vmul.f32 %v599, %v599
  %v906 = vmul.f32 %v602, %v602
  %v907 = vmul.f32 %v607, %v607
  %v908 = vmul.f32 %v610, %v610
  %v909 = vmul.f32 %v615, %v615
  %v910 = vmul.f32 %v618, %v618
  %v911 = vmul.f32 %v623, %v623
  %v912 = vmul.f32 %v626, %v626
  %v913 = vmul.f32 %v631, %v631
  %v914 = vmul.f32 %v634, %v634
  %v915 = vmul.f32 %v639, %v639
  %v916 = vmul.f32 %v642, %v642
  %v917 = vmul.f32 %v647, %v647
  %v918 = vmul.f32 %v650, %v650
  %v919 = vmul.f32 %v655, %v655
  %v920 = vmul.f32 %v658, %v658
  %v921 = vmul.f32 %v663, %v663
  %v922 = vmul.f32 %v666, %v666
  %v923 = vmul.f32 %v671, %v671
  %v924 = vmul.f32 %v674, %v674
  %v925 = vmul.f32 %v679, %v679
  %v926 = vmul.f32 %v682, %v682
  %v927 = vmul.f32 %v687, %v687
  %v928 = vmul.f32 %v690, %v690
  %v929 = vmul.f32 %v695, %v695
  %v930 = vmul.f32 %v698, %v698
  %v931 = vmul.f32 %v703, %v703
  %v932 = vmul.f32 %v706, %v706
  %v933 = vmul.f32 %v711, %v711
  %v934 = vmul.f32 %v714, %v714
  %v935 = vmul.f32 %v719, %v719
  %v936 = vmul.f32 %v722, %v722
  %v937 = vmul.f32 %v727, %v727
  %v938 = vmul.f32 %v730, %v730
  %v939 = vmul.f32 %v735, %v735
  %v940 = vmul.f32 %v738, %v738
  %v941 = vmul.f32 %v743, %v743
  %v942 = vmul.f32 %v746, %v746
  %v943 = vmul.f32 %v751, %v751
  %v944 = vmul.f32 %v754, %v754
  %v945 = vmul.f32 %v759, %v759
  %v946 = vmul.f32 %v762, %v762
  %v947 = vmul.f32 %v767, %v767
  %v948 = vmul.f32 %v770, %v770
  %v949 = vmul.f32 %v775, %v775
  %v950 = vmul.f32 %v778, %v778
  %v951 = vmul.f32 %v783, %v783
  %v952 = vmul.f32 %v786, %v786
  %v953 = vmul.f32 %v791, %v791
  %v954 = vmul.f32 %v794, %v794
  %v955 = vmul.f32 %v799, %v799
  %v956 = vmul.f32 %v802, %v802
  %v957 = vmul.f32 %v807, %v807
  %v958 = vmul.f32 %v810, %v810
  %v959 = vmul.f32 %v815, %v815
  %v960 = vmul.f32 %v818, %v818
  %v961 = vmul.f32 %v823, %v823
  %v962 = vmul.f32 %v826, %v826
  %v963 = vadd.f32 %v899, %v900
  %v964 = vadd.f32 %v963, %v901
  %v965 = vadd.f32 %v964, %v902
  %v966 = vadd.f32 %v965, %v903
  %v967 = vadd.f32 %v966, %v904
  %v968 = vadd.f32 %v967, %v905
  %v969 = vadd.f32 %v968, %v906
  %v970 = vadd.f32 %v969, %v907
  %v971 = vadd.f32 %v970, %v908
  %v972 = vadd.f32 %v971, %v909
  %v973 = vadd.f32 %v972, %v910
  %v974 = vadd.f32 %v973, %v911
  %v975 = vadd.f32 %v974, %v912
  %v976 = vadd.f32 %v975, %v913
  %v977 = vadd.f32 %v976, %v914
  %v978 = vadd.f32 %v977, %v915
  %v979 = vadd.f32 %v978, %v916
  %v980 = vadd.f32 %v979, %v917
  %v981 = vadd.f32 %v980, %v918
  %v982 = vadd.f32 %v981, %v919
  %v983 = vadd.f32 %v982, %v920
  %v984 = vadd.f32 %v983, %v921
  %v985 = vadd.f32 %v984, %v922
  %v986 = vadd.f32 %v985, %v923
  %v987 = vadd.f32 %v986, %v924
  %v988 = vadd.f32 %v987, %v925
  %v989 = vadd.f32 %v988, %v926
  %v990 = vadd.f32 %v989, %v927
  %v991 = vadd.f32 %v990, %v928
  %v992 = vadd.f32 %v991, %v929
  %v993 = vadd.f32 %v992, %v930
  %v994 = vadd.f32 %v993, %v931
  %v995 = vadd.f32 %v994, %v932
  %v996 = vadd.f32 %v995, %v933
  %v997 = vadd.f32 %v996, %v934
  %v998 = vadd.f32 %v997, %v935
  %v999 = vadd.f32 %v998, %v936
  %v1000 = vadd.f32 %v999, %v937
  %v1001 = vadd.f32 %v1000, %v938
  %v1002 = vadd.f32 %v1001, %v939
  %v1003 = vadd.f32 %v1002, %v940
  %v1004 = vadd.f32 %v1003, %v941
  %v1005 = vadd.f32 %v1004, %v942
  %v1006 = vadd.f32 %v1005, %v943
  %v1007 = vadd.f32 %v1006, %v944
  %v1008 = vadd.f32 %v1007, %v945
  %v1009 = vadd.f32 %v1008, %v946
  %v1010 = vadd.f32 %v1009, %v947
  %v1011 = vadd.f32 %v1010, %v948
  %v1012 = vadd.f32 %v1011, %v949
  %v1013 = vadd.f32 %v1012, %v950
  %v1014 = vadd.f32 %v1013, %v951
  %v1015 = vadd.f32 %v1014, %v952
  %v1016 = vadd.f32 %v1015, %v953
  %v1017 = vadd.f32 %v1016, %v954
  %v1018 = vadd.f32 %v1017, %v955
  %v1019 = vadd.f32 %v1018, %v956
  %v1020 = vadd.f32 %v1019, %v957
  %v1021 = vadd.f32 %v1020, %v958
  %v1022 = vadd.f32 %v1021, %v959
  %v1023 = vadd.f32 %v1022, %v960
  %v1024 = vadd.f32 %v1023, %v961
  %v1025 = vadd.f32 %v1024, %v962
  %v1026 = vrot.slane %v1025, 4
  %v1027 = vadd.f32 %v1025, %v1026
  %v1028 = vrot.slane %v1027, 2
  %v1029 = vadd.f32 %v1027, %v1028
  %v1030 = vrot.slane %v1029, 1
  %v1031 = vadd.f32 %v1029, %v1030
  %v1032 = vmul.f32 %v1031, 0.001953125
  %v1033 = vmul.f32 %v898, %v898
  %v1034 = vsub.f32 %v1032, %v1033
  %v1035 = vadd.f32 %v1034, 1e-05
  %v1036 = vrsqrt.pop %v1035
  %v1037 = vld [vmem:[%s3] sm:$0x1]
  %v1038 = vmul.f32 %v1036, %v1037
  %v1039 = vsub.f32 %v575, %v898
  %v1040 = vsub.f32 %v578, %v898
  %v1041 = vsub.f32 %v583, %v898
  %v1042 = vsub.f32 %v586, %v898
  %v1043 = vsub.f32 %v591, %v898
  %v1044 = vsub.f32 %v594, %v898
  %v1045 = vsub.f32 %v599, %v898
  %v1046 = vsub.f32 %v602, %v898
  %v1047 = vsub.f32 %v607, %v898
  %v1048 = vsub.f32 %v610, %v898
  %v1049 = vsub.f32 %v615, %v898
  %v1050 = vsub.f32 %v618, %v898
  %v1051 = vsub.f32 %v623, %v898
  %v1052 = vsub.f32 %v626, %v898
  %v1053 = vsub.f32 %v631, %v898
  %v1054 = vsub.f32 %v634, %v898
  %v1055 = vsub.f32 %v639, %v898
  %v1056 = vsub.f32 %v642, %v898
  %v1057 = vsub.f32 %v647, %v898
  %v1058 = vsub.f32 %v650, %v898
  %v1059 = vsub.f32 %v655, %v898
  %v1060 = vsub.f32 %v658, %v898
  %v1061 = vsub.f32 %v663, %v898
  %v1062 = vsub.f32 %v666, %v898
  %v1063 = vsub.f32 %v671, %v898
  %v1064 = vsub.f32 %v674, %v898
  %v1065 = vsub.f32 %v679, %v898
  %v1066 = vsub.f32 %v682, %v898
  %v1067 = vsub.f32 %v687, %v898
  %v1068 = vsub.f32 %v690, %v898
  %v1069 = vsub.f32 %v695, %v898
  %v1070 = vsub.f32 %v698, %v898
  %v1071 = vsub.f32 %v703, %v898
  %v1072 = vsub.f32 %v706, %v898
  %v1073 = vsub.f32 %v711, %v898
  %v1074 = vsub.f32 %v714, %v898
  %v1075 = vsub.f32 %v719, %v898
  %v1076 = vsub.f32 %v722, %v898
  %v1077 = vsub.f32 %v727, %v898
  %v1078 = vsub.f32 %v730, %v898
  %v1079 = vsub.f32 %v735, %v898
  %v1080 = vsub.f32 %v738, %v898
  %v1081 = vsub.f32 %v743, %v898
  %v1082 = vsub.f32 %v746, %v898
  %v1083 = vsub.f32 %v751, %v898
  %v1084 = vsub.f32 %v754, %v898
  %v1085 = vsub.f32 %v759, %v898
  %v1086 = vsub.f32 %v762, %v898
  %v1087 = vsub.f32 %v767, %v898
  %v1088 = vsub.f32 %v770, %v898
  %v1089 = vsub.f32 %v775, %v898
  %v1090 = vsub.f32 %v778, %v898
  %v1091 = vsub.f32 %v783, %v898
  %v1092 = vsub.f32 %v786, %v898
  %v1093 = vsub.f32 %v791, %v898
  %v1094 = vsub.f32 %v794, %v898
  %v1095 = vsub.f32 %v799, %v898
  %v1096 = vsub.f32 %v802, %v898
  %v1097 = vsub.f32 %v807, %v898
  %v1098 = vsub.f32 %v810, %v898
  %v1099 = vsub.f32 %v815, %v898
  %v1100 = vsub.f32 %v818, %v898
  %v1101 = vsub.f32 %v823, %v898
  %v1102 = vsub.f32 %v826, %v898
  %v1103 = vlaneseq
  %v1104 = vshrl.u32 %v1103, 7
  %v1105 = vsub.s32 0, %v1104
  %v1106 = vrot.slane %v1038, %v1105
  %v1107 = vmul.f32 %v1039, %v1106
  %v1108 = vmul.f32 %v1040, %v1106
  %v1109 = vmul.f32 %v1041, %v1106
  %v1110 = vmul.f32 %v1042, %v1106
  %v1111 = vmul.f32 %v1043, %v1106
  %v1112 = vmul.f32 %v1044, %v1106
  %v1113 = vmul.f32 %v1045, %v1106
  %v1114 = vmul.f32 %v1046, %v1106
  %v1115 = vmul.f32 %v1047, %v1106
  %v1116 = vmul.f32 %v1048, %v1106
  %v1117 = vmul.f32 %v1049, %v1106
  %v1118 = vmul.f32 %v1050, %v1106
  %v1119 = vmul.f32 %v1051, %v1106
  %v1120 = vmul.f32 %v1052, %v1106
  %v1121 = vmul.f32 %v1053, %v1106
  %v1122 = vmul.f32 %v1054, %v1106
  %v1123 = vmul.f32 %v1055, %v1106
  %v1124 = vmul.f32 %v1056, %v1106
  %v1125 = vmul.f32 %v1057, %v1106
  %v1126 = vmul.f32 %v1058, %v1106
  %v1127 = vmul.f32 %v1059, %v1106
  %v1128 = vmul.f32 %v1060, %v1106
  %v1129 = vmul.f32 %v1061, %v1106
  %v1130 = vmul.f32 %v1062, %v1106
  %v1131 = vmul.f32 %v1063, %v1106
  %v1132 = vmul.f32 %v1064, %v1106
  %v1133 = vmul.f32 %v1065, %v1106
  %v1134 = vmul.f32 %v1066, %v1106
  %v1135 = vmul.f32 %v1067, %v1106
  %v1136 = vmul.f32 %v1068, %v1106
  %v1137 = vmul.f32 %v1069, %v1106
  %v1138 = vmul.f32 %v1070, %v1106
  %v1139 = vmul.f32 %v1071, %v1106
  %v1140 = vmul.f32 %v1072, %v1106
  %v1141 = vmul.f32 %v1073, %v1106
  %v1142 = vmul.f32 %v1074, %v1106
  %v1143 = vmul.f32 %v1075, %v1106
  %v1144 = vmul.f32 %v1076, %v1106
  %v1145 = vmul.f32 %v1077, %v1106
  %v1146 = vmul.f32 %v1078, %v1106
  %v1147 = vmul.f32 %v1079, %v1106
  %v1148 = vmul.f32 %v1080, %v1106
  %v1149 = vmul.f32 %v1081, %v1106
  %v1150 = vmul.f32 %v1082, %v1106
  %v1151 = vmul.f32 %v1083, %v1106
  %v1152 = vmul.f32 %v1084, %v1106
  %v1153 = vmul.f32 %v1085, %v1106
  %v1154 = vmul.f32 %v1086, %v1106
  %v1155 = vmul.f32 %v1087, %v1106
  %v1156 = vmul.f32 %v1088, %v1106
  %v1157 = vmul.f32 %v1089, %v1106
  %v1158 = vmul.f32 %v1090, %v1106
  %v1159 = vmul.f32 %v1091, %v1106
  %v1160 = vmul.f32 %v1092, %v1106
  %v1161 = vmul.f32 %v1093, %v1106
  %v1162 = vmul.f32 %v1094, %v1106
  %v1163 = vmul.f32 %v1095, %v1106
  %v1164 = vmul.f32 %v1096, %v1106
  %v1165 = vmul.f32 %v1097, %v1106
  %v1166 = vmul.f32 %v1098, %v1106
  %v1167 = vmul.f32 %v1099, %v1106
  %v1168 = vmul.f32 %v1100, %v1106
  %v1169 = vmul.f32 %v1101, %v1106
  %v1170 = vmul.f32 %v1102, %v1106
  %v1171 = vld [vmem:[%s4] sm:$0x1]
  %v1173 = vlaneseq
  %v1174 = vshrl.u32 %v1173, 7
  %v1175 = vsub.s32 0, %v1174
  %v1176 = vrot.slane %v1171, %v1175
  %v1178 = vadd.f32 %v1107, %v1176
  %v1179 = vadd.f32 %v1108, %v1176
  %v1180 = vadd.f32 %v1109, %v1176
  %v1181 = vadd.f32 %v1110, %v1176
  %v1182 = vadd.f32 %v1111, %v1176
  %v1183 = vadd.f32 %v1112, %v1176
  %v1184 = vadd.f32 %v1113, %v1176
  %v1185 = vadd.f32 %v1114, %v1176
  %v1186 = vadd.f32 %v1115, %v1176
  %v1187 = vadd.f32 %v1116, %v1176
  %v1188 = vadd.f32 %v1117, %v1176
  %v1189 = vadd.f32 %v1118, %v1176
  %v1190 = vadd.f32 %v1119, %v1176
  %v1191 = vadd.f32 %v1120, %v1176
  %v1192 = vadd.f32 %v1121, %v1176
  %v1193 = vadd.f32 %v1122, %v1176
  %v1194 = vadd.f32 %v1123, %v1176
  %v1195 = vadd.f32 %v1124, %v1176
  %v1196 = vadd.f32 %v1125, %v1176
  %v1197 = vadd.f32 %v1126, %v1176
  %v1198 = vadd.f32 %v1127, %v1176
  %v1199 = vadd.f32 %v1128, %v1176
  %v1200 = vadd.f32 %v1129, %v1176
  %v1201 = vadd.f32 %v1130, %v1176
  %v1202 = vadd.f32 %v1131, %v1176
  %v1203 = vadd.f32 %v1132, %v1176
  %v1204 = vadd.f32 %v1133, %v1176
  %v1205 = vadd.f32 %v1134, %v1176
  %v1206 = vadd.f32 %v1135, %v1176
  %v1207 = vadd.f32 %v1136, %v1176
  %v1208 = vadd.f32 %v1137, %v1176
  %v1209 = vadd.f32 %v1138, %v1176
  %v1210 = vadd.f32 %v1139, %v1176
  %v1211 = vadd.f32 %v1140, %v1176
  %v1212 = vadd.f32 %v1141, %v1176
  %v1213 = vadd.f32 %v1142, %v1176
  %v1214 = vadd.f32 %v1143, %v1176
  %v1215 = vadd.f32 %v1144, %v1176
  %v1216 = vadd.f32 %v1145, %v1176
  %v1217 = vadd.f32 %v1146, %v1176
  %v1218 = vadd.f32 %v1147, %v1176
  %v1219 = vadd.f32 %v1148, %v1176
  %v1220 = vadd.f32 %v1149, %v1176
  %v1221 = vadd.f32 %v1150, %v1176
  %v1222 = vadd.f32 %v1151, %v1176
  %v1223 = vadd.f32 %v1152, %v1176
  %v1224 = vadd.f32 %v1153, %v1176
  %v1225 = vadd.f32 %v1154, %v1176
  %v1226 = vadd.f32 %v1155, %v1176
  %v1227 = vadd.f32 %v1156, %v1176
  %v1228 = vadd.f32 %v1157, %v1176
  %v1229 = vadd.f32 %v1158, %v1176
  %v1230 = vadd.f32 %v1159, %v1176
  %v1231 = vadd.f32 %v1160, %v1176
  %v1232 = vadd.f32 %v1161, %v1176
  %v1233 = vadd.f32 %v1162, %v1176
  %v1234 = vadd.f32 %v1163, %v1176
  %v1235 = vadd.f32 %v1164, %v1176
  %v1236 = vadd.f32 %v1165, %v1176
  %v1237 = vadd.f32 %v1166, %v1176
  %v1238 = vadd.f32 %v1167, %v1176
  %v1239 = vadd.f32 %v1168, %v1176
  %v1240 = vadd.f32 %v1169, %v1176
  %v1241 = vadd.f32 %v1170, %v1176
  %v1242 = vpack.c.bf16 %v1179, %v1178
  %v1243 = vpack.c.bf16 %v1181, %v1180
  %v1244 = vpack.c.bf16 %v1183, %v1182
  %v1245 = vpack.c.bf16 %v1185, %v1184
  %v1246 = vpack.c.bf16 %v1187, %v1186
  %v1247 = vpack.c.bf16 %v1189, %v1188
  %v1248 = vpack.c.bf16 %v1191, %v1190
  %v1249 = vpack.c.bf16 %v1193, %v1192
  %v1250 = vpack.c.bf16 %v1195, %v1194
  %v1251 = vpack.c.bf16 %v1197, %v1196
  %v1252 = vpack.c.bf16 %v1199, %v1198
  %v1253 = vpack.c.bf16 %v1201, %v1200
  %v1254 = vpack.c.bf16 %v1203, %v1202
  %v1255 = vpack.c.bf16 %v1205, %v1204
  %v1256 = vpack.c.bf16 %v1207, %v1206
  %v1257 = vpack.c.bf16 %v1209, %v1208
  %v1258 = vpack.c.bf16 %v1211, %v1210
  %v1259 = vpack.c.bf16 %v1213, %v1212
  %v1260 = vpack.c.bf16 %v1215, %v1214
  %v1261 = vpack.c.bf16 %v1217, %v1216
  %v1262 = vpack.c.bf16 %v1219, %v1218
  %v1263 = vpack.c.bf16 %v1221, %v1220
  %v1264 = vpack.c.bf16 %v1223, %v1222
  %v1265 = vpack.c.bf16 %v1225, %v1224
  %v1266 = vpack.c.bf16 %v1227, %v1226
  %v1267 = vpack.c.bf16 %v1229, %v1228
  %v1268 = vpack.c.bf16 %v1231, %v1230
  %v1269 = vpack.c.bf16 %v1233, %v1232
  %v1270 = vpack.c.bf16 %v1235, %v1234
  %v1271 = vpack.c.bf16 %v1237, %v1236
  %v1272 = vpack.c.bf16 %v1239, %v1238
  %v1273 = vpack.c.bf16 %v1241, %v1240
  %v1306 = vunpack.c.l.b16 %v1242
  %v1307 = vunpack.c.h.b16 %v1242
  %v1308 = vunpack.c.l.b16 %v1243
  %v1309 = vunpack.c.h.b16 %v1243
  %v1310 = vunpack.c.l.b16 %v1244
  %v1311 = vunpack.c.h.b16 %v1244
  %v1312 = vunpack.c.l.b16 %v1245
  %v1313 = vunpack.c.h.b16 %v1245
  %v1314 = vunpack.c.l.b16 %v1246
  %v1315 = vunpack.c.h.b16 %v1246
  %v1316 = vunpack.c.l.b16 %v1247
  %v1317 = vunpack.c.h.b16 %v1247
  %v1318 = vunpack.c.l.b16 %v1248
  %v1319 = vunpack.c.h.b16 %v1248
  %v1320 = vunpack.c.l.b16 %v1249
  %v1321 = vunpack.c.h.b16 %v1249
  %v1322 = vunpack.c.l.b16 %v1250
  %v1323 = vunpack.c.h.b16 %v1250
  %v1324 = vunpack.c.l.b16 %v1251
  %v1325 = vunpack.c.h.b16 %v1251
  %v1326 = vunpack.c.l.b16 %v1252
  %v1327 = vunpack.c.h.b16 %v1252
  %v1328 = vunpack.c.l.b16 %v1253
  %v1329 = vunpack.c.h.b16 %v1253
  %v1330 = vunpack.c.l.b16 %v1254
  %v1331 = vunpack.c.h.b16 %v1254
  %v1332 = vunpack.c.l.b16 %v1255
  %v1333 = vunpack.c.h.b16 %v1255
  %v1334 = vunpack.c.l.b16 %v1256
  %v1335 = vunpack.c.h.b16 %v1256
  %v1336 = vunpack.c.l.b16 %v1257
  %v1337 = vunpack.c.h.b16 %v1257
  %v1338 = vunpack.c.l.b16 %v1258
  %v1339 = vunpack.c.h.b16 %v1258
  %v1340 = vunpack.c.l.b16 %v1259
  %v1341 = vunpack.c.h.b16 %v1259
  %v1342 = vunpack.c.l.b16 %v1260
  %v1343 = vunpack.c.h.b16 %v1260
  %v1344 = vunpack.c.l.b16 %v1261
  %v1345 = vunpack.c.h.b16 %v1261
  %v1346 = vunpack.c.l.b16 %v1262
  %v1347 = vunpack.c.h.b16 %v1262
  %v1348 = vunpack.c.l.b16 %v1263
  %v1349 = vunpack.c.h.b16 %v1263
  %v1350 = vunpack.c.l.b16 %v1264
  %v1351 = vunpack.c.h.b16 %v1264
  %v1352 = vunpack.c.l.b16 %v1265
  %v1353 = vunpack.c.h.b16 %v1265
  %v1354 = vunpack.c.l.b16 %v1266
  %v1355 = vunpack.c.h.b16 %v1266
  %v1356 = vunpack.c.l.b16 %v1267
  %v1357 = vunpack.c.h.b16 %v1267
  %v1358 = vunpack.c.l.b16 %v1268
  %v1359 = vunpack.c.h.b16 %v1268
  %v1360 = vunpack.c.l.b16 %v1269
  %v1361 = vunpack.c.h.b16 %v1269
  %v1362 = vunpack.c.l.b16 %v1270
  %v1363 = vunpack.c.h.b16 %v1270
  %v1364 = vunpack.c.l.b16 %v1271
  %v1365 = vunpack.c.h.b16 %v1271
  %v1366 = vunpack.c.l.b16 %v1272
  %v1367 = vunpack.c.h.b16 %v1272
  %v1368 = vunpack.c.l.b16 %v1273
  %v1369 = vunpack.c.h.b16 %v1273
  %v1370 = vpack.c.b16 %v1306, %v1306
  %v1371 = vpack.c.b16 %v1307, %v1307
  %v1372 = vpack.c.b16 %v1308, %v1308
  %v1373 = vpack.c.b16 %v1309, %v1309
  %v1374 = vpack.c.b16 %v1310, %v1310
  %v1375 = vpack.c.b16 %v1311, %v1311
  %v1376 = vpack.c.b16 %v1312, %v1312
  %v1377 = vpack.c.b16 %v1313, %v1313
  %v1378 = vpack.c.b16 %v1314, %v1314
  %v1379 = vpack.c.b16 %v1315, %v1315
  %v1380 = vpack.c.b16 %v1316, %v1316
  %v1381 = vpack.c.b16 %v1317, %v1317
  %v1382 = vpack.c.b16 %v1318, %v1318
  %v1383 = vpack.c.b16 %v1319, %v1319
  %v1384 = vpack.c.b16 %v1320, %v1320
  %v1385 = vpack.c.b16 %v1321, %v1321
  %v1386 = vpack.c.b16 %v1322, %v1322
  %v1387 = vpack.c.b16 %v1323, %v1323
  %v1388 = vpack.c.b16 %v1324, %v1324
  %v1389 = vpack.c.b16 %v1325, %v1325
  %v1390 = vpack.c.b16 %v1326, %v1326
  %v1391 = vpack.c.b16 %v1327, %v1327
  %v1392 = vpack.c.b16 %v1328, %v1328
  %v1393 = vpack.c.b16 %v1329, %v1329
  %v1394 = vpack.c.b16 %v1330, %v1330
  %v1395 = vpack.c.b16 %v1331, %v1331
  %v1396 = vpack.c.b16 %v1332, %v1332
  %v1397 = vpack.c.b16 %v1333, %v1333
  %v1398 = vpack.c.b16 %v1334, %v1334
  %v1399 = vpack.c.b16 %v1335, %v1335
  %v1400 = vpack.c.b16 %v1336, %v1336
  %v1401 = vpack.c.b16 %v1337, %v1337
  %v1402 = vpack.c.b16 %v1338, %v1338
  %v1403 = vpack.c.b16 %v1339, %v1339
  %v1404 = vpack.c.b16 %v1340, %v1340
  %v1405 = vpack.c.b16 %v1341, %v1341
  %v1406 = vpack.c.b16 %v1342, %v1342
  %v1407 = vpack.c.b16 %v1343, %v1343
  %v1408 = vpack.c.b16 %v1344, %v1344
  %v1409 = vpack.c.b16 %v1345, %v1345
  %v1410 = vpack.c.b16 %v1346, %v1346
  %v1411 = vpack.c.b16 %v1347, %v1347
  %v1412 = vpack.c.b16 %v1348, %v1348
  %v1413 = vpack.c.b16 %v1349, %v1349
  %v1414 = vpack.c.b16 %v1350, %v1350
  %v1415 = vpack.c.b16 %v1351, %v1351
  %v1416 = vpack.c.b16 %v1352, %v1352
  %v1417 = vpack.c.b16 %v1353, %v1353
  %v1418 = vpack.c.b16 %v1354, %v1354
  %v1419 = vpack.c.b16 %v1355, %v1355
  %v1420 = vpack.c.b16 %v1356, %v1356
  %v1421 = vpack.c.b16 %v1357, %v1357
  %v1422 = vpack.c.b16 %v1358, %v1358
  %v1423 = vpack.c.b16 %v1359, %v1359
  %v1424 = vpack.c.b16 %v1360, %v1360
  %v1425 = vpack.c.b16 %v1361, %v1361
  %v1426 = vpack.c.b16 %v1362, %v1362
  %v1427 = vpack.c.b16 %v1363, %v1363
  %v1428 = vpack.c.b16 %v1364, %v1364
  %v1429 = vpack.c.b16 %v1365, %v1365
  %v1430 = vpack.c.b16 %v1366, %v1366
  %v1431 = vpack.c.b16 %v1367, %v1367
  %v1432 = vpack.c.b16 %v1368, %v1368
  %v1433 = vpack.c.b16 %v1369, %v1369
  %1498 = vst [vmem:[%s5] sm:$0xf] %v1370
  %1499 = vst [vmem:[%s5 + $0x4] sm:$0xf] %v1371
  %1500 = vst [vmem:[%s5 + $0x8] sm:$0xf] %v1372
  %1501 = vst [vmem:[%s5 + $0xc] sm:$0xf] %v1373
  %1502 = vst [vmem:[%s5 + $0x10] sm:$0xf] %v1374
  %1503 = vst [vmem:[%s5 + $0x14] sm:$0xf] %v1375
  %1504 = vst [vmem:[%s5 + $0x18] sm:$0xf] %v1376
  %1505 = vst [vmem:[%s5 + $0x1c] sm:$0xf] %v1377
  %1506 = vst [vmem:[%s5 + $0x20] sm:$0xf] %v1378
  %1507 = vst [vmem:[%s5 + $0x24] sm:$0xf] %v1379
  %1508 = vst [vmem:[%s5 + $0x28] sm:$0xf] %v1380
  %1509 = vst [vmem:[%s5 + $0x2c] sm:$0xf] %v1381
  %1510 = vst [vmem:[%s5 + $0x30] sm:$0xf] %v1382
  %1511 = vst [vmem:[%s5 + $0x34] sm:$0xf] %v1383
  %1512 = vst [vmem:[%s5 + $0x38] sm:$0xf] %v1384
  %1513 = vst [vmem:[%s5 + $0x3c] sm:$0xf] %v1385
  %1514 = vst [vmem:[%s5 + $0x40] sm:$0xf] %v1386
  %1515 = vst [vmem:[%s5 + $0x44] sm:$0xf] %v1387
  %1516 = vst [vmem:[%s5 + $0x48] sm:$0xf] %v1388
  %1517 = vst [vmem:[%s5 + $0x4c] sm:$0xf] %v1389
  %1518 = vst [vmem:[%s5 + $0x50] sm:$0xf] %v1390
  %1519 = vst [vmem:[%s5 + $0x54] sm:$0xf] %v1391
  %1520 = vst [vmem:[%s5 + $0x58] sm:$0xf] %v1392
  %1521 = vst [vmem:[%s5 + $0x5c] sm:$0xf] %v1393
  %1522 = vst [vmem:[%s5 + $0x60] sm:$0xf] %v1394
  %1523 = vst [vmem:[%s5 + $0x64] sm:$0xf] %v1395
  %1524 = vst [vmem:[%s5 + $0x68] sm:$0xf] %v1396
  %1525 = vst [vmem:[%s5 + $0x6c] sm:$0xf] %v1397
  %1526 = vst [vmem:[%s5 + $0x70] sm:$0xf] %v1398
  %1527 = vst [vmem:[%s5 + $0x74] sm:$0xf] %v1399
  %1528 = vst [vmem:[%s5 + $0x78] sm:$0xf] %v1400
  %1529 = vst [vmem:[%s5 + $0x7c] sm:$0xf] %v1401
  %1530 = vst [vmem:[%s5 + $0x80] sm:$0xf] %v1402
  %1531 = vst [vmem:[%s5 + $0x84] sm:$0xf] %v1403
  %1532 = vst [vmem:[%s5 + $0x88] sm:$0xf] %v1404
  %1533 = vst [vmem:[%s5 + $0x8c] sm:$0xf] %v1405
  %1534 = vst [vmem:[%s5 + $0x90] sm:$0xf] %v1406
  %1535 = vst [vmem:[%s5 + $0x94] sm:$0xf] %v1407
  %1536 = vst [vmem:[%s5 + $0x98] sm:$0xf] %v1408
  %1537 = vst [vmem:[%s5 + $0x9c] sm:$0xf] %v1409
  %1538 = vst [vmem:[%s5 + $0xa0] sm:$0xf] %v1410
  %1539 = vst [vmem:[%s5 + $0xa4] sm:$0xf] %v1411
  %1540 = vst [vmem:[%s5 + $0xa8] sm:$0xf] %v1412
  %1541 = vst [vmem:[%s5 + $0xac] sm:$0xf] %v1413
  %1542 = vst [vmem:[%s5 + $0xb0] sm:$0xf] %v1414
  %1543 = vst [vmem:[%s5 + $0xb4] sm:$0xf] %v1415
  %1544 = vst [vmem:[%s5 + $0xb8] sm:$0xf] %v1416
  %1545 = vst [vmem:[%s5 + $0xbc] sm:$0xf] %v1417
  %1546 = vst [vmem:[%s5 + $0xc0] sm:$0xf] %v1418
  %1547 = vst [vmem:[%s5 + $0xc4] sm:$0xf] %v1419
  %1548 = vst [vmem:[%s5 + $0xc8] sm:$0xf] %v1420
  %1549 = vst [vmem:[%s5 + $0xcc] sm:$0xf] %v1421
  %1550 = vst [vmem:[%s5 + $0xd0] sm:$0xf] %v1422
  %1551 = vst [vmem:[%s5 + $0xd4] sm:$0xf] %v1423
  %1552 = vst [vmem:[%s5 + $0xd8] sm:$0xf] %v1424
  %1553 = vst [vmem:[%s5 + $0xdc] sm:$0xf] %v1425
  %1554 = vst [vmem:[%s5 + $0xe0] sm:$0xf] %v1426
  %1555 = vst [vmem:[%s5 + $0xe4] sm:$0xf] %v1427
  %1556 = vst [vmem:[%s5 + $0xe8] sm:$0xf] %v1428
  %1557 = vst [vmem:[%s5 + $0xec] sm:$0xf] %v1429
  %1558 = vst [vmem:[%s5 + $0xf0] sm:$0xf] %v1430
  %1559 = vst [vmem:[%s5 + $0xf4] sm:$0xf] %v1431
  %1560 = vst [vmem:[%s5 + $0xf8] sm:$0xf] %v1432
  %1561 = vst [vmem:[%s5 + $0xfc] sm:$0xf] %v1433
  // Predicated region
  $region22: #{network_forward.18} parent=0 // pred_check
    _
  $region23: #{network_forward.18} parent=0 // pred_check_branch
    %1563 = sbr.rel (0) target = $region25
  $region24: #{network_forward.18} parent=0 // pred_region
    _
  $region25: #{network_forward.18} parent=0 // pred_fallthru
    _
  // Predicated region
  $region26: #{network_forward.18} parent=0 // pred_check
    _
  $region27: #{network_forward.18} parent=0 // pred_check_branch
    %1565 = sbr.rel (0) target = $region29
  $region28: #{network_forward.18} parent=0 // pred_region
    _
  $region29: #{network_forward.18} parent=0 // pred_fallthru
    _

// kernel: network_forward.19
$region0: #{network_forward.19}
  #allocation0 [shape = 'u32[]', space=smem, size = 0x4, offset = 0x4, fixed_abs, tag = 'smem constant byte address 0x4 - core index']
  #allocation1 [shape = 'u32[144,128]{1,0:T(1,128)}', space=vmem, size = 0x12000, scoped, tag = 'internal scratch']
  %s0 = inlined_call_operand.vmem [shape: bf16[128,128], index: 0, kind: input, shape index: {}]
  %s1 = inlined_call_operand.vmem [shape: bf16[128,128], index: 1, kind: input, shape index: {}]
  %s2 = inlined_call_operand.vmem [shape: f32[1,128], index: 2, kind: input, shape index: {}]
  %s3 = inlined_call_operand.vmem [shape: bf16[128,128], index: 3, kind: output, shape index: {}]
  %s4 = sld [smem:[#allocation0]]
  $region22: #{network_forward.19} parent=0
    _
  %s6 = ssub.s32 1, %s4
  %s7 = scalar_select 0, %s6, %s4
  // Predicated region
  $region2: #{network_forward.19} parent=0 // pred_check
    _
  $region3: #{network_forward.19} parent=0 // pred_check_branch
    %9 = sbr.rel (0) target = $region5
  $region4: #{network_forward.19} parent=0 // pred_region
    _
  $region5: #{network_forward.19} parent=0 // pred_fallthru
    _
  // Predicated region
  $region6: #{network_forward.19} parent=0 // pred_check
    _
  $region7: #{network_forward.19} parent=0 // pred_check_branch
    %11 = sbr.rel (0) target = $region9
  $region8: #{network_forward.19} parent=0 // pred_region
    _
  $region9: #{network_forward.19} parent=0 // pred_fallthru
    _
  // Predicated region
  $region10: #{network_forward.19} parent=0 // pred_check
    _
  $region11: #{network_forward.19} parent=0 // pred_check_branch
    %13 = sbr.rel (0) target = $region13
  $region12: #{network_forward.19} parent=0 // pred_region
    _
  $region13: #{network_forward.19} parent=0 // pred_fallthru
    _
  %v15 = vld [vmem:[%s0] sm:$0xf]
  %v16 = vld [vmem:[%s0 + $0x4] sm:$0xf]
  %v17 = vld [vmem:[%s0 + $0x8] sm:$0xf]
  %v18 = vld [vmem:[%s0 + $0xc] sm:$0xf]
  %v19 = vld [vmem:[%s0 + $0x10] sm:$0xf]
  %v20 = vld [vmem:[%s0 + $0x14] sm:$0xf]
  %v21 = vld [vmem:[%s0 + $0x18] sm:$0xf]
  %v22 = vld [vmem:[%s0 + $0x1c] sm:$0xf]
  %v23 = vld [vmem:[%s0 + $0x20] sm:$0xf]
  %v24 = vld [vmem:[%s0 + $0x24] sm:$0xf]
  %v25 = vld [vmem:[%s0 + $0x28] sm:$0xf]
  %v26 = vld [vmem:[%s0 + $0x2c] sm:$0xf]
  %v27 = vld [vmem:[%s0 + $0x30] sm:$0xf]
  %v28 = vld [vmem:[%s0 + $0x34] sm:$0xf]
  %v29 = vld [vmem:[%s0 + $0x38] sm:$0xf]
  %v30 = vld [vmem:[%s0 + $0x3c] sm:$0xf]
  %v31 = vld [vmem:[%s1] sm:$0xf]
  %v32 = vld [vmem:[%s1 + $0x4] sm:$0xf]
  %v33 = vld [vmem:[%s1 + $0x8] sm:$0xf]
  %v34 = vld [vmem:[%s1 + $0xc] sm:$0xf]
  %v35 = vld [vmem:[%s1 + $0x10] sm:$0xf]
  %v36 = vld [vmem:[%s1 + $0x14] sm:$0xf]
  %v37 = vld [vmem:[%s1 + $0x18] sm:$0xf]
  %v38 = vld [vmem:[%s1 + $0x1c] sm:$0xf]
  %v39 = vld [vmem:[%s1 + $0x20] sm:$0xf]
  %v40 = vld [vmem:[%s1 + $0x24] sm:$0xf]
  %v41 = vld [vmem:[%s1 + $0x28] sm:$0xf]
  %v42 = vld [vmem:[%s1 + $0x2c] sm:$0xf]
  %v43 = vld [vmem:[%s1 + $0x30] sm:$0xf]
  %v44 = vld [vmem:[%s1 + $0x34] sm:$0xf]
  %v45 = vld [vmem:[%s1 + $0x38] sm:$0xf]
  %v46 = vld [vmem:[%s1 + $0x3c] sm:$0xf]
  %v47 = vld [vmem:[%s2] sm:$0x1]
  %v49 = vlaneseq
  %v50 = vshrl.u32 %v49, 7
  %v51 = vsub.s32 0, %v50
  %v52 = vrot.slane %v47, %v51
  %v70 = vunpack.c.l.b16 %v15
  %v71 = vunpack.c.l.b16 %v16
  %v72 = vunpack.c.l.b16 %v17
  %v73 = vunpack.c.l.b16 %v18
  %v74 = vunpack.c.l.b16 %v19
  %v75 = vunpack.c.l.b16 %v20
  %v76 = vunpack.c.l.b16 %v21
  %v77 = vunpack.c.l.b16 %v22
  %v78 = vunpack.c.l.b16 %v23
  %v79 = vunpack.c.l.b16 %v24
  %v80 = vunpack.c.l.b16 %v25
  %v81 = vunpack.c.l.b16 %v26
  %v82 = vunpack.c.l.b16 %v27
  %v83 = vunpack.c.l.b16 %v28
  %v84 = vunpack.c.l.b16 %v29
  %v85 = vunpack.c.l.b16 %v30
  %v86 = vpack.c.b16 %v71, %v70
  %v87 = vpack.c.b16 %v73, %v72
  %v88 = vpack.c.b16 %v75, %v74
  %v89 = vpack.c.b16 %v77, %v76
  %v90 = vpack.c.b16 %v79, %v78
  %v91 = vpack.c.b16 %v81, %v80
  %v92 = vpack.c.b16 %v83, %v82
  %v93 = vpack.c.b16 %v85, %v84
  %v118 = vunpack.c.l.b16 %v31
  %v119 = vunpack.c.l.b16 %v32
  %v120 = vunpack.c.l.b16 %v33
  %v121 = vunpack.c.l.b16 %v34
  %v122 = vunpack.c.l.b16 %v35
  %v123 = vunpack.c.l.b16 %v36
  %v124 = vunpack.c.l.b16 %v37
  %v125 = vunpack.c.l.b16 %v38
  %v126 = vunpack.c.l.b16 %v39
  %v127 = vunpack.c.l.b16 %v40
  %v128 = vunpack.c.l.b16 %v41
  %v129 = vunpack.c.l.b16 %v42
  %v130 = vunpack.c.l.b16 %v43
  %v131 = vunpack.c.l.b16 %v44
  %v132 = vunpack.c.l.b16 %v45
  %v133 = vunpack.c.l.b16 %v46
  %v134 = vpack.c.b16 %v119, %v118
  %v135 = vpack.c.b16 %v121, %v120
  %v136 = vpack.c.b16 %v123, %v122
  %v137 = vpack.c.b16 %v125, %v124
  %v138 = vpack.c.b16 %v127, %v126
  %v139 = vpack.c.b16 %v129, %v128
  %v140 = vpack.c.b16 %v131, %v130
  %v141 = vpack.c.b16 %v133, %v132
  %150 = vmatprep.subr.bf16.mxu0 0
  %151 = vmatpush1.bf16.msra.mxu0 %v134
  %152 = vmatprep.subr.bf16.mxu0 0
  %153 = vmatpush1.bf16.msra.mxu0 %v135
  %154 = vmatprep.subr.bf16.mxu0 0
  %155 = vmatpush1.bf16.msra.mxu0 %v136
  %156 = vmatprep.subr.bf16.mxu0 0
  %157 = vmatpush1.bf16.msra.mxu0 %v137
  %158 = vmatprep.subr.bf16.mxu0 0
  %159 = vmatpush1.bf16.msra.mxu0 %v138
  %160 = vmatprep.subr.bf16.mxu0 0
  %161 = vmatpush1.bf16.msra.mxu0 %v139
  %162 = vmatprep.subr.bf16.mxu0 0
  %163 = vmatpush1.bf16.msra.mxu0 %v140
  %164 = vmatprep.subr.bf16.mxu0 0
  %165 = vmatpush1.bf16.msra.mxu0 %v141
  %166 = vmatprep.subr.bf16.mxu0 0
  %167 = vmatpush1.bf16.msra.mxu0 0
  %168 = vmatprep.subr.bf16.mxu0 0
  %169 = vmatpush1.bf16.msra.mxu0 0
  %170 = vmatprep.subr.bf16.mxu0 0
  %171 = vmatpush1.bf16.msra.mxu0 0
  %172 = vmatprep.subr.bf16.mxu0 0
  %173 = vmatpush1.bf16.msra.mxu0 0
  %174 = vmatprep.subr.bf16.mxu0 0
  %175 = vmatpush1.bf16.msra.mxu0 0
  %176 = vmatprep.subr.bf16.mxu0 0
  %177 = vmatpush1.bf16.msra.mxu0 0
  %178 = vmatprep.subr.bf16.mxu0 0
  %179 = vmatpush1.bf16.msra.mxu0 0
  %180 = vmatprep.subr.bf16.mxu0 0
  %181 = vmatpush1.bf16.msra.mxu0 0
  %182 = vmatprep.mubr.bf16.mxu0 0
  %183 = vmatmul.mubr.bf16.gmra.mrb[0].mxu0 %v86
  %v184 = vpop.f32.mrb[0].mxu0
  %v185 = vadd.f32 %v52, %v184
  %v186 = vpop.f32.mrb[0].mxu0
  %v187 = vpop.f32.mrb[0].mxu0
  %v188 = vadd.f32 %v52, %v187
  %v189 = vpop.f32.mrb[0].mxu0
  %190 = vmatprep.mubr.bf16.mxu0 0
  %191 = vmatmul.mubr.bf16.gmra.mrb[0].mxu0 %v87
  %v192 = vpop.f32.mrb[0].mxu0
  %v193 = vadd.f32 %v52, %v192
  %v194 = vpop.f32.mrb[0].mxu0
  %v195 = vpop.f32.mrb[0].mxu0
  %v196 = vadd.f32 %v52, %v195
  %v197 = vpop.f32.mrb[0].mxu0
  %198 = vmatprep.mubr.bf16.mxu0 0
  %199 = vmatmul.mubr.bf16.gmra.mrb[0].mxu0 %v88
  %v200 = vpop.f32.mrb[0].mxu0
  %v201 = vadd.f32 %v52, %v200
  %v202 = vpop.f32.mrb[0].mxu0
  %v203 = vpop.f32.mrb[0].mxu0
  %v204 = vadd.f32 %v52, %v203
  %v205 = vpop.f32.mrb[0].mxu0
  %206 = vmatprep.mubr.bf16.mxu0 0
  %207 = vmatmul.mubr.bf16.gmra.mrb[0].mxu0 %v89
  %v208 = vpop.f32.mrb[0].mxu0
  %v209 = vadd.f32 %v52, %v208
  %v210 = vpop.f32.mrb[0].mxu0
  %v211 = vpop.f32.mrb[0].mxu0
  %v212 = vadd.f32 %v52, %v211
  %v213 = vpop.f32.mrb[0].mxu0
  %214 = vmatprep.mubr.bf16.mxu0 0
  %215 = vmatmul.mubr.bf16.gmra.mrb[0].mxu0 %v90
  %v216 = vpop.f32.mrb[0].mxu0
  %v217 = vadd.f32 %v52, %v216
  %v218 = vpop.f32.mrb[0].mxu0
  %v219 = vpop.f32.mrb[0].mxu0
  %v220 = vadd.f32 %v52, %v219
  %v221 = vpop.f32.mrb[0].mxu0
  %222 = vmatprep.mubr.bf16.mxu0 0
  %223 = vmatmul.mubr.bf16.gmra.mrb[0].mxu0 %v91
  %v224 = vpop.f32.mrb[0].mxu0
  %v225 = vadd.f32 %v52, %v224
  %v226 = vpop.f32.mrb[0].mxu0
  %v227 = vpop.f32.mrb[0].mxu0
  %v228 = vadd.f32 %v52, %v227
  %v229 = vpop.f32.mrb[0].mxu0
  %230 = vmatprep.mubr.bf16.mxu0 0
  %231 = vmatmul.mubr.bf16.gmra.mrb[0].mxu0 %v92
  %v232 = vpop.f32.mrb[0].mxu0
  %v233 = vadd.f32 %v52, %v232
  %v234 = vpop.f32.mrb[0].mxu0
  %v235 = vpop.f32.mrb[0].mxu0
  %v236 = vadd.f32 %v52, %v235
  %v237 = vpop.f32.mrb[0].mxu0
  %238 = vmatprep.mubr.bf16.mxu0 0
  %239 = vmatmul.mubr.bf16.gmra.mrb[0].mxu0 %v93
  %v240 = vpop.f32.mrb[0].mxu0
  %v241 = vadd.f32 %v52, %v240
  %v242 = vpop.f32.mrb[0].mxu0
  %v243 = vpop.f32.mrb[0].mxu0
  %v244 = vadd.f32 %v52, %v243
  %v245 = vpop.f32.mrb[0].mxu0
  %246 = vdwg.mxu0
  %v247 = vpack.c.bf16 %v188, %v185
  %v248 = vpack.c.bf16 %v196, %v193
  %v249 = vpack.c.bf16 %v204, %v201
  %v250 = vpack.c.bf16 %v212, %v209
  %v251 = vpack.c.bf16 %v220, %v217
  %v252 = vpack.c.bf16 %v228, %v225
  %v253 = vpack.c.bf16 %v236, %v233
  %v254 = vpack.c.bf16 %v244, %v241
  %v263 = vunpack.c.l.b16 %v247
  %v264 = vunpack.c.h.b16 %v247
  %v265 = vunpack.c.l.b16 %v248
  %v266 = vunpack.c.h.b16 %v248
  %v267 = vunpack.c.l.b16 %v249
  %v268 = vunpack.c.h.b16 %v249
  %v269 = vunpack.c.l.b16 %v250
  %v270 = vunpack.c.h.b16 %v250
  %v271 = vunpack.c.l.b16 %v251
  %v272 = vunpack.c.h.b16 %v251
  %v273 = vunpack.c.l.b16 %v252
  %v274 = vunpack.c.h.b16 %v252
  %v275 = vunpack.c.l.b16 %v253
  %v276 = vunpack.c.h.b16 %v253
  %v277 = vunpack.c.l.b16 %v254
  %v278 = vunpack.c.h.b16 %v254
  %v279 = vpack.c.b16 %v263, %v263
  %v280 = vpack.c.b16 %v264, %v264
  %v281 = vpack.c.b16 %v265, %v265
  %v282 = vpack.c.b16 %v266, %v266
  %v283 = vpack.c.b16 %v267, %v267
  %v284 = vpack.c.b16 %v268, %v268
  %v285 = vpack.c.b16 %v269, %v269
  %v286 = vpack.c.b16 %v270, %v270
  %v287 = vpack.c.b16 %v271, %v271
  %v288 = vpack.c.b16 %v272, %v272
  %v289 = vpack.c.b16 %v273, %v273
  %v290 = vpack.c.b16 %v274, %v274
  %v291 = vpack.c.b16 %v275, %v275
  %v292 = vpack.c.b16 %v276, %v276
  %v293 = vpack.c.b16 %v277, %v277
  %v294 = vpack.c.b16 %v278, %v278
  %311 = vst [vmem:[%s3] sm:$0xf] %v279
  %312 = vst [vmem:[%s3 + $0x4] sm:$0xf] %v280
  %313 = vst [vmem:[%s3 + $0x8] sm:$0xf] %v281
  %314 = vst [vmem:[%s3 + $0xc] sm:$0xf] %v282
  %315 = vst [vmem:[%s3 + $0x10] sm:$0xf] %v283
  %316 = vst [vmem:[%s3 + $0x14] sm:$0xf] %v284
  %317 = vst [vmem:[%s3 + $0x18] sm:$0xf] %v285
  %318 = vst [vmem:[%s3 + $0x1c] sm:$0xf] %v286
  %319 = vst [vmem:[%s3 + $0x20] sm:$0xf] %v287
  %320 = vst [vmem:[%s3 + $0x24] sm:$0xf] %v288
  %321 = vst [vmem:[%s3 + $0x28] sm:$0xf] %v289
  %322 = vst [vmem:[%s3 + $0x2c] sm:$0xf] %v290
  %323 = vst [vmem:[%s3 + $0x30] sm:$0xf] %v291
  %324 = vst [vmem:[%s3 + $0x34] sm:$0xf] %v292
  %325 = vst [vmem:[%s3 + $0x38] sm:$0xf] %v293
  %326 = vst [vmem:[%s3 + $0x3c] sm:$0xf] %v294
  // Predicated region
  $region14: #{network_forward.19} parent=0 // pred_check
    _
  $region15: #{network_forward.19} parent=0 // pred_check_branch
    %328 = sbr.rel (0) target = $region17
  $region16: #{network_forward.19} parent=0 // pred_region
    _
  $region17: #{network_forward.19} parent=0 // pred_fallthru
    _
  // Predicated region
  $region18: #{network_forward.19} parent=0 // pred_check
    _
  $region19: #{network_forward.19} parent=0 // pred_check_branch
    %330 = sbr.rel (0) target = $region21
  $region20: #{network_forward.19} parent=0 // pred_region
    _
  $region21: #{network_forward.19} parent=0 // pred_fallthru
    _

// kernel: network_forward.20
$region0: #{network_forward.20}
  #allocation0 [shape = 'u32[]', space=smem, size = 0x4, offset = 0x4, fixed_abs, tag = 'smem constant byte address 0x4 - core index']
  #allocation1 [shape = 'u32[144,128]{1,0:T(1,128)}', space=vmem, size = 0x12000, scoped, tag = 'internal scratch']
  %s0 = inlined_call_operand.vmem [shape: bf16[128,256], index: 0, kind: input, shape index: {}]
  %s1 = inlined_call_operand.vmem [shape: bf16[256,128], index: 1, kind: input, shape index: {}]
  %s2 = inlined_call_operand.vmem [shape: f32[1,128], index: 2, kind: input, shape index: {}]
  %s3 = inlined_call_operand.vmem [shape: bf16[128,128], index: 3, kind: output, shape index: {}]
  %s4 = sld [smem:[#allocation0]]
  $region22: #{network_forward.20} parent=0
    _
  %s6 = ssub.s32 1, %s4
  %s7 = scalar_select 0, %s6, %s4
  // Predicated region
  $region2: #{network_forward.20} parent=0 // pred_check
    _
  $region3: #{network_forward.20} parent=0 // pred_check_branch
    %9 = sbr.rel (0) target = $region5
  $region4: #{network_forward.20} parent=0 // pred_region
    _
  $region5: #{network_forward.20} parent=0 // pred_fallthru
    _
  // Predicated region
  $region6: #{network_forward.20} parent=0 // pred_check
    _
  $region7: #{network_forward.20} parent=0 // pred_check_branch
    %11 = sbr.rel (0) target = $region9
  $region8: #{network_forward.20} parent=0 // pred_region
    _
  $region9: #{network_forward.20} parent=0 // pred_fallthru
    _
  // Predicated region
  $region10: #{network_forward.20} parent=0 // pred_check
    _
  $region11: #{network_forward.20} parent=0 // pred_check_branch
    %13 = sbr.rel (0) target = $region13
  $region12: #{network_forward.20} parent=0 // pred_region
    _
  $region13: #{network_forward.20} parent=0 // pred_fallthru
    _
  %v15 = vld [vmem:[%s0] sm:$0xff]
  %v16 = vld [vmem:[%s0 + $0x8] sm:$0xff]
  %v17 = vld [vmem:[%s0 + $0x10] sm:$0xff]
  %v18 = vld [vmem:[%s0 + $0x18] sm:$0xff]
  %v19 = vld [vmem:[%s0 + $0x20] sm:$0xff]
  %v20 = vld [vmem:[%s0 + $0x28] sm:$0xff]
  %v21 = vld [vmem:[%s0 + $0x30] sm:$0xff]
  %v22 = vld [vmem:[%s0 + $0x38] sm:$0xff]
  %v23 = vld [vmem:[%s0 + $0x40] sm:$0xff]
  %v24 = vld [vmem:[%s0 + $0x48] sm:$0xff]
  %v25 = vld [vmem:[%s0 + $0x50] sm:$0xff]
  %v26 = vld [vmem:[%s0 + $0x58] sm:$0xff]
  %v27 = vld [vmem:[%s0 + $0x60] sm:$0xff]
  %v28 = vld [vmem:[%s0 + $0x68] sm:$0xff]
  %v29 = vld [vmem:[%s0 + $0x70] sm:$0xff]
  %v30 = vld [vmem:[%s0 + $0x78] sm:$0xff]
  %v31 = vld [vmem:[%s1] sm:$0xf]
  %v32 = vld [vmem:[%s1 + $0x4] sm:$0xf]
  %v33 = vld [vmem:[%s1 + $0x8] sm:$0xf]
  %v34 = vld [vmem:[%s1 + $0xc] sm:$0xf]
  %v35 = vld [vmem:[%s1 + $0x10] sm:$0xf]
  %v36 = vld [vmem:[%s1 + $0x14] sm:$0xf]
  %v37 = vld [vmem:[%s1 + $0x18] sm:$0xf]
  %v38 = vld [vmem:[%s1 + $0x1c] sm:$0xf]
  %v39 = vld [vmem:[%s1 + $0x20] sm:$0xf]
  %v40 = vld [vmem:[%s1 + $0x24] sm:$0xf]
  %v41 = vld [vmem:[%s1 + $0x28] sm:$0xf]
  %v42 = vld [vmem:[%s1 + $0x2c] sm:$0xf]
  %v43 = vld [vmem:[%s1 + $0x30] sm:$0xf]
  %v44 = vld [vmem:[%s1 + $0x34] sm:$0xf]
  %v45 = vld [vmem:[%s1 + $0x38] sm:$0xf]
  %v46 = vld [vmem:[%s1 + $0x3c] sm:$0xf]
  %v47 = vld [vmem:[%s1 + $0x40] sm:$0xf]
  %v48 = vld [vmem:[%s1 + $0x44] sm:$0xf]
  %v49 = vld [vmem:[%s1 + $0x48] sm:$0xf]
  %v50 = vld [vmem:[%s1 + $0x4c] sm:$0xf]
  %v51 = vld [vmem:[%s1 + $0x50] sm:$0xf]
  %v52 = vld [vmem:[%s1 + $0x54] sm:$0xf]
  %v53 = vld [vmem:[%s1 + $0x58] sm:$0xf]
  %v54 = vld [vmem:[%s1 + $0x5c] sm:$0xf]
  %v55 = vld [vmem:[%s1 + $0x60] sm:$0xf]
  %v56 = vld [vmem:[%s1 + $0x64] sm:$0xf]
  %v57 = vld [vmem:[%s1 + $0x68] sm:$0xf]
  %v58 = vld [vmem:[%s1 + $0x6c] sm:$0xf]
  %v59 = vld [vmem:[%s1 + $0x70] sm:$0xf]
  %v60 = vld [vmem:[%s1 + $0x74] sm:$0xf]
  %v61 = vld [vmem:[%s1 + $0x78] sm:$0xf]
  %v62 = vld [vmem:[%s1 + $0x7c] sm:$0xf]
  %v63 = vld [vmem:[%s2] sm:$0x1]
  %v65 = vlaneseq
  %v66 = vshrl.u32 %v65, 7
  %v67 = vsub.s32 0, %v66
  %v68 = vrot.slane %v63, %v67
  %v86 = vunpack.c.l.b16 %v15
  %v87 = vunpack.c.h.b16 %v15
  %v88 = vunpack.c.l.b16 %v16
  %v89 = vunpack.c.h.b16 %v16
  %v90 = vunpack.c.l.b16 %v17
  %v91 = vunpack.c.h.b16 %v17
  %v92 = vunpack.c.l.b16 %v18
  %v93 = vunpack.c.h.b16 %v18
  %v94 = vunpack.c.l.b16 %v19
  %v95 = vunpack.c.h.b16 %v19
  %v96 = vunpack.c.l.b16 %v20
  %v97 = vunpack.c.h.b16 %v20
  %v98 = vunpack.c.l.b16 %v21
  %v99 = vunpack.c.h.b16 %v21
  %v100 = vunpack.c.l.b16 %v22
  %v101 = vunpack.c.h.b16 %v22
  %v102 = vunpack.c.l.b16 %v23
  %v103 = vunpack.c.h.b16 %v23
  %v104 = vunpack.c.l.b16 %v24
  %v105 = vunpack.c.h.b16 %v24
  %v106 = vunpack.c.l.b16 %v25
  %v107 = vunpack.c.h.b16 %v25
  %v108 = vunpack.c.l.b16 %v26
  %v109 = vunpack.c.h.b16 %v26
  %v110 = vunpack.c.l.b16 %v27
  %v111 = vunpack.c.h.b16 %v27
  %v112 = vunpack.c.l.b16 %v28
  %v113 = vunpack.c.h.b16 %v28
  %v114 = vunpack.c.l.b16 %v29
  %v115 = vunpack.c.h.b16 %v29
  %v116 = vunpack.c.l.b16 %v30
  %v117 = vunpack.c.h.b16 %v30
  %v118 = vpack.c.b16 %v88, %v86
  %v119 = vpack.c.b16 %v89, %v87
  %v120 = vpack.c.b16 %v92, %v90
  %v121 = vpack.c.b16 %v93, %v91
  %v122 = vpack.c.b16 %v96, %v94
  %v123 = vpack.c.b16 %v97, %v95
  %v124 = vpack.c.b16 %v100, %v98
  %v125 = vpack.c.b16 %v101, %v99
  %v126 = vpack.c.b16 %v104, %v102
  %v127 = vpack.c.b16 %v105, %v103
  %v128 = vpack.c.b16 %v108, %v106
  %v129 = vpack.c.b16 %v109, %v107
  %v130 = vpack.c.b16 %v112, %v110
  %v131 = vpack.c.b16 %v113, %v111
  %v132 = vpack.c.b16 %v116, %v114
  %v133 = vpack.c.b16 %v117, %v115
  %v182 = vunpack.c.l.b16 %v31
  %v183 = vunpack.c.l.b16 %v32
  %v184 = vunpack.c.l.b16 %v33
  %v185 = vunpack.c.l.b16 %v34
  %v186 = vunpack.c.l.b16 %v35
  %v187 = vunpack.c.l.b16 %v36
  %v188 = vunpack.c.l.b16 %v37
  %v189 = vunpack.c.l.b16 %v38
  %v190 = vunpack.c.l.b16 %v39
  %v191 = vunpack.c.l.b16 %v40
  %v192 = vunpack.c.l.b16 %v41
  %v193 = vunpack.c.l.b16 %v42
  %v194 = vunpack.c.l.b16 %v43
  %v195 = vunpack.c.l.b16 %v44
  %v196 = vunpack.c.l.b16 %v45
  %v197 = vunpack.c.l.b16 %v46
  %v198 = vunpack.c.l.b16 %v47
  %v199 = vunpack.c.l.b16 %v48
  %v200 = vunpack.c.l.b16 %v49
  %v201 = vunpack.c.l.b16 %v50
  %v202 = vunpack.c.l.b16 %v51
  %v203 = vunpack.c.l.b16 %v52
  %v204 = vunpack.c.l.b16 %v53
  %v205 = vunpack.c.l.b16 %v54
  %v206 = vunpack.c.l.b16 %v55
  %v207 = vunpack.c.l.b16 %v56
  %v208 = vunpack.c.l.b16 %v57
  %v209 = vunpack.c.l.b16 %v58
  %v210 = vunpack.c.l.b16 %v59
  %v211 = vunpack.c.l.b16 %v60
  %v212 = vunpack.c.l.b16 %v61
  %v213 = vunpack.c.l.b16 %v62
  %v214 = vpack.c.b16 %v183, %v182
  %v215 = vpack.c.b16 %v185, %v184
  %v216 = vpack.c.b16 %v187, %v186
  %v217 = vpack.c.b16 %v189, %v188
  %v218 = vpack.c.b16 %v191, %v190
  %v219 = vpack.c.b16 %v193, %v192
  %v220 = vpack.c.b16 %v195, %v194
  %v221 = vpack.c.b16 %v197, %v196
  %v222 = vpack.c.b16 %v199, %v198
  %v223 = vpack.c.b16 %v201, %v200
  %v224 = vpack.c.b16 %v203, %v202
  %v225 = vpack.c.b16 %v205, %v204
  %v226 = vpack.c.b16 %v207, %v206
  %v227 = vpack.c.b16 %v209, %v208
  %v228 = vpack.c.b16 %v211, %v210
  %v229 = vpack.c.b16 %v213, %v212
  %246 = vmatprep.subr.bf16.mxu0 0
  %247 = vmatpush1.bf16.msra.mxu0 %v214
  %248 = vmatprep.subr.bf16.mxu0 0
  %249 = vmatpush1.bf16.msra.mxu0 %v215
  %250 = vmatprep.subr.bf16.mxu0 0
  %251 = vmatpush1.bf16.msra.mxu0 %v216
  %252 = vmatprep.subr.bf16.mxu0 0
  %253 = vmatpush1.bf16.msra.mxu0 %v217
  %254 = vmatprep.subr.bf16.mxu0 0
  %255 = vmatpush1.bf16.msra.mxu0 %v218
  %256 = vmatprep.subr.bf16.mxu0 0
  %257 = vmatpush1.bf16.msra.mxu0 %v219
  %258 = vmatprep.subr.bf16.mxu0 0
  %259 = vmatpush1.bf16.msra.mxu0 %v220
  %260 = vmatprep.subr.bf16.mxu0 0
  %261 = vmatpush1.bf16.msra.mxu0 %v221
  %262 = vmatprep.subr.bf16.mxu0 0
  %263 = vmatpush1.bf16.msra.mxu0 %v222
  %264 = vmatprep.subr.bf16.mxu0 0
  %265 = vmatpush1.bf16.msra.mxu0 %v223
  %266 = vmatprep.subr.bf16.mxu0 0
  %267 = vmatpush1.bf16.msra.mxu0 %v224
  %268 = vmatprep.subr.bf16.mxu0 0
  %269 = vmatpush1.bf16.msra.mxu0 %v225
  %270 = vmatprep.subr.bf16.mxu0 0
  %271 = vmatpush1.bf16.msra.mxu0 %v226
  %272 = vmatprep.subr.bf16.mxu0 0
  %273 = vmatpush1.bf16.msra.mxu0 %v227
  %274 = vmatprep.subr.bf16.mxu0 0
  %275 = vmatpush1.bf16.msra.mxu0 %v228
  %276 = vmatprep.subr.bf16.mxu0 0
  %277 = vmatpush1.bf16.msra.mxu0 %v229
  %278 = vmatprep.mubr.bf16.mxu0 %v119
  %279 = vmatmul.mubr.bf16.gmra.mrb[0].mxu0 %v118
  %v280 = vpop.f32.mrb[0].mxu0
  %v281 = vadd.f32 %v68, %v280
  %v282 = vpop.f32.mrb[0].mxu0
  %v283 = vpop.f32.mrb[0].mxu0
  %v284 = vadd.f32 %v68, %v283
  %v285 = vpop.f32.mrb[0].mxu0
  %286 = vmatprep.mubr.bf16.mxu0 %v121
  %287 = vmatmul.mubr.bf16.gmra.mrb[0].mxu0 %v120
  %v288 = vpop.f32.mrb[0].mxu0
  %v289 = vadd.f32 %v68, %v288
  %v290 = vpop.f32.mrb[0].mxu0
  %v291 = vpop.f32.mrb[0].mxu0
  %v292 = vadd.f32 %v68, %v291
  %v293 = vpop.f32.mrb[0].mxu0
  %294 = vmatprep.mubr.bf16.mxu0 %v123
  %295 = vmatmul.mubr.bf16.gmra.mrb[0].mxu0 %v122
  %v296 = vpop.f32.mrb[0].mxu0
  %v297 = vadd.f32 %v68, %v296
  %v298 = vpop.f32.mrb[0].mxu0
  %v299 = vpop.f32.mrb[0].mxu0
  %v300 = vadd.f32 %v68, %v299
  %v301 = vpop.f32.mrb[0].mxu0
  %302 = vmatprep.mubr.bf16.mxu0 %v125
  %303 = vmatmul.mubr.bf16.gmra.mrb[0].mxu0 %v124
  %v304 = vpop.f32.mrb[0].mxu0
  %v305 = vadd.f32 %v68, %v304
  %v306 = vpop.f32.mrb[0].mxu0
  %v307 = vpop.f32.mrb[0].mxu0
  %v308 = vadd.f32 %v68, %v307
  %v309 = vpop.f32.mrb[0].mxu0
  %310 = vmatprep.mubr.bf16.mxu0 %v127
  %311 = vmatmul.mubr.bf16.gmra.mrb[0].mxu0 %v126
  %v312 = vpop.f32.mrb[0].mxu0
  %v313 = vadd.f32 %v68, %v312
  %v314 = vpop.f32.mrb[0].mxu0
  %v315 = vpop.f32.mrb[0].mxu0
  %v316 = vadd.f32 %v68, %v315
  %v317 = vpop.f32.mrb[0].mxu0
  %318 = vmatprep.mubr.bf16.mxu0 %v129
  %319 = vmatmul.mubr.bf16.gmra.mrb[0].mxu0 %v128
  %v320 = vpop.f32.mrb[0].mxu0
  %v321 = vadd.f32 %v68, %v320
  %v322 = vpop.f32.mrb[0].mxu0
  %v323 = vpop.f32.mrb[0].mxu0
  %v324 = vadd.f32 %v68, %v323
  %v325 = vpop.f32.mrb[0].mxu0
  %326 = vmatprep.mubr.bf16.mxu0 %v131
  %327 = vmatmul.mubr.bf16.gmra.mrb[0].mxu0 %v130
  %v328 = vpop.f32.mrb[0].mxu0
  %v329 = vadd.f32 %v68, %v328
  %v330 = vpop.f32.mrb[0].mxu0
  %v331 = vpop.f32.mrb[0].mxu0
  %v332 = vadd.f32 %v68, %v331
  %v333 = vpop.f32.mrb[0].mxu0
  %334 = vmatprep.mubr.bf16.mxu0 %v133
  %335 = vmatmul.mubr.bf16.gmra.mrb[0].mxu0 %v132
  %v336 = vpop.f32.mrb[0].mxu0
  %v337 = vadd.f32 %v68, %v336
  %v338 = vpop.f32.mrb[0].mxu0
  %v339 = vpop.f32.mrb[0].mxu0
  %v340 = vadd.f32 %v68, %v339
  %v341 = vpop.f32.mrb[0].mxu0
  %342 = vdwg.mxu0
  %v343 = vmax.f32 %v281, 0.0
  %v344 = vmax.f32 %v284, 0.0
  %v345 = vmax.f32 %v289, 0.0
  %v346 = vmax.f32 %v292, 0.0
  %v347 = vmax.f32 %v297, 0.0
  %v348 = vmax.f32 %v300, 0.0
  %v349 = vmax.f32 %v305, 0.0
  %v350 = vmax.f32 %v308, 0.0
  %v351 = vmax.f32 %v313, 0.0
  %v352 = vmax.f32 %v316, 0.0
  %v353 = vmax.f32 %v321, 0.0
  %v354 = vmax.f32 %v324, 0.0
  %v355 = vmax.f32 %v329, 0.0
  %v356 = vmax.f32 %v332, 0.0
  %v357 = vmax.f32 %v337, 0.0
  %v358 = vmax.f32 %v340, 0.0
  %v359 = vpack.c.bf16 %v344, %v343
  %v360 = vpack.c.bf16 %v346, %v345
  %v361 = vpack.c.bf16 %v348, %v347
  %v362 = vpack.c.bf16 %v350, %v349
  %v363 = vpack.c.bf16 %v352, %v351
  %v364 = vpack.c.bf16 %v354, %v353
  %v365 = vpack.c.bf16 %v356, %v355
  %v366 = vpack.c.bf16 %v358, %v357
  %v375 = vunpack.c.l.b16 %v359
  %v376 = vunpack.c.h.b16 %v359
  %v377 = vunpack.c.l.b16 %v360
  %v378 = vunpack.c.h.b16 %v360
  %v379 = vunpack.c.l.b16 %v361
  %v380 = vunpack.c.h.b16 %v361
  %v381 = vunpack.c.l.b16 %v362
  %v382 = vunpack.c.h.b16 %v362
  %v383 = vunpack.c.l.b16 %v363
  %v384 = vunpack.c.h.b16 %v363
  %v385 = vunpack.c.l.b16 %v364
  %v386 = vunpack.c.h.b16 %v364
  %v387 = vunpack.c.l.b16 %v365
  %v388 = vunpack.c.h.b16 %v365
  %v389 = vunpack.c.l.b16 %v366
  %v390 = vunpack.c.h.b16 %v366
  %v391 = vpack.c.b16 %v375, %v375
  %v392 = vpack.c.b16 %v376, %v376
  %v393 = vpack.c.b16 %v377, %v377
  %v394 = vpack.c.b16 %v378, %v378
  %v395 = vpack.c.b16 %v379, %v379
  %v396 = vpack.c.b16 %v380, %v380
  %v397 = vpack.c.b16 %v381, %v381
  %v398 = vpack.c.b16 %v382, %v382
  %v399 = vpack.c.b16 %v383, %v383
  %v400 = vpack.c.b16 %v384, %v384
  %v401 = vpack.c.b16 %v385, %v385
  %v402 = vpack.c.b16 %v386, %v386
  %v403 = vpack.c.b16 %v387, %v387
  %v404 = vpack.c.b16 %v388, %v388
  %v405 = vpack.c.b16 %v389, %v389
  %v406 = vpack.c.b16 %v390, %v390
  %423 = vst [vmem:[%s3] sm:$0xf] %v391
  %424 = vst [vmem:[%s3 + $0x4] sm:$0xf] %v392
  %425 = vst [vmem:[%s3 + $0x8] sm:$0xf] %v393
  %426 = vst [vmem:[%s3 + $0xc] sm:$0xf] %v394
  %427 = vst [vmem:[%s3 + $0x10] sm:$0xf] %v395
  %428 = vst [vmem:[%s3 + $0x14] sm:$0xf] %v396
  %429 = vst [vmem:[%s3 + $0x18] sm:$0xf] %v397
  %430 = vst [vmem:[%s3 + $0x1c] sm:$0xf] %v398
  %431 = vst [vmem:[%s3 + $0x20] sm:$0xf] %v399
  %432 = vst [vmem:[%s3 + $0x24] sm:$0xf] %v400
  %433 = vst [vmem:[%s3 + $0x28] sm:$0xf] %v401
  %434 = vst [vmem:[%s3 + $0x2c] sm:$0xf] %v402
  %435 = vst [vmem:[%s3 + $0x30] sm:$0xf] %v403
  %436 = vst [vmem:[%s3 + $0x34] sm:$0xf] %v404
  %437 = vst [vmem:[%s3 + $0x38] sm:$0xf] %v405
  %438 = vst [vmem:[%s3 + $0x3c] sm:$0xf] %v406
  // Predicated region
  $region14: #{network_forward.20} parent=0 // pred_check
    _
  $region15: #{network_forward.20} parent=0 // pred_check_branch
    %440 = sbr.rel (0) target = $region17
  $region16: #{network_forward.20} parent=0 // pred_region
    _
  $region17: #{network_forward.20} parent=0 // pred_fallthru
    _
  // Predicated region
  $region18: #{network_forward.20} parent=0 // pred_check
    _
  $region19: #{network_forward.20} parent=0 // pred_check_branch
    %442 = sbr.rel (0) target = $region21
  $region20: #{network_forward.20} parent=0 // pred_region
    _
  $region21: #{network_forward.20} parent=0 // pred_fallthru
    _

// kernel: network_forward.21
$region0: #{network_forward.21}
  #allocation0 [shape = 'u32[]', space=smem, size = 0x4, offset = 0x4, fixed_abs, tag = 'smem constant byte address 0x4 - core index']
  #allocation1 [shape = 'u32[144,128]{1,0:T(1,128)}', space=vmem, size = 0x12000, scoped, tag = 'internal scratch']
  %s0 = inlined_call_operand.vmem [shape: bf16[128,512], index: 0, kind: input, shape index: {}]
  %s1 = inlined_call_operand.vmem [shape: bf16[512,128], index: 1, kind: input, shape index: {}]
  %s2 = inlined_call_operand.vmem [shape: f32[1,128], index: 2, kind: input, shape index: {}]
  %s3 = inlined_call_operand.vmem [shape: f32[1,128], index: 3, kind: input, shape index: {}]
  %s4 = inlined_call_operand.vmem [shape: f32[1,128], index: 4, kind: input, shape index: {}]
  %s5 = inlined_call_operand.vmem [shape: bf16[128,128], index: 5, kind: output, shape index: {}]
  %s6 = sld [smem:[#allocation0]]
  $region30: #{network_forward.21} parent=0
    _
  %s8 = ssub.s32 1, %s6
  %s9 = scalar_select 0, %s8, %s6
  // Predicated region
  $region2: #{network_forward.21} parent=0 // pred_check
    _
  $region3: #{network_forward.21} parent=0 // pred_check_branch
    %11 = sbr.rel (0) target = $region5
  $region4: #{network_forward.21} parent=0 // pred_region
    _
  $region5: #{network_forward.21} parent=0 // pred_fallthru
    _
  // Predicated region
  $region6: #{network_forward.21} parent=0 // pred_check
    _
  $region7: #{network_forward.21} parent=0 // pred_check_branch
    %13 = sbr.rel (0) target = $region9
  $region8: #{network_forward.21} parent=0 // pred_region
    _
  $region9: #{network_forward.21} parent=0 // pred_fallthru
    _
  // Predicated region
  $region10: #{network_forward.21} parent=0 // pred_check
    _
  $region11: #{network_forward.21} parent=0 // pred_check_branch
    %15 = sbr.rel (0) target = $region13
  $region12: #{network_forward.21} parent=0 // pred_region
    _
  $region13: #{network_forward.21} parent=0 // pred_fallthru
    _
  // Predicated region
  $region14: #{network_forward.21} parent=0 // pred_check
    _
  $region15: #{network_forward.21} parent=0 // pred_check_branch
    %17 = sbr.rel (0) target = $region17
  $region16: #{network_forward.21} parent=0 // pred_region
    _
  $region17: #{network_forward.21} parent=0 // pred_fallthru
    _
  // Predicated region
  $region18: #{network_forward.21} parent=0 // pred_check
    _
  $region19: #{network_forward.21} parent=0 // pred_check_branch
    %19 = sbr.rel (0) target = $region21
  $region20: #{network_forward.21} parent=0 // pred_region
    _
  $region21: #{network_forward.21} parent=0 // pred_fallthru
    _
  %v21 = vld [vmem:[%s0] sm:$0xff]
  %v22 = vld [vmem:[%s0 + $0x8] sm:$0xff]
  %v23 = vld [vmem:[%s0 + $0x10] sm:$0xff]
  %v24 = vld [vmem:[%s0 + $0x18] sm:$0xff]
  %v25 = vld [vmem:[%s0 + $0x20] sm:$0xff]
  %v26 = vld [vmem:[%s0 + $0x28] sm:$0xff]
  %v27 = vld [vmem:[%s0 + $0x30] sm:$0xff]
  %v28 = vld [vmem:[%s0 + $0x38] sm:$0xff]
  %v29 = vld [vmem:[%s0 + $0x40] sm:$0xff]
  %v30 = vld [vmem:[%s0 + $0x48] sm:$0xff]
  %v31 = vld [vmem:[%s0 + $0x50] sm:$0xff]
  %v32 = vld [vmem:[%s0 + $0x58] sm:$0xff]
  %v33 = vld [vmem:[%s0 + $0x60] sm:$0xff]
  %v34 = vld [vmem:[%s0 + $0x68] sm:$0xff]
  %v35 = vld [vmem:[%s0 + $0x70] sm:$0xff]
  %v36 = vld [vmem:[%s0 + $0x78] sm:$0xff]
  %v37 = vld [vmem:[%s0 + $0x80] sm:$0xff]
  %v38 = vld [vmem:[%s0 + $0x88] sm:$0xff]
  %v39 = vld [vmem:[%s0 + $0x90] sm:$0xff]
  %v40 = vld [vmem:[%s0 + $0x98] sm:$0xff]
  %v41 = vld [vmem:[%s0 + $0xa0] sm:$0xff]
  %v42 = vld [vmem:[%s0 + $0xa8] sm:$0xff]
  %v43 = vld [vmem:[%s0 + $0xb0] sm:$0xff]
  %v44 = vld [vmem:[%s0 + $0xb8] sm:$0xff]
  %v45 = vld [vmem:[%s0 + $0xc0] sm:$0xff]
  %v46 = vld [vmem:[%s0 + $0xc8] sm:$0xff]
  %v47 = vld [vmem:[%s0 + $0xd0] sm:$0xff]
  %v48 = vld [vmem:[%s0 + $0xd8] sm:$0xff]
  %v49 = vld [vmem:[%s0 + $0xe0] sm:$0xff]
  %v50 = vld [vmem:[%s0 + $0xe8] sm:$0xff]
  %v51 = vld [vmem:[%s0 + $0xf0] sm:$0xff]
  %v52 = vld [vmem:[%s0 + $0xf8] sm:$0xff]
  %v53 = vld [vmem:[%s1] sm:$0xf]
  %v54 = vld [vmem:[%s1 + $0x4] sm:$0xf]
  %v55 = vld [vmem:[%s1 + $0x8] sm:$0xf]
  %v56 = vld [vmem:[%s1 + $0xc] sm:$0xf]
  %v57 = vld [vmem:[%s1 + $0x10] sm:$0xf]
  %v58 = vld [vmem:[%s1 + $0x14] sm:$0xf]
  %v59 = vld [vmem:[%s1 + $0x18] sm:$0xf]
  %v60 = vld [vmem:[%s1 + $0x1c] sm:$0xf]
  %v61 = vld [vmem:[%s1 + $0x20] sm:$0xf]
  %v62 = vld [vmem:[%s1 + $0x24] sm:$0xf]
  %v63 = vld [vmem:[%s1 + $0x28] sm:$0xf]
  %v64 = vld [vmem:[%s1 + $0x2c] sm:$0xf]
  %v65 = vld [vmem:[%s1 + $0x30] sm:$0xf]
  %v66 = vld [vmem:[%s1 + $0x34] sm:$0xf]
  %v67 = vld [vmem:[%s1 + $0x38] sm:$0xf]
  %v68 = vld [vmem:[%s1 + $0x3c] sm:$0xf]
  %v69 = vld [vmem:[%s1 + $0x40] sm:$0xf]
  %v70 = vld [vmem:[%s1 + $0x44] sm:$0xf]
  %v71 = vld [vmem:[%s1 + $0x48] sm:$0xf]
  %v72 = vld [vmem:[%s1 + $0x4c] sm:$0xf]
  %v73 = vld [vmem:[%s1 + $0x50] sm:$0xf]
  %v74 = vld [vmem:[%s1 + $0x54] sm:$0xf]
  %v75 = vld [vmem:[%s1 + $0x58] sm:$0xf]
  %v76 = vld [vmem:[%s1 + $0x5c] sm:$0xf]
  %v77 = vld [vmem:[%s1 + $0x60] sm:$0xf]
  %v78 = vld [vmem:[%s1 + $0x64] sm:$0xf]
  %v79 = vld [vmem:[%s1 + $0x68] sm:$0xf]
  %v80 = vld [vmem:[%s1 + $0x6c] sm:$0xf]
  %v81 = vld [vmem:[%s1 + $0x70] sm:$0xf]
  %v82 = vld [vmem:[%s1 + $0x74] sm:$0xf]
  %v83 = vld [vmem:[%s1 + $0x78] sm:$0xf]
  %v84 = vld [vmem:[%s1 + $0x7c] sm:$0xf]
  %v85 = vld [vmem:[%s1 + $0x80] sm:$0xf]
  %v86 = vld [vmem:[%s1 + $0x84] sm:$0xf]
  %v87 = vld [vmem:[%s1 + $0x88] sm:$0xf]
  %v88 = vld [vmem:[%s1 + $0x8c] sm:$0xf]
  %v89 = vld [vmem:[%s1 + $0x90] sm:$0xf]
  %v90 = vld [vmem:[%s1 + $0x94] sm:$0xf]
  %v91 = vld [vmem:[%s1 + $0x98] sm:$0xf]
  %v92 = vld [vmem:[%s1 + $0x9c] sm:$0xf]
  %v93 = vld [vmem:[%s1 + $0xa0] sm:$0xf]
  %v94 = vld [vmem:[%s1 + $0xa4] sm:$0xf]
  %v95 = vld [vmem:[%s1 + $0xa8] sm:$0xf]
  %v96 = vld [vmem:[%s1 + $0xac] sm:$0xf]
  %v97 = vld [vmem:[%s1 + $0xb0] sm:$0xf]
  %v98 = vld [vmem:[%s1 + $0xb4] sm:$0xf]
  %v99 = vld [vmem:[%s1 + $0xb8] sm:$0xf]
  %v100 = vld [vmem:[%s1 + $0xbc] sm:$0xf]
  %v101 = vld [vmem:[%s1 + $0xc0] sm:$0xf]
  %v102 = vld [vmem:[%s1 + $0xc4] sm:$0xf]
  %v103 = vld [vmem:[%s1 + $0xc8] sm:$0xf]
  %v104 = vld [vmem:[%s1 + $0xcc] sm:$0xf]
  %v105 = vld [vmem:[%s1 + $0xd0] sm:$0xf]
  %v106 = vld [vmem:[%s1 + $0xd4] sm:$0xf]
  %v107 = vld [vmem:[%s1 + $0xd8] sm:$0xf]
  %v108 = vld [vmem:[%s1 + $0xdc] sm:$0xf]
  %v109 = vld [vmem:[%s1 + $0xe0] sm:$0xf]
  %v110 = vld [vmem:[%s1 + $0xe4] sm:$0xf]
  %v111 = vld [vmem:[%s1 + $0xe8] sm:$0xf]
  %v112 = vld [vmem:[%s1 + $0xec] sm:$0xf]
  %v113 = vld [vmem:[%s1 + $0xf0] sm:$0xf]
  %v114 = vld [vmem:[%s1 + $0xf4] sm:$0xf]
  %v115 = vld [vmem:[%s1 + $0xf8] sm:$0xf]
  %v116 = vld [vmem:[%s1 + $0xfc] sm:$0xf]
  %v117 = vld [vmem:[%s2] sm:$0x1]
  %v119 = vlaneseq
  %v120 = vshrl.u32 %v119, 7
  %v121 = vsub.s32 0, %v120
  %v122 = vrot.slane %v117, %v121
  %v156 = vunpack.c.l.b16 %v21
  %v157 = vunpack.c.h.b16 %v21
  %v158 = vunpack.c.l.b16 %v22
  %v159 = vunpack.c.h.b16 %v22
  %v160 = vunpack.c.l.b16 %v23
  %v161 = vunpack.c.h.b16 %v23
  %v162 = vunpack.c.l.b16 %v24
  %v163 = vunpack.c.h.b16 %v24
  %v164 = vunpack.c.l.b16 %v25
  %v165 = vunpack.c.h.b16 %v25
  %v166 = vunpack.c.l.b16 %v26
  %v167 = vunpack.c.h.b16 %v26
  %v168 = vunpack.c.l.b16 %v27
  %v169 = vunpack.c.h.b16 %v27
  %v170 = vunpack.c.l.b16 %v28
  %v171 = vunpack.c.h.b16 %v28
  %v172 = vunpack.c.l.b16 %v29
  %v173 = vunpack.c.h.b16 %v29
  %v174 = vunpack.c.l.b16 %v30
  %v175 = vunpack.c.h.b16 %v30
  %v176 = vunpack.c.l.b16 %v31
  %v177 = vunpack.c.h.b16 %v31
  %v178 = vunpack.c.l.b16 %v32
  %v179 = vunpack.c.h.b16 %v32
  %v180 = vunpack.c.l.b16 %v33
  %v181 = vunpack.c.h.b16 %v33
  %v182 = vunpack.c.l.b16 %v34
  %v183 = vunpack.c.h.b16 %v34
  %v184 = vunpack.c.l.b16 %v35
  %v185 = vunpack.c.h.b16 %v35
  %v186 = vunpack.c.l.b16 %v36
  %v187 = vunpack.c.h.b16 %v36
  %v188 = vunpack.c.l.b16 %v37
  %v189 = vunpack.c.h.b16 %v37
  %v190 = vunpack.c.l.b16 %v38
  %v191 = vunpack.c.h.b16 %v38
  %v192 = vunpack.c.l.b16 %v39
  %v193 = vunpack.c.h.b16 %v39
  %v194 = vunpack.c.l.b16 %v40
  %v195 = vunpack.c.h.b16 %v40
  %v196 = vunpack.c.l.b16 %v41
  %v197 = vunpack.c.h.b16 %v41
  %v198 = vunpack.c.l.b16 %v42
  %v199 = vunpack.c.h.b16 %v42
  %v200 = vunpack.c.l.b16 %v43
  %v201 = vunpack.c.h.b16 %v43
  %v202 = vunpack.c.l.b16 %v44
  %v203 = vunpack.c.h.b16 %v44
  %v204 = vunpack.c.l.b16 %v45
  %v205 = vunpack.c.h.b16 %v45
  %v206 = vunpack.c.l.b16 %v46
  %v207 = vunpack.c.h.b16 %v46
  %v208 = vunpack.c.l.b16 %v47
  %v209 = vunpack.c.h.b16 %v47
  %v210 = vunpack.c.l.b16 %v48
  %v211 = vunpack.c.h.b16 %v48
  %v212 = vunpack.c.l.b16 %v49
  %v213 = vunpack.c.h.b16 %v49
  %v214 = vunpack.c.l.b16 %v50
  %v215 = vunpack.c.h.b16 %v50
  %v216 = vunpack.c.l.b16 %v51
  %v217 = vunpack.c.h.b16 %v51
  %v218 = vunpack.c.l.b16 %v52
  %v219 = vunpack.c.h.b16 %v52
  %v220 = vpack.c.b16 %v160, %v156
  %v221 = vpack.c.b16 %v161, %v157
  %v222 = vpack.c.b16 %v162, %v158
  %v223 = vpack.c.b16 %v163, %v159
  %v224 = vpack.c.b16 %v168, %v164
  %v225 = vpack.c.b16 %v169, %v165
  %v226 = vpack.c.b16 %v170, %v166
  %v227 = vpack.c.b16 %v171, %v167
  %v228 = vpack.c.b16 %v176, %v172
  %v229 = vpack.c.b16 %v177, %v173
  %v230 = vpack.c.b16 %v178, %v174
  %v231 = vpack.c.b16 %v179, %v175
  %v232 = vpack.c.b16 %v184, %v180
  %v233 = vpack.c.b16 %v185, %v181
  %v234 = vpack.c.b16 %v186, %v182
  %v235 = vpack.c.b16 %v187, %v183
  %v236 = vpack.c.b16 %v192, %v188
  %v237 = vpack.c.b16 %v193, %v189
  %v238 = vpack.c.b16 %v194, %v190
  %v239 = vpack.c.b16 %v195, %v191
  %v240 = vpack.c.b16 %v200, %v196
  %v241 = vpack.c.b16 %v201, %v197
  %v242 = vpack.c.b16 %v202, %v198
  %v243 = vpack.c.b16 %v203, %v199
  %v244 = vpack.c.b16 %v208, %v204
  %v245 = vpack.c.b16 %v209, %v205
  %v246 = vpack.c.b16 %v210, %v206
  %v247 = vpack.c.b16 %v211, %v207
  %v248 = vpack.c.b16 %v216, %v212
  %v249 = vpack.c.b16 %v217, %v213
  %v250 = vpack.c.b16 %v218, %v214
  %v251 = vpack.c.b16 %v219, %v215
  %v348 = vunpack.c.l.b16 %v53
  %v349 = vunpack.c.l.b16 %v54
  %v350 = vunpack.c.l.b16 %v55
  %v351 = vunpack.c.l.b16 %v56
  %v352 = vunpack.c.l.b16 %v57
  %v353 = vunpack.c.l.b16 %v58
  %v354 = vunpack.c.l.b16 %v59
  %v355 = vunpack.c.l.b16 %v60
  %v356 = vunpack.c.l.b16 %v61
  %v357 = vunpack.c.l.b16 %v62
  %v358 = vunpack.c.l.b16 %v63
  %v359 = vunpack.c.l.b16 %v64
  %v360 = vunpack.c.l.b16 %v65
  %v361 = vunpack.c.l.b16 %v66
  %v362 = vunpack.c.l.b16 %v67
  %v363 = vunpack.c.l.b16 %v68
  %v364 = vunpack.c.l.b16 %v69
  %v365 = vunpack.c.l.b16 %v70
  %v366 = vunpack.c.l.b16 %v71
  %v367 = vunpack.c.l.b16 %v72
  %v368 = vunpack.c.l.b16 %v73
  %v369 = vunpack.c.l.b16 %v74
  %v370 = vunpack.c.l.b16 %v75
  %v371 = vunpack.c.l.b16 %v76
  %v372 = vunpack.c.l.b16 %v77
  %v373 = vunpack.c.l.b16 %v78
  %v374 = vunpack.c.l.b16 %v79
  %v375 = vunpack.c.l.b16 %v80
  %v376 = vunpack.c.l.b16 %v81
  %v377 = vunpack.c.l.b16 %v82
  %v378 = vunpack.c.l.b16 %v83
  %v379 = vunpack.c.l.b16 %v84
  %v380 = vunpack.c.l.b16 %v85
  %v381 = vunpack.c.l.b16 %v86
  %v382 = vunpack.c.l.b16 %v87
  %v383 = vunpack.c.l.b16 %v88
  %v384 = vunpack.c.l.b16 %v89
  %v385 = vunpack.c.l.b16 %v90
  %v386 = vunpack.c.l.b16 %v91
  %v387 = vunpack.c.l.b16 %v92
  %v388 = vunpack.c.l.b16 %v93
  %v389 = vunpack.c.l.b16 %v94
  %v390 = vunpack.c.l.b16 %v95
  %v391 = vunpack.c.l.b16 %v96
  %v392 = vunpack.c.l.b16 %v97
  %v393 = vunpack.c.l.b16 %v98
  %v394 = vunpack.c.l.b16 %v99
  %v395 = vunpack.c.l.b16 %v100
  %v396 = vunpack.c.l.b16 %v101
  %v397 = vunpack.c.l.b16 %v102
  %v398 = vunpack.c.l.b16 %v103
  %v399 = vunpack.c.l.b16 %v104
  %v400 = vunpack.c.l.b16 %v105
  %v401 = vunpack.c.l.b16 %v106
  %v402 = vunpack.c.l.b16 %v107
  %v403 = vunpack.c.l.b16 %v108
  %v404 = vunpack.c.l.b16 %v109
  %v405 = vunpack.c.l.b16 %v110
  %v406 = vunpack.c.l.b16 %v111
  %v407 = vunpack.c.l.b16 %v112
  %v408 = vunpack.c.l.b16 %v113
  %v409 = vunpack.c.l.b16 %v114
  %v410 = vunpack.c.l.b16 %v115
  %v411 = vunpack.c.l.b16 %v116
  %v412 = vpack.c.b16 %v349, %v348
  %v413 = vpack.c.b16 %v351, %v350
  %v414 = vpack.c.b16 %v353, %v352
  %v415 = vpack.c.b16 %v355, %v354
  %v416 = vpack.c.b16 %v357, %v356
  %v417 = vpack.c.b16 %v359, %v358
  %v418 = vpack.c.b16 %v361, %v360
  %v419 = vpack.c.b16 %v363, %v362
  %v420 = vpack.c.b16 %v365, %v364
  %v421 = vpack.c.b16 %v367, %v366
  %v422 = vpack.c.b16 %v369, %v368
  %v423 = vpack.c.b16 %v371, %v370
  %v424 = vpack.c.b16 %v373, %v372
  %v425 = vpack.c.b16 %v375, %v374
  %v426 = vpack.c.b16 %v377, %v376
  %v427 = vpack.c.b16 %v379, %v378
  %v428 = vpack.c.b16 %v381, %v380
  %v429 = vpack.c.b16 %v383, %v382
  %v430 = vpack.c.b16 %v385, %v384
  %v431 = vpack.c.b16 %v387, %v386
  %v432 = vpack.c.b16 %v389, %v388
  %v433 = vpack.c.b16 %v391, %v390
  %v434 = vpack.c.b16 %v393, %v392
  %v435 = vpack.c.b16 %v395, %v394
  %v436 = vpack.c.b16 %v397, %v396
  %v437 = vpack.c.b16 %v399, %v398
  %v438 = vpack.c.b16 %v401, %v400
  %v439 = vpack.c.b16 %v403, %v402
  %v440 = vpack.c.b16 %v405, %v404
  %v441 = vpack.c.b16 %v407, %v406
  %v442 = vpack.c.b16 %v409, %v408
  %v443 = vpack.c.b16 %v411, %v410
  %476 = vmatprep.subr.bf16.mxu0 0
  %477 = vmatpush1.bf16.msra.mxu0 %v412
  %478 = vmatprep.subr.bf16.mxu0 0
  %479 = vmatpush1.bf16.msra.mxu0 %v413
  %480 = vmatprep.subr.bf16.mxu0 0
  %481 = vmatpush1.bf16.msra.mxu0 %v414
  %482 = vmatprep.subr.bf16.mxu0 0
  %483 = vmatpush1.bf16.msra.mxu0 %v415
  %484 = vmatprep.subr.bf16.mxu0 0
  %485 = vmatpush1.bf16.msra.mxu0 %v416
  %486 = vmatprep.subr.bf16.mxu0 0
  %487 = vmatpush1.bf16.msra.mxu0 %v417
  %488 = vmatprep.subr.bf16.mxu0 0
  %489 = vmatpush1.bf16.msra.mxu0 %v418
  %490 = vmatprep.subr.bf16.mxu0 0
  %491 = vmatpush1.bf16.msra.mxu0 %v419
  %492 = vmatprep.subr.bf16.mxu0 0
  %493 = vmatpush1.bf16.msra.mxu0 %v420
  %494 = vmatprep.subr.bf16.mxu0 0
  %495 = vmatpush1.bf16.msra.mxu0 %v421
  %496 = vmatprep.subr.bf16.mxu0 0
  %497 = vmatpush1.bf16.msra.mxu0 %v422
  %498 = vmatprep.subr.bf16.mxu0 0
  %499 = vmatpush1.bf16.msra.mxu0 %v423
  %500 = vmatprep.subr.bf16.mxu0 0
  %501 = vmatpush1.bf16.msra.mxu0 %v424
  %502 = vmatprep.subr.bf16.mxu0 0
  %503 = vmatpush1.bf16.msra.mxu0 %v425
  %504 = vmatprep.subr.bf16.mxu0 0
  %505 = vmatpush1.bf16.msra.mxu0 %v426
  %506 = vmatprep.subr.bf16.mxu0 0
  %507 = vmatpush1.bf16.msra.mxu0 %v427
  %508 = vmatprep.mubr.bf16.mxu0 %v221
  %509 = vmatmul.mubr.bf16.gmra.mrb[0].mxu0 %v220
  %v510 = vpop.f32.mrb[0].mxu0
  %v511 = vadd.f32 %v122, %v510
  %v512 = vpop.f32.mrb[0].mxu0
  %v513 = vpop.f32.mrb[0].mxu0
  %v514 = vadd.f32 %v122, %v513
  %v515 = vpop.f32.mrb[0].mxu0
  %516 = vmatprep.mubr.bf16.mxu0 %v225
  %517 = vmatmul.mubr.bf16.gmra.mrb[0].mxu0 %v224
  %v518 = vpop.f32.mrb[0].mxu0
  %v519 = vadd.f32 %v122, %v518
  %v520 = vpop.f32.mrb[0].mxu0
  %v521 = vpop.f32.mrb[0].mxu0
  %v522 = vadd.f32 %v122, %v521
  %v523 = vpop.f32.mrb[0].mxu0
  %524 = vmatprep.mubr.bf16.mxu0 %v229
  %525 = vmatmul.mubr.bf16.gmra.mrb[0].mxu0 %v228
  %v526 = vpop.f32.mrb[0].mxu0
  %v527 = vadd.f32 %v122, %v526
  %v528 = vpop.f32.mrb[0].mxu0
  %v529 = vpop.f32.mrb[0].mxu0
  %v530 = vadd.f32 %v122, %v529
  %v531 = vpop.f32.mrb[0].mxu0
  %532 = vmatprep.mubr.bf16.mxu0 %v233
  %533 = vmatmul.mubr.bf16.gmra.mrb[0].mxu0 %v232
  %v534 = vpop.f32.mrb[0].mxu0
  %v535 = vadd.f32 %v122, %v534
  %v536 = vpop.f32.mrb[0].mxu0
  %v537 = vpop.f32.mrb[0].mxu0
  %v538 = vadd.f32 %v122, %v537
  %v539 = vpop.f32.mrb[0].mxu0
  %540 = vmatprep.mubr.bf16.mxu0 %v237
  %541 = vmatmul.mubr.bf16.gmra.mrb[0].mxu0 %v236
  %v542 = vpop.f32.mrb[0].mxu0
  %v543 = vadd.f32 %v122, %v542
  %v544 = vpop.f32.mrb[0].mxu0
  %v545 = vpop.f32.mrb[0].mxu0
  %v546 = vadd.f32 %v122, %v545
  %v547 = vpop.f32.mrb[0].mxu0
  %548 = vmatprep.mubr.bf16.mxu0 %v241
  %549 = vmatmul.mubr.bf16.gmra.mrb[0].mxu0 %v240
  %v550 = vpop.f32.mrb[0].mxu0
  %v551 = vadd.f32 %v122, %v550
  %v552 = vpop.f32.mrb[0].mxu0
  %v553 = vpop.f32.mrb[0].mxu0
  %v554 = vadd.f32 %v122, %v553
  %v555 = vpop.f32.mrb[0].mxu0
  %556 = vmatprep.mubr.bf16.mxu0 %v245
  %557 = vmatmul.mubr.bf16.gmra.mrb[0].mxu0 %v244
  %v558 = vpop.f32.mrb[0].mxu0
  %v559 = vadd.f32 %v122, %v558
  %v560 = vpop.f32.mrb[0].mxu0
  %v561 = vpop.f32.mrb[0].mxu0
  %v562 = vadd.f32 %v122, %v561
  %v563 = vpop.f32.mrb[0].mxu0
  %564 = vmatprep.mubr.bf16.mxu0 %v249
  %565 = vmatmul.mubr.bf16.gmra.mrb[0].mxu0 %v248
  %v566 = vpop.f32.mrb[0].mxu0
  %v567 = vadd.f32 %v122, %v566
  %v568 = vpop.f32.mrb[0].mxu0
  %v569 = vpop.f32.mrb[0].mxu0
  %v570 = vadd.f32 %v122, %v569
  %v571 = vpop.f32.mrb[0].mxu0
  %572 = vdwg.mxu0
  %573 = vmatprep.subr.bf16.mxu0 0
  %574 = vmatpush1.bf16.msra.mxu0 %v428
  %575 = vmatprep.subr.bf16.mxu0 0
  %576 = vmatpush1.bf16.msra.mxu0 %v429
  %577 = vmatprep.subr.bf16.mxu0 0
  %578 = vmatpush1.bf16.msra.mxu0 %v430
  %579 = vmatprep.subr.bf16.mxu0 0
  %580 = vmatpush1.bf16.msra.mxu0 %v431
  %581 = vmatprep.subr.bf16.mxu0 0
  %582 = vmatpush1.bf16.msra.mxu0 %v432
  %583 = vmatprep.subr.bf16.mxu0 0
  %584 = vmatpush1.bf16.msra.mxu0 %v433
  %585 = vmatprep.subr.bf16.mxu0 0
  %586 = vmatpush1.bf16.msra.mxu0 %v434
  %587 = vmatprep.subr.bf16.mxu0 0
  %588 = vmatpush1.bf16.msra.mxu0 %v435
  %589 = vmatprep.subr.bf16.mxu0 0
  %590 = vmatpush1.bf16.msra.mxu0 %v436
  %591 = vmatprep.subr.bf16.mxu0 0
  %592 = vmatpush1.bf16.msra.mxu0 %v437
  %593 = vmatprep.subr.bf16.mxu0 0
  %594 = vmatpush1.bf16.msra.mxu0 %v438
  %595 = vmatprep.subr.bf16.mxu0 0
  %596 = vmatpush1.bf16.msra.mxu0 %v439
  %597 = vmatprep.subr.bf16.mxu0 0
  %598 = vmatpush1.bf16.msra.mxu0 %v440
  %599 = vmatprep.subr.bf16.mxu0 0
  %600 = vmatpush1.bf16.msra.mxu0 %v441
  %601 = vmatprep.subr.bf16.mxu0 0
  %602 = vmatpush1.bf16.msra.mxu0 %v442
  %603 = vmatprep.subr.bf16.mxu0 0
  %604 = vmatpush1.bf16.msra.mxu0 %v443
  %605 = vmatprep.mubr.bf16.mxu0 %v223
  %606 = vmatmul.mubr.bf16.gmra.mrb[0].mxu0 %v222
  %v607 = vpop.f32.mrb[0].mxu0
  %v608 = vadd.f32 %v511, %v607
  %v609 = vpop.f32.mrb[0].mxu0
  %v610 = vpop.f32.mrb[0].mxu0
  %v611 = vadd.f32 %v514, %v610
  %v612 = vpop.f32.mrb[0].mxu0
  %613 = vmatprep.mubr.bf16.mxu0 %v227
  %614 = vmatmul.mubr.bf16.gmra.mrb[0].mxu0 %v226
  %v615 = vpop.f32.mrb[0].mxu0
  %v616 = vadd.f32 %v519, %v615
  %v617 = vpop.f32.mrb[0].mxu0
  %v618 = vpop.f32.mrb[0].mxu0
  %v619 = vadd.f32 %v522, %v618
  %v620 = vpop.f32.mrb[0].mxu0
  %621 = vmatprep.mubr.bf16.mxu0 %v231
  %622 = vmatmul.mubr.bf16.gmra.mrb[0].mxu0 %v230
  %v623 = vpop.f32.mrb[0].mxu0
  %v624 = vadd.f32 %v527, %v623
  %v625 = vpop.f32.mrb[0].mxu0
  %v626 = vpop.f32.mrb[0].mxu0
  %v627 = vadd.f32 %v530, %v626
  %v628 = vpop.f32.mrb[0].mxu0
  %629 = vmatprep.mubr.bf16.mxu0 %v235
  %630 = vmatmul.mubr.bf16.gmra.mrb[0].mxu0 %v234
  %v631 = vpop.f32.mrb[0].mxu0
  %v632 = vadd.f32 %v535, %v631
  %v633 = vpop.f32.mrb[0].mxu0
  %v634 = vpop.f32.mrb[0].mxu0
  %v635 = vadd.f32 %v538, %v634
  %v636 = vpop.f32.mrb[0].mxu0
  %637 = vmatprep.mubr.bf16.mxu0 %v239
  %638 = vmatmul.mubr.bf16.gmra.mrb[0].mxu0 %v238
  %v639 = vpop.f32.mrb[0].mxu0
  %v640 = vadd.f32 %v543, %v639
  %v641 = vpop.f32.mrb[0].mxu0
  %v642 = vpop.f32.mrb[0].mxu0
  %v643 = vadd.f32 %v546, %v642
  %v644 = vpop.f32.mrb[0].mxu0
  %645 = vmatprep.mubr.bf16.mxu0 %v243
  %646 = vmatmul.mubr.bf16.gmra.mrb[0].mxu0 %v242
  %v647 = vpop.f32.mrb[0].mxu0
  %v648 = vadd.f32 %v551, %v647
  %v649 = vpop.f32.mrb[0].mxu0
  %v650 = vpop.f32.mrb[0].mxu0
  %v651 = vadd.f32 %v554, %v650
  %v652 = vpop.f32.mrb[0].mxu0
  %653 = vmatprep.mubr.bf16.mxu0 %v247
  %654 = vmatmul.mubr.bf16.gmra.mrb[0].mxu0 %v246
  %v655 = vpop.f32.mrb[0].mxu0
  %v656 = vadd.f32 %v559, %v655
  %v657 = vpop.f32.mrb[0].mxu0
  %v658 = vpop.f32.mrb[0].mxu0
  %v659 = vadd.f32 %v562, %v658
  %v660 = vpop.f32.mrb[0].mxu0
  %661 = vmatprep.mubr.bf16.mxu0 %v251
  %662 = vmatmul.mubr.bf16.gmra.mrb[0].mxu0 %v250
  %v663 = vpop.f32.mrb[0].mxu0
  %v664 = vadd.f32 %v567, %v663
  %v665 = vpop.f32.mrb[0].mxu0
  %v666 = vpop.f32.mrb[0].mxu0
  %v667 = vadd.f32 %v570, %v666
  %v668 = vpop.f32.mrb[0].mxu0
  %669 = vdwg.mxu0
  %v670 = vadd.f32 %v608, %v611
  %v671 = vadd.f32 %v670, %v616
  %v672 = vadd.f32 %v671, %v619
  %v673 = vadd.f32 %v672, %v624
  %v674 = vadd.f32 %v673, %v627
  %v675 = vadd.f32 %v674, %v632
  %v676 = vadd.f32 %v675, %v635
  %v677 = vadd.f32 %v676, %v640
  %v678 = vadd.f32 %v677, %v643
  %v679 = vadd.f32 %v678, %v648
  %v680 = vadd.f32 %v679, %v651
  %v681 = vadd.f32 %v680, %v656
  %v682 = vadd.f32 %v681, %v659
  %v683 = vadd.f32 %v682, %v664
  %v684 = vadd.f32 %v683, %v667
  %v685 = vrot.slane %v684, 4
  %v686 = vadd.f32 %v684, %v685
  %v687 = vrot.slane %v686, 2
  %v688 = vadd.f32 %v686, %v687
  %v689 = vrot.slane %v688, 1
  %v690 = vadd.f32 %v688, %v689
  %v691 = vmul.f32 %v690, 0.0078125
  %v692 = vmul.f32 %v608, %v608
  %v693 = vmul.f32 %v611, %v611
  %v694 = vmul.f32 %v616, %v616
  %v695 = vmul.f32 %v619, %v619
  %v696 = vmul.f32 %v624, %v624
  %v697 = vmul.f32 %v627, %v627
  %v698 = vmul.f32 %v632, %v632
  %v699 = vmul.f32 %v635, %v635
  %v700 = vmul.f32 %v640, %v640
  %v701 = vmul.f32 %v643, %v643
  %v702 = vmul.f32 %v648, %v648
  %v703 = vmul.f32 %v651, %v651
  %v704 = vmul.f32 %v656, %v656
  %v705 = vmul.f32 %v659, %v659
  %v706 = vmul.f32 %v664, %v664
  %v707 = vmul.f32 %v667, %v667
  %v708 = vadd.f32 %v692, %v693
  %v709 = vadd.f32 %v708, %v694
  %v710 = vadd.f32 %v709, %v695
  %v711 = vadd.f32 %v710, %v696
  %v712 = vadd.f32 %v711, %v697
  %v713 = vadd.f32 %v712, %v698
  %v714 = vadd.f32 %v713, %v699
  %v715 = vadd.f32 %v714, %v700
  %v716 = vadd.f32 %v715, %v701
  %v717 = vadd.f32 %v716, %v702
  %v718 = vadd.f32 %v717, %v703
  %v719 = vadd.f32 %v718, %v704
  %v720 = vadd.f32 %v719, %v705
  %v721 = vadd.f32 %v720, %v706
  %v722 = vadd.f32 %v721, %v707
  %v723 = vrot.slane %v722, 4
  %v724 = vadd.f32 %v722, %v723
  %v725 = vrot.slane %v724, 2
  %v726 = vadd.f32 %v724, %v725
  %v727 = vrot.slane %v726, 1
  %v728 = vadd.f32 %v726, %v727
  %v729 = vmul.f32 %v728, 0.0078125
  %v730 = vmul.f32 %v691, %v691
  %v731 = vsub.f32 %v729, %v730
  %v732 = vadd.f32 %v731, 1e-05
  %v733 = vrsqrt.pop %v732
  %v734 = vld [vmem:[%s3] sm:$0x1]
  %v735 = vmul.f32 %v733, %v734
  %v736 = vsub.f32 %v608, %v691
  %v737 = vsub.f32 %v611, %v691
  %v738 = vsub.f32 %v616, %v691
  %v739 = vsub.f32 %v619, %v691
  %v740 = vsub.f32 %v624, %v691
  %v741 = vsub.f32 %v627, %v691
  %v742 = vsub.f32 %v632, %v691
  %v743 = vsub.f32 %v635, %v691
  %v744 = vsub.f32 %v640, %v691
  %v745 = vsub.f32 %v643, %v691
  %v746 = vsub.f32 %v648, %v691
  %v747 = vsub.f32 %v651, %v691
  %v748 = vsub.f32 %v656, %v691
  %v749 = vsub.f32 %v659, %v691
  %v750 = vsub.f32 %v664, %v691
  %v751 = vsub.f32 %v667, %v691
  %v752 = vlaneseq
  %v753 = vshrl.u32 %v752, 7
  %v754 = vsub.s32 0, %v753
  %v755 = vrot.slane %v735, %v754
  %v756 = vmul.f32 %v736, %v755
  %v757 = vmul.f32 %v737, %v755
  %v758 = vmul.f32 %v738, %v755
  %v759 = vmul.f32 %v739, %v755
  %v760 = vmul.f32 %v740, %v755
  %v761 = vmul.f32 %v741, %v755
  %v762 = vmul.f32 %v742, %v755
  %v763 = vmul.f32 %v743, %v755
  %v764 = vmul.f32 %v744, %v755
  %v765 = vmul.f32 %v745, %v755
  %v766 = vmul.f32 %v746, %v755
  %v767 = vmul.f32 %v747, %v755
  %v768 = vmul.f32 %v748, %v755
  %v769 = vmul.f32 %v749, %v755
  %v770 = vmul.f32 %v750, %v755
  %v771 = vmul.f32 %v751, %v755
  %v772 = vld [vmem:[%s4] sm:$0x1]
  %v774 = vlaneseq
  %v775 = vshrl.u32 %v774, 7
  %v776 = vsub.s32 0, %v775
  %v777 = vrot.slane %v772, %v776
  %v779 = vadd.f32 %v756, %v777
  %v780 = vadd.f32 %v757, %v777
  %v781 = vadd.f32 %v758, %v777
  %v782 = vadd.f32 %v759, %v777
  %v783 = vadd.f32 %v760, %v777
  %v784 = vadd.f32 %v761, %v777
  %v785 = vadd.f32 %v762, %v777
  %v786 = vadd.f32 %v763, %v777
  %v787 = vadd.f32 %v764, %v777
  %v788 = vadd.f32 %v765, %v777
  %v789 = vadd.f32 %v766, %v777
  %v790 = vadd.f32 %v767, %v777
  %v791 = vadd.f32 %v768, %v777
  %v792 = vadd.f32 %v769, %v777
  %v793 = vadd.f32 %v770, %v777
  %v794 = vadd.f32 %v771, %v777
  %v795 = vpack.c.bf16 %v780, %v779
  %v796 = vpack.c.bf16 %v782, %v781
  %v797 = vpack.c.bf16 %v784, %v783
  %v798 = vpack.c.bf16 %v786, %v785
  %v799 = vpack.c.bf16 %v788, %v787
  %v800 = vpack.c.bf16 %v790, %v789
  %v801 = vpack.c.bf16 %v792, %v791
  %v802 = vpack.c.bf16 %v794, %v793
  %v811 = vunpack.c.l.b16 %v795
  %v812 = vunpack.c.h.b16 %v795
  %v813 = vunpack.c.l.b16 %v796
  %v814 = vunpack.c.h.b16 %v796
  %v815 = vunpack.c.l.b16 %v797
  %v816 = vunpack.c.h.b16 %v797
  %v817 = vunpack.c.l.b16 %v798
  %v818 = vunpack.c.h.b16 %v798
  %v819 = vunpack.c.l.b16 %v799
  %v820 = vunpack.c.h.b16 %v799
  %v821 = vunpack.c.l.b16 %v800
  %v822 = vunpack.c.h.b16 %v800
  %v823 = vunpack.c.l.b16 %v801
  %v824 = vunpack.c.h.b16 %v801
  %v825 = vunpack.c.l.b16 %v802
  %v826 = vunpack.c.h.b16 %v802
  %v827 = vpack.c.b16 %v811, %v811
  %v828 = vpack.c.b16 %v812, %v812
  %v829 = vpack.c.b16 %v813, %v813
  %v830 = vpack.c.b16 %v814, %v814
  %v831 = vpack.c.b16 %v815, %v815
  %v832 = vpack.c.b16 %v816, %v816
  %v833 = vpack.c.b16 %v817, %v817
  %v834 = vpack.c.b16 %v818, %v818
  %v835 = vpack.c.b16 %v819, %v819
  %v836 = vpack.c.b16 %v820, %v820
  %v837 = vpack.c.b16 %v821, %v821
  %v838 = vpack.c.b16 %v822, %v822
  %v839 = vpack.c.b16 %v823, %v823
  %v840 = vpack.c.b16 %v824, %v824
  %v841 = vpack.c.b16 %v825, %v825
  %v842 = vpack.c.b16 %v826, %v826
  %859 = vst [vmem:[%s5] sm:$0xf] %v827
  %860 = vst [vmem:[%s5 + $0x4] sm:$0xf] %v828
  %861 = vst [vmem:[%s5 + $0x8] sm:$0xf] %v829
  %862 = vst [vmem:[%s5 + $0xc] sm:$0xf] %v830
  %863 = vst [vmem:[%s5 + $0x10] sm:$0xf] %v831
  %864 = vst [vmem:[%s5 + $0x14] sm:$0xf] %v832
  %865 = vst [vmem:[%s5 + $0x18] sm:$0xf] %v833
  %866 = vst [vmem:[%s5 + $0x1c] sm:$0xf] %v834
  %867 = vst [vmem:[%s5 + $0x20] sm:$0xf] %v835
  %868 = vst [vmem:[%s5 + $0x24] sm:$0xf] %v836
  %869 = vst [vmem:[%s5 + $0x28] sm:$0xf] %v837
  %870 = vst [vmem:[%s5 + $0x2c] sm:$0xf] %v838
  %871 = vst [vmem:[%s5 + $0x30] sm:$0xf] %v839
  %872 = vst [vmem:[%s5 + $0x34] sm:$0xf] %v840
  %873 = vst [vmem:[%s5 + $0x38] sm:$0xf] %v841
  %874 = vst [vmem:[%s5 + $0x3c] sm:$0xf] %v842
  // Predicated region
  $region22: #{network_forward.21} parent=0 // pred_check
    _
  $region23: #{network_forward.21} parent=0 // pred_check_branch
    %876 = sbr.rel (0) target = $region25
  $region24: #{network_forward.21} parent=0 // pred_region
    _
  $region25: #{network_forward.21} parent=0 // pred_fallthru
    _
  // Predicated region
  $region26: #{network_forward.21} parent=0 // pred_check
    _
  $region27: #{network_forward.21} parent=0 // pred_check_branch
    %878 = sbr.rel (0) target = $region29
  $region28: #{network_forward.21} parent=0 // pred_region
    _
  $region29: #{network_forward.21} parent=0 // pred_fallthru
    _

// kernel: network_forward.22
$region0: #{network_forward.22}
  #allocation0 [shape = 'u32[]', space=smem, size = 0x4, offset = 0x4, fixed_abs, tag = 'smem constant byte address 0x4 - core index']
  #allocation1 [shape = 'u32[144,128]{1,0:T(1,128)}', space=vmem, size = 0x12000, scoped, tag = 'internal scratch']
  %s0 = inlined_call_operand.vmem [shape: bf16[32,256], index: 0, kind: input, shape index: {}]
  %s1 = inlined_call_operand.vmem [shape: bf16[256,128], index: 1, kind: input, shape index: {}]
  %s2 = inlined_call_operand.vmem [shape: f32[1,128], index: 2, kind: input, shape index: {}]
  %s3 = inlined_call_operand.vmem [shape: bf16[32,128], index: 3, kind: output, shape index: {}]
  %s4 = sld [smem:[#allocation0]]
  $region22: #{network_forward.22} parent=0
    _
  %s6 = ssub.s32 1, %s4
  %s7 = scalar_select 0, %s6, %s4
  // Predicated region
  $region2: #{network_forward.22} parent=0 // pred_check
    _
  $region3: #{network_forward.22} parent=0 // pred_check_branch
    %9 = sbr.rel (0) target = $region5
  $region4: #{network_forward.22} parent=0 // pred_region
    _
  $region5: #{network_forward.22} parent=0 // pred_fallthru
    _
  // Predicated region
  $region6: #{network_forward.22} parent=0 // pred_check
    _
  $region7: #{network_forward.22} parent=0 // pred_check_branch
    %11 = sbr.rel (0) target = $region9
  $region8: #{network_forward.22} parent=0 // pred_region
    _
  $region9: #{network_forward.22} parent=0 // pred_fallthru
    _
  // Predicated region
  $region10: #{network_forward.22} parent=0 // pred_check
    _
  $region11: #{network_forward.22} parent=0 // pred_check_branch
    %13 = sbr.rel (0) target = $region13
  $region12: #{network_forward.22} parent=0 // pred_region
    _
  $region13: #{network_forward.22} parent=0 // pred_fallthru
    _
  %v15 = vld [vmem:[%s0] sm:$0xff]
  %v16 = vld [vmem:[%s0 + $0x8] sm:$0xff]
  %v17 = vld [vmem:[%s0 + $0x10] sm:$0xff]
  %v18 = vld [vmem:[%s0 + $0x18] sm:$0xff]
  %v19 = vld [vmem:[%s1] sm:$0xf]
  %v20 = vld [vmem:[%s1 + $0x4] sm:$0xf]
  %v21 = vld [vmem:[%s1 + $0x8] sm:$0xf]
  %v22 = vld [vmem:[%s1 + $0xc] sm:$0xf]
  %v23 = vld [vmem:[%s1 + $0x10] sm:$0xf]
  %v24 = vld [vmem:[%s1 + $0x14] sm:$0xf]
  %v25 = vld [vmem:[%s1 + $0x18] sm:$0xf]
  %v26 = vld [vmem:[%s1 + $0x1c] sm:$0xf]
  %v27 = vld [vmem:[%s1 + $0x20] sm:$0xf]
  %v28 = vld [vmem:[%s1 + $0x24] sm:$0xf]
  %v29 = vld [vmem:[%s1 + $0x28] sm:$0xf]
  %v30 = vld [vmem:[%s1 + $0x2c] sm:$0xf]
  %v31 = vld [vmem:[%s1 + $0x30] sm:$0xf]
  %v32 = vld [vmem:[%s1 + $0x34] sm:$0xf]
  %v33 = vld [vmem:[%s1 + $0x38] sm:$0xf]
  %v34 = vld [vmem:[%s1 + $0x3c] sm:$0xf]
  %v35 = vld [vmem:[%s1 + $0x40] sm:$0xf]
  %v36 = vld [vmem:[%s1 + $0x44] sm:$0xf]
  %v37 = vld [vmem:[%s1 + $0x48] sm:$0xf]
  %v38 = vld [vmem:[%s1 + $0x4c] sm:$0xf]
  %v39 = vld [vmem:[%s1 + $0x50] sm:$0xf]
  %v40 = vld [vmem:[%s1 + $0x54] sm:$0xf]
  %v41 = vld [vmem:[%s1 + $0x58] sm:$0xf]
  %v42 = vld [vmem:[%s1 + $0x5c] sm:$0xf]
  %v43 = vld [vmem:[%s1 + $0x60] sm:$0xf]
  %v44 = vld [vmem:[%s1 + $0x64] sm:$0xf]
  %v45 = vld [vmem:[%s1 + $0x68] sm:$0xf]
  %v46 = vld [vmem:[%s1 + $0x6c] sm:$0xf]
  %v47 = vld [vmem:[%s1 + $0x70] sm:$0xf]
  %v48 = vld [vmem:[%s1 + $0x74] sm:$0xf]
  %v49 = vld [vmem:[%s1 + $0x78] sm:$0xf]
  %v50 = vld [vmem:[%s1 + $0x7c] sm:$0xf]
  %v51 = vld [vmem:[%s2] sm:$0x1]
  %v53 = vlaneseq
  %v54 = vshrl.u32 %v53, 7
  %v55 = vsub.s32 0, %v54
  %v56 = vrot.slane %v51, %v55
  %v62 = vunpack.c.l.b16 %v15
  %v63 = vunpack.c.h.b16 %v15
  %v64 = vunpack.c.l.b16 %v16
  %v65 = vunpack.c.h.b16 %v16
  %v66 = vunpack.c.l.b16 %v17
  %v67 = vunpack.c.h.b16 %v17
  %v68 = vunpack.c.l.b16 %v18
  %v69 = vunpack.c.h.b16 %v18
  %v70 = vpack.c.b16 %v64, %v62
  %v71 = vpack.c.b16 %v65, %v63
  %v72 = vpack.c.b16 %v68, %v66
  %v73 = vpack.c.b16 %v69, %v67
  %v110 = vunpack.c.l.b16 %v19
  %v111 = vunpack.c.l.b16 %v20
  %v112 = vunpack.c.l.b16 %v21
  %v113 = vunpack.c.l.b16 %v22
  %v114 = vunpack.c.l.b16 %v23
  %v115 = vunpack.c.l.b16 %v24
  %v116 = vunpack.c.l.b16 %v25
  %v117 = vunpack.c.l.b16 %v26
  %v118 = vunpack.c.l.b16 %v27
  %v119 = vunpack.c.l.b16 %v28
  %v120 = vunpack.c.l.b16 %v29
  %v121 = vunpack.c.l.b16 %v30
  %v122 = vunpack.c.l.b16 %v31
  %v123 = vunpack.c.l.b16 %v32
  %v124 = vunpack.c.l.b16 %v33
  %v125 = vunpack.c.l.b16 %v34
  %v126 = vunpack.c.l.b16 %v35
  %v127 = vunpack.c.l.b16 %v36
  %v128 = vunpack.c.l.b16 %v37
  %v129 = vunpack.c.l.b16 %v38
  %v130 = vunpack.c.l.b16 %v39
  %v131 = vunpack.c.l.b16 %v40
  %v132 = vunpack.c.l.b16 %v41
  %v133 = vunpack.c.l.b16 %v42
  %v134 = vunpack.c.l.b16 %v43
  %v135 = vunpack.c.l.b16 %v44
  %v136 = vunpack.c.l.b16 %v45
  %v137 = vunpack.c.l.b16 %v46
  %v138 = vunpack.c.l.b16 %v47
  %v139 = vunpack.c.l.b16 %v48
  %v140 = vunpack.c.l.b16 %v49
  %v141 = vunpack.c.l.b16 %v50
  %v142 = vpack.c.b16 %v111, %v110
  %v143 = vpack.c.b16 %v113, %v112
  %v144 = vpack.c.b16 %v115, %v114
  %v145 = vpack.c.b16 %v117, %v116
  %v146 = vpack.c.b16 %v119, %v118
  %v147 = vpack.c.b16 %v121, %v120
  %v148 = vpack.c.b16 %v123, %v122
  %v149 = vpack.c.b16 %v125, %v124
  %v150 = vpack.c.b16 %v127, %v126
  %v151 = vpack.c.b16 %v129, %v128
  %v152 = vpack.c.b16 %v131, %v130
  %v153 = vpack.c.b16 %v133, %v132
  %v154 = vpack.c.b16 %v135, %v134
  %v155 = vpack.c.b16 %v137, %v136
  %v156 = vpack.c.b16 %v139, %v138
  %v157 = vpack.c.b16 %v141, %v140
  %174 = vmatprep.subr.bf16.mxu0 0
  %175 = vmatpush1.bf16.msra.mxu0 %v142
  %176 = vmatprep.subr.bf16.mxu0 0
  %177 = vmatpush1.bf16.msra.mxu0 %v143
  %178 = vmatprep.subr.bf16.mxu0 0
  %179 = vmatpush1.bf16.msra.mxu0 %v144
  %180 = vmatprep.subr.bf16.mxu0 0
  %181 = vmatpush1.bf16.msra.mxu0 %v145
  %182 = vmatprep.subr.bf16.mxu0 0
  %183 = vmatpush1.bf16.msra.mxu0 %v146
  %184 = vmatprep.subr.bf16.mxu0 0
  %185 = vmatpush1.bf16.msra.mxu0 %v147
  %186 = vmatprep.subr.bf16.mxu0 0
  %187 = vmatpush1.bf16.msra.mxu0 %v148
  %188 = vmatprep.subr.bf16.mxu0 0
  %189 = vmatpush1.bf16.msra.mxu0 %v149
  %190 = vmatprep.subr.bf16.mxu0 0
  %191 = vmatpush1.bf16.msra.mxu0 %v150
  %192 = vmatprep.subr.bf16.mxu0 0
  %193 = vmatpush1.bf16.msra.mxu0 %v151
  %194 = vmatprep.subr.bf16.mxu0 0
  %195 = vmatpush1.bf16.msra.mxu0 %v152
  %196 = vmatprep.subr.bf16.mxu0 0
  %197 = vmatpush1.bf16.msra.mxu0 %v153
  %198 = vmatprep.subr.bf16.mxu0 0
  %199 = vmatpush1.bf16.msra.mxu0 %v154
  %200 = vmatprep.subr.bf16.mxu0 0
  %201 = vmatpush1.bf16.msra.mxu0 %v155
  %202 = vmatprep.subr.bf16.mxu0 0
  %203 = vmatpush1.bf16.msra.mxu0 %v156
  %204 = vmatprep.subr.bf16.mxu0 0
  %205 = vmatpush1.bf16.msra.mxu0 %v157
  %206 = vmatprep.mubr.bf16.mxu0 %v71
  %207 = vmatmul.mubr.bf16.gmra.mrb[0].mxu0 %v70
  %v208 = vpop.f32.mrb[0].mxu0
  %v209 = vadd.f32 %v56, %v208
  %v210 = vpop.f32.mrb[0].mxu0
  %v211 = vpop.f32.mrb[0].mxu0
  %v212 = vadd.f32 %v56, %v211
  %v213 = vpop.f32.mrb[0].mxu0
  %214 = vmatprep.mubr.bf16.mxu0 %v73
  %215 = vmatmul.mubr.bf16.gmra.mrb[0].mxu0 %v72
  %v216 = vpop.f32.mrb[0].mxu0
  %v217 = vadd.f32 %v56, %v216
  %v218 = vpop.f32.mrb[0].mxu0
  %v219 = vpop.f32.mrb[0].mxu0
  %v220 = vadd.f32 %v56, %v219
  %v221 = vpop.f32.mrb[0].mxu0
  %222 = vdwg.mxu0
  %v223 = vpack.c.bf16 %v212, %v209
  %v224 = vpack.c.bf16 %v220, %v217
  %v227 = vunpack.c.l.b16 %v223
  %v228 = vunpack.c.h.b16 %v223
  %v229 = vunpack.c.l.b16 %v224
  %v230 = vunpack.c.h.b16 %v224
  %v231 = vpack.c.b16 %v227, %v227
  %v232 = vpack.c.b16 %v228, %v228
  %v233 = vpack.c.b16 %v229, %v229
  %v234 = vpack.c.b16 %v230, %v230
  %239 = vst [vmem:[%s3] sm:$0xf] %v231
  %240 = vst [vmem:[%s3 + $0x4] sm:$0xf] %v232
  %241 = vst [vmem:[%s3 + $0x8] sm:$0xf] %v233
  %242 = vst [vmem:[%s3 + $0xc] sm:$0xf] %v234
  // Predicated region
  $region14: #{network_forward.22} parent=0 // pred_check
    _
  $region15: #{network_forward.22} parent=0 // pred_check_branch
    %244 = sbr.rel (0) target = $region17
  $region16: #{network_forward.22} parent=0 // pred_region
    _
  $region17: #{network_forward.22} parent=0 // pred_fallthru
    _
  // Predicated region
  $region18: #{network_forward.22} parent=0 // pred_check
    _
  $region19: #{network_forward.22} parent=0 // pred_check_branch
    %246 = sbr.rel (0) target = $region21
  $region20: #{network_forward.22} parent=0 // pred_region
    _
  $region21: #{network_forward.22} parent=0 // pred_fallthru
    _

// kernel: network_forward.23
$region0: #{network_forward.23}
  #allocation0 [shape = 'u32[]', space=smem, size = 0x4, offset = 0x4, fixed_abs, tag = 'smem constant byte address 0x4 - core index']
  #allocation1 [shape = 'u32[144,128]{1,0:T(1,128)}', space=vmem, size = 0x12000, scoped, tag = 'internal scratch']
  %s0 = inlined_call_operand.vmem [shape: bf16[32,512], index: 0, kind: input, shape index: {}]
  %s1 = inlined_call_operand.vmem [shape: bf16[512,128], index: 1, kind: input, shape index: {}]
  %s2 = inlined_call_operand.vmem [shape: f32[1,128], index: 2, kind: input, shape index: {}]
  %s3 = inlined_call_operand.vmem [shape: bf16[32,128], index: 3, kind: output, shape index: {}]
  %s4 = sld [smem:[#allocation0]]
  $region22: #{network_forward.23} parent=0
    _
  %s6 = ssub.s32 1, %s4
  %s7 = scalar_select 0, %s6, %s4
  // Predicated region
  $region2: #{network_forward.23} parent=0 // pred_check
    _
  $region3: #{network_forward.23} parent=0 // pred_check_branch
    %9 = sbr.rel (0) target = $region5
  $region4: #{network_forward.23} parent=0 // pred_region
    _
  $region5: #{network_forward.23} parent=0 // pred_fallthru
    _
  // Predicated region
  $region6: #{network_forward.23} parent=0 // pred_check
    _
  $region7: #{network_forward.23} parent=0 // pred_check_branch
    %11 = sbr.rel (0) target = $region9
  $region8: #{network_forward.23} parent=0 // pred_region
    _
  $region9: #{network_forward.23} parent=0 // pred_fallthru
    _
  // Predicated region
  $region10: #{network_forward.23} parent=0 // pred_check
    _
  $region11: #{network_forward.23} parent=0 // pred_check_branch
    %13 = sbr.rel (0) target = $region13
  $region12: #{network_forward.23} parent=0 // pred_region
    _
  $region13: #{network_forward.23} parent=0 // pred_fallthru
    _
  %v15 = vld [vmem:[%s0] sm:$0xff]
  %v16 = vld [vmem:[%s0 + $0x8] sm:$0xff]
  %v17 = vld [vmem:[%s0 + $0x10] sm:$0xff]
  %v18 = vld [vmem:[%s0 + $0x18] sm:$0xff]
  %v19 = vld [vmem:[%s0 + $0x20] sm:$0xff]
  %v20 = vld [vmem:[%s0 + $0x28] sm:$0xff]
  %v21 = vld [vmem:[%s0 + $0x30] sm:$0xff]
  %v22 = vld [vmem:[%s0 + $0x38] sm:$0xff]
  %v23 = vld [vmem:[%s1] sm:$0xf]
  %v24 = vld [vmem:[%s1 + $0x4] sm:$0xf]
  %v25 = vld [vmem:[%s1 + $0x8] sm:$0xf]
  %v26 = vld [vmem:[%s1 + $0xc] sm:$0xf]
  %v27 = vld [vmem:[%s1 + $0x10] sm:$0xf]
  %v28 = vld [vmem:[%s1 + $0x14] sm:$0xf]
  %v29 = vld [vmem:[%s1 + $0x18] sm:$0xf]
  %v30 = vld [vmem:[%s1 + $0x1c] sm:$0xf]
  %v31 = vld [vmem:[%s1 + $0x20] sm:$0xf]
  %v32 = vld [vmem:[%s1 + $0x24] sm:$0xf]
  %v33 = vld [vmem:[%s1 + $0x28] sm:$0xf]
  %v34 = vld [vmem:[%s1 + $0x2c] sm:$0xf]
  %v35 = vld [vmem:[%s1 + $0x30] sm:$0xf]
  %v36 = vld [vmem:[%s1 + $0x34] sm:$0xf]
  %v37 = vld [vmem:[%s1 + $0x38] sm:$0xf]
  %v38 = vld [vmem:[%s1 + $0x3c] sm:$0xf]
  %v39 = vld [vmem:[%s1 + $0x40] sm:$0xf]
  %v40 = vld [vmem:[%s1 + $0x44] sm:$0xf]
  %v41 = vld [vmem:[%s1 + $0x48] sm:$0xf]
  %v42 = vld [vmem:[%s1 + $0x4c] sm:$0xf]
  %v43 = vld [vmem:[%s1 + $0x50] sm:$0xf]
  %v44 = vld [vmem:[%s1 + $0x54] sm:$0xf]
  %v45 = vld [vmem:[%s1 + $0x58] sm:$0xf]
  %v46 = vld [vmem:[%s1 + $0x5c] sm:$0xf]
  %v47 = vld [vmem:[%s1 + $0x60] sm:$0xf]
  %v48 = vld [vmem:[%s1 + $0x64] sm:$0xf]
  %v49 = vld [vmem:[%s1 + $0x68] sm:$0xf]
  %v50 = vld [vmem:[%s1 + $0x6c] sm:$0xf]
  %v51 = vld [vmem:[%s1 + $0x70] sm:$0xf]
  %v52 = vld [vmem:[%s1 + $0x74] sm:$0xf]
  %v53 = vld [vmem:[%s1 + $0x78] sm:$0xf]
  %v54 = vld [vmem:[%s1 + $0x7c] sm:$0xf]
  %v55 = vld [vmem:[%s1 + $0x80] sm:$0xf]
  %v56 = vld [vmem:[%s1 + $0x84] sm:$0xf]
  %v57 = vld [vmem:[%s1 + $0x88] sm:$0xf]
  %v58 = vld [vmem:[%s1 + $0x8c] sm:$0xf]
  %v59 = vld [vmem:[%s1 + $0x90] sm:$0xf]
  %v60 = vld [vmem:[%s1 + $0x94] sm:$0xf]
  %v61 = vld [vmem:[%s1 + $0x98] sm:$0xf]
  %v62 = vld [vmem:[%s1 + $0x9c] sm:$0xf]
  %v63 = vld [vmem:[%s1 + $0xa0] sm:$0xf]
  %v64 = vld [vmem:[%s1 + $0xa4] sm:$0xf]
  %v65 = vld [vmem:[%s1 + $0xa8] sm:$0xf]
  %v66 = vld [vmem:[%s1 + $0xac] sm:$0xf]
  %v67 = vld [vmem:[%s1 + $0xb0] sm:$0xf]
  %v68 = vld [vmem:[%s1 + $0xb4] sm:$0xf]
  %v69 = vld [vmem:[%s1 + $0xb8] sm:$0xf]
  %v70 = vld [vmem:[%s1 + $0xbc] sm:$0xf]
  %v71 = vld [vmem:[%s1 + $0xc0] sm:$0xf]
  %v72 = vld [vmem:[%s1 + $0xc4] sm:$0xf]
  %v73 = vld [vmem:[%s1 + $0xc8] sm:$0xf]
  %v74 = vld [vmem:[%s1 + $0xcc] sm:$0xf]
  %v75 = vld [vmem:[%s1 + $0xd0] sm:$0xf]
  %v76 = vld [vmem:[%s1 + $0xd4] sm:$0xf]
  %v77 = vld [vmem:[%s1 + $0xd8] sm:$0xf]
  %v78 = vld [vmem:[%s1 + $0xdc] sm:$0xf]
  %v79 = vld [vmem:[%s1 + $0xe0] sm:$0xf]
  %v80 = vld [vmem:[%s1 + $0xe4] sm:$0xf]
  %v81 = vld [vmem:[%s1 + $0xe8] sm:$0xf]
  %v82 = vld [vmem:[%s1 + $0xec] sm:$0xf]
  %v83 = vld [vmem:[%s1 + $0xf0] sm:$0xf]
  %v84 = vld [vmem:[%s1 + $0xf4] sm:$0xf]
  %v85 = vld [vmem:[%s1 + $0xf8] sm:$0xf]
  %v86 = vld [vmem:[%s1 + $0xfc] sm:$0xf]
  %v87 = vld [vmem:[%s2] sm:$0x1]
  %v89 = vlaneseq
  %v90 = vshrl.u32 %v89, 7
  %v91 = vsub.s32 0, %v90
  %v92 = vrot.slane %v87, %v91
  %v102 = vunpack.c.l.b16 %v15
  %v103 = vunpack.c.h.b16 %v15
  %v104 = vunpack.c.l.b16 %v16
  %v105 = vunpack.c.h.b16 %v16
  %v106 = vunpack.c.l.b16 %v17
  %v107 = vunpack.c.h.b16 %v17
  %v108 = vunpack.c.l.b16 %v18
  %v109 = vunpack.c.h.b16 %v18
  %v110 = vunpack.c.l.b16 %v19
  %v111 = vunpack.c.h.b16 %v19
  %v112 = vunpack.c.l.b16 %v20
  %v113 = vunpack.c.h.b16 %v20
  %v114 = vunpack.c.l.b16 %v21
  %v115 = vunpack.c.h.b16 %v21
  %v116 = vunpack.c.l.b16 %v22
  %v117 = vunpack.c.h.b16 %v22
  %v118 = vpack.c.b16 %v106, %v102
  %v119 = vpack.c.b16 %v107, %v103
  %v120 = vpack.c.b16 %v108, %v104
  %v121 = vpack.c.b16 %v109, %v105
  %v122 = vpack.c.b16 %v114, %v110
  %v123 = vpack.c.b16 %v115, %v111
  %v124 = vpack.c.b16 %v116, %v112
  %v125 = vpack.c.b16 %v117, %v113
  %v198 = vunpack.c.l.b16 %v23
  %v199 = vunpack.c.l.b16 %v24
  %v200 = vunpack.c.l.b16 %v25
  %v201 = vunpack.c.l.b16 %v26
  %v202 = vunpack.c.l.b16 %v27
  %v203 = vunpack.c.l.b16 %v28
  %v204 = vunpack.c.l.b16 %v29
  %v205 = vunpack.c.l.b16 %v30
  %v206 = vunpack.c.l.b16 %v31
  %v207 = vunpack.c.l.b16 %v32
  %v208 = vunpack.c.l.b16 %v33
  %v209 = vunpack.c.l.b16 %v34
  %v210 = vunpack.c.l.b16 %v35
  %v211 = vunpack.c.l.b16 %v36
  %v212 = vunpack.c.l.b16 %v37
  %v213 = vunpack.c.l.b16 %v38
  %v214 = vunpack.c.l.b16 %v39
  %v215 = vunpack.c.l.b16 %v40
  %v216 = vunpack.c.l.b16 %v41
  %v217 = vunpack.c.l.b16 %v42
  %v218 = vunpack.c.l.b16 %v43
  %v219 = vunpack.c.l.b16 %v44
  %v220 = vunpack.c.l.b16 %v45
  %v221 = vunpack.c.l.b16 %v46
  %v222 = vunpack.c.l.b16 %v47
  %v223 = vunpack.c.l.b16 %v48
  %v224 = vunpack.c.l.b16 %v49
  %v225 = vunpack.c.l.b16 %v50
  %v226 = vunpack.c.l.b16 %v51
  %v227 = vunpack.c.l.b16 %v52
  %v228 = vunpack.c.l.b16 %v53
  %v229 = vunpack.c.l.b16 %v54
  %v230 = vunpack.c.l.b16 %v55
  %v231 = vunpack.c.l.b16 %v56
  %v232 = vunpack.c.l.b16 %v57
  %v233 = vunpack.c.l.b16 %v58
  %v234 = vunpack.c.l.b16 %v59
  %v235 = vunpack.c.l.b16 %v60
  %v236 = vunpack.c.l.b16 %v61
  %v237 = vunpack.c.l.b16 %v62
  %v238 = vunpack.c.l.b16 %v63
  %v239 = vunpack.c.l.b16 %v64
  %v240 = vunpack.c.l.b16 %v65
  %v241 = vunpack.c.l.b16 %v66
  %v242 = vunpack.c.l.b16 %v67
  %v243 = vunpack.c.l.b16 %v68
  %v244 = vunpack.c.l.b16 %v69
  %v245 = vunpack.c.l.b16 %v70
  %v246 = vunpack.c.l.b16 %v71
  %v247 = vunpack.c.l.b16 %v72
  %v248 = vunpack.c.l.b16 %v73
  %v249 = vunpack.c.l.b16 %v74
  %v250 = vunpack.c.l.b16 %v75
  %v251 = vunpack.c.l.b16 %v76
  %v252 = vunpack.c.l.b16 %v77
  %v253 = vunpack.c.l.b16 %v78
  %v254 = vunpack.c.l.b16 %v79
  %v255 = vunpack.c.l.b16 %v80
  %v256 = vunpack.c.l.b16 %v81
  %v257 = vunpack.c.l.b16 %v82
  %v258 = vunpack.c.l.b16 %v83
  %v259 = vunpack.c.l.b16 %v84
  %v260 = vunpack.c.l.b16 %v85
  %v261 = vunpack.c.l.b16 %v86
  %v262 = vpack.c.b16 %v199, %v198
  %v263 = vpack.c.b16 %v201, %v200
  %v264 = vpack.c.b16 %v203, %v202
  %v265 = vpack.c.b16 %v205, %v204
  %v266 = vpack.c.b16 %v207, %v206
  %v267 = vpack.c.b16 %v209, %v208
  %v268 = vpack.c.b16 %v211, %v210
  %v269 = vpack.c.b16 %v213, %v212
  %v270 = vpack.c.b16 %v215, %v214
  %v271 = vpack.c.b16 %v217, %v216
  %v272 = vpack.c.b16 %v219, %v218
  %v273 = vpack.c.b16 %v221, %v220
  %v274 = vpack.c.b16 %v223, %v222
  %v275 = vpack.c.b16 %v225, %v224
  %v276 = vpack.c.b16 %v227, %v226
  %v277 = vpack.c.b16 %v229, %v228
  %v278 = vpack.c.b16 %v231, %v230
  %v279 = vpack.c.b16 %v233, %v232
  %v280 = vpack.c.b16 %v235, %v234
  %v281 = vpack.c.b16 %v237, %v236
  %v282 = vpack.c.b16 %v239, %v238
  %v283 = vpack.c.b16 %v241, %v240
  %v284 = vpack.c.b16 %v243, %v242
  %v285 = vpack.c.b16 %v245, %v244
  %v286 = vpack.c.b16 %v247, %v246
  %v287 = vpack.c.b16 %v249, %v248
  %v288 = vpack.c.b16 %v251, %v250
  %v289 = vpack.c.b16 %v253, %v252
  %v290 = vpack.c.b16 %v255, %v254
  %v291 = vpack.c.b16 %v257, %v256
  %v292 = vpack.c.b16 %v259, %v258
  %v293 = vpack.c.b16 %v261, %v260
  %326 = vmatprep.subr.bf16.mxu0 0
  %327 = vmatpush1.bf16.msra.mxu0 %v262
  %328 = vmatprep.subr.bf16.mxu0 0
  %329 = vmatpush1.bf16.msra.mxu0 %v263
  %330 = vmatprep.subr.bf16.mxu0 0
  %331 = vmatpush1.bf16.msra.mxu0 %v264
  %332 = vmatprep.subr.bf16.mxu0 0
  %333 = vmatpush1.bf16.msra.mxu0 %v265
  %334 = vmatprep.subr.bf16.mxu0 0
  %335 = vmatpush1.bf16.msra.mxu0 %v266
  %336 = vmatprep.subr.bf16.mxu0 0
  %337 = vmatpush1.bf16.msra.mxu0 %v267
  %338 = vmatprep.subr.bf16.mxu0 0
  %339 = vmatpush1.bf16.msra.mxu0 %v268
  %340 = vmatprep.subr.bf16.mxu0 0
  %341 = vmatpush1.bf16.msra.mxu0 %v269
  %342 = vmatprep.subr.bf16.mxu0 0
  %343 = vmatpush1.bf16.msra.mxu0 %v270
  %344 = vmatprep.subr.bf16.mxu0 0
  %345 = vmatpush1.bf16.msra.mxu0 %v271
  %346 = vmatprep.subr.bf16.mxu0 0
  %347 = vmatpush1.bf16.msra.mxu0 %v272
  %348 = vmatprep.subr.bf16.mxu0 0
  %349 = vmatpush1.bf16.msra.mxu0 %v273
  %350 = vmatprep.subr.bf16.mxu0 0
  %351 = vmatpush1.bf16.msra.mxu0 %v274
  %352 = vmatprep.subr.bf16.mxu0 0
  %353 = vmatpush1.bf16.msra.mxu0 %v275
  %354 = vmatprep.subr.bf16.mxu0 0
  %355 = vmatpush1.bf16.msra.mxu0 %v276
  %356 = vmatprep.subr.bf16.mxu0 0
  %357 = vmatpush1.bf16.msra.mxu0 %v277
  %358 = vmatprep.mubr.bf16.mxu0 %v119
  %359 = vmatmul.mubr.bf16.gmra.mrb[0].mxu0 %v118
  %v360 = vpop.f32.mrb[0].mxu0
  %v361 = vadd.f32 %v92, %v360
  %v362 = vpop.f32.mrb[0].mxu0
  %v363 = vpop.f32.mrb[0].mxu0
  %v364 = vadd.f32 %v92, %v363
  %v365 = vpop.f32.mrb[0].mxu0
  %366 = vmatprep.mubr.bf16.mxu0 %v123
  %367 = vmatmul.mubr.bf16.gmra.mrb[0].mxu0 %v122
  %v368 = vpop.f32.mrb[0].mxu0
  %v369 = vadd.f32 %v92, %v368
  %v370 = vpop.f32.mrb[0].mxu0
  %v371 = vpop.f32.mrb[0].mxu0
  %v372 = vadd.f32 %v92, %v371
  %v373 = vpop.f32.mrb[0].mxu0
  %374 = vdwg.mxu0
  %375 = vmatprep.subr.bf16.mxu0 0
  %376 = vmatpush1.bf16.msra.mxu0 %v278
  %377 = vmatprep.subr.bf16.mxu0 0
  %378 = vmatpush1.bf16.msra.mxu0 %v279
  %379 = vmatprep.subr.bf16.mxu0 0
  %380 = vmatpush1.bf16.msra.mxu0 %v280
  %381 = vmatprep.subr.bf16.mxu0 0
  %382 = vmatpush1.bf16.msra.mxu0 %v281
  %383 = vmatprep.subr.bf16.mxu0 0
  %384 = vmatpush1.bf16.msra.mxu0 %v282
  %385 = vmatprep.subr.bf16.mxu0 0
  %386 = vmatpush1.bf16.msra.mxu0 %v283
  %387 = vmatprep.subr.bf16.mxu0 0
  %388 = vmatpush1.bf16.msra.mxu0 %v284
  %389 = vmatprep.subr.bf16.mxu0 0
  %390 = vmatpush1.bf16.msra.mxu0 %v285
  %391 = vmatprep.subr.bf16.mxu0 0
  %392 = vmatpush1.bf16.msra.mxu0 %v286
  %393 = vmatprep.subr.bf16.mxu0 0
  %394 = vmatpush1.bf16.msra.mxu0 %v287
  %395 = vmatprep.subr.bf16.mxu0 0
  %396 = vmatpush1.bf16.msra.mxu0 %v288
  %397 = vmatprep.subr.bf16.mxu0 0
  %398 = vmatpush1.bf16.msra.mxu0 %v289
  %399 = vmatprep.subr.bf16.mxu0 0
  %400 = vmatpush1.bf16.msra.mxu0 %v290
  %401 = vmatprep.subr.bf16.mxu0 0
  %402 = vmatpush1.bf16.msra.mxu0 %v291
  %403 = vmatprep.subr.bf16.mxu0 0
  %404 = vmatpush1.bf16.msra.mxu0 %v292
  %405 = vmatprep.subr.bf16.mxu0 0
  %406 = vmatpush1.bf16.msra.mxu0 %v293
  %407 = vmatprep.mubr.bf16.mxu0 %v121
  %408 = vmatmul.mubr.bf16.gmra.mrb[0].mxu0 %v120
  %v409 = vpop.f32.mrb[0].mxu0
  %v410 = vadd.f32 %v361, %v409
  %v411 = vpop.f32.mrb[0].mxu0
  %v412 = vpop.f32.mrb[0].mxu0
  %v413 = vadd.f32 %v364, %v412
  %v414 = vpop.f32.mrb[0].mxu0
  %415 = vmatprep.mubr.bf16.mxu0 %v125
  %416 = vmatmul.mubr.bf16.gmra.mrb[0].mxu0 %v124
  %v417 = vpop.f32.mrb[0].mxu0
  %v418 = vadd.f32 %v369, %v417
  %v419 = vpop.f32.mrb[0].mxu0
  %v420 = vpop.f32.mrb[0].mxu0
  %v421 = vadd.f32 %v372, %v420
  %v422 = vpop.f32.mrb[0].mxu0
  %423 = vdwg.mxu0
  %v424 = vmax.f32 %v410, 0.0
  %v425 = vmax.f32 %v413, 0.0
  %v426 = vmax.f32 %v418, 0.0
  %v427 = vmax.f32 %v421, 0.0
  %v428 = vpack.c.bf16 %v425, %v424
  %v429 = vpack.c.bf16 %v427, %v426
  %v432 = vunpack.c.l.b16 %v428
  %v433 = vunpack.c.h.b16 %v428
  %v434 = vunpack.c.l.b16 %v429
  %v435 = vunpack.c.h.b16 %v429
  %v436 = vpack.c.b16 %v432, %v432
  %v437 = vpack.c.b16 %v433, %v433
  %v438 = vpack.c.b16 %v434, %v434
  %v439 = vpack.c.b16 %v435, %v435
  %444 = vst [vmem:[%s3] sm:$0xf] %v436
  %445 = vst [vmem:[%s3 + $0x4] sm:$0xf] %v437
  %446 = vst [vmem:[%s3 + $0x8] sm:$0xf] %v438
  %447 = vst [vmem:[%s3 + $0xc] sm:$0xf] %v439
  // Predicated region
  $region14: #{network_forward.23} parent=0 // pred_check
    _
  $region15: #{network_forward.23} parent=0 // pred_check_branch
    %449 = sbr.rel (0) target = $region17
  $region16: #{network_forward.23} parent=0 // pred_region
    _
  $region17: #{network_forward.23} parent=0 // pred_fallthru
    _
  // Predicated region
  $region18: #{network_forward.23} parent=0 // pred_check
    _
  $region19: #{network_forward.23} parent=0 // pred_check_branch
    %451 = sbr.rel (0) target = $region21
  $region20: #{network_forward.23} parent=0 // pred_region
    _
  $region21: #{network_forward.23} parent=0 // pred_fallthru
    _

// kernel: network_forward.24
$region0: #{network_forward.24}
  #allocation0 [shape = 'u32[]', space=smem, size = 0x4, offset = 0x4, fixed_abs, tag = 'smem constant byte address 0x4 - core index']
  #allocation1 [shape = 'u32[144,128]{1,0:T(1,128)}', space=vmem, size = 0x12000, scoped, tag = 'internal scratch']
  %s0 = inlined_call_operand.vmem [shape: bf16[32,512], index: 0, kind: input, shape index: {}]
  %s1 = inlined_call_operand.vmem [shape: bf16[512,128], index: 1, kind: input, shape index: {}]
  %s2 = inlined_call_operand.vmem [shape: f32[1,128], index: 2, kind: input, shape index: {}]
  %s3 = inlined_call_operand.vmem [shape: f32[1,128], index: 3, kind: input, shape index: {}]
  %s4 = inlined_call_operand.vmem [shape: f32[1,128], index: 4, kind: input, shape index: {}]
  %s5 = inlined_call_operand.vmem [shape: bf16[32,128], index: 5, kind: output, shape index: {}]
  %s6 = sld [smem:[#allocation0]]
  $region30: #{network_forward.24} parent=0
    _
  %s8 = ssub.s32 1, %s6
  %s9 = scalar_select 0, %s8, %s6
  // Predicated region
  $region2: #{network_forward.24} parent=0 // pred_check
    _
  $region3: #{network_forward.24} parent=0 // pred_check_branch
    %11 = sbr.rel (0) target = $region5
  $region4: #{network_forward.24} parent=0 // pred_region
    _
  $region5: #{network_forward.24} parent=0 // pred_fallthru
    _
  // Predicated region
  $region6: #{network_forward.24} parent=0 // pred_check
    _
  $region7: #{network_forward.24} parent=0 // pred_check_branch
    %13 = sbr.rel (0) target = $region9
  $region8: #{network_forward.24} parent=0 // pred_region
    _
  $region9: #{network_forward.24} parent=0 // pred_fallthru
    _
  // Predicated region
  $region10: #{network_forward.24} parent=0 // pred_check
    _
  $region11: #{network_forward.24} parent=0 // pred_check_branch
    %15 = sbr.rel (0) target = $region13
  $region12: #{network_forward.24} parent=0 // pred_region
    _
  $region13: #{network_forward.24} parent=0 // pred_fallthru
    _
  // Predicated region
  $region14: #{network_forward.24} parent=0 // pred_check
    _
  $region15: #{network_forward.24} parent=0 // pred_check_branch
    %17 = sbr.rel (0) target = $region17
  $region16: #{network_forward.24} parent=0 // pred_region
    _
  $region17: #{network_forward.24} parent=0 // pred_fallthru
    _
  // Predicated region
  $region18: #{network_forward.24} parent=0 // pred_check
    _
  $region19: #{network_forward.24} parent=0 // pred_check_branch
    %19 = sbr.rel (0) target = $region21
  $region20: #{network_forward.24} parent=0 // pred_region
    _
  $region21: #{network_forward.24} parent=0 // pred_fallthru
    _
  %v21 = vld [vmem:[%s0] sm:$0xff]
  %v22 = vld [vmem:[%s0 + $0x8] sm:$0xff]
  %v23 = vld [vmem:[%s0 + $0x10] sm:$0xff]
  %v24 = vld [vmem:[%s0 + $0x18] sm:$0xff]
  %v25 = vld [vmem:[%s0 + $0x20] sm:$0xff]
  %v26 = vld [vmem:[%s0 + $0x28] sm:$0xff]
  %v27 = vld [vmem:[%s0 + $0x30] sm:$0xff]
  %v28 = vld [vmem:[%s0 + $0x38] sm:$0xff]
  %v29 = vld [vmem:[%s1] sm:$0xf]
  %v30 = vld [vmem:[%s1 + $0x4] sm:$0xf]
  %v31 = vld [vmem:[%s1 + $0x8] sm:$0xf]
  %v32 = vld [vmem:[%s1 + $0xc] sm:$0xf]
  %v33 = vld [vmem:[%s1 + $0x10] sm:$0xf]
  %v34 = vld [vmem:[%s1 + $0x14] sm:$0xf]
  %v35 = vld [vmem:[%s1 + $0x18] sm:$0xf]
  %v36 = vld [vmem:[%s1 + $0x1c] sm:$0xf]
  %v37 = vld [vmem:[%s1 + $0x20] sm:$0xf]
  %v38 = vld [vmem:[%s1 + $0x24] sm:$0xf]
  %v39 = vld [vmem:[%s1 + $0x28] sm:$0xf]
  %v40 = vld [vmem:[%s1 + $0x2c] sm:$0xf]
  %v41 = vld [vmem:[%s1 + $0x30] sm:$0xf]
  %v42 = vld [vmem:[%s1 + $0x34] sm:$0xf]
  %v43 = vld [vmem:[%s1 + $0x38] sm:$0xf]
  %v44 = vld [vmem:[%s1 + $0x3c] sm:$0xf]
  %v45 = vld [vmem:[%s1 + $0x40] sm:$0xf]
  %v46 = vld [vmem:[%s1 + $0x44] sm:$0xf]
  %v47 = vld [vmem:[%s1 + $0x48] sm:$0xf]
  %v48 = vld [vmem:[%s1 + $0x4c] sm:$0xf]
  %v49 = vld [vmem:[%s1 + $0x50] sm:$0xf]
  %v50 = vld [vmem:[%s1 + $0x54] sm:$0xf]
  %v51 = vld [vmem:[%s1 + $0x58] sm:$0xf]
  %v52 = vld [vmem:[%s1 + $0x5c] sm:$0xf]
  %v53 = vld [vmem:[%s1 + $0x60] sm:$0xf]
  %v54 = vld [vmem:[%s1 + $0x64] sm:$0xf]
  %v55 = vld [vmem:[%s1 + $0x68] sm:$0xf]
  %v56 = vld [vmem:[%s1 + $0x6c] sm:$0xf]
  %v57 = vld [vmem:[%s1 + $0x70] sm:$0xf]
  %v58 = vld [vmem:[%s1 + $0x74] sm:$0xf]
  %v59 = vld [vmem:[%s1 + $0x78] sm:$0xf]
  %v60 = vld [vmem:[%s1 + $0x7c] sm:$0xf]
  %v61 = vld [vmem:[%s1 + $0x80] sm:$0xf]
  %v62 = vld [vmem:[%s1 + $0x84] sm:$0xf]
  %v63 = vld [vmem:[%s1 + $0x88] sm:$0xf]
  %v64 = vld [vmem:[%s1 + $0x8c] sm:$0xf]
  %v65 = vld [vmem:[%s1 + $0x90] sm:$0xf]
  %v66 = vld [vmem:[%s1 + $0x94] sm:$0xf]
  %v67 = vld [vmem:[%s1 + $0x98] sm:$0xf]
  %v68 = vld [vmem:[%s1 + $0x9c] sm:$0xf]
  %v69 = vld [vmem:[%s1 + $0xa0] sm:$0xf]
  %v70 = vld [vmem:[%s1 + $0xa4] sm:$0xf]
  %v71 = vld [vmem:[%s1 + $0xa8] sm:$0xf]
  %v72 = vld [vmem:[%s1 + $0xac] sm:$0xf]
  %v73 = vld [vmem:[%s1 + $0xb0] sm:$0xf]
  %v74 = vld [vmem:[%s1 + $0xb4] sm:$0xf]
  %v75 = vld [vmem:[%s1 + $0xb8] sm:$0xf]
  %v76 = vld [vmem:[%s1 + $0xbc] sm:$0xf]
  %v77 = vld [vmem:[%s1 + $0xc0] sm:$0xf]
  %v78 = vld [vmem:[%s1 + $0xc4] sm:$0xf]
  %v79 = vld [vmem:[%s1 + $0xc8] sm:$0xf]
  %v80 = vld [vmem:[%s1 + $0xcc] sm:$0xf]
  %v81 = vld [vmem:[%s1 + $0xd0] sm:$0xf]
  %v82 = vld [vmem:[%s1 + $0xd4] sm:$0xf]
  %v83 = vld [vmem:[%s1 + $0xd8] sm:$0xf]
  %v84 = vld [vmem:[%s1 + $0xdc] sm:$0xf]
  %v85 = vld [vmem:[%s1 + $0xe0] sm:$0xf]
  %v86 = vld [vmem:[%s1 + $0xe4] sm:$0xf]
  %v87 = vld [vmem:[%s1 + $0xe8] sm:$0xf]
  %v88 = vld [vmem:[%s1 + $0xec] sm:$0xf]
  %v89 = vld [vmem:[%s1 + $0xf0] sm:$0xf]
  %v90 = vld [vmem:[%s1 + $0xf4] sm:$0xf]
  %v91 = vld [vmem:[%s1 + $0xf8] sm:$0xf]
  %v92 = vld [vmem:[%s1 + $0xfc] sm:$0xf]
  %v93 = vld [vmem:[%s2] sm:$0x1]
  %v95 = vlaneseq
  %v96 = vshrl.u32 %v95, 7
  %v97 = vsub.s32 0, %v96
  %v98 = vrot.slane %v93, %v97
  %v108 = vunpack.c.l.b16 %v21
  %v109 = vunpack.c.h.b16 %v21
  %v110 = vunpack.c.l.b16 %v22
  %v111 = vunpack.c.h.b16 %v22
  %v112 = vunpack.c.l.b16 %v23
  %v113 = vunpack.c.h.b16 %v23
  %v114 = vunpack.c.l.b16 %v24
  %v115 = vunpack.c.h.b16 %v24
  %v116 = vunpack.c.l.b16 %v25
  %v117 = vunpack.c.h.b16 %v25
  %v118 = vunpack.c.l.b16 %v26
  %v119 = vunpack.c.h.b16 %v26
  %v120 = vunpack.c.l.b16 %v27
  %v121 = vunpack.c.h.b16 %v27
  %v122 = vunpack.c.l.b16 %v28
  %v123 = vunpack.c.h.b16 %v28
  %v124 = vpack.c.b16 %v112, %v108
  %v125 = vpack.c.b16 %v113, %v109
  %v126 = vpack.c.b16 %v114, %v110
  %v127 = vpack.c.b16 %v115, %v111
  %v128 = vpack.c.b16 %v120, %v116
  %v129 = vpack.c.b16 %v121, %v117
  %v130 = vpack.c.b16 %v122, %v118
  %v131 = vpack.c.b16 %v123, %v119
  %v204 = vunpack.c.l.b16 %v29
  %v205 = vunpack.c.l.b16 %v30
  %v206 = vunpack.c.l.b16 %v31
  %v207 = vunpack.c.l.b16 %v32
  %v208 = vunpack.c.l.b16 %v33
  %v209 = vunpack.c.l.b16 %v34
  %v210 = vunpack.c.l.b16 %v35
  %v211 = vunpack.c.l.b16 %v36
  %v212 = vunpack.c.l.b16 %v37
  %v213 = vunpack.c.l.b16 %v38
  %v214 = vunpack.c.l.b16 %v39
  %v215 = vunpack.c.l.b16 %v40
  %v216 = vunpack.c.l.b16 %v41
  %v217 = vunpack.c.l.b16 %v42
  %v218 = vunpack.c.l.b16 %v43
  %v219 = vunpack.c.l.b16 %v44
  %v220 = vunpack.c.l.b16 %v45
  %v221 = vunpack.c.l.b16 %v46
  %v222 = vunpack.c.l.b16 %v47
  %v223 = vunpack.c.l.b16 %v48
  %v224 = vunpack.c.l.b16 %v49
  %v225 = vunpack.c.l.b16 %v50
  %v226 = vunpack.c.l.b16 %v51
  %v227 = vunpack.c.l.b16 %v52
  %v228 = vunpack.c.l.b16 %v53
  %v229 = vunpack.c.l.b16 %v54
  %v230 = vunpack.c.l.b16 %v55
  %v231 = vunpack.c.l.b16 %v56
  %v232 = vunpack.c.l.b16 %v57
  %v233 = vunpack.c.l.b16 %v58
  %v234 = vunpack.c.l.b16 %v59
  %v235 = vunpack.c.l.b16 %v60
  %v236 = vunpack.c.l.b16 %v61
  %v237 = vunpack.c.l.b16 %v62
  %v238 = vunpack.c.l.b16 %v63
  %v239 = vunpack.c.l.b16 %v64
  %v240 = vunpack.c.l.b16 %v65
  %v241 = vunpack.c.l.b16 %v66
  %v242 = vunpack.c.l.b16 %v67
  %v243 = vunpack.c.l.b16 %v68
  %v244 = vunpack.c.l.b16 %v69
  %v245 = vunpack.c.l.b16 %v70
  %v246 = vunpack.c.l.b16 %v71
  %v247 = vunpack.c.l.b16 %v72
  %v248 = vunpack.c.l.b16 %v73
  %v249 = vunpack.c.l.b16 %v74
  %v250 = vunpack.c.l.b16 %v75
  %v251 = vunpack.c.l.b16 %v76
  %v252 = vunpack.c.l.b16 %v77
  %v253 = vunpack.c.l.b16 %v78
  %v254 = vunpack.c.l.b16 %v79
  %v255 = vunpack.c.l.b16 %v80
  %v256 = vunpack.c.l.b16 %v81
  %v257 = vunpack.c.l.b16 %v82
  %v258 = vunpack.c.l.b16 %v83
  %v259 = vunpack.c.l.b16 %v84
  %v260 = vunpack.c.l.b16 %v85
  %v261 = vunpack.c.l.b16 %v86
  %v262 = vunpack.c.l.b16 %v87
  %v263 = vunpack.c.l.b16 %v88
  %v264 = vunpack.c.l.b16 %v89
  %v265 = vunpack.c.l.b16 %v90
  %v266 = vunpack.c.l.b16 %v91
  %v267 = vunpack.c.l.b16 %v92
  %v268 = vpack.c.b16 %v205, %v204
  %v269 = vpack.c.b16 %v207, %v206
  %v270 = vpack.c.b16 %v209, %v208
  %v271 = vpack.c.b16 %v211, %v210
  %v272 = vpack.c.b16 %v213, %v212
  %v273 = vpack.c.b16 %v215, %v214
  %v274 = vpack.c.b16 %v217, %v216
  %v275 = vpack.c.b16 %v219, %v218
  %v276 = vpack.c.b16 %v221, %v220
  %v277 = vpack.c.b16 %v223, %v222
  %v278 = vpack.c.b16 %v225, %v224
  %v279 = vpack.c.b16 %v227, %v226
  %v280 = vpack.c.b16 %v229, %v228
  %v281 = vpack.c.b16 %v231, %v230
  %v282 = vpack.c.b16 %v233, %v232
  %v283 = vpack.c.b16 %v235, %v234
  %v284 = vpack.c.b16 %v237, %v236
  %v285 = vpack.c.b16 %v239, %v238
  %v286 = vpack.c.b16 %v241, %v240
  %v287 = vpack.c.b16 %v243, %v242
  %v288 = vpack.c.b16 %v245, %v244
  %v289 = vpack.c.b16 %v247, %v246
  %v290 = vpack.c.b16 %v249, %v248
  %v291 = vpack.c.b16 %v251, %v250
  %v292 = vpack.c.b16 %v253, %v252
  %v293 = vpack.c.b16 %v255, %v254
  %v294 = vpack.c.b16 %v257, %v256
  %v295 = vpack.c.b16 %v259, %v258
  %v296 = vpack.c.b16 %v261, %v260
  %v297 = vpack.c.b16 %v263, %v262
  %v298 = vpack.c.b16 %v265, %v264
  %v299 = vpack.c.b16 %v267, %v266
  %332 = vmatprep.subr.bf16.mxu0 0
  %333 = vmatpush1.bf16.msra.mxu0 %v268
  %334 = vmatprep.subr.bf16.mxu0 0
  %335 = vmatpush1.bf16.msra.mxu0 %v269
  %336 = vmatprep.subr.bf16.mxu0 0
  %337 = vmatpush1.bf16.msra.mxu0 %v270
  %338 = vmatprep.subr.bf16.mxu0 0
  %339 = vmatpush1.bf16.msra.mxu0 %v271
  %340 = vmatprep.subr.bf16.mxu0 0
  %341 = vmatpush1.bf16.msra.mxu0 %v272
  %342 = vmatprep.subr.bf16.mxu0 0
  %343 = vmatpush1.bf16.msra.mxu0 %v273
  %344 = vmatprep.subr.bf16.mxu0 0
  %345 = vmatpush1.bf16.msra.mxu0 %v274
  %346 = vmatprep.subr.bf16.mxu0 0
  %347 = vmatpush1.bf16.msra.mxu0 %v275
  %348 = vmatprep.subr.bf16.mxu0 0
  %349 = vmatpush1.bf16.msra.mxu0 %v276
  %350 = vmatprep.subr.bf16.mxu0 0
  %351 = vmatpush1.bf16.msra.mxu0 %v277
  %352 = vmatprep.subr.bf16.mxu0 0
  %353 = vmatpush1.bf16.msra.mxu0 %v278
  %354 = vmatprep.subr.bf16.mxu0 0
  %355 = vmatpush1.bf16.msra.mxu0 %v279
  %356 = vmatprep.subr.bf16.mxu0 0
  %357 = vmatpush1.bf16.msra.mxu0 %v280
  %358 = vmatprep.subr.bf16.mxu0 0
  %359 = vmatpush1.bf16.msra.mxu0 %v281
  %360 = vmatprep.subr.bf16.mxu0 0
  %361 = vmatpush1.bf16.msra.mxu0 %v282
  %362 = vmatprep.subr.bf16.mxu0 0
  %363 = vmatpush1.bf16.msra.mxu0 %v283
  %364 = vmatprep.mubr.bf16.mxu0 %v125
  %365 = vmatmul.mubr.bf16.gmra.mrb[0].mxu0 %v124
  %v366 = vpop.f32.mrb[0].mxu0
  %v367 = vadd.f32 %v98, %v366
  %v368 = vpop.f32.mrb[0].mxu0
  %v369 = vpop.f32.mrb[0].mxu0
  %v370 = vadd.f32 %v98, %v369
  %v371 = vpop.f32.mrb[0].mxu0
  %372 = vmatprep.mubr.bf16.mxu0 %v129
  %373 = vmatmul.mubr.bf16.gmra.mrb[0].mxu0 %v128
  %v374 = vpop.f32.mrb[0].mxu0
  %v375 = vadd.f32 %v98, %v374
  %v376 = vpop.f32.mrb[0].mxu0
  %v377 = vpop.f32.mrb[0].mxu0
  %v378 = vadd.f32 %v98, %v377
  %v379 = vpop.f32.mrb[0].mxu0
  %380 = vdwg.mxu0
  %381 = vmatprep.subr.bf16.mxu0 0
  %382 = vmatpush1.bf16.msra.mxu0 %v284
  %383 = vmatprep.subr.bf16.mxu0 0
  %384 = vmatpush1.bf16.msra.mxu0 %v285
  %385 = vmatprep.subr.bf16.mxu0 0
  %386 = vmatpush1.bf16.msra.mxu0 %v286
  %387 = vmatprep.subr.bf16.mxu0 0
  %388 = vmatpush1.bf16.msra.mxu0 %v287
  %389 = vmatprep.subr.bf16.mxu0 0
  %390 = vmatpush1.bf16.msra.mxu0 %v288
  %391 = vmatprep.subr.bf16.mxu0 0
  %392 = vmatpush1.bf16.msra.mxu0 %v289
  %393 = vmatprep.subr.bf16.mxu0 0
  %394 = vmatpush1.bf16.msra.mxu0 %v290
  %395 = vmatprep.subr.bf16.mxu0 0
  %396 = vmatpush1.bf16.msra.mxu0 %v291
  %397 = vmatprep.subr.bf16.mxu0 0
  %398 = vmatpush1.bf16.msra.mxu0 %v292
  %399 = vmatprep.subr.bf16.mxu0 0
  %400 = vmatpush1.bf16.msra.mxu0 %v293
  %401 = vmatprep.subr.bf16.mxu0 0
  %402 = vmatpush1.bf16.msra.mxu0 %v294
  %403 = vmatprep.subr.bf16.mxu0 0
  %404 = vmatpush1.bf16.msra.mxu0 %v295
  %405 = vmatprep.subr.bf16.mxu0 0
  %406 = vmatpush1.bf16.msra.mxu0 %v296
  %407 = vmatprep.subr.bf16.mxu0 0
  %408 = vmatpush1.bf16.msra.mxu0 %v297
  %409 = vmatprep.subr.bf16.mxu0 0
  %410 = vmatpush1.bf16.msra.mxu0 %v298
  %411 = vmatprep.subr.bf16.mxu0 0
  %412 = vmatpush1.bf16.msra.mxu0 %v299
  %413 = vmatprep.mubr.bf16.mxu0 %v127
  %414 = vmatmul.mubr.bf16.gmra.mrb[0].mxu0 %v126
  %v415 = vpop.f32.mrb[0].mxu0
  %v416 = vadd.f32 %v367, %v415
  %v417 = vpop.f32.mrb[0].mxu0
  %v418 = vpop.f32.mrb[0].mxu0
  %v419 = vadd.f32 %v370, %v418
  %v420 = vpop.f32.mrb[0].mxu0
  %421 = vmatprep.mubr.bf16.mxu0 %v131
  %422 = vmatmul.mubr.bf16.gmra.mrb[0].mxu0 %v130
  %v423 = vpop.f32.mrb[0].mxu0
  %v424 = vadd.f32 %v375, %v423
  %v425 = vpop.f32.mrb[0].mxu0
  %v426 = vpop.f32.mrb[0].mxu0
  %v427 = vadd.f32 %v378, %v426
  %v428 = vpop.f32.mrb[0].mxu0
  %429 = vdwg.mxu0
  %v430 = vadd.f32 %v416, %v419
  %v431 = vadd.f32 %v430, %v424
  %v432 = vadd.f32 %v431, %v427
  %v433 = vrot.slane %v432, 4
  %v434 = vadd.f32 %v432, %v433
  %v435 = vrot.slane %v434, 2
  %v436 = vadd.f32 %v434, %v435
  %v437 = vrot.slane %v436, 1
  %v438 = vadd.f32 %v436, %v437
  %v439 = vmul.f32 %v438, 0.03125
  %v440 = vmul.f32 %v416, %v416
  %v441 = vmul.f32 %v419, %v419
  %v442 = vmul.f32 %v424, %v424
  %v443 = vmul.f32 %v427, %v427
  %v444 = vadd.f32 %v440, %v441
  %v445 = vadd.f32 %v444, %v442
  %v446 = vadd.f32 %v445, %v443
  %v447 = vrot.slane %v446, 4
  %v448 = vadd.f32 %v446, %v447
  %v449 = vrot.slane %v448, 2
  %v450 = vadd.f32 %v448, %v449
  %v451 = vrot.slane %v450, 1
  %v452 = vadd.f32 %v450, %v451
  %v453 = vmul.f32 %v452, 0.03125
  %v454 = vmul.f32 %v439, %v439
  %v455 = vsub.f32 %v453, %v454
  %v456 = vadd.f32 %v455, 1e-05
  %v457 = vrsqrt.pop %v456
  %v458 = vld [vmem:[%s3] sm:$0x1]
  %v459 = vmul.f32 %v457, %v458
  %v460 = vsub.f32 %v416, %v439
  %v461 = vsub.f32 %v419, %v439
  %v462 = vsub.f32 %v424, %v439
  %v463 = vsub.f32 %v427, %v439
  %v464 = vlaneseq
  %v465 = vshrl.u32 %v464, 7
  %v466 = vsub.s32 0, %v465
  %v467 = vrot.slane %v459, %v466
  %v468 = vmul.f32 %v460, %v467
  %v469 = vmul.f32 %v461, %v467
  %v470 = vmul.f32 %v462, %v467
  %v471 = vmul.f32 %v463, %v467
  %v472 = vld [vmem:[%s4] sm:$0x1]
  %v474 = vlaneseq
  %v475 = vshrl.u32 %v474, 7
  %v476 = vsub.s32 0, %v475
  %v477 = vrot.slane %v472, %v476
  %v479 = vadd.f32 %v468, %v477
  %v480 = vadd.f32 %v469, %v477
  %v481 = vadd.f32 %v470, %v477
  %v482 = vadd.f32 %v471, %v477
  %v483 = vpack.c.bf16 %v480, %v479
  %v484 = vpack.c.bf16 %v482, %v481
  %v487 = vunpack.c.l.b16 %v483
  %v488 = vunpack.c.h.b16 %v483
  %v489 = vunpack.c.l.b16 %v484
  %v490 = vunpack.c.h.b16 %v484
  %v491 = vpack.c.b16 %v487, %v487
  %v492 = vpack.c.b16 %v488, %v488
  %v493 = vpack.c.b16 %v489, %v489
  %v494 = vpack.c.b16 %v490, %v490
  %499 = vst [vmem:[%s5] sm:$0xf] %v491
  %500 = vst [vmem:[%s5 + $0x4] sm:$0xf] %v492
  %501 = vst [vmem:[%s5 + $0x8] sm:$0xf] %v493
  %502 = vst [vmem:[%s5 + $0xc] sm:$0xf] %v494
  // Predicated region
  $region22: #{network_forward.24} parent=0 // pred_check
    _
  $region23: #{network_forward.24} parent=0 // pred_check_branch
    %504 = sbr.rel (0) target = $region25
  $region24: #{network_forward.24} parent=0 // pred_region
    _
  $region25: #{network_forward.24} parent=0 // pred_fallthru
    _
  // Predicated region
  $region26: #{network_forward.24} parent=0 // pred_check
    _
  $region27: #{network_forward.24} parent=0 // pred_check_branch
    %506 = sbr.rel (0) target = $region29
  $region28: #{network_forward.24} parent=0 // pred_region
    _
  $region29: #{network_forward.24} parent=0 // pred_fallthru
    _

// kernel: network_forward.26
$region0: #{network_forward.26}
  #allocation0 [shape = 'u32[]', space=smem, size = 0x4, offset = 0x4, fixed_abs, tag = 'smem constant byte address 0x4 - core index']
  #allocation1 [shape = 'u32[144,128]{1,0:T(1,128)}', space=vmem, size = 0x12000, scoped, tag = 'internal scratch']
  %s0 = inlined_call_operand.vmem [shape: bf16[128,896], index: 0, kind: input, shape index: {}]
  %s1 = inlined_call_operand.vmem [shape: bf16[896,128], index: 1, kind: input, shape index: {}]
  %s2 = inlined_call_operand.vmem [shape: f32[1,128], index: 2, kind: input, shape index: {}]
  %s3 = inlined_call_operand.vmem [shape: bf16[128,128], index: 3, kind: output, shape index: {}]
  %s4 = sld [smem:[#allocation0]]
  $region22: #{network_forward.26} parent=0
    _
  %s6 = ssub.s32 1, %s4
  %s7 = scalar_select 0, %s6, %s4
  // Predicated region
  $region2: #{network_forward.26} parent=0 // pred_check
    _
  $region3: #{network_forward.26} parent=0 // pred_check_branch
    %9 = sbr.rel (0) target = $region5
  $region4: #{network_forward.26} parent=0 // pred_region
    _
  $region5: #{network_forward.26} parent=0 // pred_fallthru
    _
  // Predicated region
  $region6: #{network_forward.26} parent=0 // pred_check
    _
  $region7: #{network_forward.26} parent=0 // pred_check_branch
    %11 = sbr.rel (0) target = $region9
  $region8: #{network_forward.26} parent=0 // pred_region
    _
  $region9: #{network_forward.26} parent=0 // pred_fallthru
    _
  // Predicated region
  $region10: #{network_forward.26} parent=0 // pred_check
    _
  $region11: #{network_forward.26} parent=0 // pred_check_branch
    %13 = sbr.rel (0) target = $region13
  $region12: #{network_forward.26} parent=0 // pred_region
    _
  $region13: #{network_forward.26} parent=0 // pred_fallthru
    _
  %v15 = vld [vmem:[%s0] sm:$0xff]
  %v16 = vld [vmem:[%s0 + $0x8] sm:$0xff]
  %v17 = vld [vmem:[%s0 + $0x10] sm:$0xff]
  %v18 = vld [vmem:[%s0 + $0x18] sm:$0xf]
  %v19 = vld [vmem:[%s0 + $0x1c] sm:$0xff]
  %v20 = vld [vmem:[%s0 + $0x24] sm:$0xff]
  %v21 = vld [vmem:[%s0 + $0x2c] sm:$0xff]
  %v22 = vld [vmem:[%s0 + $0x34] sm:$0xf]
  %v23 = vld [vmem:[%s0 + $0x38] sm:$0xff]
  %v24 = vld [vmem:[%s0 + $0x40] sm:$0xff]
  %v25 = vld [vmem:[%s0 + $0x48] sm:$0xff]
  %v26 = vld [vmem:[%s0 + $0x50] sm:$0xf]
  %v27 = vld [vmem:[%s0 + $0x54] sm:$0xff]
  %v28 = vld [vmem:[%s0 + $0x5c] sm:$0xff]
  %v29 = vld [vmem:[%s0 + $0x64] sm:$0xff]
  %v30 = vld [vmem:[%s0 + $0x6c] sm:$0xf]
  %v31 = vld [vmem:[%s0 + $0x70] sm:$0xff]
  %v32 = vld [vmem:[%s0 + $0x78] sm:$0xff]
  %v33 = vld [vmem:[%s0 + $0x80] sm:$0xff]
  %v34 = vld [vmem:[%s0 + $0x88] sm:$0xf]
  %v35 = vld [vmem:[%s0 + $0x8c] sm:$0xff]
  %v36 = vld [vmem:[%s0 + $0x94] sm:$0xff]
  %v37 = vld [vmem:[%s0 + $0x9c] sm:$0xff]
  %v38 = vld [vmem:[%s0 + $0xa4] sm:$0xf]
  %v39 = vld [vmem:[%s0 + $0xa8] sm:$0xff]
  %v40 = vld [vmem:[%s0 + $0xb0] sm:$0xff]
  %v41 = vld [vmem:[%s0 + $0xb8] sm:$0xff]
  %v42 = vld [vmem:[%s0 + $0xc0] sm:$0xf]
  %v43 = vld [vmem:[%s0 + $0xc4] sm:$0xff]
  %v44 = vld [vmem:[%s0 + $0xcc] sm:$0xff]
  %v45 = vld [vmem:[%s0 + $0xd4] sm:$0xff]
  %v46 = vld [vmem:[%s0 + $0xdc] sm:$0xf]
  %v47 = vld [vmem:[%s0 + $0xe0] sm:$0xff]
  %v48 = vld [vmem:[%s0 + $0xe8] sm:$0xff]
  %v49 = vld [vmem:[%s0 + $0xf0] sm:$0xff]
  %v50 = vld [vmem:[%s0 + $0xf8] sm:$0xf]
  %v51 = vld [vmem:[%s0 + $0xfc] sm:$0xff]
  %v52 = vld [vmem:[%s0 + $0x104] sm:$0xff]
  %v53 = vld [vmem:[%s0 + $0x10c] sm:$0xff]
  %v54 = vld [vmem:[%s0 + $0x114] sm:$0xf]
  %v55 = vld [vmem:[%s0 + $0x118] sm:$0xff]
  %v56 = vld [vmem:[%s0 + $0x120] sm:$0xff]
  %v57 = vld [vmem:[%s0 + $0x128] sm:$0xff]
  %v58 = vld [vmem:[%s0 + $0x130] sm:$0xf]
  %v59 = vld [vmem:[%s0 + $0x134] sm:$0xff]
  %v60 = vld [vmem:[%s0 + $0x13c] sm:$0xff]
  %v61 = vld [vmem:[%s0 + $0x144] sm:$0xff]
  %v62 = vld [vmem:[%s0 + $0x14c] sm:$0xf]
  %v63 = vld [vmem:[%s0 + $0x150] sm:$0xff]
  %v64 = vld [vmem:[%s0 + $0x158] sm:$0xff]
  %v65 = vld [vmem:[%s0 + $0x160] sm:$0xff]
  %v66 = vld [vmem:[%s0 + $0x168] sm:$0xf]
  %v67 = vld [vmem:[%s0 + $0x16c] sm:$0xff]
  %v68 = vld [vmem:[%s0 + $0x174] sm:$0xff]
  %v69 = vld [vmem:[%s0 + $0x17c] sm:$0xff]
  %v70 = vld [vmem:[%s0 + $0x184] sm:$0xf]
  %v71 = vld [vmem:[%s0 + $0x188] sm:$0xff]
  %v72 = vld [vmem:[%s0 + $0x190] sm:$0xff]
  %v73 = vld [vmem:[%s0 + $0x198] sm:$0xff]
  %v74 = vld [vmem:[%s0 + $0x1a0] sm:$0xf]
  %v75 = vld [vmem:[%s0 + $0x1a4] sm:$0xff]
  %v76 = vld [vmem:[%s0 + $0x1ac] sm:$0xff]
  %v77 = vld [vmem:[%s0 + $0x1b4] sm:$0xff]
  %v78 = vld [vmem:[%s0 + $0x1bc] sm:$0xf]
  %v79 = vld [vmem:[%s1] sm:$0xf]
  %v80 = vld [vmem:[%s1 + $0x4] sm:$0xf]
  %v81 = vld [vmem:[%s1 + $0x8] sm:$0xf]
  %v82 = vld [vmem:[%s1 + $0xc] sm:$0xf]
  %v83 = vld [vmem:[%s1 + $0x10] sm:$0xf]
  %v84 = vld [vmem:[%s1 + $0x14] sm:$0xf]
  %v85 = vld [vmem:[%s1 + $0x18] sm:$0xf]
  %v86 = vld [vmem:[%s1 + $0x1c] sm:$0xf]
  %v87 = vld [vmem:[%s1 + $0x20] sm:$0xf]
  %v88 = vld [vmem:[%s1 + $0x24] sm:$0xf]
  %v89 = vld [vmem:[%s1 + $0x28] sm:$0xf]
  %v90 = vld [vmem:[%s1 + $0x2c] sm:$0xf]
  %v91 = vld [vmem:[%s1 + $0x30] sm:$0xf]
  %v92 = vld [vmem:[%s1 + $0x34] sm:$0xf]
  %v93 = vld [vmem:[%s1 + $0x38] sm:$0xf]
  %v94 = vld [vmem:[%s1 + $0x3c] sm:$0xf]
  %v95 = vld [vmem:[%s1 + $0x40] sm:$0xf]
  %v96 = vld [vmem:[%s1 + $0x44] sm:$0xf]
  %v97 = vld [vmem:[%s1 + $0x48] sm:$0xf]
  %v98 = vld [vmem:[%s1 + $0x4c] sm:$0xf]
  %v99 = vld [vmem:[%s1 + $0x50] sm:$0xf]
  %v100 = vld [vmem:[%s1 + $0x54] sm:$0xf]
  %v101 = vld [vmem:[%s1 + $0x58] sm:$0xf]
  %v102 = vld [vmem:[%s1 + $0x5c] sm:$0xf]
  %v103 = vld [vmem:[%s1 + $0x60] sm:$0xf]
  %v104 = vld [vmem:[%s1 + $0x64] sm:$0xf]
  %v105 = vld [vmem:[%s1 + $0x68] sm:$0xf]
  %v106 = vld [vmem:[%s1 + $0x6c] sm:$0xf]
  %v107 = vld [vmem:[%s1 + $0x70] sm:$0xf]
  %v108 = vld [vmem:[%s1 + $0x74] sm:$0xf]
  %v109 = vld [vmem:[%s1 + $0x78] sm:$0xf]
  %v110 = vld [vmem:[%s1 + $0x7c] sm:$0xf]
  %v111 = vld [vmem:[%s1 + $0x80] sm:$0xf]
  %v112 = vld [vmem:[%s1 + $0x84] sm:$0xf]
  %v113 = vld [vmem:[%s1 + $0x88] sm:$0xf]
  %v114 = vld [vmem:[%s1 + $0x8c] sm:$0xf]
  %v115 = vld [vmem:[%s1 + $0x90] sm:$0xf]
  %v116 = vld [vmem:[%s1 + $0x94] sm:$0xf]
  %v117 = vld [vmem:[%s1 + $0x98] sm:$0xf]
  %v118 = vld [vmem:[%s1 + $0x9c] sm:$0xf]
  %v119 = vld [vmem:[%s1 + $0xa0] sm:$0xf]
  %v120 = vld [vmem:[%s1 + $0xa4] sm:$0xf]
  %v121 = vld [vmem:[%s1 + $0xa8] sm:$0xf]
  %v122 = vld [vmem:[%s1 + $0xac] sm:$0xf]
  %v123 = vld [vmem:[%s1 + $0xb0] sm:$0xf]
  %v124 = vld [vmem:[%s1 + $0xb4] sm:$0xf]
  %v125 = vld [vmem:[%s1 + $0xb8] sm:$0xf]
  %v126 = vld [vmem:[%s1 + $0xbc] sm:$0xf]
  %v127 = vld [vmem:[%s1 + $0xc0] sm:$0xf]
  %v128 = vld [vmem:[%s1 + $0xc4] sm:$0xf]
  %v129 = vld [vmem:[%s1 + $0xc8] sm:$0xf]
  %v130 = vld [vmem:[%s1 + $0xcc] sm:$0xf]
  %v131 = vld [vmem:[%s1 + $0xd0] sm:$0xf]
  %v132 = vld [vmem:[%s1 + $0xd4] sm:$0xf]
  %v133 = vld [vmem:[%s1 + $0xd8] sm:$0xf]
  %v134 = vld [vmem:[%s1 + $0xdc] sm:$0xf]
  %v135 = vld [vmem:[%s1 + $0xe0] sm:$0xf]
  %v136 = vld [vmem:[%s1 + $0xe4] sm:$0xf]
  %v137 = vld [vmem:[%s1 + $0xe8] sm:$0xf]
  %v138 = vld [vmem:[%s1 + $0xec] sm:$0xf]
  %v139 = vld [vmem:[%s1 + $0xf0] sm:$0xf]
  %v140 = vld [vmem:[%s1 + $0xf4] sm:$0xf]
  %v141 = vld [vmem:[%s1 + $0xf8] sm:$0xf]
  %v142 = vld [vmem:[%s1 + $0xfc] sm:$0xf]
  %v143 = vld [vmem:[%s1 + $0x100] sm:$0xf]
  %v144 = vld [vmem:[%s1 + $0x104] sm:$0xf]
  %v145 = vld [vmem:[%s1 + $0x108] sm:$0xf]
  %v146 = vld [vmem:[%s1 + $0x10c] sm:$0xf]
  %v147 = vld [vmem:[%s1 + $0x110] sm:$0xf]
  %v148 = vld [vmem:[%s1 + $0x114] sm:$0xf]
  %v149 = vld [vmem:[%s1 + $0x118] sm:$0xf]
  %v150 = vld [vmem:[%s1 + $0x11c] sm:$0xf]
  %v151 = vld [vmem:[%s1 + $0x120] sm:$0xf]
  %v152 = vld [vmem:[%s1 + $0x124] sm:$0xf]
  %v153 = vld [vmem:[%s1 + $0x128] sm:$0xf]
  %v154 = vld [vmem:[%s1 + $0x12c] sm:$0xf]
  %v155 = vld [vmem:[%s1 + $0x130] sm:$0xf]
  %v156 = vld [vmem:[%s1 + $0x134] sm:$0xf]
  %v157 = vld [vmem:[%s1 + $0x138] sm:$0xf]
  %v158 = vld [vmem:[%s1 + $0x13c] sm:$0xf]
  %v159 = vld [vmem:[%s1 + $0x140] sm:$0xf]
  %v160 = vld [vmem:[%s1 + $0x144] sm:$0xf]
  %v161 = vld [vmem:[%s1 + $0x148] sm:$0xf]
  %v162 = vld [vmem:[%s1 + $0x14c] sm:$0xf]
  %v163 = vld [vmem:[%s1 + $0x150] sm:$0xf]
  %v164 = vld [vmem:[%s1 + $0x154] sm:$0xf]
  %v165 = vld [vmem:[%s1 + $0x158] sm:$0xf]
  %v166 = vld [vmem:[%s1 + $0x15c] sm:$0xf]
  %v167 = vld [vmem:[%s1 + $0x160] sm:$0xf]
  %v168 = vld [vmem:[%s1 + $0x164] sm:$0xf]
  %v169 = vld [vmem:[%s1 + $0x168] sm:$0xf]
  %v170 = vld [vmem:[%s1 + $0x16c] sm:$0xf]
  %v171 = vld [vmem:[%s1 + $0x170] sm:$0xf]
  %v172 = vld [vmem:[%s1 + $0x174] sm:$0xf]
  %v173 = vld [vmem:[%s1 + $0x178] sm:$0xf]
  %v174 = vld [vmem:[%s1 + $0x17c] sm:$0xf]
  %v175 = vld [vmem:[%s1 + $0x180] sm:$0xf]
  %v176 = vld [vmem:[%s1 + $0x184] sm:$0xf]
  %v177 = vld [vmem:[%s1 + $0x188] sm:$0xf]
  %v178 = vld [vmem:[%s1 + $0x18c] sm:$0xf]
  %v179 = vld [vmem:[%s1 + $0x190] sm:$0xf]
  %v180 = vld [vmem:[%s1 + $0x194] sm:$0xf]
  %v181 = vld [vmem:[%s1 + $0x198] sm:$0xf]
  %v182 = vld [vmem:[%s1 + $0x19c] sm:$0xf]
  %v183 = vld [vmem:[%s1 + $0x1a0] sm:$0xf]
  %v184 = vld [vmem:[%s1 + $0x1a4] sm:$0xf]
  %v185 = vld [vmem:[%s1 + $0x1a8] sm:$0xf]
  %v186 = vld [vmem:[%s1 + $0x1ac] sm:$0xf]
  %v187 = vld [vmem:[%s1 + $0x1b0] sm:$0xf]
  %v188 = vld [vmem:[%s1 + $0x1b4] sm:$0xf]
  %v189 = vld [vmem:[%s1 + $0x1b8] sm:$0xf]
  %v190 = vld [vmem:[%s1 + $0x1bc] sm:$0xf]
  %v191 = vld [vmem:[%s2] sm:$0x1]
  %v193 = vlaneseq
  %v194 = vshrl.u32 %v193, 7
  %v195 = vsub.s32 0, %v194
  %v196 = vrot.slane %v191, %v195
  %v262 = vunpack.c.l.b16 %v15
  %v263 = vunpack.c.h.b16 %v15
  %v264 = vunpack.c.l.b16 %v16
  %v265 = vunpack.c.h.b16 %v16
  %v266 = vunpack.c.l.b16 %v17
  %v267 = vunpack.c.h.b16 %v17
  %v268 = vunpack.c.l.b16 %v18
  %v269 = vunpack.c.l.b16 %v19
  %v270 = vunpack.c.h.b16 %v19
  %v271 = vunpack.c.l.b16 %v20
  %v272 = vunpack.c.h.b16 %v20
  %v273 = vunpack.c.l.b16 %v21
  %v274 = vunpack.c.h.b16 %v21
  %v275 = vunpack.c.l.b16 %v22
  %v276 = vunpack.c.l.b16 %v23
  %v277 = vunpack.c.h.b16 %v23
  %v278 = vunpack.c.l.b16 %v24
  %v279 = vunpack.c.h.b16 %v24
  %v280 = vunpack.c.l.b16 %v25
  %v281 = vunpack.c.h.b16 %v25
  %v282 = vunpack.c.l.b16 %v26
  %v283 = vunpack.c.l.b16 %v27
  %v284 = vunpack.c.h.b16 %v27
  %v285 = vunpack.c.l.b16 %v28
  %v286 = vunpack.c.h.b16 %v28
  %v287 = vunpack.c.l.b16 %v29
  %v288 = vunpack.c.h.b16 %v29
  %v289 = vunpack.c.l.b16 %v30
  %v290 = vunpack.c.l.b16 %v31
  %v291 = vunpack.c.h.b16 %v31
  %v292 = vunpack.c.l.b16 %v32
  %v293 = vunpack.c.h.b16 %v32
  %v294 = vunpack.c.l.b16 %v33
  %v295 = vunpack.c.h.b16 %v33
  %v296 = vunpack.c.l.b16 %v34
  %v297 = vunpack.c.l.b16 %v35
  %v298 = vunpack.c.h.b16 %v35
  %v299 = vunpack.c.l.b16 %v36
  %v300 = vunpack.c.h.b16 %v36
  %v301 = vunpack.c.l.b16 %v37
  %v302 = vunpack.c.h.b16 %v37
  %v303 = vunpack.c.l.b16 %v38
  %v304 = vunpack.c.l.b16 %v39
  %v305 = vunpack.c.h.b16 %v39
  %v306 = vunpack.c.l.b16 %v40
  %v307 = vunpack.c.h.b16 %v40
  %v308 = vunpack.c.l.b16 %v41
  %v309 = vunpack.c.h.b16 %v41
  %v310 = vunpack.c.l.b16 %v42
  %v311 = vunpack.c.l.b16 %v43
  %v312 = vunpack.c.h.b16 %v43
  %v313 = vunpack.c.l.b16 %v44
  %v314 = vunpack.c.h.b16 %v44
  %v315 = vunpack.c.l.b16 %v45
  %v316 = vunpack.c.h.b16 %v45
  %v317 = vunpack.c.l.b16 %v46
  %v318 = vunpack.c.l.b16 %v47
  %v319 = vunpack.c.h.b16 %v47
  %v320 = vunpack.c.l.b16 %v48
  %v321 = vunpack.c.h.b16 %v48
  %v322 = vunpack.c.l.b16 %v49
  %v323 = vunpack.c.h.b16 %v49
  %v324 = vunpack.c.l.b16 %v50
  %v325 = vunpack.c.l.b16 %v51
  %v326 = vunpack.c.h.b16 %v51
  %v327 = vunpack.c.l.b16 %v52
  %v328 = vunpack.c.h.b16 %v52
  %v329 = vunpack.c.l.b16 %v53
  %v330 = vunpack.c.h.b16 %v53
  %v331 = vunpack.c.l.b16 %v54
  %v332 = vunpack.c.l.b16 %v55
  %v333 = vunpack.c.h.b16 %v55
  %v334 = vunpack.c.l.b16 %v56
  %v335 = vunpack.c.h.b16 %v56
  %v336 = vunpack.c.l.b16 %v57
  %v337 = vunpack.c.h.b16 %v57
  %v338 = vunpack.c.l.b16 %v58
  %v339 = vunpack.c.l.b16 %v59
  %v340 = vunpack.c.h.b16 %v59
  %v341 = vunpack.c.l.b16 %v60
  %v342 = vunpack.c.h.b16 %v60
  %v343 = vunpack.c.l.b16 %v61
  %v344 = vunpack.c.h.b16 %v61
  %v345 = vunpack.c.l.b16 %v62
  %v346 = vunpack.c.l.b16 %v63
  %v347 = vunpack.c.h.b16 %v63
  %v348 = vunpack.c.l.b16 %v64
  %v349 = vunpack.c.h.b16 %v64
  %v350 = vunpack.c.l.b16 %v65
  %v351 = vunpack.c.h.b16 %v65
  %v352 = vunpack.c.l.b16 %v66
  %v353 = vunpack.c.l.b16 %v67
  %v354 = vunpack.c.h.b16 %v67
  %v355 = vunpack.c.l.b16 %v68
  %v356 = vunpack.c.h.b16 %v68
  %v357 = vunpack.c.l.b16 %v69
  %v358 = vunpack.c.h.b16 %v69
  %v359 = vunpack.c.l.b16 %v70
  %v360 = vunpack.c.l.b16 %v71
  %v361 = vunpack.c.h.b16 %v71
  %v362 = vunpack.c.l.b16 %v72
  %v363 = vunpack.c.h.b16 %v72
  %v364 = vunpack.c.l.b16 %v73
  %v365 = vunpack.c.h.b16 %v73
  %v366 = vunpack.c.l.b16 %v74
  %v367 = vunpack.c.l.b16 %v75
  %v368 = vunpack.c.h.b16 %v75
  %v369 = vunpack.c.l.b16 %v76
  %v370 = vunpack.c.h.b16 %v76
  %v371 = vunpack.c.l.b16 %v77
  %v372 = vunpack.c.h.b16 %v77
  %v373 = vunpack.c.l.b16 %v78
  %v374 = vpack.c.b16 %v269, %v262
  %v375 = vpack.c.b16 %v270, %v263
  %v376 = vpack.c.b16 %v271, %v264
  %v377 = vpack.c.b16 %v272, %v265
  %v378 = vpack.c.b16 %v273, %v266
  %v379 = vpack.c.b16 %v274, %v267
  %v380 = vpack.c.b16 %v275, %v268
  %v381 = vpack.c.b16 %v283, %v276
  %v382 = vpack.c.b16 %v284, %v277
  %v383 = vpack.c.b16 %v285, %v278
  %v384 = vpack.c.b16 %v286, %v279
  %v385 = vpack.c.b16 %v287, %v280
  %v386 = vpack.c.b16 %v288, %v281
  %v387 = vpack.c.b16 %v289, %v282
  %v388 = vpack.c.b16 %v297, %v290
  %v389 = vpack.c.b16 %v298, %v291
  %v390 = vpack.c.b16 %v299, %v292
  %v391 = vpack.c.b16 %v300, %v293
  %v392 = vpack.c.b16 %v301, %v294
  %v393 = vpack.c.b16 %v302, %v295
  %v394 = vpack.c.b16 %v303, %v296
  %v395 = vpack.c.b16 %v311, %v304
  %v396 = vpack.c.b16 %v312, %v305
  %v397 = vpack.c.b16 %v313, %v306
  %v398 = vpack.c.b16 %v314, %v307
  %v399 = vpack.c.b16 %v315, %v308
  %v400 = vpack.c.b16 %v316, %v309
  %v401 = vpack.c.b16 %v317, %v310
  %v402 = vpack.c.b16 %v325, %v318
  %v403 = vpack.c.b16 %v326, %v319
  %v404 = vpack.c.b16 %v327, %v320
  %v405 = vpack.c.b16 %v328, %v321
  %v406 = vpack.c.b16 %v329, %v322
  %v407 = vpack.c.b16 %v330, %v323
  %v408 = vpack.c.b16 %v331, %v324
  %v409 = vpack.c.b16 %v339, %v332
  %v410 = vpack.c.b16 %v340, %v333
  %v411 = vpack.c.b16 %v341, %v334
  %v412 = vpack.c.b16 %v342, %v335
  %v413 = vpack.c.b16 %v343, %v336
  %v414 = vpack.c.b16 %v344, %v337
  %v415 = vpack.c.b16 %v345, %v338
  %v416 = vpack.c.b16 %v353, %v346
  %v417 = vpack.c.b16 %v354, %v347
  %v418 = vpack.c.b16 %v355, %v348
  %v419 = vpack.c.b16 %v356, %v349
  %v420 = vpack.c.b16 %v357, %v350
  %v421 = vpack.c.b16 %v358, %v351
  %v422 = vpack.c.b16 %v359, %v352
  %v423 = vpack.c.b16 %v367, %v360
  %v424 = vpack.c.b16 %v368, %v361
  %v425 = vpack.c.b16 %v369, %v362
  %v426 = vpack.c.b16 %v370, %v363
  %v427 = vpack.c.b16 %v371, %v364
  %v428 = vpack.c.b16 %v372, %v365
  %v429 = vpack.c.b16 %v373, %v366
  %v598 = vunpack.c.l.b16 %v79
  %v599 = vunpack.c.l.b16 %v80
  %v600 = vunpack.c.l.b16 %v81
  %v601 = vunpack.c.l.b16 %v82
  %v602 = vunpack.c.l.b16 %v83
  %v603 = vunpack.c.l.b16 %v84
  %v604 = vunpack.c.l.b16 %v85
  %v605 = vunpack.c.l.b16 %v86
  %v606 = vunpack.c.l.b16 %v87
  %v607 = vunpack.c.l.b16 %v88
  %v608 = vunpack.c.l.b16 %v89
  %v609 = vunpack.c.l.b16 %v90
  %v610 = vunpack.c.l.b16 %v91
  %v611 = vunpack.c.l.b16 %v92
  %v612 = vunpack.c.l.b16 %v93
  %v613 = vunpack.c.l.b16 %v94
  %v614 = vunpack.c.l.b16 %v95
  %v615 = vunpack.c.l.b16 %v96
  %v616 = vunpack.c.l.b16 %v97
  %v617 = vunpack.c.l.b16 %v98
  %v618 = vunpack.c.l.b16 %v99
  %v619 = vunpack.c.l.b16 %v100
  %v620 = vunpack.c.l.b16 %v101
  %v621 = vunpack.c.l.b16 %v102
  %v622 = vunpack.c.l.b16 %v103
  %v623 = vunpack.c.l.b16 %v104
  %v624 = vunpack.c.l.b16 %v105
  %v625 = vunpack.c.l.b16 %v106
  %v626 = vunpack.c.l.b16 %v107
  %v627 = vunpack.c.l.b16 %v108
  %v628 = vunpack.c.l.b16 %v109
  %v629 = vunpack.c.l.b16 %v110
  %v630 = vunpack.c.l.b16 %v111
  %v631 = vunpack.c.l.b16 %v112
  %v632 = vunpack.c.l.b16 %v113
  %v633 = vunpack.c.l.b16 %v114
  %v634 = vunpack.c.l.b16 %v115
  %v635 = vunpack.c.l.b16 %v116
  %v636 = vunpack.c.l.b16 %v117
  %v637 = vunpack.c.l.b16 %v118
  %v638 = vunpack.c.l.b16 %v119
  %v639 = vunpack.c.l.b16 %v120
  %v640 = vunpack.c.l.b16 %v121
  %v641 = vunpack.c.l.b16 %v122
  %v642 = vunpack.c.l.b16 %v123
  %v643 = vunpack.c.l.b16 %v124
  %v644 = vunpack.c.l.b16 %v125
  %v645 = vunpack.c.l.b16 %v126
  %v646 = vunpack.c.l.b16 %v127
  %v647 = vunpack.c.l.b16 %v128
  %v648 = vunpack.c.l.b16 %v129
  %v649 = vunpack.c.l.b16 %v130
  %v650 = vunpack.c.l.b16 %v131
  %v651 = vunpack.c.l.b16 %v132
  %v652 = vunpack.c.l.b16 %v133
  %v653 = vunpack.c.l.b16 %v134
  %v654 = vunpack.c.l.b16 %v135
  %v655 = vunpack.c.l.b16 %v136
  %v656 = vunpack.c.l.b16 %v137
  %v657 = vunpack.c.l.b16 %v138
  %v658 = vunpack.c.l.b16 %v139
  %v659 = vunpack.c.l.b16 %v140
  %v660 = vunpack.c.l.b16 %v141
  %v661 = vunpack.c.l.b16 %v142
  %v662 = vunpack.c.l.b16 %v143
  %v663 = vunpack.c.l.b16 %v144
  %v664 = vunpack.c.l.b16 %v145
  %v665 = vunpack.c.l.b16 %v146
  %v666 = vunpack.c.l.b16 %v147
  %v667 = vunpack.c.l.b16 %v148
  %v668 = vunpack.c.l.b16 %v149
  %v669 = vunpack.c.l.b16 %v150
  %v670 = vunpack.c.l.b16 %v151
  %v671 = vunpack.c.l.b16 %v152
  %v672 = vunpack.c.l.b16 %v153
  %v673 = vunpack.c.l.b16 %v154
  %v674 = vunpack.c.l.b16 %v155
  %v675 = vunpack.c.l.b16 %v156
  %v676 = vunpack.c.l.b16 %v157
  %v677 = vunpack.c.l.b16 %v158
  %v678 = vunpack.c.l.b16 %v159
  %v679 = vunpack.c.l.b16 %v160
  %v680 = vunpack.c.l.b16 %v161
  %v681 = vunpack.c.l.b16 %v162
  %v682 = vunpack.c.l.b16 %v163
  %v683 = vunpack.c.l.b16 %v164
  %v684 = vunpack.c.l.b16 %v165
  %v685 = vunpack.c.l.b16 %v166
  %v686 = vunpack.c.l.b16 %v167
  %v687 = vunpack.c.l.b16 %v168
  %v688 = vunpack.c.l.b16 %v169
  %v689 = vunpack.c.l.b16 %v170
  %v690 = vunpack.c.l.b16 %v171
  %v691 = vunpack.c.l.b16 %v172
  %v692 = vunpack.c.l.b16 %v173
  %v693 = vunpack.c.l.b16 %v174
  %v694 = vunpack.c.l.b16 %v175
  %v695 = vunpack.c.l.b16 %v176
  %v696 = vunpack.c.l.b16 %v177
  %v697 = vunpack.c.l.b16 %v178
  %v698 = vunpack.c.l.b16 %v179
  %v699 = vunpack.c.l.b16 %v180
  %v700 = vunpack.c.l.b16 %v181
  %v701 = vunpack.c.l.b16 %v182
  %v702 = vunpack.c.l.b16 %v183
  %v703 = vunpack.c.l.b16 %v184
  %v704 = vunpack.c.l.b16 %v185
  %v705 = vunpack.c.l.b16 %v186
  %v706 = vunpack.c.l.b16 %v187
  %v707 = vunpack.c.l.b16 %v188
  %v708 = vunpack.c.l.b16 %v189
  %v709 = vunpack.c.l.b16 %v190
  %v710 = vpack.c.b16 %v599, %v598
  %v711 = vpack.c.b16 %v601, %v600
  %v712 = vpack.c.b16 %v603, %v602
  %v713 = vpack.c.b16 %v605, %v604
  %v714 = vpack.c.b16 %v607, %v606
  %v715 = vpack.c.b16 %v609, %v608
  %v716 = vpack.c.b16 %v611, %v610
  %v717 = vpack.c.b16 %v613, %v612
  %v718 = vpack.c.b16 %v615, %v614
  %v719 = vpack.c.b16 %v617, %v616
  %v720 = vpack.c.b16 %v619, %v618
  %v721 = vpack.c.b16 %v621, %v620
  %v722 = vpack.c.b16 %v623, %v622
  %v723 = vpack.c.b16 %v625, %v624
  %v724 = vpack.c.b16 %v627, %v626
  %v725 = vpack.c.b16 %v629, %v628
  %v726 = vpack.c.b16 %v631, %v630
  %v727 = vpack.c.b16 %v633, %v632
  %v728 = vpack.c.b16 %v635, %v634
  %v729 = vpack.c.b16 %v637, %v636
  %v730 = vpack.c.b16 %v639, %v638
  %v731 = vpack.c.b16 %v641, %v640
  %v732 = vpack.c.b16 %v643, %v642
  %v733 = vpack.c.b16 %v645, %v644
  %v734 = vpack.c.b16 %v647, %v646
  %v735 = vpack.c.b16 %v649, %v648
  %v736 = vpack.c.b16 %v651, %v650
  %v737 = vpack.c.b16 %v653, %v652
  %v738 = vpack.c.b16 %v655, %v654
  %v739 = vpack.c.b16 %v657, %v656
  %v740 = vpack.c.b16 %v659, %v658
  %v741 = vpack.c.b16 %v661, %v660
  %v742 = vpack.c.b16 %v663, %v662
  %v743 = vpack.c.b16 %v665, %v664
  %v744 = vpack.c.b16 %v667, %v666
  %v745 = vpack.c.b16 %v669, %v668
  %v746 = vpack.c.b16 %v671, %v670
  %v747 = vpack.c.b16 %v673, %v672
  %v748 = vpack.c.b16 %v675, %v674
  %v749 = vpack.c.b16 %v677, %v676
  %v750 = vpack.c.b16 %v679, %v678
  %v751 = vpack.c.b16 %v681, %v680
  %v752 = vpack.c.b16 %v683, %v682
  %v753 = vpack.c.b16 %v685, %v684
  %v754 = vpack.c.b16 %v687, %v686
  %v755 = vpack.c.b16 %v689, %v688
  %v756 = vpack.c.b16 %v691, %v690
  %v757 = vpack.c.b16 %v693, %v692
  %v758 = vpack.c.b16 %v695, %v694
  %v759 = vpack.c.b16 %v697, %v696
  %v760 = vpack.c.b16 %v699, %v698
  %v761 = vpack.c.b16 %v701, %v700
  %v762 = vpack.c.b16 %v703, %v702
  %v763 = vpack.c.b16 %v705, %v704
  %v764 = vpack.c.b16 %v707, %v706
  %v765 = vpack.c.b16 %v709, %v708
  %822 = vmatprep.subr.bf16.mxu0 0
  %823 = vmatpush1.bf16.msra.mxu0 %v710
  %824 = vmatprep.subr.bf16.mxu0 0
  %825 = vmatpush1.bf16.msra.mxu0 %v711
  %826 = vmatprep.subr.bf16.mxu0 0
  %827 = vmatpush1.bf16.msra.mxu0 %v712
  %828 = vmatprep.subr.bf16.mxu0 0
  %829 = vmatpush1.bf16.msra.mxu0 %v713
  %830 = vmatprep.subr.bf16.mxu0 0
  %831 = vmatpush1.bf16.msra.mxu0 %v714
  %832 = vmatprep.subr.bf16.mxu0 0
  %833 = vmatpush1.bf16.msra.mxu0 %v715
  %834 = vmatprep.subr.bf16.mxu0 0
  %835 = vmatpush1.bf16.msra.mxu0 %v716
  %836 = vmatprep.subr.bf16.mxu0 0
  %837 = vmatpush1.bf16.msra.mxu0 %v717
  %838 = vmatprep.subr.bf16.mxu0 0
  %839 = vmatpush1.bf16.msra.mxu0 %v718
  %840 = vmatprep.subr.bf16.mxu0 0
  %841 = vmatpush1.bf16.msra.mxu0 %v719
  %842 = vmatprep.subr.bf16.mxu0 0
  %843 = vmatpush1.bf16.msra.mxu0 %v720
  %844 = vmatprep.subr.bf16.mxu0 0
  %845 = vmatpush1.bf16.msra.mxu0 %v721
  %846 = vmatprep.subr.bf16.mxu0 0
  %847 = vmatpush1.bf16.msra.mxu0 %v722
  %848 = vmatprep.subr.bf16.mxu0 0
  %849 = vmatpush1.bf16.msra.mxu0 %v723
  %850 = vmatprep.subr.bf16.mxu0 0
  %851 = vmatpush1.bf16.msra.mxu0 %v724
  %852 = vmatprep.subr.bf16.mxu0 0
  %853 = vmatpush1.bf16.msra.mxu0 %v725
  %854 = vmatprep.mubr.bf16.mxu0 %v375
  %855 = vmatmul.mubr.bf16.gmra.mrb[0].mxu0 %v374
  %v856 = vpop.f32.mrb[0].mxu0
  %v857 = vadd.f32 %v196, %v856
  %v858 = vpop.f32.mrb[0].mxu0
  %v859 = vpop.f32.mrb[0].mxu0
  %v860 = vadd.f32 %v196, %v859
  %v861 = vpop.f32.mrb[0].mxu0
  %862 = vmatprep.mubr.bf16.mxu0 %v382
  %863 = vmatmul.mubr.bf16.gmra.mrb[0].mxu0 %v381
  %v864 = vpop.f32.mrb[0].mxu0
  %v865 = vadd.f32 %v196, %v864
  %v866 = vpop.f32.mrb[0].mxu0
  %v867 = vpop.f32.mrb[0].mxu0
  %v868 = vadd.f32 %v196, %v867
  %v869 = vpop.f32.mrb[0].mxu0
  %870 = vmatprep.mubr.bf16.mxu0 %v389
  %871 = vmatmul.mubr.bf16.gmra.mrb[0].mxu0 %v388
  %v872 = vpop.f32.mrb[0].mxu0
  %v873 = vadd.f32 %v196, %v872
  %v874 = vpop.f32.mrb[0].mxu0
  %v875 = vpop.f32.mrb[0].mxu0
  %v876 = vadd.f32 %v196, %v875
  %v877 = vpop.f32.mrb[0].mxu0
  %878 = vmatprep.mubr.bf16.mxu0 %v396
  %879 = vmatmul.mubr.bf16.gmra.mrb[0].mxu0 %v395
  %v880 = vpop.f32.mrb[0].mxu0
  %v881 = vadd.f32 %v196, %v880
  %v882 = vpop.f32.mrb[0].mxu0
  %v883 = vpop.f32.mrb[0].mxu0
  %v884 = vadd.f32 %v196, %v883
  %v885 = vpop.f32.mrb[0].mxu0
  %886 = vmatprep.mubr.bf16.mxu0 %v403
  %887 = vmatmul.mubr.bf16.gmra.mrb[0].mxu0 %v402
  %v888 = vpop.f32.mrb[0].mxu0
  %v889 = vadd.f32 %v196, %v888
  %v890 = vpop.f32.mrb[0].mxu0
  %v891 = vpop.f32.mrb[0].mxu0
  %v892 = vadd.f32 %v196, %v891
  %v893 = vpop.f32.mrb[0].mxu0
  %894 = vmatprep.mubr.bf16.mxu0 %v410
  %895 = vmatmul.mubr.bf16.gmra.mrb[0].mxu0 %v409
  %v896 = vpop.f32.mrb[0].mxu0
  %v897 = vadd.f32 %v196, %v896
  %v898 = vpop.f32.mrb[0].mxu0
  %v899 = vpop.f32.mrb[0].mxu0
  %v900 = vadd.f32 %v196, %v899
  %v901 = vpop.f32.mrb[0].mxu0
  %902 = vmatprep.mubr.bf16.mxu0 %v417
  %903 = vmatmul.mubr.bf16.gmra.mrb[0].mxu0 %v416
  %v904 = vpop.f32.mrb[0].mxu0
  %v905 = vadd.f32 %v196, %v904
  %v906 = vpop.f32.mrb[0].mxu0
  %v907 = vpop.f32.mrb[0].mxu0
  %v908 = vadd.f32 %v196, %v907
  %v909 = vpop.f32.mrb[0].mxu0
  %910 = vmatprep.mubr.bf16.mxu0 %v424
  %911 = vmatmul.mubr.bf16.gmra.mrb[0].mxu0 %v423
  %v912 = vpop.f32.mrb[0].mxu0
  %v913 = vadd.f32 %v196, %v912
  %v914 = vpop.f32.mrb[0].mxu0
  %v915 = vpop.f32.mrb[0].mxu0
  %v916 = vadd.f32 %v196, %v915
  %v917 = vpop.f32.mrb[0].mxu0
  %918 = vdwg.mxu0
  %919 = vmatprep.subr.bf16.mxu0 0
  %920 = vmatpush1.bf16.msra.mxu0 %v726
  %921 = vmatprep.subr.bf16.mxu0 0
  %922 = vmatpush1.bf16.msra.mxu0 %v727
  %923 = vmatprep.subr.bf16.mxu0 0
  %924 = vmatpush1.bf16.msra.mxu0 %v728
  %925 = vmatprep.subr.bf16.mxu0 0
  %926 = vmatpush1.bf16.msra.mxu0 %v729
  %927 = vmatprep.subr.bf16.mxu0 0
  %928 = vmatpush1.bf16.msra.mxu0 %v730
  %929 = vmatprep.subr.bf16.mxu0 0
  %930 = vmatpush1.bf16.msra.mxu0 %v731
  %931 = vmatprep.subr.bf16.mxu0 0
  %932 = vmatpush1.bf16.msra.mxu0 %v732
  %933 = vmatprep.subr.bf16.mxu0 0
  %934 = vmatpush1.bf16.msra.mxu0 %v733
  %935 = vmatprep.subr.bf16.mxu0 0
  %936 = vmatpush1.bf16.msra.mxu0 %v734
  %937 = vmatprep.subr.bf16.mxu0 0
  %938 = vmatpush1.bf16.msra.mxu0 %v735
  %939 = vmatprep.subr.bf16.mxu0 0
  %940 = vmatpush1.bf16.msra.mxu0 %v736
  %941 = vmatprep.subr.bf16.mxu0 0
  %942 = vmatpush1.bf16.msra.mxu0 %v737
  %943 = vmatprep.subr.bf16.mxu0 0
  %944 = vmatpush1.bf16.msra.mxu0 %v738
  %945 = vmatprep.subr.bf16.mxu0 0
  %946 = vmatpush1.bf16.msra.mxu0 %v739
  %947 = vmatprep.subr.bf16.mxu0 0
  %948 = vmatpush1.bf16.msra.mxu0 %v740
  %949 = vmatprep.subr.bf16.mxu0 0
  %950 = vmatpush1.bf16.msra.mxu0 %v741
  %951 = vmatprep.mubr.bf16.mxu0 %v377
  %952 = vmatmul.mubr.bf16.gmra.mrb[0].mxu0 %v376
  %v953 = vpop.f32.mrb[0].mxu0
  %v954 = vadd.f32 %v857, %v953
  %v955 = vpop.f32.mrb[0].mxu0
  %v956 = vpop.f32.mrb[0].mxu0
  %v957 = vadd.f32 %v860, %v956
  %v958 = vpop.f32.mrb[0].mxu0
  %959 = vmatprep.mubr.bf16.mxu0 %v384
  %960 = vmatmul.mubr.bf16.gmra.mrb[0].mxu0 %v383
  %v961 = vpop.f32.mrb[0].mxu0
  %v962 = vadd.f32 %v865, %v961
  %v963 = vpop.f32.mrb[0].mxu0
  %v964 = vpop.f32.mrb[0].mxu0
  %v965 = vadd.f32 %v868, %v964
  %v966 = vpop.f32.mrb[0].mxu0
  %967 = vmatprep.mubr.bf16.mxu0 %v391
  %968 = vmatmul.mubr.bf16.gmra.mrb[0].mxu0 %v390
  %v969 = vpop.f32.mrb[0].mxu0
  %v970 = vadd.f32 %v873, %v969
  %v971 = vpop.f32.mrb[0].mxu0
  %v972 = vpop.f32.mrb[0].mxu0
  %v973 = vadd.f32 %v876, %v972
  %v974 = vpop.f32.mrb[0].mxu0
  %975 = vmatprep.mubr.bf16.mxu0 %v398
  %976 = vmatmul.mubr.bf16.gmra.mrb[0].mxu0 %v397
  %v977 = vpop.f32.mrb[0].mxu0
  %v978 = vadd.f32 %v881, %v977
  %v979 = vpop.f32.mrb[0].mxu0
  %v980 = vpop.f32.mrb[0].mxu0
  %v981 = vadd.f32 %v884, %v980
  %v982 = vpop.f32.mrb[0].mxu0
  %983 = vmatprep.mubr.bf16.mxu0 %v405
  %984 = vmatmul.mubr.bf16.gmra.mrb[0].mxu0 %v404
  %v985 = vpop.f32.mrb[0].mxu0
  %v986 = vadd.f32 %v889, %v985
  %v987 = vpop.f32.mrb[0].mxu0
  %v988 = vpop.f32.mrb[0].mxu0
  %v989 = vadd.f32 %v892, %v988
  %v990 = vpop.f32.mrb[0].mxu0
  %991 = vmatprep.mubr.bf16.mxu0 %v412
  %992 = vmatmul.mubr.bf16.gmra.mrb[0].mxu0 %v411
  %v993 = vpop.f32.mrb[0].mxu0
  %v994 = vadd.f32 %v897, %v993
  %v995 = vpop.f32.mrb[0].mxu0
  %v996 = vpop.f32.mrb[0].mxu0
  %v997 = vadd.f32 %v900, %v996
  %v998 = vpop.f32.mrb[0].mxu0
  %999 = vmatprep.mubr.bf16.mxu0 %v419
  %1000 = vmatmul.mubr.bf16.gmra.mrb[0].mxu0 %v418
  %v1001 = vpop.f32.mrb[0].mxu0
  %v1002 = vadd.f32 %v905, %v1001
  %v1003 = vpop.f32.mrb[0].mxu0
  %v1004 = vpop.f32.mrb[0].mxu0
  %v1005 = vadd.f32 %v908, %v1004
  %v1006 = vpop.f32.mrb[0].mxu0
  %1007 = vmatprep.mubr.bf16.mxu0 %v426
  %1008 = vmatmul.mubr.bf16.gmra.mrb[0].mxu0 %v425
  %v1009 = vpop.f32.mrb[0].mxu0
  %v1010 = vadd.f32 %v913, %v1009
  %v1011 = vpop.f32.mrb[0].mxu0
  %v1012 = vpop.f32.mrb[0].mxu0
  %v1013 = vadd.f32 %v916, %v1012
  %v1014 = vpop.f32.mrb[0].mxu0
  %1015 = vdwg.mxu0
  %1016 = vmatprep.subr.bf16.mxu0 0
  %1017 = vmatpush1.bf16.msra.mxu0 %v742
  %1018 = vmatprep.subr.bf16.mxu0 0
  %1019 = vmatpush1.bf16.msra.mxu0 %v743
  %1020 = vmatprep.subr.bf16.mxu0 0
  %1021 = vmatpush1.bf16.msra.mxu0 %v744
  %1022 = vmatprep.subr.bf16.mxu0 0
  %1023 = vmatpush1.bf16.msra.mxu0 %v745
  %1024 = vmatprep.subr.bf16.mxu0 0
  %1025 = vmatpush1.bf16.msra.mxu0 %v746
  %1026 = vmatprep.subr.bf16.mxu0 0
  %1027 = vmatpush1.bf16.msra.mxu0 %v747
  %1028 = vmatprep.subr.bf16.mxu0 0
  %1029 = vmatpush1.bf16.msra.mxu0 %v748
  %1030 = vmatprep.subr.bf16.mxu0 0
  %1031 = vmatpush1.bf16.msra.mxu0 %v749
  %1032 = vmatprep.subr.bf16.mxu0 0
  %1033 = vmatpush1.bf16.msra.mxu0 %v750
  %1034 = vmatprep.subr.bf16.mxu0 0
  %1035 = vmatpush1.bf16.msra.mxu0 %v751
  %1036 = vmatprep.subr.bf16.mxu0 0
  %1037 = vmatpush1.bf16.msra.mxu0 %v752
  %1038 = vmatprep.subr.bf16.mxu0 0
  %1039 = vmatpush1.bf16.msra.mxu0 %v753
  %1040 = vmatprep.subr.bf16.mxu0 0
  %1041 = vmatpush1.bf16.msra.mxu0 %v754
  %1042 = vmatprep.subr.bf16.mxu0 0
  %1043 = vmatpush1.bf16.msra.mxu0 %v755
  %1044 = vmatprep.subr.bf16.mxu0 0
  %1045 = vmatpush1.bf16.msra.mxu0 %v756
  %1046 = vmatprep.subr.bf16.mxu0 0
  %1047 = vmatpush1.bf16.msra.mxu0 %v757
  %1048 = vmatprep.mubr.bf16.mxu0 %v379
  %1049 = vmatmul.mubr.bf16.gmra.mrb[0].mxu0 %v378
  %v1050 = vpop.f32.mrb[0].mxu0
  %v1051 = vadd.f32 %v954, %v1050
  %v1052 = vpop.f32.mrb[0].mxu0
  %v1053 = vpop.f32.mrb[0].mxu0
  %v1054 = vadd.f32 %v957, %v1053
  %v1055 = vpop.f32.mrb[0].mxu0
  %1056 = vmatprep.mubr.bf16.mxu0 %v386
  %1057 = vmatmul.mubr.bf16.gmra.mrb[0].mxu0 %v385
  %v1058 = vpop.f32.mrb[0].mxu0
  %v1059 = vadd.f32 %v962, %v1058
  %v1060 = vpop.f32.mrb[0].mxu0
  %v1061 = vpop.f32.mrb[0].mxu0
  %v1062 = vadd.f32 %v965, %v1061
  %v1063 = vpop.f32.mrb[0].mxu0
  %1064 = vmatprep.mubr.bf16.mxu0 %v393
  %1065 = vmatmul.mubr.bf16.gmra.mrb[0].mxu0 %v392
  %v1066 = vpop.f32.mrb[0].mxu0
  %v1067 = vadd.f32 %v970, %v1066
  %v1068 = vpop.f32.mrb[0].mxu0
  %v1069 = vpop.f32.mrb[0].mxu0
  %v1070 = vadd.f32 %v973, %v1069
  %v1071 = vpop.f32.mrb[0].mxu0
  %1072 = vmatprep.mubr.bf16.mxu0 %v400
  %1073 = vmatmul.mubr.bf16.gmra.mrb[0].mxu0 %v399
  %v1074 = vpop.f32.mrb[0].mxu0
  %v1075 = vadd.f32 %v978, %v1074
  %v1076 = vpop.f32.mrb[0].mxu0
  %v1077 = vpop.f32.mrb[0].mxu0
  %v1078 = vadd.f32 %v981, %v1077
  %v1079 = vpop.f32.mrb[0].mxu0
  %1080 = vmatprep.mubr.bf16.mxu0 %v407
  %1081 = vmatmul.mubr.bf16.gmra.mrb[0].mxu0 %v406
  %v1082 = vpop.f32.mrb[0].mxu0
  %v1083 = vadd.f32 %v986, %v1082
  %v1084 = vpop.f32.mrb[0].mxu0
  %v1085 = vpop.f32.mrb[0].mxu0
  %v1086 = vadd.f32 %v989, %v1085
  %v1087 = vpop.f32.mrb[0].mxu0
  %1088 = vmatprep.mubr.bf16.mxu0 %v414
  %1089 = vmatmul.mubr.bf16.gmra.mrb[0].mxu0 %v413
  %v1090 = vpop.f32.mrb[0].mxu0
  %v1091 = vadd.f32 %v994, %v1090
  %v1092 = vpop.f32.mrb[0].mxu0
  %v1093 = vpop.f32.mrb[0].mxu0
  %v1094 = vadd.f32 %v997, %v1093
  %v1095 = vpop.f32.mrb[0].mxu0
  %1096 = vmatprep.mubr.bf16.mxu0 %v421
  %1097 = vmatmul.mubr.bf16.gmra.mrb[0].mxu0 %v420
  %v1098 = vpop.f32.mrb[0].mxu0
  %v1099 = vadd.f32 %v1002, %v1098
  %v1100 = vpop.f32.mrb[0].mxu0
  %v1101 = vpop.f32.mrb[0].mxu0
  %v1102 = vadd.f32 %v1005, %v1101
  %v1103 = vpop.f32.mrb[0].mxu0
  %1104 = vmatprep.mubr.bf16.mxu0 %v428
  %1105 = vmatmul.mubr.bf16.gmra.mrb[0].mxu0 %v427
  %v1106 = vpop.f32.mrb[0].mxu0
  %v1107 = vadd.f32 %v1010, %v1106
  %v1108 = vpop.f32.mrb[0].mxu0
  %v1109 = vpop.f32.mrb[0].mxu0
  %v1110 = vadd.f32 %v1013, %v1109
  %v1111 = vpop.f32.mrb[0].mxu0
  %1112 = vdwg.mxu0
  %1113 = vmatprep.subr.bf16.mxu0 0
  %1114 = vmatpush1.bf16.msra.mxu0 %v758
  %1115 = vmatprep.subr.bf16.mxu0 0
  %1116 = vmatpush1.bf16.msra.mxu0 %v759
  %1117 = vmatprep.subr.bf16.mxu0 0
  %1118 = vmatpush1.bf16.msra.mxu0 %v760
  %1119 = vmatprep.subr.bf16.mxu0 0
  %1120 = vmatpush1.bf16.msra.mxu0 %v761
  %1121 = vmatprep.subr.bf16.mxu0 0
  %1122 = vmatpush1.bf16.msra.mxu0 %v762
  %1123 = vmatprep.subr.bf16.mxu0 0
  %1124 = vmatpush1.bf16.msra.mxu0 %v763
  %1125 = vmatprep.subr.bf16.mxu0 0
  %1126 = vmatpush1.bf16.msra.mxu0 %v764
  %1127 = vmatprep.subr.bf16.mxu0 0
  %1128 = vmatpush1.bf16.msra.mxu0 %v765
  %1129 = vmatprep.subr.bf16.mxu0 0
  %1130 = vmatpush1.bf16.msra.mxu0 0
  %1131 = vmatprep.subr.bf16.mxu0 0
  %1132 = vmatpush1.bf16.msra.mxu0 0
  %1133 = vmatprep.subr.bf16.mxu0 0
  %1134 = vmatpush1.bf16.msra.mxu0 0
  %1135 = vmatprep.subr.bf16.mxu0 0
  %1136 = vmatpush1.bf16.msra.mxu0 0
  %1137 = vmatprep.subr.bf16.mxu0 0
  %1138 = vmatpush1.bf16.msra.mxu0 0
  %1139 = vmatprep.subr.bf16.mxu0 0
  %1140 = vmatpush1.bf16.msra.mxu0 0
  %1141 = vmatprep.subr.bf16.mxu0 0
  %1142 = vmatpush1.bf16.msra.mxu0 0
  %1143 = vmatprep.subr.bf16.mxu0 0
  %1144 = vmatpush1.bf16.msra.mxu0 0
  %1145 = vmatprep.mubr.bf16.mxu0 0
  %1146 = vmatmul.mubr.bf16.gmra.mrb[0].mxu0 %v380
  %v1147 = vpop.f32.mrb[0].mxu0
  %v1148 = vadd.f32 %v1051, %v1147
  %v1149 = vpop.f32.mrb[0].mxu0
  %v1150 = vpop.f32.mrb[0].mxu0
  %v1151 = vadd.f32 %v1054, %v1150
  %v1152 = vpop.f32.mrb[0].mxu0
  %1153 = vmatprep.mubr.bf16.mxu0 0
  %1154 = vmatmul.mubr.bf16.gmra.mrb[0].mxu0 %v387
  %v1155 = vpop.f32.mrb[0].mxu0
  %v1156 = vadd.f32 %v1059, %v1155
  %v1157 = vpop.f32.mrb[0].mxu0
  %v1158 = vpop.f32.mrb[0].mxu0
  %v1159 = vadd.f32 %v1062, %v1158
  %v1160 = vpop.f32.mrb[0].mxu0
  %1161 = vmatprep.mubr.bf16.mxu0 0
  %1162 = vmatmul.mubr.bf16.gmra.mrb[0].mxu0 %v394
  %v1163 = vpop.f32.mrb[0].mxu0
  %v1164 = vadd.f32 %v1067, %v1163
  %v1165 = vpop.f32.mrb[0].mxu0
  %v1166 = vpop.f32.mrb[0].mxu0
  %v1167 = vadd.f32 %v1070, %v1166
  %v1168 = vpop.f32.mrb[0].mxu0
  %1169 = vmatprep.mubr.bf16.mxu0 0
  %1170 = vmatmul.mubr.bf16.gmra.mrb[0].mxu0 %v401
  %v1171 = vpop.f32.mrb[0].mxu0
  %v1172 = vadd.f32 %v1075, %v1171
  %v1173 = vpop.f32.mrb[0].mxu0
  %v1174 = vpop.f32.mrb[0].mxu0
  %v1175 = vadd.f32 %v1078, %v1174
  %v1176 = vpop.f32.mrb[0].mxu0
  %1177 = vmatprep.mubr.bf16.mxu0 0
  %1178 = vmatmul.mubr.bf16.gmra.mrb[0].mxu0 %v408
  %v1179 = vpop.f32.mrb[0].mxu0
  %v1180 = vadd.f32 %v1083, %v1179
  %v1181 = vpop.f32.mrb[0].mxu0
  %v1182 = vpop.f32.mrb[0].mxu0
  %v1183 = vadd.f32 %v1086, %v1182
  %v1184 = vpop.f32.mrb[0].mxu0
  %1185 = vmatprep.mubr.bf16.mxu0 0
  %1186 = vmatmul.mubr.bf16.gmra.mrb[0].mxu0 %v415
  %v1187 = vpop.f32.mrb[0].mxu0
  %v1188 = vadd.f32 %v1091, %v1187
  %v1189 = vpop.f32.mrb[0].mxu0
  %v1190 = vpop.f32.mrb[0].mxu0
  %v1191 = vadd.f32 %v1094, %v1190
  %v1192 = vpop.f32.mrb[0].mxu0
  %1193 = vmatprep.mubr.bf16.mxu0 0
  %1194 = vmatmul.mubr.bf16.gmra.mrb[0].mxu0 %v422
  %v1195 = vpop.f32.mrb[0].mxu0
  %v1196 = vadd.f32 %v1099, %v1195
  %v1197 = vpop.f32.mrb[0].mxu0
  %v1198 = vpop.f32.mrb[0].mxu0
  %v1199 = vadd.f32 %v1102, %v1198
  %v1200 = vpop.f32.mrb[0].mxu0
  %1201 = vmatprep.mubr.bf16.mxu0 0
  %1202 = vmatmul.mubr.bf16.gmra.mrb[0].mxu0 %v429
  %v1203 = vpop.f32.mrb[0].mxu0
  %v1204 = vadd.f32 %v1107, %v1203
  %v1205 = vpop.f32.mrb[0].mxu0
  %v1206 = vpop.f32.mrb[0].mxu0
  %v1207 = vadd.f32 %v1110, %v1206
  %v1208 = vpop.f32.mrb[0].mxu0
  %1209 = vdwg.mxu0
  %v1210 = vmax.f32 %v1148, 0.0
  %v1211 = vmax.f32 %v1151, 0.0
  %v1212 = vmax.f32 %v1156, 0.0
  %v1213 = vmax.f32 %v1159, 0.0
  %v1214 = vmax.f32 %v1164, 0.0
  %v1215 = vmax.f32 %v1167, 0.0
  %v1216 = vmax.f32 %v1172, 0.0
  %v1217 = vmax.f32 %v1175, 0.0
  %v1218 = vmax.f32 %v1180, 0.0
  %v1219 = vmax.f32 %v1183, 0.0
  %v1220 = vmax.f32 %v1188, 0.0
  %v1221 = vmax.f32 %v1191, 0.0
  %v1222 = vmax.f32 %v1196, 0.0
  %v1223 = vmax.f32 %v1199, 0.0
  %v1224 = vmax.f32 %v1204, 0.0
  %v1225 = vmax.f32 %v1207, 0.0
  %v1226 = vpack.c.bf16 %v1211, %v1210
  %v1227 = vpack.c.bf16 %v1213, %v1212
  %v1228 = vpack.c.bf16 %v1215, %v1214
  %v1229 = vpack.c.bf16 %v1217, %v1216
  %v1230 = vpack.c.bf16 %v1219, %v1218
  %v1231 = vpack.c.bf16 %v1221, %v1220
  %v1232 = vpack.c.bf16 %v1223, %v1222
  %v1233 = vpack.c.bf16 %v1225, %v1224
  %v1242 = vunpack.c.l.b16 %v1226
  %v1243 = vunpack.c.h.b16 %v1226
  %v1244 = vunpack.c.l.b16 %v1227
  %v1245 = vunpack.c.h.b16 %v1227
  %v1246 = vunpack.c.l.b16 %v1228
  %v1247 = vunpack.c.h.b16 %v1228
  %v1248 = vunpack.c.l.b16 %v1229
  %v1249 = vunpack.c.h.b16 %v1229
  %v1250 = vunpack.c.l.b16 %v1230
  %v1251 = vunpack.c.h.b16 %v1230
  %v1252 = vunpack.c.l.b16 %v1231
  %v1253 = vunpack.c.h.b16 %v1231
  %v1254 = vunpack.c.l.b16 %v1232
  %v1255 = vunpack.c.h.b16 %v1232
  %v1256 = vunpack.c.l.b16 %v1233
  %v1257 = vunpack.c.h.b16 %v1233
  %v1258 = vpack.c.b16 %v1242, %v1242
  %v1259 = vpack.c.b16 %v1243, %v1243
  %v1260 = vpack.c.b16 %v1244, %v1244
  %v1261 = vpack.c.b16 %v1245, %v1245
  %v1262 = vpack.c.b16 %v1246, %v1246
  %v1263 = vpack.c.b16 %v1247, %v1247
  %v1264 = vpack.c.b16 %v1248, %v1248
  %v1265 = vpack.c.b16 %v1249, %v1249
  %v1266 = vpack.c.b16 %v1250, %v1250
  %v1267 = vpack.c.b16 %v1251, %v1251
  %v1268 = vpack.c.b16 %v1252, %v1252
  %v1269 = vpack.c.b16 %v1253, %v1253
  %v1270 = vpack.c.b16 %v1254, %v1254
  %v1271 = vpack.c.b16 %v1255, %v1255
  %v1272 = vpack.c.b16 %v1256, %v1256
  %v1273 = vpack.c.b16 %v1257, %v1257
  %1290 = vst [vmem:[%s3] sm:$0xf] %v1258
  %1291 = vst [vmem:[%s3 + $0x4] sm:$0xf] %v1259
  %1292 = vst [vmem:[%s3 + $0x8] sm:$0xf] %v1260
  %1293 = vst [vmem:[%s3 + $0xc] sm:$0xf] %v1261
  %1294 = vst [vmem:[%s3 + $0x10] sm:$0xf] %v1262
  %1295 = vst [vmem:[%s3 + $0x14] sm:$0xf] %v1263
  %1296 = vst [vmem:[%s3 + $0x18] sm:$0xf] %v1264
  %1297 = vst [vmem:[%s3 + $0x1c] sm:$0xf] %v1265
  %1298 = vst [vmem:[%s3 + $0x20] sm:$0xf] %v1266
  %1299 = vst [vmem:[%s3 + $0x24] sm:$0xf] %v1267
  %1300 = vst [vmem:[%s3 + $0x28] sm:$0xf] %v1268
  %1301 = vst [vmem:[%s3 + $0x2c] sm:$0xf] %v1269
  %1302 = vst [vmem:[%s3 + $0x30] sm:$0xf] %v1270
  %1303 = vst [vmem:[%s3 + $0x34] sm:$0xf] %v1271
  %1304 = vst [vmem:[%s3 + $0x38] sm:$0xf] %v1272
  %1305 = vst [vmem:[%s3 + $0x3c] sm:$0xf] %v1273
  // Predicated region
  $region14: #{network_forward.26} parent=0 // pred_check
    _
  $region15: #{network_forward.26} parent=0 // pred_check_branch
    %1307 = sbr.rel (0) target = $region17
  $region16: #{network_forward.26} parent=0 // pred_region
    _
  $region17: #{network_forward.26} parent=0 // pred_fallthru
    _
  // Predicated region
  $region18: #{network_forward.26} parent=0 // pred_check
    _
  $region19: #{network_forward.26} parent=0 // pred_check_branch
    %1309 = sbr.rel (0) target = $region21
  $region20: #{network_forward.26} parent=0 // pred_region
    _
  $region21: #{network_forward.26} parent=0 // pred_fallthru
    _

// kernel: network_forward.27
$region0: #{network_forward.27}
  #allocation0 [shape = 'u32[]', space=smem, size = 0x4, offset = 0x4, fixed_abs, tag = 'smem constant byte address 0x4 - core index']
  #allocation1 [shape = 'u32[144,128]{1,0:T(1,128)}', space=vmem, size = 0x12000, scoped, tag = 'internal scratch']
  %s0 = inlined_call_operand.vmem [shape: bf16[128,256], index: 0, kind: input, shape index: {}]
  %s1 = inlined_call_operand.vmem [shape: bf16[256,128], index: 1, kind: input, shape index: {}]
  %s2 = inlined_call_operand.vmem [shape: f32[1,128], index: 2, kind: input, shape index: {}]
  %s3 = inlined_call_operand.vmem [shape: f32[1,128], index: 3, kind: input, shape index: {}]
  %s4 = inlined_call_operand.vmem [shape: f32[1,128], index: 4, kind: input, shape index: {}]
  %s5 = inlined_call_operand.vmem [shape: bf16[128,128], index: 5, kind: output, shape index: {}]
  %s6 = sld [smem:[#allocation0]]
  $region30: #{network_forward.27} parent=0
    _
  %s8 = ssub.s32 1, %s6
  %s9 = scalar_select 0, %s8, %s6
  // Predicated region
  $region2: #{network_forward.27} parent=0 // pred_check
    _
  $region3: #{network_forward.27} parent=0 // pred_check_branch
    %11 = sbr.rel (0) target = $region5
  $region4: #{network_forward.27} parent=0 // pred_region
    _
  $region5: #{network_forward.27} parent=0 // pred_fallthru
    _
  // Predicated region
  $region6: #{network_forward.27} parent=0 // pred_check
    _
  $region7: #{network_forward.27} parent=0 // pred_check_branch
    %13 = sbr.rel (0) target = $region9
  $region8: #{network_forward.27} parent=0 // pred_region
    _
  $region9: #{network_forward.27} parent=0 // pred_fallthru
    _
  // Predicated region
  $region10: #{network_forward.27} parent=0 // pred_check
    _
  $region11: #{network_forward.27} parent=0 // pred_check_branch
    %15 = sbr.rel (0) target = $region13
  $region12: #{network_forward.27} parent=0 // pred_region
    _
  $region13: #{network_forward.27} parent=0 // pred_fallthru
    _
  // Predicated region
  $region14: #{network_forward.27} parent=0 // pred_check
    _
  $region15: #{network_forward.27} parent=0 // pred_check_branch
    %17 = sbr.rel (0) target = $region17
  $region16: #{network_forward.27} parent=0 // pred_region
    _
  $region17: #{network_forward.27} parent=0 // pred_fallthru
    _
  // Predicated region
  $region18: #{network_forward.27} parent=0 // pred_check
    _
  $region19: #{network_forward.27} parent=0 // pred_check_branch
    %19 = sbr.rel (0) target = $region21
  $region20: #{network_forward.27} parent=0 // pred_region
    _
  $region21: #{network_forward.27} parent=0 // pred_fallthru
    _
  %v21 = vld [vmem:[%s0] sm:$0xff]
  %v22 = vld [vmem:[%s0 + $0x8] sm:$0xff]
  %v23 = vld [vmem:[%s0 + $0x10] sm:$0xff]
  %v24 = vld [vmem:[%s0 + $0x18] sm:$0xff]
  %v25 = vld [vmem:[%s0 + $0x20] sm:$0xff]
  %v26 = vld [vmem:[%s0 + $0x28] sm:$0xff]
  %v27 = vld [vmem:[%s0 + $0x30] sm:$0xff]
  %v28 = vld [vmem:[%s0 + $0x38] sm:$0xff]
  %v29 = vld [vmem:[%s0 + $0x40] sm:$0xff]
  %v30 = vld [vmem:[%s0 + $0x48] sm:$0xff]
  %v31 = vld [vmem:[%s0 + $0x50] sm:$0xff]
  %v32 = vld [vmem:[%s0 + $0x58] sm:$0xff]
  %v33 = vld [vmem:[%s0 + $0x60] sm:$0xff]
  %v34 = vld [vmem:[%s0 + $0x68] sm:$0xff]
  %v35 = vld [vmem:[%s0 + $0x70] sm:$0xff]
  %v36 = vld [vmem:[%s0 + $0x78] sm:$0xff]
  %v37 = vld [vmem:[%s1] sm:$0xf]
  %v38 = vld [vmem:[%s1 + $0x4] sm:$0xf]
  %v39 = vld [vmem:[%s1 + $0x8] sm:$0xf]
  %v40 = vld [vmem:[%s1 + $0xc] sm:$0xf]
  %v41 = vld [vmem:[%s1 + $0x10] sm:$0xf]
  %v42 = vld [vmem:[%s1 + $0x14] sm:$0xf]
  %v43 = vld [vmem:[%s1 + $0x18] sm:$0xf]
  %v44 = vld [vmem:[%s1 + $0x1c] sm:$0xf]
  %v45 = vld [vmem:[%s1 + $0x20] sm:$0xf]
  %v46 = vld [vmem:[%s1 + $0x24] sm:$0xf]
  %v47 = vld [vmem:[%s1 + $0x28] sm:$0xf]
  %v48 = vld [vmem:[%s1 + $0x2c] sm:$0xf]
  %v49 = vld [vmem:[%s1 + $0x30] sm:$0xf]
  %v50 = vld [vmem:[%s1 + $0x34] sm:$0xf]
  %v51 = vld [vmem:[%s1 + $0x38] sm:$0xf]
  %v52 = vld [vmem:[%s1 + $0x3c] sm:$0xf]
  %v53 = vld [vmem:[%s1 + $0x40] sm:$0xf]
  %v54 = vld [vmem:[%s1 + $0x44] sm:$0xf]
  %v55 = vld [vmem:[%s1 + $0x48] sm:$0xf]
  %v56 = vld [vmem:[%s1 + $0x4c] sm:$0xf]
  %v57 = vld [vmem:[%s1 + $0x50] sm:$0xf]
  %v58 = vld [vmem:[%s1 + $0x54] sm:$0xf]
  %v59 = vld [vmem:[%s1 + $0x58] sm:$0xf]
  %v60 = vld [vmem:[%s1 + $0x5c] sm:$0xf]
  %v61 = vld [vmem:[%s1 + $0x60] sm:$0xf]
  %v62 = vld [vmem:[%s1 + $0x64] sm:$0xf]
  %v63 = vld [vmem:[%s1 + $0x68] sm:$0xf]
  %v64 = vld [vmem:[%s1 + $0x6c] sm:$0xf]
  %v65 = vld [vmem:[%s1 + $0x70] sm:$0xf]
  %v66 = vld [vmem:[%s1 + $0x74] sm:$0xf]
  %v67 = vld [vmem:[%s1 + $0x78] sm:$0xf]
  %v68 = vld [vmem:[%s1 + $0x7c] sm:$0xf]
  %v69 = vld [vmem:[%s2] sm:$0x1]
  %v71 = vlaneseq
  %v72 = vshrl.u32 %v71, 7
  %v73 = vsub.s32 0, %v72
  %v74 = vrot.slane %v69, %v73
  %v92 = vunpack.c.l.b16 %v21
  %v93 = vunpack.c.h.b16 %v21
  %v94 = vunpack.c.l.b16 %v22
  %v95 = vunpack.c.h.b16 %v22
  %v96 = vunpack.c.l.b16 %v23
  %v97 = vunpack.c.h.b16 %v23
  %v98 = vunpack.c.l.b16 %v24
  %v99 = vunpack.c.h.b16 %v24
  %v100 = vunpack.c.l.b16 %v25
  %v101 = vunpack.c.h.b16 %v25
  %v102 = vunpack.c.l.b16 %v26
  %v103 = vunpack.c.h.b16 %v26
  %v104 = vunpack.c.l.b16 %v27
  %v105 = vunpack.c.h.b16 %v27
  %v106 = vunpack.c.l.b16 %v28
  %v107 = vunpack.c.h.b16 %v28
  %v108 = vunpack.c.l.b16 %v29
  %v109 = vunpack.c.h.b16 %v29
  %v110 = vunpack.c.l.b16 %v30
  %v111 = vunpack.c.h.b16 %v30
  %v112 = vunpack.c.l.b16 %v31
  %v113 = vunpack.c.h.b16 %v31
  %v114 = vunpack.c.l.b16 %v32
  %v115 = vunpack.c.h.b16 %v32
  %v116 = vunpack.c.l.b16 %v33
  %v117 = vunpack.c.h.b16 %v33
  %v118 = vunpack.c.l.b16 %v34
  %v119 = vunpack.c.h.b16 %v34
  %v120 = vunpack.c.l.b16 %v35
  %v121 = vunpack.c.h.b16 %v35
  %v122 = vunpack.c.l.b16 %v36
  %v123 = vunpack.c.h.b16 %v36
  %v124 = vpack.c.b16 %v94, %v92
  %v125 = vpack.c.b16 %v95, %v93
  %v126 = vpack.c.b16 %v98, %v96
  %v127 = vpack.c.b16 %v99, %v97
  %v128 = vpack.c.b16 %v102, %v100
  %v129 = vpack.c.b16 %v103, %v101
  %v130 = vpack.c.b16 %v106, %v104
  %v131 = vpack.c.b16 %v107, %v105
  %v132 = vpack.c.b16 %v110, %v108
  %v133 = vpack.c.b16 %v111, %v109
  %v134 = vpack.c.b16 %v114, %v112
  %v135 = vpack.c.b16 %v115, %v113
  %v136 = vpack.c.b16 %v118, %v116
  %v137 = vpack.c.b16 %v119, %v117
  %v138 = vpack.c.b16 %v122, %v120
  %v139 = vpack.c.b16 %v123, %v121
  %v188 = vunpack.c.l.b16 %v37
  %v189 = vunpack.c.l.b16 %v38
  %v190 = vunpack.c.l.b16 %v39
  %v191 = vunpack.c.l.b16 %v40
  %v192 = vunpack.c.l.b16 %v41
  %v193 = vunpack.c.l.b16 %v42
  %v194 = vunpack.c.l.b16 %v43
  %v195 = vunpack.c.l.b16 %v44
  %v196 = vunpack.c.l.b16 %v45
  %v197 = vunpack.c.l.b16 %v46
  %v198 = vunpack.c.l.b16 %v47
  %v199 = vunpack.c.l.b16 %v48
  %v200 = vunpack.c.l.b16 %v49
  %v201 = vunpack.c.l.b16 %v50
  %v202 = vunpack.c.l.b16 %v51
  %v203 = vunpack.c.l.b16 %v52
  %v204 = vunpack.c.l.b16 %v53
  %v205 = vunpack.c.l.b16 %v54
  %v206 = vunpack.c.l.b16 %v55
  %v207 = vunpack.c.l.b16 %v56
  %v208 = vunpack.c.l.b16 %v57
  %v209 = vunpack.c.l.b16 %v58
  %v210 = vunpack.c.l.b16 %v59
  %v211 = vunpack.c.l.b16 %v60
  %v212 = vunpack.c.l.b16 %v61
  %v213 = vunpack.c.l.b16 %v62
  %v214 = vunpack.c.l.b16 %v63
  %v215 = vunpack.c.l.b16 %v64
  %v216 = vunpack.c.l.b16 %v65
  %v217 = vunpack.c.l.b16 %v66
  %v218 = vunpack.c.l.b16 %v67
  %v219 = vunpack.c.l.b16 %v68
  %v220 = vpack.c.b16 %v189, %v188
  %v221 = vpack.c.b16 %v191, %v190
  %v222 = vpack.c.b16 %v193, %v192
  %v223 = vpack.c.b16 %v195, %v194
  %v224 = vpack.c.b16 %v197, %v196
  %v225 = vpack.c.b16 %v199, %v198
  %v226 = vpack.c.b16 %v201, %v200
  %v227 = vpack.c.b16 %v203, %v202
  %v228 = vpack.c.b16 %v205, %v204
  %v229 = vpack.c.b16 %v207, %v206
  %v230 = vpack.c.b16 %v209, %v208
  %v231 = vpack.c.b16 %v211, %v210
  %v232 = vpack.c.b16 %v213, %v212
  %v233 = vpack.c.b16 %v215, %v214
  %v234 = vpack.c.b16 %v217, %v216
  %v235 = vpack.c.b16 %v219, %v218
  %252 = vmatprep.subr.bf16.mxu0 0
  %253 = vmatpush1.bf16.msra.mxu0 %v220
  %254 = vmatprep.subr.bf16.mxu0 0
  %255 = vmatpush1.bf16.msra.mxu0 %v221
  %256 = vmatprep.subr.bf16.mxu0 0
  %257 = vmatpush1.bf16.msra.mxu0 %v222
  %258 = vmatprep.subr.bf16.mxu0 0
  %259 = vmatpush1.bf16.msra.mxu0 %v223
  %260 = vmatprep.subr.bf16.mxu0 0
  %261 = vmatpush1.bf16.msra.mxu0 %v224
  %262 = vmatprep.subr.bf16.mxu0 0
  %263 = vmatpush1.bf16.msra.mxu0 %v225
  %264 = vmatprep.subr.bf16.mxu0 0
  %265 = vmatpush1.bf16.msra.mxu0 %v226
  %266 = vmatprep.subr.bf16.mxu0 0
  %267 = vmatpush1.bf16.msra.mxu0 %v227
  %268 = vmatprep.subr.bf16.mxu0 0
  %269 = vmatpush1.bf16.msra.mxu0 %v228
  %270 = vmatprep.subr.bf16.mxu0 0
  %271 = vmatpush1.bf16.msra.mxu0 %v229
  %272 = vmatprep.subr.bf16.mxu0 0
  %273 = vmatpush1.bf16.msra.mxu0 %v230
  %274 = vmatprep.subr.bf16.mxu0 0
  %275 = vmatpush1.bf16.msra.mxu0 %v231
  %276 = vmatprep.subr.bf16.mxu0 0
  %277 = vmatpush1.bf16.msra.mxu0 %v232
  %278 = vmatprep.subr.bf16.mxu0 0
  %279 = vmatpush1.bf16.msra.mxu0 %v233
  %280 = vmatprep.subr.bf16.mxu0 0
  %281 = vmatpush1.bf16.msra.mxu0 %v234
  %282 = vmatprep.subr.bf16.mxu0 0
  %283 = vmatpush1.bf16.msra.mxu0 %v235
  %284 = vmatprep.mubr.bf16.mxu0 %v125
  %285 = vmatmul.mubr.bf16.gmra.mrb[0].mxu0 %v124
  %v286 = vpop.f32.mrb[0].mxu0
  %v287 = vadd.f32 %v74, %v286
  %v288 = vpop.f32.mrb[0].mxu0
  %v289 = vpop.f32.mrb[0].mxu0
  %v290 = vadd.f32 %v74, %v289
  %v291 = vpop.f32.mrb[0].mxu0
  %292 = vmatprep.mubr.bf16.mxu0 %v127
  %293 = vmatmul.mubr.bf16.gmra.mrb[0].mxu0 %v126
  %v294 = vpop.f32.mrb[0].mxu0
  %v295 = vadd.f32 %v74, %v294
  %v296 = vpop.f32.mrb[0].mxu0
  %v297 = vpop.f32.mrb[0].mxu0
  %v298 = vadd.f32 %v74, %v297
  %v299 = vpop.f32.mrb[0].mxu0
  %300 = vmatprep.mubr.bf16.mxu0 %v129
  %301 = vmatmul.mubr.bf16.gmra.mrb[0].mxu0 %v128
  %v302 = vpop.f32.mrb[0].mxu0
  %v303 = vadd.f32 %v74, %v302
  %v304 = vpop.f32.mrb[0].mxu0
  %v305 = vpop.f32.mrb[0].mxu0
  %v306 = vadd.f32 %v74, %v305
  %v307 = vpop.f32.mrb[0].mxu0
  %308 = vmatprep.mubr.bf16.mxu0 %v131
  %309 = vmatmul.mubr.bf16.gmra.mrb[0].mxu0 %v130
  %v310 = vpop.f32.mrb[0].mxu0
  %v311 = vadd.f32 %v74, %v310
  %v312 = vpop.f32.mrb[0].mxu0
  %v313 = vpop.f32.mrb[0].mxu0
  %v314 = vadd.f32 %v74, %v313
  %v315 = vpop.f32.mrb[0].mxu0
  %316 = vmatprep.mubr.bf16.mxu0 %v133
  %317 = vmatmul.mubr.bf16.gmra.mrb[0].mxu0 %v132
  %v318 = vpop.f32.mrb[0].mxu0
  %v319 = vadd.f32 %v74, %v318
  %v320 = vpop.f32.mrb[0].mxu0
  %v321 = vpop.f32.mrb[0].mxu0
  %v322 = vadd.f32 %v74, %v321
  %v323 = vpop.f32.mrb[0].mxu0
  %324 = vmatprep.mubr.bf16.mxu0 %v135
  %325 = vmatmul.mubr.bf16.gmra.mrb[0].mxu0 %v134
  %v326 = vpop.f32.mrb[0].mxu0
  %v327 = vadd.f32 %v74, %v326
  %v328 = vpop.f32.mrb[0].mxu0
  %v329 = vpop.f32.mrb[0].mxu0
  %v330 = vadd.f32 %v74, %v329
  %v331 = vpop.f32.mrb[0].mxu0
  %332 = vmatprep.mubr.bf16.mxu0 %v137
  %333 = vmatmul.mubr.bf16.gmra.mrb[0].mxu0 %v136
  %v334 = vpop.f32.mrb[0].mxu0
  %v335 = vadd.f32 %v74, %v334
  %v336 = vpop.f32.mrb[0].mxu0
  %v337 = vpop.f32.mrb[0].mxu0
  %v338 = vadd.f32 %v74, %v337
  %v339 = vpop.f32.mrb[0].mxu0
  %340 = vmatprep.mubr.bf16.mxu0 %v139
  %341 = vmatmul.mubr.bf16.gmra.mrb[0].mxu0 %v138
  %v342 = vpop.f32.mrb[0].mxu0
  %v343 = vadd.f32 %v74, %v342
  %v344 = vpop.f32.mrb[0].mxu0
  %v345 = vpop.f32.mrb[0].mxu0
  %v346 = vadd.f32 %v74, %v345
  %v347 = vpop.f32.mrb[0].mxu0
  %348 = vdwg.mxu0
  %v349 = vadd.f32 %v287, %v290
  %v350 = vadd.f32 %v349, %v295
  %v351 = vadd.f32 %v350, %v298
  %v352 = vadd.f32 %v351, %v303
  %v353 = vadd.f32 %v352, %v306
  %v354 = vadd.f32 %v353, %v311
  %v355 = vadd.f32 %v354, %v314
  %v356 = vadd.f32 %v355, %v319
  %v357 = vadd.f32 %v356, %v322
  %v358 = vadd.f32 %v357, %v327
  %v359 = vadd.f32 %v358, %v330
  %v360 = vadd.f32 %v359, %v335
  %v361 = vadd.f32 %v360, %v338
  %v362 = vadd.f32 %v361, %v343
  %v363 = vadd.f32 %v362, %v346
  %v364 = vrot.slane %v363, 4
  %v365 = vadd.f32 %v363, %v364
  %v366 = vrot.slane %v365, 2
  %v367 = vadd.f32 %v365, %v366
  %v368 = vrot.slane %v367, 1
  %v369 = vadd.f32 %v367, %v368
  %v370 = vmul.f32 %v369, 0.0078125
  %v371 = vmul.f32 %v287, %v287
  %v372 = vmul.f32 %v290, %v290
  %v373 = vmul.f32 %v295, %v295
  %v374 = vmul.f32 %v298, %v298
  %v375 = vmul.f32 %v303, %v303
  %v376 = vmul.f32 %v306, %v306
  %v377 = vmul.f32 %v311, %v311
  %v378 = vmul.f32 %v314, %v314
  %v379 = vmul.f32 %v319, %v319
  %v380 = vmul.f32 %v322, %v322
  %v381 = vmul.f32 %v327, %v327
  %v382 = vmul.f32 %v330, %v330
  %v383 = vmul.f32 %v335, %v335
  %v384 = vmul.f32 %v338, %v338
  %v385 = vmul.f32 %v343, %v343
  %v386 = vmul.f32 %v346, %v346
  %v387 = vadd.f32 %v371, %v372
  %v388 = vadd.f32 %v387, %v373
  %v389 = vadd.f32 %v388, %v374
  %v390 = vadd.f32 %v389, %v375
  %v391 = vadd.f32 %v390, %v376
  %v392 = vadd.f32 %v391, %v377
  %v393 = vadd.f32 %v392, %v378
  %v394 = vadd.f32 %v393, %v379
  %v395 = vadd.f32 %v394, %v380
  %v396 = vadd.f32 %v395, %v381
  %v397 = vadd.f32 %v396, %v382
  %v398 = vadd.f32 %v397, %v383
  %v399 = vadd.f32 %v398, %v384
  %v400 = vadd.f32 %v399, %v385
  %v401 = vadd.f32 %v400, %v386
  %v402 = vrot.slane %v401, 4
  %v403 = vadd.f32 %v401, %v402
  %v404 = vrot.slane %v403, 2
  %v405 = vadd.f32 %v403, %v404
  %v406 = vrot.slane %v405, 1
  %v407 = vadd.f32 %v405, %v406
  %v408 = vmul.f32 %v407, 0.0078125
  %v409 = vmul.f32 %v370, %v370
  %v410 = vsub.f32 %v408, %v409
  %v411 = vadd.f32 %v410, 1e-05
  %v412 = vrsqrt.pop %v411
  %v413 = vld [vmem:[%s3] sm:$0x1]
  %v414 = vmul.f32 %v412, %v413
  %v415 = vsub.f32 %v287, %v370
  %v416 = vsub.f32 %v290, %v370
  %v417 = vsub.f32 %v295, %v370
  %v418 = vsub.f32 %v298, %v370
  %v419 = vsub.f32 %v303, %v370
  %v420 = vsub.f32 %v306, %v370
  %v421 = vsub.f32 %v311, %v370
  %v422 = vsub.f32 %v314, %v370
  %v423 = vsub.f32 %v319, %v370
  %v424 = vsub.f32 %v322, %v370
  %v425 = vsub.f32 %v327, %v370
  %v426 = vsub.f32 %v330, %v370
  %v427 = vsub.f32 %v335, %v370
  %v428 = vsub.f32 %v338, %v370
  %v429 = vsub.f32 %v343, %v370
  %v430 = vsub.f32 %v346, %v370
  %v431 = vlaneseq
  %v432 = vshrl.u32 %v431, 7
  %v433 = vsub.s32 0, %v432
  %v434 = vrot.slane %v414, %v433
  %v435 = vmul.f32 %v415, %v434
  %v436 = vmul.f32 %v416, %v434
  %v437 = vmul.f32 %v417, %v434
  %v438 = vmul.f32 %v418, %v434
  %v439 = vmul.f32 %v419, %v434
  %v440 = vmul.f32 %v420, %v434
  %v441 = vmul.f32 %v421, %v434
  %v442 = vmul.f32 %v422, %v434
  %v443 = vmul.f32 %v423, %v434
  %v444 = vmul.f32 %v424, %v434
  %v445 = vmul.f32 %v425, %v434
  %v446 = vmul.f32 %v426, %v434
  %v447 = vmul.f32 %v427, %v434
  %v448 = vmul.f32 %v428, %v434
  %v449 = vmul.f32 %v429, %v434
  %v450 = vmul.f32 %v430, %v434
  %v451 = vld [vmem:[%s4] sm:$0x1]
  %v453 = vlaneseq
  %v454 = vshrl.u32 %v453, 7
  %v455 = vsub.s32 0, %v454
  %v456 = vrot.slane %v451, %v455
  %v458 = vadd.f32 %v435, %v456
  %v459 = vadd.f32 %v436, %v456
  %v460 = vadd.f32 %v437, %v456
  %v461 = vadd.f32 %v438, %v456
  %v462 = vadd.f32 %v439, %v456
  %v463 = vadd.f32 %v440, %v456
  %v464 = vadd.f32 %v441, %v456
  %v465 = vadd.f32 %v442, %v456
  %v466 = vadd.f32 %v443, %v456
  %v467 = vadd.f32 %v444, %v456
  %v468 = vadd.f32 %v445, %v456
  %v469 = vadd.f32 %v446, %v456
  %v470 = vadd.f32 %v447, %v456
  %v471 = vadd.f32 %v448, %v456
  %v472 = vadd.f32 %v449, %v456
  %v473 = vadd.f32 %v450, %v456
  %v474 = vpack.c.bf16 %v459, %v458
  %v475 = vpack.c.bf16 %v461, %v460
  %v476 = vpack.c.bf16 %v463, %v462
  %v477 = vpack.c.bf16 %v465, %v464
  %v478 = vpack.c.bf16 %v467, %v466
  %v479 = vpack.c.bf16 %v469, %v468
  %v480 = vpack.c.bf16 %v471, %v470
  %v481 = vpack.c.bf16 %v473, %v472
  %v490 = vunpack.c.l.b16 %v474
  %v491 = vunpack.c.h.b16 %v474
  %v492 = vunpack.c.l.b16 %v475
  %v493 = vunpack.c.h.b16 %v475
  %v494 = vunpack.c.l.b16 %v476
  %v495 = vunpack.c.h.b16 %v476
  %v496 = vunpack.c.l.b16 %v477
  %v497 = vunpack.c.h.b16 %v477
  %v498 = vunpack.c.l.b16 %v478
  %v499 = vunpack.c.h.b16 %v478
  %v500 = vunpack.c.l.b16 %v479
  %v501 = vunpack.c.h.b16 %v479
  %v502 = vunpack.c.l.b16 %v480
  %v503 = vunpack.c.h.b16 %v480
  %v504 = vunpack.c.l.b16 %v481
  %v505 = vunpack.c.h.b16 %v481
  %v506 = vpack.c.b16 %v490, %v490
  %v507 = vpack.c.b16 %v491, %v491
  %v508 = vpack.c.b16 %v492, %v492
  %v509 = vpack.c.b16 %v493, %v493
  %v510 = vpack.c.b16 %v494, %v494
  %v511 = vpack.c.b16 %v495, %v495
  %v512 = vpack.c.b16 %v496, %v496
  %v513 = vpack.c.b16 %v497, %v497
  %v514 = vpack.c.b16 %v498, %v498
  %v515 = vpack.c.b16 %v499, %v499
  %v516 = vpack.c.b16 %v500, %v500
  %v517 = vpack.c.b16 %v501, %v501
  %v518 = vpack.c.b16 %v502, %v502
  %v519 = vpack.c.b16 %v503, %v503
  %v520 = vpack.c.b16 %v504, %v504
  %v521 = vpack.c.b16 %v505, %v505
  %538 = vst [vmem:[%s5] sm:$0xf] %v506
  %539 = vst [vmem:[%s5 + $0x4] sm:$0xf] %v507
  %540 = vst [vmem:[%s5 + $0x8] sm:$0xf] %v508
  %541 = vst [vmem:[%s5 + $0xc] sm:$0xf] %v509
  %542 = vst [vmem:[%s5 + $0x10] sm:$0xf] %v510
  %543 = vst [vmem:[%s5 + $0x14] sm:$0xf] %v511
  %544 = vst [vmem:[%s5 + $0x18] sm:$0xf] %v512
  %545 = vst [vmem:[%s5 + $0x1c] sm:$0xf] %v513
  %546 = vst [vmem:[%s5 + $0x20] sm:$0xf] %v514
  %547 = vst [vmem:[%s5 + $0x24] sm:$0xf] %v515
  %548 = vst [vmem:[%s5 + $0x28] sm:$0xf] %v516
  %549 = vst [vmem:[%s5 + $0x2c] sm:$0xf] %v517
  %550 = vst [vmem:[%s5 + $0x30] sm:$0xf] %v518
  %551 = vst [vmem:[%s5 + $0x34] sm:$0xf] %v519
  %552 = vst [vmem:[%s5 + $0x38] sm:$0xf] %v520
  %553 = vst [vmem:[%s5 + $0x3c] sm:$0xf] %v521
  // Predicated region
  $region22: #{network_forward.27} parent=0 // pred_check
    _
  $region23: #{network_forward.27} parent=0 // pred_check_branch
    %555 = sbr.rel (0) target = $region25
  $region24: #{network_forward.27} parent=0 // pred_region
    _
  $region25: #{network_forward.27} parent=0 // pred_fallthru
    _
  // Predicated region
  $region26: #{network_forward.27} parent=0 // pred_check
    _
  $region27: #{network_forward.27} parent=0 // pred_check_branch
    %557 = sbr.rel (0) target = $region29
  $region28: #{network_forward.27} parent=0 // pred_region
    _
  $region29: #{network_forward.27} parent=0 // pred_fallthru
    _

// kernel: network_forward.29
$region0: #{network_forward.29}
  #allocation0 [shape = 'u32[]', space=smem, size = 0x4, offset = 0x4, fixed_abs, tag = 'smem constant byte address 0x4 - core index']
  #allocation1 [shape = 'u32[144,128]{1,0:T(1,128)}', space=vmem, size = 0x12000, scoped, tag = 'internal scratch']
  %s0 = inlined_call_operand.vmem [shape: bf16[512,512], index: 0, kind: input, shape index: {}]
  %s1 = inlined_call_operand.vmem [shape: bf16[512,128], index: 1, kind: input, shape index: {}]
  %s2 = inlined_call_operand.vmem [shape: f32[1,128], index: 2, kind: input, shape index: {}]
  %s3 = inlined_call_operand.vmem [shape: bf16[512,128], index: 3, kind: output, shape index: {}]
  %s4 = sld [smem:[#allocation0]]
  $region45: #{network_forward.29} parent=0
    _
  %s6 = ssub.s32 1, %s4
  %s7 = scalar_select 0, %s6, %s4
  loop: start=0, step=1, limit=4
  $region2: #{network_forward.29} parent=0 // loop_pre_header
    _
  $region3: #{network_forward.29} parent=0 // loop_header
    %s9 = sphi 0, %s13
    %p10 = scmp.ge.s32.totalorder %s9, 4
    %s19 = sphi 0, %s21
    %s22 = sphi 0, %s19
    %s23 = sphi 0, %s22
    %s39 = sphi 0, %s23
    %s43 = sphi 0, %s43
    %s45 = sphi 0, %s43
    %s46 = sphi 0, %s45
    %s60 = sphi 0, %s46
    %s64 = sphi 0, %s64
    %s66 = sphi 0, %s64
    %s67 = sphi 0, %s66
    %s81 = sphi 0, %s67
    %s87 = sphi 0, %s89
    %s90 = sphi 0, %s87
    %s91 = sphi 0, %s90
    %s107 = sphi 0, %s91
  $region4: #{network_forward.29} parent=0 // loop_header_branch
    %12 = sbr.rel (%p10) target = $region8
  $region5: #{network_forward.29} parent=0 // loop_body
    %s14 = ssub.s32 %s9, 1
    %s15 = ssub.s32 %s9, 2
    %s16 = sadd.s32 %s9, 1
    %s17 = ssub.s32 %s9, %s16
    %p18 = scmp.eq.s32.totalorder %s17, 0
    %s20 = sadd.s32 %s19, 1
    %s21 = scalar_select %p18, %s19, %s20
    %p24 = pneg %p18
    %p25 = scmp.eq.s32.totalorder %s9, 1
    %p26 = por %p24, %p25
    %p27 = scmp.ne.s32.totalorder %s19, %s22
    %p28 = scmp.eq.s32.totalorder %s9, 0
    %p29 = por %p27, %p28
    %p30 = scmp.ne.s32.totalorder %s19, %s22
    %p31 = scmp.eq.s32.totalorder %s14, 1
    %p32 = por %p30, %p31
    %p33 = scmp.ne.s32.totalorder %s22, %s23
    %p34 = scmp.eq.s32.totalorder %s14, 0
    %p35 = por %p33, %p34
    %p36 = scmp.ne.s32.totalorder %s22, %s23
    %p37 = scmp.eq.s32.totalorder %s15, 1
    %p38 = por %p36, %p37
    %p40 = scmp.ne.s32.totalorder %s23, %s39
    %p41 = scmp.eq.s32.totalorder %s15, 0
    %p42 = por %p40, %p41
    %s44 = sadd.s32 %s43, 1
    %p47 = scmp.eq.s32.totalorder %s9, 1
    %p48 = scmp.ne.s32.totalorder %s43, %s45
    %p49 = scmp.eq.s32.totalorder %s9, 0
    %p50 = por %p48, %p49
    %p51 = scmp.ne.s32.totalorder %s43, %s45
    %p52 = scmp.eq.s32.totalorder %s14, 1
    %p53 = por %p51, %p52
    %p54 = scmp.ne.s32.totalorder %s45, %s46
    %p55 = scmp.eq.s32.totalorder %s14, 0
    %p56 = por %p54, %p55
    %p57 = scmp.ne.s32.totalorder %s45, %s46
    %p58 = scmp.eq.s32.totalorder %s15, 1
    %p59 = por %p57, %p58
    %p61 = scmp.ne.s32.totalorder %s46, %s60
    %p62 = scmp.eq.s32.totalorder %s15, 0
    %p63 = por %p61, %p62
    %s65 = sadd.s32 %s64, 1
    %p68 = scmp.eq.s32.totalorder %s9, 1
    %p69 = scmp.ne.s32.totalorder %s64, %s66
    %p70 = scmp.eq.s32.totalorder %s9, 0
    %p71 = por %p69, %p70
    %p72 = scmp.ne.s32.totalorder %s64, %s66
    %p73 = scmp.eq.s32.totalorder %s14, 1
    %p74 = por %p72, %p73
    %p75 = scmp.ne.s32.totalorder %s66, %s67
    %p76 = scmp.eq.s32.totalorder %s14, 0
    %p77 = por %p75, %p76
    %p78 = scmp.ne.s32.totalorder %s66, %s67
    %p79 = scmp.eq.s32.totalorder %s15, 1
    %p80 = por %p78, %p79
    %p82 = scmp.ne.s32.totalorder %s67, %s81
    %p83 = scmp.eq.s32.totalorder %s15, 0
    %p84 = por %p82, %p83
    %s85 = ssub.s32 %s9, %s16
    %p86 = scmp.eq.s32.totalorder %s85, 0
    %s88 = sadd.s32 %s87, 1
    %s89 = scalar_select %p86, %s87, %s88
    %p92 = pneg %p86
    %p93 = scmp.eq.s32.totalorder %s9, 1
    %p94 = por %p92, %p93
    %p95 = scmp.ne.s32.totalorder %s87, %s90
    %p96 = scmp.eq.s32.totalorder %s9, 0
    %p97 = por %p95, %p96
    %p98 = scmp.ne.s32.totalorder %s87, %s90
    %p99 = scmp.eq.s32.totalorder %s14, 1
    %p100 = por %p98, %p99
    %p101 = scmp.ne.s32.totalorder %s90, %s91
    %p102 = scmp.eq.s32.totalorder %s14, 0
    %p103 = por %p101, %p102
    %p104 = scmp.ne.s32.totalorder %s90, %s91
    %p105 = scmp.eq.s32.totalorder %s15, 1
    %p106 = por %p104, %p105
    %p108 = scmp.ne.s32.totalorder %s91, %s107
    %p109 = scmp.eq.s32.totalorder %s15, 0
    %p110 = por %p108, %p109
    %p111 = scmp.le.s32.totalorder 1, %s9
    %p112 = scmp.lt.s32.totalorder %s9, 3
    %p113 = pnand %p111, %p112
    %p114 = pneg %p113
    // Predicated region
    $region9: #{network_forward.29} parent=5 // pred_check
      _
    $region10: #{network_forward.29} parent=5 // pred_check_branch
      %116 = sbr.rel (%p113) target = $region12
    $region11: #{network_forward.29} parent=5 // pred_region
      %s117 = ssub.s32 %s9, 1
      // Predicated region
      $region13: #{network_forward.29} parent=11 // pred_check
        %p118 = pneg %p56
      $region14: #{network_forward.29} parent=11 // pred_check_branch
        %120 = sbr.rel (%p118) target = $region16
      $region15: #{network_forward.29} parent=11 // pred_region
        _
      $region16: #{network_forward.29} parent=11 // pred_fallthru
        _
      // Predicated region
      $region17: #{network_forward.29} parent=11 // pred_check
        %p121 = pneg %p77
      $region18: #{network_forward.29} parent=11 // pred_check_branch
        %123 = sbr.rel (%p121) target = $region20
      $region19: #{network_forward.29} parent=11 // pred_region
        _
      $region20: #{network_forward.29} parent=11 // pred_fallthru
        _
    $region12: #{network_forward.29} parent=5 // pred_fallthru
      _
    %p124 = scmp.lt.s32.totalorder %s9, 2
    // Predicated region
    $region21: #{network_forward.29} parent=5 // pred_check
      %p125 = pneg %p124
    $region22: #{network_forward.29} parent=5 // pred_check_branch
      %127 = sbr.rel (%p125) target = $region24
    $region23: #{network_forward.29} parent=5 // pred_region
      // Predicated region
      $region25: #{network_forward.29} parent=23 // pred_check
        %p128 = pneg %p29
      $region26: #{network_forward.29} parent=23 // pred_check_branch
        %130 = sbr.rel (%p128) target = $region28
      $region27: #{network_forward.29} parent=23 // pred_region
        %s131 = smul.u32 32, %s9
        %p132 = scmp.lt.s32.totalorder %s131, 63
        %s133 = scalar_select %p132, %s131, 63
        %s134 = smul.addr %s133, 4
        %s135 = smul.addr %s134, 4
        %s136 = scalar_lea.vmem %s0, %s135
        %s137 = smul.u32 32, %s9
      $region28: #{network_forward.29} parent=23 // pred_fallthru
        _
    $region24: #{network_forward.29} parent=5 // pred_fallthru
      _
    %p138 = scmp.le.s32.totalorder 1, %s9
    %p139 = scmp.lt.s32.totalorder %s9, 3
    %p140 = pnand %p138, %p139
    %p141 = pneg %p140
    // Predicated region
    $region29: #{network_forward.29} parent=5 // pred_check
      _
    $region30: #{network_forward.29} parent=5 // pred_check_branch
      %143 = sbr.rel (%p140) target = $region32
    $region31: #{network_forward.29} parent=5 // pred_region
      %s144 = ssub.s32 %s9, 1
      %s145 = smul.u32 32, %s14
      %p146 = scmp.lt.s32.totalorder %s145, 63
      %s147 = scalar_select %p146, %s145, 63
      %s148 = smul.addr %s147, 4
      %s149 = smul.addr %s148, 4
      %s150 = scalar_lea.vmem %s0, %s149
      %p151 = pneg %p35
      %p152 = pneg %p32
      %p153 = pneg %p56
      %p154 = pneg %p53
      %p155 = pneg %p77
      %p156 = pneg %p74
      %p157 = pneg %p103
      %p158 = pneg %p100
      %s159 = smul.u32 32, %s14
      %p160 = scmp.lt.s32.totalorder %s159, 63
      %s161 = scalar_select %p160, %s159, 63
      %s162 = smul.addr %s161, 4
      %s163 = scalar_lea.vmem %s3, %s162
      %s164 = smul.u32 32, %s14
      %p165 = scmp.lt.s32.totalorder %s164, 63
      %s166 = scalar_select %p165, %s164, 63
      %s167 = smul.addr %s166, 4
      %s168 = smul.addr %s167, 4
      %s169 = scalar_lea.vmem %s0, %s168
      %s170 = smul.u32 32, %s14
      %s171 = smul.u32 32, %s14
      %p172 = scmp.lt.s32.totalorder %s171, 63
      %s173 = scalar_select %p172, %s171, 63
      %s174 = smul.addr %s173, 4
      %s175 = scalar_lea.vmem %s3, %s174
      %s176 = smul.u32 32, %s14
      %v178 = vld [vmem:[%s169] sm:$0xff]
      %v179 = vld [vmem:[%s169 + $0x8] sm:$0xff]
      %v180 = vld [vmem:[%s169 + $0x10] sm:$0xff]
      %v181 = vld [vmem:[%s169 + $0x18] sm:$0xff]
      %v182 = vld [vmem:[%s169 + $0x20] sm:$0xff]
      %v183 = vld [vmem:[%s169 + $0x28] sm:$0xff]
      %v184 = vld [vmem:[%s169 + $0x30] sm:$0xff]
      %v185 = vld [vmem:[%s169 + $0x38] sm:$0xff]
      %v186 = vld [vmem:[%s169 + $0x40] sm:$0xff]
      %v187 = vld [vmem:[%s169 + $0x48] sm:$0xff]
      %v188 = vld [vmem:[%s169 + $0x50] sm:$0xff]
      %v189 = vld [vmem:[%s169 + $0x58] sm:$0xff]
      %v190 = vld [vmem:[%s169 + $0x60] sm:$0xff]
      %v191 = vld [vmem:[%s169 + $0x68] sm:$0xff]
      %v192 = vld [vmem:[%s169 + $0x70] sm:$0xff]
      %v193 = vld [vmem:[%s169 + $0x78] sm:$0xff]
      %v194 = vld [vmem:[%s169 + $0x80] sm:$0xff]
      %v195 = vld [vmem:[%s169 + $0x88] sm:$0xff]
      %v196 = vld [vmem:[%s169 + $0x90] sm:$0xff]
      %v197 = vld [vmem:[%s169 + $0x98] sm:$0xff]
      %v198 = vld [vmem:[%s169 + $0xa0] sm:$0xff]
      %v199 = vld [vmem:[%s169 + $0xa8] sm:$0xff]
      %v200 = vld [vmem:[%s169 + $0xb0] sm:$0xff]
      %v201 = vld [vmem:[%s169 + $0xb8] sm:$0xff]
      %v202 = vld [vmem:[%s169 + $0xc0] sm:$0xff]
      %v203 = vld [vmem:[%s169 + $0xc8] sm:$0xff]
      %v204 = vld [vmem:[%s169 + $0xd0] sm:$0xff]
      %v205 = vld [vmem:[%s169 + $0xd8] sm:$0xff]
      %v206 = vld [vmem:[%s169 + $0xe0] sm:$0xff]
      %v207 = vld [vmem:[%s169 + $0xe8] sm:$0xff]
      %v208 = vld [vmem:[%s169 + $0xf0] sm:$0xff]
      %v209 = vld [vmem:[%s169 + $0xf8] sm:$0xff]
      %v210 = vld [vmem:[%s169 + $0x100] sm:$0xff]
      %v211 = vld [vmem:[%s169 + $0x108] sm:$0xff]
      %v212 = vld [vmem:[%s169 + $0x110] sm:$0xff]
      %v213 = vld [vmem:[%s169 + $0x118] sm:$0xff]
      %v214 = vld [vmem:[%s169 + $0x120] sm:$0xff]
      %v215 = vld [vmem:[%s169 + $0x128] sm:$0xff]
      %v216 = vld [vmem:[%s169 + $0x130] sm:$0xff]
      %v217 = vld [vmem:[%s169 + $0x138] sm:$0xff]
      %v218 = vld [vmem:[%s169 + $0x140] sm:$0xff]
      %v219 = vld [vmem:[%s169 + $0x148] sm:$0xff]
      %v220 = vld [vmem:[%s169 + $0x150] sm:$0xff]
      %v221 = vld [vmem:[%s169 + $0x158] sm:$0xff]
      %v222 = vld [vmem:[%s169 + $0x160] sm:$0xff]
      %v223 = vld [vmem:[%s169 + $0x168] sm:$0xff]
      %v224 = vld [vmem:[%s169 + $0x170] sm:$0xff]
      %v225 = vld [vmem:[%s169 + $0x178] sm:$0xff]
      %v226 = vld [vmem:[%s169 + $0x180] sm:$0xff]
      %v227 = vld [vmem:[%s169 + $0x188] sm:$0xff]
      %v228 = vld [vmem:[%s169 + $0x190] sm:$0xff]
      %v229 = vld [vmem:[%s169 + $0x198] sm:$0xff]
      %v230 = vld [vmem:[%s169 + $0x1a0] sm:$0xff]
      %v231 = vld [vmem:[%s169 + $0x1a8] sm:$0xff]
      %v232 = vld [vmem:[%s169 + $0x1b0] sm:$0xff]
      %v233 = vld [vmem:[%s169 + $0x1b8] sm:$0xff]
      %v234 = vld [vmem:[%s169 + $0x1c0] sm:$0xff]
      %v235 = vld [vmem:[%s169 + $0x1c8] sm:$0xff]
      %v236 = vld [vmem:[%s169 + $0x1d0] sm:$0xff]
      %v237 = vld [vmem:[%s169 + $0x1d8] sm:$0xff]
      %v238 = vld [vmem:[%s169 + $0x1e0] sm:$0xff]
      %v239 = vld [vmem:[%s169 + $0x1e8] sm:$0xff]
      %v240 = vld [vmem:[%s169 + $0x1f0] sm:$0xff]
      %v241 = vld [vmem:[%s169 + $0x1f8] sm:$0xff]
      %v242 = vld [vmem:[%s1] sm:$0xf]
      %v243 = vld [vmem:[%s1 + $0x4] sm:$0xf]
      %v244 = vld [vmem:[%s1 + $0x8] sm:$0xf]
      %v245 = vld [vmem:[%s1 + $0xc] sm:$0xf]
      %v246 = vld [vmem:[%s1 + $0x10] sm:$0xf]
      %v247 = vld [vmem:[%s1 + $0x14] sm:$0xf]
      %v248 = vld [vmem:[%s1 + $0x18] sm:$0xf]
      %v249 = vld [vmem:[%s1 + $0x1c] sm:$0xf]
      %v250 = vld [vmem:[%s1 + $0x20] sm:$0xf]
      %v251 = vld [vmem:[%s1 + $0x24] sm:$0xf]
      %v252 = vld [vmem:[%s1 + $0x28] sm:$0xf]
      %v253 = vld [vmem:[%s1 + $0x2c] sm:$0xf]
      %v254 = vld [vmem:[%s1 + $0x30] sm:$0xf]
      %v255 = vld [vmem:[%s1 + $0x34] sm:$0xf]
      %v256 = vld [vmem:[%s1 + $0x38] sm:$0xf]
      %v257 = vld [vmem:[%s1 + $0x3c] sm:$0xf]
      %v258 = vld [vmem:[%s1 + $0x40] sm:$0xf]
      %v259 = vld [vmem:[%s1 + $0x44] sm:$0xf]
      %v260 = vld [vmem:[%s1 + $0x48] sm:$0xf]
      %v261 = vld [vmem:[%s1 + $0x4c] sm:$0xf]
      %v262 = vld [vmem:[%s1 + $0x50] sm:$0xf]
      %v263 = vld [vmem:[%s1 + $0x54] sm:$0xf]
      %v264 = vld [vmem:[%s1 + $0x58] sm:$0xf]
      %v265 = vld [vmem:[%s1 + $0x5c] sm:$0xf]
      %v266 = vld [vmem:[%s1 + $0x60] sm:$0xf]
      %v267 = vld [vmem:[%s1 + $0x64] sm:$0xf]
      %v268 = vld [vmem:[%s1 + $0x68] sm:$0xf]
      %v269 = vld [vmem:[%s1 + $0x6c] sm:$0xf]
      %v270 = vld [vmem:[%s1 + $0x70] sm:$0xf]
      %v271 = vld [vmem:[%s1 + $0x74] sm:$0xf]
      %v272 = vld [vmem:[%s1 + $0x78] sm:$0xf]
      %v273 = vld [vmem:[%s1 + $0x7c] sm:$0xf]
      %v274 = vld [vmem:[%s1 + $0x80] sm:$0xf]
      %v275 = vld [vmem:[%s1 + $0x84] sm:$0xf]
      %v276 = vld [vmem:[%s1 + $0x88] sm:$0xf]
      %v277 = vld [vmem:[%s1 + $0x8c] sm:$0xf]
      %v278 = vld [vmem:[%s1 + $0x90] sm:$0xf]
      %v279 = vld [vmem:[%s1 + $0x94] sm:$0xf]
      %v280 = vld [vmem:[%s1 + $0x98] sm:$0xf]
      %v281 = vld [vmem:[%s1 + $0x9c] sm:$0xf]
      %v282 = vld [vmem:[%s1 + $0xa0] sm:$0xf]
      %v283 = vld [vmem:[%s1 + $0xa4] sm:$0xf]
      %v284 = vld [vmem:[%s1 + $0xa8] sm:$0xf]
      %v285 = vld [vmem:[%s1 + $0xac] sm:$0xf]
      %v286 = vld [vmem:[%s1 + $0xb0] sm:$0xf]
      %v287 = vld [vmem:[%s1 + $0xb4] sm:$0xf]
      %v288 = vld [vmem:[%s1 + $0xb8] sm:$0xf]
      %v289 = vld [vmem:[%s1 + $0xbc] sm:$0xf]
      %v290 = vld [vmem:[%s1 + $0xc0] sm:$0xf]
      %v291 = vld [vmem:[%s1 + $0xc4] sm:$0xf]
      %v292 = vld [vmem:[%s1 + $0xc8] sm:$0xf]
      %v293 = vld [vmem:[%s1 + $0xcc] sm:$0xf]
      %v294 = vld [vmem:[%s1 + $0xd0] sm:$0xf]
      %v295 = vld [vmem:[%s1 + $0xd4] sm:$0xf]
      %v296 = vld [vmem:[%s1 + $0xd8] sm:$0xf]
      %v297 = vld [vmem:[%s1 + $0xdc] sm:$0xf]
      %v298 = vld [vmem:[%s1 + $0xe0] sm:$0xf]
      %v299 = vld [vmem:[%s1 + $0xe4] sm:$0xf]
      %v300 = vld [vmem:[%s1 + $0xe8] sm:$0xf]
      %v301 = vld [vmem:[%s1 + $0xec] sm:$0xf]
      %v302 = vld [vmem:[%s1 + $0xf0] sm:$0xf]
      %v303 = vld [vmem:[%s1 + $0xf4] sm:$0xf]
      %v304 = vld [vmem:[%s1 + $0xf8] sm:$0xf]
      %v305 = vld [vmem:[%s1 + $0xfc] sm:$0xf]
      %v306 = vld [vmem:[%s2] sm:$0x1]
      %v308 = vlaneseq
      %v309 = vshrl.u32 %v308, 7
      %v310 = vsub.s32 0, %v309
      %v311 = vrot.slane %v306, %v310
      %v377 = vunpack.c.l.b16 %v178
      %v378 = vunpack.c.h.b16 %v178
      %v379 = vunpack.c.l.b16 %v179
      %v380 = vunpack.c.h.b16 %v179
      %v381 = vunpack.c.l.b16 %v180
      %v382 = vunpack.c.h.b16 %v180
      %v383 = vunpack.c.l.b16 %v181
      %v384 = vunpack.c.h.b16 %v181
      %v385 = vunpack.c.l.b16 %v182
      %v386 = vunpack.c.h.b16 %v182
      %v387 = vunpack.c.l.b16 %v183
      %v388 = vunpack.c.h.b16 %v183
      %v389 = vunpack.c.l.b16 %v184
      %v390 = vunpack.c.h.b16 %v184
      %v391 = vunpack.c.l.b16 %v185
      %v392 = vunpack.c.h.b16 %v185
      %v393 = vunpack.c.l.b16 %v186
      %v394 = vunpack.c.h.b16 %v186
      %v395 = vunpack.c.l.b16 %v187
      %v396 = vunpack.c.h.b16 %v187
      %v397 = vunpack.c.l.b16 %v188
      %v398 = vunpack.c.h.b16 %v188
      %v399 = vunpack.c.l.b16 %v189
      %v400 = vunpack.c.h.b16 %v189
      %v401 = vunpack.c.l.b16 %v190
      %v402 = vunpack.c.h.b16 %v190
      %v403 = vunpack.c.l.b16 %v191
      %v404 = vunpack.c.h.b16 %v191
      %v405 = vunpack.c.l.b16 %v192
      %v406 = vunpack.c.h.b16 %v192
      %v407 = vunpack.c.l.b16 %v193
      %v408 = vunpack.c.h.b16 %v193
      %v409 = vunpack.c.l.b16 %v194
      %v410 = vunpack.c.h.b16 %v194
      %v411 = vunpack.c.l.b16 %v195
      %v412 = vunpack.c.h.b16 %v195
      %v413 = vunpack.c.l.b16 %v196
      %v414 = vunpack.c.h.b16 %v196
      %v415 = vunpack.c.l.b16 %v197
      %v416 = vunpack.c.h.b16 %v197
      %v417 = vunpack.c.l.b16 %v198
      %v418 = vunpack.c.h.b16 %v198
      %v419 = vunpack.c.l.b16 %v199
      %v420 = vunpack.c.h.b16 %v199
      %v421 = vunpack.c.l.b16 %v200
      %v422 = vunpack.c.h.b16 %v200
      %v423 = vunpack.c.l.b16 %v201
      %v424 = vunpack.c.h.b16 %v201
      %v425 = vunpack.c.l.b16 %v202
      %v426 = vunpack.c.h.b16 %v202
      %v427 = vunpack.c.l.b16 %v203
      %v428 = vunpack.c.h.b16 %v203
      %v429 = vunpack.c.l.b16 %v204
      %v430 = vunpack.c.h.b16 %v204
      %v431 = vunpack.c.l.b16 %v205
      %v432 = vunpack.c.h.b16 %v205
      %v433 = vunpack.c.l.b16 %v206
      %v434 = vunpack.c.h.b16 %v206
      %v435 = vunpack.c.l.b16 %v207
      %v436 = vunpack.c.h.b16 %v207
      %v437 = vunpack.c.l.b16 %v208
      %v438 = vunpack.c.h.b16 %v208
      %v439 = vunpack.c.l.b16 %v209
      %v440 = vunpack.c.h.b16 %v209
      %v441 = vunpack.c.l.b16 %v210
      %v442 = vunpack.c.h.b16 %v210
      %v443 = vunpack.c.l.b16 %v211
      %v444 = vunpack.c.h.b16 %v211
      %v445 = vunpack.c.l.b16 %v212
      %v446 = vunpack.c.h.b16 %v212
      %v447 = vunpack.c.l.b16 %v213
      %v448 = vunpack.c.h.b16 %v213
      %v449 = vunpack.c.l.b16 %v214
      %v450 = vunpack.c.h.b16 %v214
      %v451 = vunpack.c.l.b16 %v215
      %v452 = vunpack.c.h.b16 %v215
      %v453 = vunpack.c.l.b16 %v216
      %v454 = vunpack.c.h.b16 %v216
      %v455 = vunpack.c.l.b16 %v217
      %v456 = vunpack.c.h.b16 %v217
      %v457 = vunpack.c.l.b16 %v218
      %v458 = vunpack.c.h.b16 %v218
      %v459 = vunpack.c.l.b16 %v219
      %v460 = vunpack.c.h.b16 %v219
      %v461 = vunpack.c.l.b16 %v220
      %v462 = vunpack.c.h.b16 %v220
      %v463 = vunpack.c.l.b16 %v221
      %v464 = vunpack.c.h.b16 %v221
      %v465 = vunpack.c.l.b16 %v222
      %v466 = vunpack.c.h.b16 %v222
      %v467 = vunpack.c.l.b16 %v223
      %v468 = vunpack.c.h.b16 %v223
      %v469 = vunpack.c.l.b16 %v224
      %v470 = vunpack.c.h.b16 %v224
      %v471 = vunpack.c.l.b16 %v225
      %v472 = vunpack.c.h.b16 %v225
      %v473 = vunpack.c.l.b16 %v226
      %v474 = vunpack.c.h.b16 %v226
      %v475 = vunpack.c.l.b16 %v227
      %v476 = vunpack.c.h.b16 %v227
      %v477 = vunpack.c.l.b16 %v228
      %v478 = vunpack.c.h.b16 %v228
      %v479 = vunpack.c.l.b16 %v229
      %v480 = vunpack.c.h.b16 %v229
      %v481 = vunpack.c.l.b16 %v230
      %v482 = vunpack.c.h.b16 %v230
      %v483 = vunpack.c.l.b16 %v231
      %v484 = vunpack.c.h.b16 %v231
      %v485 = vunpack.c.l.b16 %v232
      %v486 = vunpack.c.h.b16 %v232
      %v487 = vunpack.c.l.b16 %v233
      %v488 = vunpack.c.h.b16 %v233
      %v489 = vunpack.c.l.b16 %v234
      %v490 = vunpack.c.h.b16 %v234
      %v491 = vunpack.c.l.b16 %v235
      %v492 = vunpack.c.h.b16 %v235
      %v493 = vunpack.c.l.b16 %v236
      %v494 = vunpack.c.h.b16 %v236
      %v495 = vunpack.c.l.b16 %v237
      %v496 = vunpack.c.h.b16 %v237
      %v497 = vunpack.c.l.b16 %v238
      %v498 = vunpack.c.h.b16 %v238
      %v499 = vunpack.c.l.b16 %v239
      %v500 = vunpack.c.h.b16 %v239
      %v501 = vunpack.c.l.b16 %v240
      %v502 = vunpack.c.h.b16 %v240
      %v503 = vunpack.c.l.b16 %v241
      %v504 = vunpack.c.h.b16 %v241
      %v505 = vpack.c.b16 %v381, %v377
      %v506 = vpack.c.b16 %v382, %v378
      %v507 = vpack.c.b16 %v383, %v379
      %v508 = vpack.c.b16 %v384, %v380
      %v509 = vpack.c.b16 %v389, %v385
      %v510 = vpack.c.b16 %v390, %v386
      %v511 = vpack.c.b16 %v391, %v387
      %v512 = vpack.c.b16 %v392, %v388
      %v513 = vpack.c.b16 %v397, %v393
      %v514 = vpack.c.b16 %v398, %v394
      %v515 = vpack.c.b16 %v399, %v395
      %v516 = vpack.c.b16 %v400, %v396
      %v517 = vpack.c.b16 %v405, %v401
      %v518 = vpack.c.b16 %v406, %v402
      %v519 = vpack.c.b16 %v407, %v403
      %v520 = vpack.c.b16 %v408, %v404
      %v521 = vpack.c.b16 %v413, %v409
      %v522 = vpack.c.b16 %v414, %v410
      %v523 = vpack.c.b16 %v415, %v411
      %v524 = vpack.c.b16 %v416, %v412
      %v525 = vpack.c.b16 %v421, %v417
      %v526 = vpack.c.b16 %v422, %v418
      %v527 = vpack.c.b16 %v423, %v419
      %v528 = vpack.c.b16 %v424, %v420
      %v529 = vpack.c.b16 %v429, %v425
      %v530 = vpack.c.b16 %v430, %v426
      %v531 = vpack.c.b16 %v431, %v427
      %v532 = vpack.c.b16 %v432, %v428
      %v533 = vpack.c.b16 %v437, %v433
      %v534 = vpack.c.b16 %v438, %v434
      %v535 = vpack.c.b16 %v439, %v435
      %v536 = vpack.c.b16 %v440, %v436
      %v537 = vpack.c.b16 %v445, %v441
      %v538 = vpack.c.b16 %v446, %v442
      %v539 = vpack.c.b16 %v447, %v443
      %v540 = vpack.c.b16 %v448, %v444
      %v541 = vpack.c.b16 %v453, %v449
      %v542 = vpack.c.b16 %v454, %v450
      %v543 = vpack.c.b16 %v455, %v451
      %v544 = vpack.c.b16 %v456, %v452
      %v545 = vpack.c.b16 %v461, %v457
      %v546 = vpack.c.b16 %v462, %v458
      %v547 = vpack.c.b16 %v463, %v459
      %v548 = vpack.c.b16 %v464, %v460
      %v549 = vpack.c.b16 %v469, %v465
      %v550 = vpack.c.b16 %v470, %v466
      %v551 = vpack.c.b16 %v471, %v467
      %v552 = vpack.c.b16 %v472, %v468
      %v553 = vpack.c.b16 %v477, %v473
      %v554 = vpack.c.b16 %v478, %v474
      %v555 = vpack.c.b16 %v479, %v475
      %v556 = vpack.c.b16 %v480, %v476
      %v557 = vpack.c.b16 %v485, %v481
      %v558 = vpack.c.b16 %v486, %v482
      %v559 = vpack.c.b16 %v487, %v483
      %v560 = vpack.c.b16 %v488, %v484
      %v561 = vpack.c.b16 %v493, %v489
      %v562 = vpack.c.b16 %v494, %v490
      %v563 = vpack.c.b16 %v495, %v491
      %v564 = vpack.c.b16 %v496, %v492
      %v565 = vpack.c.b16 %v501, %v497
      %v566 = vpack.c.b16 %v502, %v498
      %v567 = vpack.c.b16 %v503, %v499
      %v568 = vpack.c.b16 %v504, %v500
      %v697 = vunpack.c.l.b16 %v242
      %v698 = vunpack.c.l.b16 %v243
      %v699 = vunpack.c.l.b16 %v244
      %v700 = vunpack.c.l.b16 %v245
      %v701 = vunpack.c.l.b16 %v246
      %v702 = vunpack.c.l.b16 %v247
      %v703 = vunpack.c.l.b16 %v248
      %v704 = vunpack.c.l.b16 %v249
      %v705 = vunpack.c.l.b16 %v250
      %v706 = vunpack.c.l.b16 %v251
      %v707 = vunpack.c.l.b16 %v252
      %v708 = vunpack.c.l.b16 %v253
      %v709 = vunpack.c.l.b16 %v254
      %v710 = vunpack.c.l.b16 %v255
      %v711 = vunpack.c.l.b16 %v256
      %v712 = vunpack.c.l.b16 %v257
      %v713 = vunpack.c.l.b16 %v258
      %v714 = vunpack.c.l.b16 %v259
      %v715 = vunpack.c.l.b16 %v260
      %v716 = vunpack.c.l.b16 %v261
      %v717 = vunpack.c.l.b16 %v262
      %v718 = vunpack.c.l.b16 %v263
      %v719 = vunpack.c.l.b16 %v264
      %v720 = vunpack.c.l.b16 %v265
      %v721 = vunpack.c.l.b16 %v266
      %v722 = vunpack.c.l.b16 %v267
      %v723 = vunpack.c.l.b16 %v268
      %v724 = vunpack.c.l.b16 %v269
      %v725 = vunpack.c.l.b16 %v270
      %v726 = vunpack.c.l.b16 %v271
      %v727 = vunpack.c.l.b16 %v272
      %v728 = vunpack.c.l.b16 %v273
      %v729 = vunpack.c.l.b16 %v274
      %v730 = vunpack.c.l.b16 %v275
      %v731 = vunpack.c.l.b16 %v276
      %v732 = vunpack.c.l.b16 %v277
      %v733 = vunpack.c.l.b16 %v278
      %v734 = vunpack.c.l.b16 %v279
      %v735 = vunpack.c.l.b16 %v280
      %v736 = vunpack.c.l.b16 %v281
      %v737 = vunpack.c.l.b16 %v282
      %v738 = vunpack.c.l.b16 %v283
      %v739 = vunpack.c.l.b16 %v284
      %v740 = vunpack.c.l.b16 %v285
      %v741 = vunpack.c.l.b16 %v286
      %v742 = vunpack.c.l.b16 %v287
      %v743 = vunpack.c.l.b16 %v288
      %v744 = vunpack.c.l.b16 %v289
      %v745 = vunpack.c.l.b16 %v290
      %v746 = vunpack.c.l.b16 %v291
      %v747 = vunpack.c.l.b16 %v292
      %v748 = vunpack.c.l.b16 %v293
      %v749 = vunpack.c.l.b16 %v294
      %v750 = vunpack.c.l.b16 %v295
      %v751 = vunpack.c.l.b16 %v296
      %v752 = vunpack.c.l.b16 %v297
      %v753 = vunpack.c.l.b16 %v298
      %v754 = vunpack.c.l.b16 %v299
      %v755 = vunpack.c.l.b16 %v300
      %v756 = vunpack.c.l.b16 %v301
      %v757 = vunpack.c.l.b16 %v302
      %v758 = vunpack.c.l.b16 %v303
      %v759 = vunpack.c.l.b16 %v304
      %v760 = vunpack.c.l.b16 %v305
      %v761 = vpack.c.b16 %v698, %v697
      %v762 = vpack.c.b16 %v700, %v699
      %v763 = vpack.c.b16 %v702, %v701
      %v764 = vpack.c.b16 %v704, %v703
      %v765 = vpack.c.b16 %v706, %v705
      %v766 = vpack.c.b16 %v708, %v707
      %v767 = vpack.c.b16 %v710, %v709
      %v768 = vpack.c.b16 %v712, %v711
      %v769 = vpack.c.b16 %v714, %v713
      %v770 = vpack.c.b16 %v716, %v715
      %v771 = vpack.c.b16 %v718, %v717
      %v772 = vpack.c.b16 %v720, %v719
      %v773 = vpack.c.b16 %v722, %v721
      %v774 = vpack.c.b16 %v724, %v723
      %v775 = vpack.c.b16 %v726, %v725
      %v776 = vpack.c.b16 %v728, %v727
      %v777 = vpack.c.b16 %v730, %v729
      %v778 = vpack.c.b16 %v732, %v731
      %v779 = vpack.c.b16 %v734, %v733
      %v780 = vpack.c.b16 %v736, %v735
      %v781 = vpack.c.b16 %v738, %v737
      %v782 = vpack.c.b16 %v740, %v739
      %v783 = vpack.c.b16 %v742, %v741
      %v784 = vpack.c.b16 %v744, %v743
      %v785 = vpack.c.b16 %v746, %v745
      %v786 = vpack.c.b16 %v748, %v747
      %v787 = vpack.c.b16 %v750, %v749
      %v788 = vpack.c.b16 %v752, %v751
      %v789 = vpack.c.b16 %v754, %v753
      %v790 = vpack.c.b16 %v756, %v755
      %v791 = vpack.c.b16 %v758, %v757
      %v792 = vpack.c.b16 %v760, %v759
      %825 = vmatprep.subr.bf16.mxu0 0
      %826 = vmatpush1.bf16.msra.mxu0 %v761
      %827 = vmatprep.subr.bf16.mxu0 0
      %828 = vmatpush1.bf16.msra.mxu0 %v762
      %829 = vmatprep.subr.bf16.mxu0 0
      %830 = vmatpush1.bf16.msra.mxu0 %v763
      %831 = vmatprep.subr.bf16.mxu0 0
      %832 = vmatpush1.bf16.msra.mxu0 %v764
      %833 = vmatprep.subr.bf16.mxu0 0
      %834 = vmatpush1.bf16.msra.mxu0 %v765
      %835 = vmatprep.subr.bf16.mxu0 0
      %836 = vmatpush1.bf16.msra.mxu0 %v766
      %837 = vmatprep.subr.bf16.mxu0 0
      %838 = vmatpush1.bf16.msra.mxu0 %v767
      %839 = vmatprep.subr.bf16.mxu0 0
      %840 = vmatpush1.bf16.msra.mxu0 %v768
      %841 = vmatprep.subr.bf16.mxu0 0
      %842 = vmatpush1.bf16.msra.mxu0 %v769
      %843 = vmatprep.subr.bf16.mxu0 0
      %844 = vmatpush1.bf16.msra.mxu0 %v770
      %845 = vmatprep.subr.bf16.mxu0 0
      %846 = vmatpush1.bf16.msra.mxu0 %v771
      %847 = vmatprep.subr.bf16.mxu0 0
      %848 = vmatpush1.bf16.msra.mxu0 %v772
      %849 = vmatprep.subr.bf16.mxu0 0
      %850 = vmatpush1.bf16.msra.mxu0 %v773
      %851 = vmatprep.subr.bf16.mxu0 0
      %852 = vmatpush1.bf16.msra.mxu0 %v774
      %853 = vmatprep.subr.bf16.mxu0 0
      %854 = vmatpush1.bf16.msra.mxu0 %v775
      %855 = vmatprep.subr.bf16.mxu0 0
      %856 = vmatpush1.bf16.msra.mxu0 %v776
      %857 = vmatprep.mubr.bf16.mxu0 %v506
      %858 = vmatmul.mubr.bf16.gmra.mrb[0].mxu0 %v505
      %v859 = vpop.f32.mrb[0].mxu0
      %v860 = vadd.f32 %v311, %v859
      %v861 = vpop.f32.mrb[0].mxu0
      %v862 = vpop.f32.mrb[0].mxu0
      %v863 = vadd.f32 %v311, %v862
      %v864 = vpop.f32.mrb[0].mxu0
      %865 = vmatprep.mubr.bf16.mxu0 %v510
      %866 = vmatmul.mubr.bf16.gmra.mrb[0].mxu0 %v509
      %v867 = vpop.f32.mrb[0].mxu0
      %v868 = vadd.f32 %v311, %v867
      %v869 = vpop.f32.mrb[0].mxu0
      %v870 = vpop.f32.mrb[0].mxu0
      %v871 = vadd.f32 %v311, %v870
      %v872 = vpop.f32.mrb[0].mxu0
      %873 = vmatprep.mubr.bf16.mxu0 %v514
      %874 = vmatmul.mubr.bf16.gmra.mrb[0].mxu0 %v513
      %v875 = vpop.f32.mrb[0].mxu0
      %v876 = vadd.f32 %v311, %v875
      %v877 = vpop.f32.mrb[0].mxu0
      %v878 = vpop.f32.mrb[0].mxu0
      %v879 = vadd.f32 %v311, %v878
      %v880 = vpop.f32.mrb[0].mxu0
      %881 = vmatprep.mubr.bf16.mxu0 %v518
      %882 = vmatmul.mubr.bf16.gmra.mrb[0].mxu0 %v517
      %v883 = vpop.f32.mrb[0].mxu0
      %v884 = vadd.f32 %v311, %v883
      %v885 = vpop.f32.mrb[0].mxu0
      %v886 = vpop.f32.mrb[0].mxu0
      %v887 = vadd.f32 %v311, %v886
      %v888 = vpop.f32.mrb[0].mxu0
      %889 = vmatprep.mubr.bf16.mxu0 %v522
      %890 = vmatmul.mubr.bf16.gmra.mrb[0].mxu0 %v521
      %v891 = vpop.f32.mrb[0].mxu0
      %v892 = vadd.f32 %v311, %v891
      %v893 = vpop.f32.mrb[0].mxu0
      %v894 = vpop.f32.mrb[0].mxu0
      %v895 = vadd.f32 %v311, %v894
      %v896 = vpop.f32.mrb[0].mxu0
      %897 = vmatprep.mubr.bf16.mxu0 %v526
      %898 = vmatmul.mubr.bf16.gmra.mrb[0].mxu0 %v525
      %v899 = vpop.f32.mrb[0].mxu0
      %v900 = vadd.f32 %v311, %v899
      %v901 = vpop.f32.mrb[0].mxu0
      %v902 = vpop.f32.mrb[0].mxu0
      %v903 = vadd.f32 %v311, %v902
      %v904 = vpop.f32.mrb[0].mxu0
      %905 = vmatprep.mubr.bf16.mxu0 %v530
      %906 = vmatmul.mubr.bf16.gmra.mrb[0].mxu0 %v529
      %v907 = vpop.f32.mrb[0].mxu0
      %v908 = vadd.f32 %v311, %v907
      %v909 = vpop.f32.mrb[0].mxu0
      %v910 = vpop.f32.mrb[0].mxu0
      %v911 = vadd.f32 %v311, %v910
      %v912 = vpop.f32.mrb[0].mxu0
      %913 = vmatprep.mubr.bf16.mxu0 %v534
      %914 = vmatmul.mubr.bf16.gmra.mrb[0].mxu0 %v533
      %v915 = vpop.f32.mrb[0].mxu0
      %v916 = vadd.f32 %v311, %v915
      %v917 = vpop.f32.mrb[0].mxu0
      %v918 = vpop.f32.mrb[0].mxu0
      %v919 = vadd.f32 %v311, %v918
      %v920 = vpop.f32.mrb[0].mxu0
      %921 = vmatprep.mubr.bf16.mxu0 %v538
      %922 = vmatmul.mubr.bf16.gmra.mrb[0].mxu0 %v537
      %v923 = vpop.f32.mrb[0].mxu0
      %v924 = vadd.f32 %v311, %v923
      %v925 = vpop.f32.mrb[0].mxu0
      %v926 = vpop.f32.mrb[0].mxu0
      %v927 = vadd.f32 %v311, %v926
      %v928 = vpop.f32.mrb[0].mxu0
      %929 = vmatprep.mubr.bf16.mxu0 %v542
      %930 = vmatmul.mubr.bf16.gmra.mrb[0].mxu0 %v541
      %v931 = vpop.f32.mrb[0].mxu0
      %v932 = vadd.f32 %v311, %v931
      %v933 = vpop.f32.mrb[0].mxu0
      %v934 = vpop.f32.mrb[0].mxu0
      %v935 = vadd.f32 %v311, %v934
      %v936 = vpop.f32.mrb[0].mxu0
      %937 = vmatprep.mubr.bf16.mxu0 %v546
      %938 = vmatmul.mubr.bf16.gmra.mrb[0].mxu0 %v545
      %v939 = vpop.f32.mrb[0].mxu0
      %v940 = vadd.f32 %v311, %v939
      %v941 = vpop.f32.mrb[0].mxu0
      %v942 = vpop.f32.mrb[0].mxu0
      %v943 = vadd.f32 %v311, %v942
      %v944 = vpop.f32.mrb[0].mxu0
      %945 = vmatprep.mubr.bf16.mxu0 %v550
      %946 = vmatmul.mubr.bf16.gmra.mrb[0].mxu0 %v549
      %v947 = vpop.f32.mrb[0].mxu0
      %v948 = vadd.f32 %v311, %v947
      %v949 = vpop.f32.mrb[0].mxu0
      %v950 = vpop.f32.mrb[0].mxu0
      %v951 = vadd.f32 %v311, %v950
      %v952 = vpop.f32.mrb[0].mxu0
      %953 = vmatprep.mubr.bf16.mxu0 %v554
      %954 = vmatmul.mubr.bf16.gmra.mrb[0].mxu0 %v553
      %v955 = vpop.f32.mrb[0].mxu0
      %v956 = vadd.f32 %v311, %v955
      %v957 = vpop.f32.mrb[0].mxu0
      %v958 = vpop.f32.mrb[0].mxu0
      %v959 = vadd.f32 %v311, %v958
      %v960 = vpop.f32.mrb[0].mxu0
      %961 = vmatprep.mubr.bf16.mxu0 %v558
      %962 = vmatmul.mubr.bf16.gmra.mrb[0].mxu0 %v557
      %v963 = vpop.f32.mrb[0].mxu0
      %v964 = vadd.f32 %v311, %v963
      %v965 = vpop.f32.mrb[0].mxu0
      %v966 = vpop.f32.mrb[0].mxu0
      %v967 = vadd.f32 %v311, %v966
      %v968 = vpop.f32.mrb[0].mxu0
      %969 = vmatprep.mubr.bf16.mxu0 %v562
      %970 = vmatmul.mubr.bf16.gmra.mrb[0].mxu0 %v561
      %v971 = vpop.f32.mrb[0].mxu0
      %v972 = vadd.f32 %v311, %v971
      %v973 = vpop.f32.mrb[0].mxu0
      %v974 = vpop.f32.mrb[0].mxu0
      %v975 = vadd.f32 %v311, %v974
      %v976 = vpop.f32.mrb[0].mxu0
      %977 = vmatprep.mubr.bf16.mxu0 %v566
      %978 = vmatmul.mubr.bf16.gmra.mrb[0].mxu0 %v565
      %v979 = vpop.f32.mrb[0].mxu0
      %v980 = vadd.f32 %v311, %v979
      %v981 = vpop.f32.mrb[0].mxu0
      %v982 = vpop.f32.mrb[0].mxu0
      %v983 = vadd.f32 %v311, %v982
      %v984 = vpop.f32.mrb[0].mxu0
      %985 = vdwg.mxu0
      %986 = vmatprep.subr.bf16.mxu0 0
      %987 = vmatpush1.bf16.msra.mxu0 %v777
      %988 = vmatprep.subr.bf16.mxu0 0
      %989 = vmatpush1.bf16.msra.mxu0 %v778
      %990 = vmatprep.subr.bf16.mxu0 0
      %991 = vmatpush1.bf16.msra.mxu0 %v779
      %992 = vmatprep.subr.bf16.mxu0 0
      %993 = vmatpush1.bf16.msra.mxu0 %v780
      %994 = vmatprep.subr.bf16.mxu0 0
      %995 = vmatpush1.bf16.msra.mxu0 %v781
      %996 = vmatprep.subr.bf16.mxu0 0
      %997 = vmatpush1.bf16.msra.mxu0 %v782
      %998 = vmatprep.subr.bf16.mxu0 0
      %999 = vmatpush1.bf16.msra.mxu0 %v783
      %1000 = vmatprep.subr.bf16.mxu0 0
      %1001 = vmatpush1.bf16.msra.mxu0 %v784
      %1002 = vmatprep.subr.bf16.mxu0 0
      %1003 = vmatpush1.bf16.msra.mxu0 %v785
      %1004 = vmatprep.subr.bf16.mxu0 0
      %1005 = vmatpush1.bf16.msra.mxu0 %v786
      %1006 = vmatprep.subr.bf16.mxu0 0
      %1007 = vmatpush1.bf16.msra.mxu0 %v787
      %1008 = vmatprep.subr.bf16.mxu0 0
      %1009 = vmatpush1.bf16.msra.mxu0 %v788
      %1010 = vmatprep.subr.bf16.mxu0 0
      %1011 = vmatpush1.bf16.msra.mxu0 %v789
      %1012 = vmatprep.subr.bf16.mxu0 0
      %1013 = vmatpush1.bf16.msra.mxu0 %v790
      %1014 = vmatprep.subr.bf16.mxu0 0
      %1015 = vmatpush1.bf16.msra.mxu0 %v791
      %1016 = vmatprep.subr.bf16.mxu0 0
      %1017 = vmatpush1.bf16.msra.mxu0 %v792
      %1018 = vmatprep.mubr.bf16.mxu0 %v508
      %1019 = vmatmul.mubr.bf16.gmra.mrb[0].mxu0 %v507
      %v1020 = vpop.f32.mrb[0].mxu0
      %v1021 = vadd.f32 %v860, %v1020
      %v1022 = vpop.f32.mrb[0].mxu0
      %v1023 = vpop.f32.mrb[0].mxu0
      %v1024 = vadd.f32 %v863, %v1023
      %v1025 = vpop.f32.mrb[0].mxu0
      %1026 = vmatprep.mubr.bf16.mxu0 %v512
      %1027 = vmatmul.mubr.bf16.gmra.mrb[0].mxu0 %v511
      %v1028 = vpop.f32.mrb[0].mxu0
      %v1029 = vadd.f32 %v868, %v1028
      %v1030 = vpop.f32.mrb[0].mxu0
      %v1031 = vpop.f32.mrb[0].mxu0
      %v1032 = vadd.f32 %v871, %v1031
      %v1033 = vpop.f32.mrb[0].mxu0
      %1034 = vmatprep.mubr.bf16.mxu0 %v516
      %1035 = vmatmul.mubr.bf16.gmra.mrb[0].mxu0 %v515
      %v1036 = vpop.f32.mrb[0].mxu0
      %v1037 = vadd.f32 %v876, %v1036
      %v1038 = vpop.f32.mrb[0].mxu0
      %v1039 = vpop.f32.mrb[0].mxu0
      %v1040 = vadd.f32 %v879, %v1039
      %v1041 = vpop.f32.mrb[0].mxu0
      %1042 = vmatprep.mubr.bf16.mxu0 %v520
      %1043 = vmatmul.mubr.bf16.gmra.mrb[0].mxu0 %v519
      %v1044 = vpop.f32.mrb[0].mxu0
      %v1045 = vadd.f32 %v884, %v1044
      %v1046 = vpop.f32.mrb[0].mxu0
      %v1047 = vpop.f32.mrb[0].mxu0
      %v1048 = vadd.f32 %v887, %v1047
      %v1049 = vpop.f32.mrb[0].mxu0
      %1050 = vmatprep.mubr.bf16.mxu0 %v524
      %1051 = vmatmul.mubr.bf16.gmra.mrb[0].mxu0 %v523
      %v1052 = vpop.f32.mrb[0].mxu0
      %v1053 = vadd.f32 %v892, %v1052
      %v1054 = vpop.f32.mrb[0].mxu0
      %v1055 = vpop.f32.mrb[0].mxu0
      %v1056 = vadd.f32 %v895, %v1055
      %v1057 = vpop.f32.mrb[0].mxu0
      %1058 = vmatprep.mubr.bf16.mxu0 %v528
      %1059 = vmatmul.mubr.bf16.gmra.mrb[0].mxu0 %v527
      %v1060 = vpop.f32.mrb[0].mxu0
      %v1061 = vadd.f32 %v900, %v1060
      %v1062 = vpop.f32.mrb[0].mxu0
      %v1063 = vpop.f32.mrb[0].mxu0
      %v1064 = vadd.f32 %v903, %v1063
      %v1065 = vpop.f32.mrb[0].mxu0
      %1066 = vmatprep.mubr.bf16.mxu0 %v532
      %1067 = vmatmul.mubr.bf16.gmra.mrb[0].mxu0 %v531
      %v1068 = vpop.f32.mrb[0].mxu0
      %v1069 = vadd.f32 %v908, %v1068
      %v1070 = vpop.f32.mrb[0].mxu0
      %v1071 = vpop.f32.mrb[0].mxu0
      %v1072 = vadd.f32 %v911, %v1071
      %v1073 = vpop.f32.mrb[0].mxu0
      %1074 = vmatprep.mubr.bf16.mxu0 %v536
      %1075 = vmatmul.mubr.bf16.gmra.mrb[0].mxu0 %v535
      %v1076 = vpop.f32.mrb[0].mxu0
      %v1077 = vadd.f32 %v916, %v1076
      %v1078 = vpop.f32.mrb[0].mxu0
      %v1079 = vpop.f32.mrb[0].mxu0
      %v1080 = vadd.f32 %v919, %v1079
      %v1081 = vpop.f32.mrb[0].mxu0
      %1082 = vmatprep.mubr.bf16.mxu0 %v540
      %1083 = vmatmul.mubr.bf16.gmra.mrb[0].mxu0 %v539
      %v1084 = vpop.f32.mrb[0].mxu0
      %v1085 = vadd.f32 %v924, %v1084
      %v1086 = vpop.f32.mrb[0].mxu0
      %v1087 = vpop.f32.mrb[0].mxu0
      %v1088 = vadd.f32 %v927, %v1087
      %v1089 = vpop.f32.mrb[0].mxu0
      %1090 = vmatprep.mubr.bf16.mxu0 %v544
      %1091 = vmatmul.mubr.bf16.gmra.mrb[0].mxu0 %v543
      %v1092 = vpop.f32.mrb[0].mxu0
      %v1093 = vadd.f32 %v932, %v1092
      %v1094 = vpop.f32.mrb[0].mxu0
      %v1095 = vpop.f32.mrb[0].mxu0
      %v1096 = vadd.f32 %v935, %v1095
      %v1097 = vpop.f32.mrb[0].mxu0
      %1098 = vmatprep.mubr.bf16.mxu0 %v548
      %1099 = vmatmul.mubr.bf16.gmra.mrb[0].mxu0 %v547
      %v1100 = vpop.f32.mrb[0].mxu0
      %v1101 = vadd.f32 %v940, %v1100
      %v1102 = vpop.f32.mrb[0].mxu0
      %v1103 = vpop.f32.mrb[0].mxu0
      %v1104 = vadd.f32 %v943, %v1103
      %v1105 = vpop.f32.mrb[0].mxu0
      %1106 = vmatprep.mubr.bf16.mxu0 %v552
      %1107 = vmatmul.mubr.bf16.gmra.mrb[0].mxu0 %v551
      %v1108 = vpop.f32.mrb[0].mxu0
      %v1109 = vadd.f32 %v948, %v1108
      %v1110 = vpop.f32.mrb[0].mxu0
      %v1111 = vpop.f32.mrb[0].mxu0
      %v1112 = vadd.f32 %v951, %v1111
      %v1113 = vpop.f32.mrb[0].mxu0
      %1114 = vmatprep.mubr.bf16.mxu0 %v556
      %1115 = vmatmul.mubr.bf16.gmra.mrb[0].mxu0 %v555
      %v1116 = vpop.f32.mrb[0].mxu0
      %v1117 = vadd.f32 %v956, %v1116
      %v1118 = vpop.f32.mrb[0].mxu0
      %v1119 = vpop.f32.mrb[0].mxu0
      %v1120 = vadd.f32 %v959, %v1119
      %v1121 = vpop.f32.mrb[0].mxu0
      %1122 = vmatprep.mubr.bf16.mxu0 %v560
      %1123 = vmatmul.mubr.bf16.gmra.mrb[0].mxu0 %v559
      %v1124 = vpop.f32.mrb[0].mxu0
      %v1125 = vadd.f32 %v964, %v1124
      %v1126 = vpop.f32.mrb[0].mxu0
      %v1127 = vpop.f32.mrb[0].mxu0
      %v1128 = vadd.f32 %v967, %v1127
      %v1129 = vpop.f32.mrb[0].mxu0
      %1130 = vmatprep.mubr.bf16.mxu0 %v564
      %1131 = vmatmul.mubr.bf16.gmra.mrb[0].mxu0 %v563
      %v1132 = vpop.f32.mrb[0].mxu0
      %v1133 = vadd.f32 %v972, %v1132
      %v1134 = vpop.f32.mrb[0].mxu0
      %v1135 = vpop.f32.mrb[0].mxu0
      %v1136 = vadd.f32 %v975, %v1135
      %v1137 = vpop.f32.mrb[0].mxu0
      %1138 = vmatprep.mubr.bf16.mxu0 %v568
      %1139 = vmatmul.mubr.bf16.gmra.mrb[0].mxu0 %v567
      %v1140 = vpop.f32.mrb[0].mxu0
      %v1141 = vadd.f32 %v980, %v1140
      %v1142 = vpop.f32.mrb[0].mxu0
      %v1143 = vpop.f32.mrb[0].mxu0
      %v1144 = vadd.f32 %v983, %v1143
      %v1145 = vpop.f32.mrb[0].mxu0
      %1146 = vdwg.mxu0
      %v1147 = vmax.f32 %v1021, 0.0
      %v1148 = vmax.f32 %v1024, 0.0
      %v1149 = vmax.f32 %v1029, 0.0
      %v1150 = vmax.f32 %v1032, 0.0
      %v1151 = vmax.f32 %v1037, 0.0
      %v1152 = vmax.f32 %v1040, 0.0
      %v1153 = vmax.f32 %v1045, 0.0
      %v1154 = vmax.f32 %v1048, 0.0
      %v1155 = vmax.f32 %v1053, 0.0
      %v1156 = vmax.f32 %v1056, 0.0
      %v1157 = vmax.f32 %v1061, 0.0
      %v1158 = vmax.f32 %v1064, 0.0
      %v1159 = vmax.f32 %v1069, 0.0
      %v1160 = vmax.f32 %v1072, 0.0
      %v1161 = vmax.f32 %v1077, 0.0
      %v1162 = vmax.f32 %v1080, 0.0
      %v1163 = vmax.f32 %v1085, 0.0
      %v1164 = vmax.f32 %v1088, 0.0
      %v1165 = vmax.f32 %v1093, 0.0
      %v1166 = vmax.f32 %v1096, 0.0
      %v1167 = vmax.f32 %v1101, 0.0
      %v1168 = vmax.f32 %v1104, 0.0
      %v1169 = vmax.f32 %v1109, 0.0
      %v1170 = vmax.f32 %v1112, 0.0
      %v1171 = vmax.f32 %v1117, 0.0
      %v1172 = vmax.f32 %v1120, 0.0
      %v1173 = vmax.f32 %v1125, 0.0
      %v1174 = vmax.f32 %v1128, 0.0
      %v1175 = vmax.f32 %v1133, 0.0
      %v1176 = vmax.f32 %v1136, 0.0
      %v1177 = vmax.f32 %v1141, 0.0
      %v1178 = vmax.f32 %v1144, 0.0
      %v1179 = vpack.c.bf16 %v1148, %v1147
      %v1180 = vpack.c.bf16 %v1150, %v1149
      %v1181 = vpack.c.bf16 %v1152, %v1151
      %v1182 = vpack.c.bf16 %v1154, %v1153
      %v1183 = vpack.c.bf16 %v1156, %v1155
      %v1184 = vpack.c.bf16 %v1158, %v1157
      %v1185 = vpack.c.bf16 %v1160, %v1159
      %v1186 = vpack.c.bf16 %v1162, %v1161
      %v1187 = vpack.c.bf16 %v1164, %v1163
      %v1188 = vpack.c.bf16 %v1166, %v1165
      %v1189 = vpack.c.bf16 %v1168, %v1167
      %v1190 = vpack.c.bf16 %v1170, %v1169
      %v1191 = vpack.c.bf16 %v1172, %v1171
      %v1192 = vpack.c.bf16 %v1174, %v1173
      %v1193 = vpack.c.bf16 %v1176, %v1175
      %v1194 = vpack.c.bf16 %v1178, %v1177
      %v1211 = vunpack.c.l.b16 %v1179
      %v1212 = vunpack.c.h.b16 %v1179
      %v1213 = vunpack.c.l.b16 %v1180
      %v1214 = vunpack.c.h.b16 %v1180
      %v1215 = vunpack.c.l.b16 %v1181
      %v1216 = vunpack.c.h.b16 %v1181
      %v1217 = vunpack.c.l.b16 %v1182
      %v1218 = vunpack.c.h.b16 %v1182
      %v1219 = vunpack.c.l.b16 %v1183
      %v1220 = vunpack.c.h.b16 %v1183
      %v1221 = vunpack.c.l.b16 %v1184
      %v1222 = vunpack.c.h.b16 %v1184
      %v1223 = vunpack.c.l.b16 %v1185
      %v1224 = vunpack.c.h.b16 %v1185
      %v1225 = vunpack.c.l.b16 %v1186
      %v1226 = vunpack.c.h.b16 %v1186
      %v1227 = vunpack.c.l.b16 %v1187
      %v1228 = vunpack.c.h.b16 %v1187
      %v1229 = vunpack.c.l.b16 %v1188
      %v1230 = vunpack.c.h.b16 %v1188
      %v1231 = vunpack.c.l.b16 %v1189
      %v1232 = vunpack.c.h.b16 %v1189
      %v1233 = vunpack.c.l.b16 %v1190
      %v1234 = vunpack.c.h.b16 %v1190
      %v1235 = vunpack.c.l.b16 %v1191
      %v1236 = vunpack.c.h.b16 %v1191
      %v1237 = vunpack.c.l.b16 %v1192
      %v1238 = vunpack.c.h.b16 %v1192
      %v1239 = vunpack.c.l.b16 %v1193
      %v1240 = vunpack.c.h.b16 %v1193
      %v1241 = vunpack.c.l.b16 %v1194
      %v1242 = vunpack.c.h.b16 %v1194
      %v1243 = vpack.c.b16 %v1211, %v1211
      %v1244 = vpack.c.b16 %v1212, %v1212
      %v1245 = vpack.c.b16 %v1213, %v1213
      %v1246 = vpack.c.b16 %v1214, %v1214
      %v1247 = vpack.c.b16 %v1215, %v1215
      %v1248 = vpack.c.b16 %v1216, %v1216
      %v1249 = vpack.c.b16 %v1217, %v1217
      %v1250 = vpack.c.b16 %v1218, %v1218
      %v1251 = vpack.c.b16 %v1219, %v1219
      %v1252 = vpack.c.b16 %v1220, %v1220
      %v1253 = vpack.c.b16 %v1221, %v1221
      %v1254 = vpack.c.b16 %v1222, %v1222
      %v1255 = vpack.c.b16 %v1223, %v1223
      %v1256 = vpack.c.b16 %v1224, %v1224
      %v1257 = vpack.c.b16 %v1225, %v1225
      %v1258 = vpack.c.b16 %v1226, %v1226
      %v1259 = vpack.c.b16 %v1227, %v1227
      %v1260 = vpack.c.b16 %v1228, %v1228
      %v1261 = vpack.c.b16 %v1229, %v1229
      %v1262 = vpack.c.b16 %v1230, %v1230
      %v1263 = vpack.c.b16 %v1231, %v1231
      %v1264 = vpack.c.b16 %v1232, %v1232
      %v1265 = vpack.c.b16 %v1233, %v1233
      %v1266 = vpack.c.b16 %v1234, %v1234
      %v1267 = vpack.c.b16 %v1235, %v1235
      %v1268 = vpack.c.b16 %v1236, %v1236
      %v1269 = vpack.c.b16 %v1237, %v1237
      %v1270 = vpack.c.b16 %v1238, %v1238
      %v1271 = vpack.c.b16 %v1239, %v1239
      %v1272 = vpack.c.b16 %v1240, %v1240
      %v1273 = vpack.c.b16 %v1241, %v1241
      %v1274 = vpack.c.b16 %v1242, %v1242
      %1307 = vst [vmem:[%s175] sm:$0xf] %v1243
      %1308 = vst [vmem:[%s175 + $0x4] sm:$0xf] %v1244
      %1309 = vst [vmem:[%s175 + $0x8] sm:$0xf] %v1245
      %1310 = vst [vmem:[%s175 + $0xc] sm:$0xf] %v1246
      %1311 = vst [vmem:[%s175 + $0x10] sm:$0xf] %v1247
      %1312 = vst [vmem:[%s175 + $0x14] sm:$0xf] %v1248
      %1313 = vst [vmem:[%s175 + $0x18] sm:$0xf] %v1249
      %1314 = vst [vmem:[%s175 + $0x1c] sm:$0xf] %v1250
      %1315 = vst [vmem:[%s175 + $0x20] sm:$0xf] %v1251
      %1316 = vst [vmem:[%s175 + $0x24] sm:$0xf] %v1252
      %1317 = vst [vmem:[%s175 + $0x28] sm:$0xf] %v1253
      %1318 = vst [vmem:[%s175 + $0x2c] sm:$0xf] %v1254
      %1319 = vst [vmem:[%s175 + $0x30] sm:$0xf] %v1255
      %1320 = vst [vmem:[%s175 + $0x34] sm:$0xf] %v1256
      %1321 = vst [vmem:[%s175 + $0x38] sm:$0xf] %v1257
      %1322 = vst [vmem:[%s175 + $0x3c] sm:$0xf] %v1258
      %1323 = vst [vmem:[%s175 + $0x40] sm:$0xf] %v1259
      %1324 = vst [vmem:[%s175 + $0x44] sm:$0xf] %v1260
      %1325 = vst [vmem:[%s175 + $0x48] sm:$0xf] %v1261
      %1326 = vst [vmem:[%s175 + $0x4c] sm:$0xf] %v1262
      %1327 = vst [vmem:[%s175 + $0x50] sm:$0xf] %v1263
      %1328 = vst [vmem:[%s175 + $0x54] sm:$0xf] %v1264
      %1329 = vst [vmem:[%s175 + $0x58] sm:$0xf] %v1265
      %1330 = vst [vmem:[%s175 + $0x5c] sm:$0xf] %v1266
      %1331 = vst [vmem:[%s175 + $0x60] sm:$0xf] %v1267
      %1332 = vst [vmem:[%s175 + $0x64] sm:$0xf] %v1268
      %1333 = vst [vmem:[%s175 + $0x68] sm:$0xf] %v1269
      %1334 = vst [vmem:[%s175 + $0x6c] sm:$0xf] %v1270
      %1335 = vst [vmem:[%s175 + $0x70] sm:$0xf] %v1271
      %1336 = vst [vmem:[%s175 + $0x74] sm:$0xf] %v1272
      %1337 = vst [vmem:[%s175 + $0x78] sm:$0xf] %v1273
      %1338 = vst [vmem:[%s175 + $0x7c] sm:$0xf] %v1274
      %s1339 = smul.u32 32, %s14
      %p1340 = scmp.lt.s32.totalorder %s1339, 63
      %s1341 = scalar_select %p1340, %s1339, 63
      %s1342 = smul.addr %s1341, 4
      %s1343 = scalar_lea.vmem %s3, %s1342
      // Predicated region
      $region33: #{network_forward.29} parent=31 // pred_check
        %p1344 = pneg %p100
      $region34: #{network_forward.29} parent=31 // pred_check_branch
        %1346 = sbr.rel (%p1344) target = $region36
      $region35: #{network_forward.29} parent=31 // pred_region
        %s1347 = smul.u32 32, %s14
      $region36: #{network_forward.29} parent=31 // pred_fallthru
        _
    $region32: #{network_forward.29} parent=5 // pred_fallthru
      _
    %p1348 = scmp.le.s32.totalorder 2, %s9
    // Predicated region
    $region37: #{network_forward.29} parent=5 // pred_check
      %p1349 = pneg %p1348
    $region38: #{network_forward.29} parent=5 // pred_check_branch
      %1351 = sbr.rel (%p1349) target = $region40
    $region39: #{network_forward.29} parent=5 // pred_region
      %s1352 = ssub.s32 %s9, 2
      // Predicated region
      $region41: #{network_forward.29} parent=39 // pred_check
        %p1353 = pneg %p106
      $region42: #{network_forward.29} parent=39 // pred_check_branch
        %1355 = sbr.rel (%p1353) target = $region44
      $region43: #{network_forward.29} parent=39 // pred_region
        %s1356 = smul.u32 32, %s15
        %p1357 = scmp.lt.s32.totalorder %s1356, 63
        %s1358 = scalar_select %p1357, %s1356, 63
        %s1359 = smul.addr %s1358, 4
        %s1360 = scalar_lea.vmem %s3, %s1359
      $region44: #{network_forward.29} parent=39 // pred_fallthru
        _
    $region40: #{network_forward.29} parent=5 // pred_fallthru
      _
  $region6: #{network_forward.29} parent=0 // loop_footer
    %s13 = sadd.s32 1, %s9
  $region7: #{network_forward.29} parent=0 // loop_footer_branch
    %8 = sbr.rel target = $region3
  $region8: #{network_forward.29} parent=0 // loop_exit
    _

// kernel: network_forward.31
$region0: #{network_forward.31}
  #allocation0 [shape = 'u32[]', space=smem, size = 0x4, offset = 0x4, fixed_abs, tag = 'smem constant byte address 0x4 - core index']
  #allocation1 [shape = 'u32[144,128]{1,0:T(1,128)}', space=vmem, size = 0x12000, scoped, tag = 'internal scratch']
  %s0 = inlined_call_operand.vmem [shape: bf16[512,256], index: 0, kind: input, shape index: {}]
  %s1 = inlined_call_operand.vmem [shape: bf16[256,128], index: 1, kind: input, shape index: {}]
  %s2 = inlined_call_operand.vmem [shape: f32[1,128], index: 2, kind: input, shape index: {}]
  %s3 = inlined_call_operand.vmem [shape: f32[512,128], index: 3, kind: output, shape index: {}]
  %s4 = sld [smem:[#allocation0]]
  $region45: #{network_forward.31} parent=0
    _
  %s6 = ssub.s32 1, %s4
  %s7 = scalar_select 0, %s6, %s4
  loop: start=0, step=1, limit=4
  $region2: #{network_forward.31} parent=0 // loop_pre_header
    _
  $region3: #{network_forward.31} parent=0 // loop_header
    %s9 = sphi 0, %s13
    %p10 = scmp.ge.s32.totalorder %s9, 4
    %s19 = sphi 0, %s21
    %s22 = sphi 0, %s19
    %s23 = sphi 0, %s22
    %s39 = sphi 0, %s23
    %s43 = sphi 0, %s43
    %s45 = sphi 0, %s43
    %s46 = sphi 0, %s45
    %s60 = sphi 0, %s46
    %s64 = sphi 0, %s64
    %s66 = sphi 0, %s64
    %s67 = sphi 0, %s66
    %s81 = sphi 0, %s67
    %s87 = sphi 0, %s89
    %s90 = sphi 0, %s87
    %s91 = sphi 0, %s90
    %s107 = sphi 0, %s91
  $region4: #{network_forward.31} parent=0 // loop_header_branch
    %12 = sbr.rel (%p10) target = $region8
  $region5: #{network_forward.31} parent=0 // loop_body
    %s14 = ssub.s32 %s9, 1
    %s15 = ssub.s32 %s9, 2
    %s16 = sadd.s32 %s9, 1
    %s17 = ssub.s32 %s9, %s16
    %p18 = scmp.eq.s32.totalorder %s17, 0
    %s20 = sadd.s32 %s19, 1
    %s21 = scalar_select %p18, %s19, %s20
    %p24 = pneg %p18
    %p25 = scmp.eq.s32.totalorder %s9, 1
    %p26 = por %p24, %p25
    %p27 = scmp.ne.s32.totalorder %s19, %s22
    %p28 = scmp.eq.s32.totalorder %s9, 0
    %p29 = por %p27, %p28
    %p30 = scmp.ne.s32.totalorder %s19, %s22
    %p31 = scmp.eq.s32.totalorder %s14, 1
    %p32 = por %p30, %p31
    %p33 = scmp.ne.s32.totalorder %s22, %s23
    %p34 = scmp.eq.s32.totalorder %s14, 0
    %p35 = por %p33, %p34
    %p36 = scmp.ne.s32.totalorder %s22, %s23
    %p37 = scmp.eq.s32.totalorder %s15, 1
    %p38 = por %p36, %p37
    %p40 = scmp.ne.s32.totalorder %s23, %s39
    %p41 = scmp.eq.s32.totalorder %s15, 0
    %p42 = por %p40, %p41
    %s44 = sadd.s32 %s43, 1
    %p47 = scmp.eq.s32.totalorder %s9, 1
    %p48 = scmp.ne.s32.totalorder %s43, %s45
    %p49 = scmp.eq.s32.totalorder %s9, 0
    %p50 = por %p48, %p49
    %p51 = scmp.ne.s32.totalorder %s43, %s45
    %p52 = scmp.eq.s32.totalorder %s14, 1
    %p53 = por %p51, %p52
    %p54 = scmp.ne.s32.totalorder %s45, %s46
    %p55 = scmp.eq.s32.totalorder %s14, 0
    %p56 = por %p54, %p55
    %p57 = scmp.ne.s32.totalorder %s45, %s46
    %p58 = scmp.eq.s32.totalorder %s15, 1
    %p59 = por %p57, %p58
    %p61 = scmp.ne.s32.totalorder %s46, %s60
    %p62 = scmp.eq.s32.totalorder %s15, 0
    %p63 = por %p61, %p62
    %s65 = sadd.s32 %s64, 1
    %p68 = scmp.eq.s32.totalorder %s9, 1
    %p69 = scmp.ne.s32.totalorder %s64, %s66
    %p70 = scmp.eq.s32.totalorder %s9, 0
    %p71 = por %p69, %p70
    %p72 = scmp.ne.s32.totalorder %s64, %s66
    %p73 = scmp.eq.s32.totalorder %s14, 1
    %p74 = por %p72, %p73
    %p75 = scmp.ne.s32.totalorder %s66, %s67
    %p76 = scmp.eq.s32.totalorder %s14, 0
    %p77 = por %p75, %p76
    %p78 = scmp.ne.s32.totalorder %s66, %s67
    %p79 = scmp.eq.s32.totalorder %s15, 1
    %p80 = por %p78, %p79
    %p82 = scmp.ne.s32.totalorder %s67, %s81
    %p83 = scmp.eq.s32.totalorder %s15, 0
    %p84 = por %p82, %p83
    %s85 = ssub.s32 %s9, %s16
    %p86 = scmp.eq.s32.totalorder %s85, 0
    %s88 = sadd.s32 %s87, 1
    %s89 = scalar_select %p86, %s87, %s88
    %p92 = pneg %p86
    %p93 = scmp.eq.s32.totalorder %s9, 1
    %p94 = por %p92, %p93
    %p95 = scmp.ne.s32.totalorder %s87, %s90
    %p96 = scmp.eq.s32.totalorder %s9, 0
    %p97 = por %p95, %p96
    %p98 = scmp.ne.s32.totalorder %s87, %s90
    %p99 = scmp.eq.s32.totalorder %s14, 1
    %p100 = por %p98, %p99
    %p101 = scmp.ne.s32.totalorder %s90, %s91
    %p102 = scmp.eq.s32.totalorder %s14, 0
    %p103 = por %p101, %p102
    %p104 = scmp.ne.s32.totalorder %s90, %s91
    %p105 = scmp.eq.s32.totalorder %s15, 1
    %p106 = por %p104, %p105
    %p108 = scmp.ne.s32.totalorder %s91, %s107
    %p109 = scmp.eq.s32.totalorder %s15, 0
    %p110 = por %p108, %p109
    %p111 = scmp.le.s32.totalorder 1, %s9
    %p112 = scmp.lt.s32.totalorder %s9, 3
    %p113 = pnand %p111, %p112
    %p114 = pneg %p113
    // Predicated region
    $region9: #{network_forward.31} parent=5 // pred_check
      _
    $region10: #{network_forward.31} parent=5 // pred_check_branch
      %116 = sbr.rel (%p113) target = $region12
    $region11: #{network_forward.31} parent=5 // pred_region
      %s117 = ssub.s32 %s9, 1
      // Predicated region
      $region13: #{network_forward.31} parent=11 // pred_check
        %p118 = pneg %p56
      $region14: #{network_forward.31} parent=11 // pred_check_branch
        %120 = sbr.rel (%p118) target = $region16
      $region15: #{network_forward.31} parent=11 // pred_region
        _
      $region16: #{network_forward.31} parent=11 // pred_fallthru
        _
      // Predicated region
      $region17: #{network_forward.31} parent=11 // pred_check
        %p121 = pneg %p77
      $region18: #{network_forward.31} parent=11 // pred_check_branch
        %123 = sbr.rel (%p121) target = $region20
      $region19: #{network_forward.31} parent=11 // pred_region
        _
      $region20: #{network_forward.31} parent=11 // pred_fallthru
        _
    $region12: #{network_forward.31} parent=5 // pred_fallthru
      _
    %p124 = scmp.lt.s32.totalorder %s9, 2
    // Predicated region
    $region21: #{network_forward.31} parent=5 // pred_check
      %p125 = pneg %p124
    $region22: #{network_forward.31} parent=5 // pred_check_branch
      %127 = sbr.rel (%p125) target = $region24
    $region23: #{network_forward.31} parent=5 // pred_region
      // Predicated region
      $region25: #{network_forward.31} parent=23 // pred_check
        %p128 = pneg %p29
      $region26: #{network_forward.31} parent=23 // pred_check_branch
        %130 = sbr.rel (%p128) target = $region28
      $region27: #{network_forward.31} parent=23 // pred_region
        %s131 = smul.u32 32, %s9
        %p132 = scmp.lt.s32.totalorder %s131, 63
        %s133 = scalar_select %p132, %s131, 63
        %s134 = smul.addr %s133, 2
        %s135 = smul.addr %s134, 4
        %s136 = scalar_lea.vmem %s0, %s135
        %s137 = smul.u32 32, %s9
      $region28: #{network_forward.31} parent=23 // pred_fallthru
        _
    $region24: #{network_forward.31} parent=5 // pred_fallthru
      _
    %p138 = scmp.le.s32.totalorder 1, %s9
    %p139 = scmp.lt.s32.totalorder %s9, 3
    %p140 = pnand %p138, %p139
    %p141 = pneg %p140
    // Predicated region
    $region29: #{network_forward.31} parent=5 // pred_check
      _
    $region30: #{network_forward.31} parent=5 // pred_check_branch
      %143 = sbr.rel (%p140) target = $region32
    $region31: #{network_forward.31} parent=5 // pred_region
      %s144 = ssub.s32 %s9, 1
      %s145 = smul.u32 32, %s14
      %p146 = scmp.lt.s32.totalorder %s145, 63
      %s147 = scalar_select %p146, %s145, 63
      %s148 = smul.addr %s147, 2
      %s149 = smul.addr %s148, 4
      %s150 = scalar_lea.vmem %s0, %s149
      %p151 = pneg %p35
      %p152 = pneg %p32
      %p153 = pneg %p56
      %p154 = pneg %p53
      %p155 = pneg %p77
      %p156 = pneg %p74
      %p157 = pneg %p103
      %p158 = pneg %p100
      %s159 = smul.u32 32, %s14
      %p160 = scmp.lt.s32.totalorder %s159, 63
      %s161 = scalar_select %p160, %s159, 63
      %s162 = smul.addr %s161, 8
      %s163 = scalar_lea.vmem %s3, %s162
      %s164 = smul.u32 32, %s14
      %p165 = scmp.lt.s32.totalorder %s164, 63
      %s166 = scalar_select %p165, %s164, 63
      %s167 = smul.addr %s166, 2
      %s168 = smul.addr %s167, 4
      %s169 = scalar_lea.vmem %s0, %s168
      %s170 = smul.u32 32, %s14
      %s171 = smul.u32 32, %s14
      %p172 = scmp.lt.s32.totalorder %s171, 63
      %s173 = scalar_select %p172, %s171, 63
      %s174 = smul.addr %s173, 8
      %s175 = scalar_lea.vmem %s3, %s174
      %s176 = smul.u32 32, %s14
      %v178 = vld [vmem:[%s169] sm:$0xff]
      %v179 = vld [vmem:[%s169 + $0x8] sm:$0xff]
      %v180 = vld [vmem:[%s169 + $0x10] sm:$0xff]
      %v181 = vld [vmem:[%s169 + $0x18] sm:$0xff]
      %v182 = vld [vmem:[%s169 + $0x20] sm:$0xff]
      %v183 = vld [vmem:[%s169 + $0x28] sm:$0xff]
      %v184 = vld [vmem:[%s169 + $0x30] sm:$0xff]
      %v185 = vld [vmem:[%s169 + $0x38] sm:$0xff]
      %v186 = vld [vmem:[%s169 + $0x40] sm:$0xff]
      %v187 = vld [vmem:[%s169 + $0x48] sm:$0xff]
      %v188 = vld [vmem:[%s169 + $0x50] sm:$0xff]
      %v189 = vld [vmem:[%s169 + $0x58] sm:$0xff]
      %v190 = vld [vmem:[%s169 + $0x60] sm:$0xff]
      %v191 = vld [vmem:[%s169 + $0x68] sm:$0xff]
      %v192 = vld [vmem:[%s169 + $0x70] sm:$0xff]
      %v193 = vld [vmem:[%s169 + $0x78] sm:$0xff]
      %v194 = vld [vmem:[%s169 + $0x80] sm:$0xff]
      %v195 = vld [vmem:[%s169 + $0x88] sm:$0xff]
      %v196 = vld [vmem:[%s169 + $0x90] sm:$0xff]
      %v197 = vld [vmem:[%s169 + $0x98] sm:$0xff]
      %v198 = vld [vmem:[%s169 + $0xa0] sm:$0xff]
      %v199 = vld [vmem:[%s169 + $0xa8] sm:$0xff]
      %v200 = vld [vmem:[%s169 + $0xb0] sm:$0xff]
      %v201 = vld [vmem:[%s169 + $0xb8] sm:$0xff]
      %v202 = vld [vmem:[%s169 + $0xc0] sm:$0xff]
      %v203 = vld [vmem:[%s169 + $0xc8] sm:$0xff]
      %v204 = vld [vmem:[%s169 + $0xd0] sm:$0xff]
      %v205 = vld [vmem:[%s169 + $0xd8] sm:$0xff]
      %v206 = vld [vmem:[%s169 + $0xe0] sm:$0xff]
      %v207 = vld [vmem:[%s169 + $0xe8] sm:$0xff]
      %v208 = vld [vmem:[%s169 + $0xf0] sm:$0xff]
      %v209 = vld [vmem:[%s169 + $0xf8] sm:$0xff]
      %v210 = vld [vmem:[%s1] sm:$0xf]
      %v211 = vld [vmem:[%s1 + $0x4] sm:$0xf]
      %v212 = vld [vmem:[%s1 + $0x8] sm:$0xf]
      %v213 = vld [vmem:[%s1 + $0xc] sm:$0xf]
      %v214 = vld [vmem:[%s1 + $0x10] sm:$0xf]
      %v215 = vld [vmem:[%s1 + $0x14] sm:$0xf]
      %v216 = vld [vmem:[%s1 + $0x18] sm:$0xf]
      %v217 = vld [vmem:[%s1 + $0x1c] sm:$0xf]
      %v218 = vld [vmem:[%s1 + $0x20] sm:$0xf]
      %v219 = vld [vmem:[%s1 + $0x24] sm:$0xf]
      %v220 = vld [vmem:[%s1 + $0x28] sm:$0xf]
      %v221 = vld [vmem:[%s1 + $0x2c] sm:$0xf]
      %v222 = vld [vmem:[%s1 + $0x30] sm:$0xf]
      %v223 = vld [vmem:[%s1 + $0x34] sm:$0xf]
      %v224 = vld [vmem:[%s1 + $0x38] sm:$0xf]
      %v225 = vld [vmem:[%s1 + $0x3c] sm:$0xf]
      %v226 = vld [vmem:[%s1 + $0x40] sm:$0xf]
      %v227 = vld [vmem:[%s1 + $0x44] sm:$0xf]
      %v228 = vld [vmem:[%s1 + $0x48] sm:$0xf]
      %v229 = vld [vmem:[%s1 + $0x4c] sm:$0xf]
      %v230 = vld [vmem:[%s1 + $0x50] sm:$0xf]
      %v231 = vld [vmem:[%s1 + $0x54] sm:$0xf]
      %v232 = vld [vmem:[%s1 + $0x58] sm:$0xf]
      %v233 = vld [vmem:[%s1 + $0x5c] sm:$0xf]
      %v234 = vld [vmem:[%s1 + $0x60] sm:$0xf]
      %v235 = vld [vmem:[%s1 + $0x64] sm:$0xf]
      %v236 = vld [vmem:[%s1 + $0x68] sm:$0xf]
      %v237 = vld [vmem:[%s1 + $0x6c] sm:$0xf]
      %v238 = vld [vmem:[%s1 + $0x70] sm:$0xf]
      %v239 = vld [vmem:[%s1 + $0x74] sm:$0xf]
      %v240 = vld [vmem:[%s1 + $0x78] sm:$0xf]
      %v241 = vld [vmem:[%s1 + $0x7c] sm:$0xf]
      %v242 = vld [vmem:[%s2] sm:$0x1]
      %v244 = vlaneseq
      %v245 = vshrl.u32 %v244, 7
      %v246 = vsub.s32 0, %v245
      %v247 = vrot.slane %v242, %v246
      %v281 = vunpack.c.l.b16 %v178
      %v282 = vunpack.c.h.b16 %v178
      %v283 = vunpack.c.l.b16 %v179
      %v284 = vunpack.c.h.b16 %v179
      %v285 = vunpack.c.l.b16 %v180
      %v286 = vunpack.c.h.b16 %v180
      %v287 = vunpack.c.l.b16 %v181
      %v288 = vunpack.c.h.b16 %v181
      %v289 = vunpack.c.l.b16 %v182
      %v290 = vunpack.c.h.b16 %v182
      %v291 = vunpack.c.l.b16 %v183
      %v292 = vunpack.c.h.b16 %v183
      %v293 = vunpack.c.l.b16 %v184
      %v294 = vunpack.c.h.b16 %v184
      %v295 = vunpack.c.l.b16 %v185
      %v296 = vunpack.c.h.b16 %v185
      %v297 = vunpack.c.l.b16 %v186
      %v298 = vunpack.c.h.b16 %v186
      %v299 = vunpack.c.l.b16 %v187
      %v300 = vunpack.c.h.b16 %v187
      %v301 = vunpack.c.l.b16 %v188
      %v302 = vunpack.c.h.b16 %v188
      %v303 = vunpack.c.l.b16 %v189
      %v304 = vunpack.c.h.b16 %v189
      %v305 = vunpack.c.l.b16 %v190
      %v306 = vunpack.c.h.b16 %v190
      %v307 = vunpack.c.l.b16 %v191
      %v308 = vunpack.c.h.b16 %v191
      %v309 = vunpack.c.l.b16 %v192
      %v310 = vunpack.c.h.b16 %v192
      %v311 = vunpack.c.l.b16 %v193
      %v312 = vunpack.c.h.b16 %v193
      %v313 = vunpack.c.l.b16 %v194
      %v314 = vunpack.c.h.b16 %v194
      %v315 = vunpack.c.l.b16 %v195
      %v316 = vunpack.c.h.b16 %v195
      %v317 = vunpack.c.l.b16 %v196
      %v318 = vunpack.c.h.b16 %v196
      %v319 = vunpack.c.l.b16 %v197
      %v320 = vunpack.c.h.b16 %v197
      %v321 = vunpack.c.l.b16 %v198
      %v322 = vunpack.c.h.b16 %v198
      %v323 = vunpack.c.l.b16 %v199
      %v324 = vunpack.c.h.b16 %v199
      %v325 = vunpack.c.l.b16 %v200
      %v326 = vunpack.c.h.b16 %v200
      %v327 = vunpack.c.l.b16 %v201
      %v328 = vunpack.c.h.b16 %v201
      %v329 = vunpack.c.l.b16 %v202
      %v330 = vunpack.c.h.b16 %v202
      %v331 = vunpack.c.l.b16 %v203
      %v332 = vunpack.c.h.b16 %v203
      %v333 = vunpack.c.l.b16 %v204
      %v334 = vunpack.c.h.b16 %v204
      %v335 = vunpack.c.l.b16 %v205
      %v336 = vunpack.c.h.b16 %v205
      %v337 = vunpack.c.l.b16 %v206
      %v338 = vunpack.c.h.b16 %v206
      %v339 = vunpack.c.l.b16 %v207
      %v340 = vunpack.c.h.b16 %v207
      %v341 = vunpack.c.l.b16 %v208
      %v342 = vunpack.c.h.b16 %v208
      %v343 = vunpack.c.l.b16 %v209
      %v344 = vunpack.c.h.b16 %v209
      %v345 = vpack.c.b16 %v283, %v281
      %v346 = vpack.c.b16 %v284, %v282
      %v347 = vpack.c.b16 %v287, %v285
      %v348 = vpack.c.b16 %v288, %v286
      %v349 = vpack.c.b16 %v291, %v289
      %v350 = vpack.c.b16 %v292, %v290
      %v351 = vpack.c.b16 %v295, %v293
      %v352 = vpack.c.b16 %v296, %v294
      %v353 = vpack.c.b16 %v299, %v297
      %v354 = vpack.c.b16 %v300, %v298
      %v355 = vpack.c.b16 %v303, %v301
      %v356 = vpack.c.b16 %v304, %v302
      %v357 = vpack.c.b16 %v307, %v305
      %v358 = vpack.c.b16 %v308, %v306
      %v359 = vpack.c.b16 %v311, %v309
      %v360 = vpack.c.b16 %v312, %v310
      %v361 = vpack.c.b16 %v315, %v313
      %v362 = vpack.c.b16 %v316, %v314
      %v363 = vpack.c.b16 %v319, %v317
      %v364 = vpack.c.b16 %v320, %v318
      %v365 = vpack.c.b16 %v323, %v321
      %v366 = vpack.c.b16 %v324, %v322
      %v367 = vpack.c.b16 %v327, %v325
      %v368 = vpack.c.b16 %v328, %v326
      %v369 = vpack.c.b16 %v331, %v329
      %v370 = vpack.c.b16 %v332, %v330
      %v371 = vpack.c.b16 %v335, %v333
      %v372 = vpack.c.b16 %v336, %v334
      %v373 = vpack.c.b16 %v339, %v337
      %v374 = vpack.c.b16 %v340, %v338
      %v375 = vpack.c.b16 %v343, %v341
      %v376 = vpack.c.b16 %v344, %v342
      %v441 = vunpack.c.l.b16 %v210
      %v442 = vunpack.c.l.b16 %v211
      %v443 = vunpack.c.l.b16 %v212
      %v444 = vunpack.c.l.b16 %v213
      %v445 = vunpack.c.l.b16 %v214
      %v446 = vunpack.c.l.b16 %v215
      %v447 = vunpack.c.l.b16 %v216
      %v448 = vunpack.c.l.b16 %v217
      %v449 = vunpack.c.l.b16 %v218
      %v450 = vunpack.c.l.b16 %v219
      %v451 = vunpack.c.l.b16 %v220
      %v452 = vunpack.c.l.b16 %v221
      %v453 = vunpack.c.l.b16 %v222
      %v454 = vunpack.c.l.b16 %v223
      %v455 = vunpack.c.l.b16 %v224
      %v456 = vunpack.c.l.b16 %v225
      %v457 = vunpack.c.l.b16 %v226
      %v458 = vunpack.c.l.b16 %v227
      %v459 = vunpack.c.l.b16 %v228
      %v460 = vunpack.c.l.b16 %v229
      %v461 = vunpack.c.l.b16 %v230
      %v462 = vunpack.c.l.b16 %v231
      %v463 = vunpack.c.l.b16 %v232
      %v464 = vunpack.c.l.b16 %v233
      %v465 = vunpack.c.l.b16 %v234
      %v466 = vunpack.c.l.b16 %v235
      %v467 = vunpack.c.l.b16 %v236
      %v468 = vunpack.c.l.b16 %v237
      %v469 = vunpack.c.l.b16 %v238
      %v470 = vunpack.c.l.b16 %v239
      %v471 = vunpack.c.l.b16 %v240
      %v472 = vunpack.c.l.b16 %v241
      %v473 = vpack.c.b16 %v442, %v441
      %v474 = vpack.c.b16 %v444, %v443
      %v475 = vpack.c.b16 %v446, %v445
      %v476 = vpack.c.b16 %v448, %v447
      %v477 = vpack.c.b16 %v450, %v449
      %v478 = vpack.c.b16 %v452, %v451
      %v479 = vpack.c.b16 %v454, %v453
      %v480 = vpack.c.b16 %v456, %v455
      %v481 = vpack.c.b16 %v458, %v457
      %v482 = vpack.c.b16 %v460, %v459
      %v483 = vpack.c.b16 %v462, %v461
      %v484 = vpack.c.b16 %v464, %v463
      %v485 = vpack.c.b16 %v466, %v465
      %v486 = vpack.c.b16 %v468, %v467
      %v487 = vpack.c.b16 %v470, %v469
      %v488 = vpack.c.b16 %v472, %v471
      %505 = vmatprep.subr.bf16.mxu0 0
      %506 = vmatpush1.bf16.msra.mxu0 %v473
      %507 = vmatprep.subr.bf16.mxu0 0
      %508 = vmatpush1.bf16.msra.mxu0 %v474
      %509 = vmatprep.subr.bf16.mxu0 0
      %510 = vmatpush1.bf16.msra.mxu0 %v475
      %511 = vmatprep.subr.bf16.mxu0 0
      %512 = vmatpush1.bf16.msra.mxu0 %v476
      %513 = vmatprep.subr.bf16.mxu0 0
      %514 = vmatpush1.bf16.msra.mxu0 %v477
      %515 = vmatprep.subr.bf16.mxu0 0
      %516 = vmatpush1.bf16.msra.mxu0 %v478
      %517 = vmatprep.subr.bf16.mxu0 0
      %518 = vmatpush1.bf16.msra.mxu0 %v479
      %519 = vmatprep.subr.bf16.mxu0 0
      %520 = vmatpush1.bf16.msra.mxu0 %v480
      %521 = vmatprep.subr.bf16.mxu0 0
      %522 = vmatpush1.bf16.msra.mxu0 %v481
      %523 = vmatprep.subr.bf16.mxu0 0
      %524 = vmatpush1.bf16.msra.mxu0 %v482
      %525 = vmatprep.subr.bf16.mxu0 0
      %526 = vmatpush1.bf16.msra.mxu0 %v483
      %527 = vmatprep.subr.bf16.mxu0 0
      %528 = vmatpush1.bf16.msra.mxu0 %v484
      %529 = vmatprep.subr.bf16.mxu0 0
      %530 = vmatpush1.bf16.msra.mxu0 %v485
      %531 = vmatprep.subr.bf16.mxu0 0
      %532 = vmatpush1.bf16.msra.mxu0 %v486
      %533 = vmatprep.subr.bf16.mxu0 0
      %534 = vmatpush1.bf16.msra.mxu0 %v487
      %535 = vmatprep.subr.bf16.mxu0 0
      %536 = vmatpush1.bf16.msra.mxu0 %v488
      %537 = vmatprep.mubr.bf16.mxu0 %v346
      %538 = vmatmul.mubr.bf16.gmra.mrb[0].mxu0 %v345
      %v539 = vpop.f32.mrb[0].mxu0
      %v540 = vadd.f32 %v247, %v539
      %v541 = vpop.f32.mrb[0].mxu0
      %v542 = vpop.f32.mrb[0].mxu0
      %v543 = vadd.f32 %v247, %v542
      %v544 = vpop.f32.mrb[0].mxu0
      %545 = vmatprep.mubr.bf16.mxu0 %v348
      %546 = vmatmul.mubr.bf16.gmra.mrb[0].mxu0 %v347
      %v547 = vpop.f32.mrb[0].mxu0
      %v548 = vadd.f32 %v247, %v547
      %v549 = vpop.f32.mrb[0].mxu0
      %v550 = vpop.f32.mrb[0].mxu0
      %v551 = vadd.f32 %v247, %v550
      %v552 = vpop.f32.mrb[0].mxu0
      %553 = vmatprep.mubr.bf16.mxu0 %v350
      %554 = vmatmul.mubr.bf16.gmra.mrb[0].mxu0 %v349
      %v555 = vpop.f32.mrb[0].mxu0
      %v556 = vadd.f32 %v247, %v555
      %v557 = vpop.f32.mrb[0].mxu0
      %v558 = vpop.f32.mrb[0].mxu0
      %v559 = vadd.f32 %v247, %v558
      %v560 = vpop.f32.mrb[0].mxu0
      %561 = vmatprep.mubr.bf16.mxu0 %v352
      %562 = vmatmul.mubr.bf16.gmra.mrb[0].mxu0 %v351
      %v563 = vpop.f32.mrb[0].mxu0
      %v564 = vadd.f32 %v247, %v563
      %v565 = vpop.f32.mrb[0].mxu0
      %v566 = vpop.f32.mrb[0].mxu0
      %v567 = vadd.f32 %v247, %v566
      %v568 = vpop.f32.mrb[0].mxu0
      %569 = vmatprep.mubr.bf16.mxu0 %v354
      %570 = vmatmul.mubr.bf16.gmra.mrb[0].mxu0 %v353
      %v571 = vpop.f32.mrb[0].mxu0
      %v572 = vadd.f32 %v247, %v571
      %v573 = vpop.f32.mrb[0].mxu0
      %v574 = vpop.f32.mrb[0].mxu0
      %v575 = vadd.f32 %v247, %v574
      %v576 = vpop.f32.mrb[0].mxu0
      %577 = vmatprep.mubr.bf16.mxu0 %v356
      %578 = vmatmul.mubr.bf16.gmra.mrb[0].mxu0 %v355
      %v579 = vpop.f32.mrb[0].mxu0
      %v580 = vadd.f32 %v247, %v579
      %v581 = vpop.f32.mrb[0].mxu0
      %v582 = vpop.f32.mrb[0].mxu0
      %v583 = vadd.f32 %v247, %v582
      %v584 = vpop.f32.mrb[0].mxu0
      %585 = vmatprep.mubr.bf16.mxu0 %v358
      %586 = vmatmul.mubr.bf16.gmra.mrb[0].mxu0 %v357
      %v587 = vpop.f32.mrb[0].mxu0
      %v588 = vadd.f32 %v247, %v587
      %v589 = vpop.f32.mrb[0].mxu0
      %v590 = vpop.f32.mrb[0].mxu0
      %v591 = vadd.f32 %v247, %v590
      %v592 = vpop.f32.mrb[0].mxu0
      %593 = vmatprep.mubr.bf16.mxu0 %v360
      %594 = vmatmul.mubr.bf16.gmra.mrb[0].mxu0 %v359
      %v595 = vpop.f32.mrb[0].mxu0
      %v596 = vadd.f32 %v247, %v595
      %v597 = vpop.f32.mrb[0].mxu0
      %v598 = vpop.f32.mrb[0].mxu0
      %v599 = vadd.f32 %v247, %v598
      %v600 = vpop.f32.mrb[0].mxu0
      %601 = vmatprep.mubr.bf16.mxu0 %v362
      %602 = vmatmul.mubr.bf16.gmra.mrb[0].mxu0 %v361
      %v603 = vpop.f32.mrb[0].mxu0
      %v604 = vadd.f32 %v247, %v603
      %v605 = vpop.f32.mrb[0].mxu0
      %v606 = vpop.f32.mrb[0].mxu0
      %v607 = vadd.f32 %v247, %v606
      %v608 = vpop.f32.mrb[0].mxu0
      %609 = vmatprep.mubr.bf16.mxu0 %v364
      %610 = vmatmul.mubr.bf16.gmra.mrb[0].mxu0 %v363
      %v611 = vpop.f32.mrb[0].mxu0
      %v612 = vadd.f32 %v247, %v611
      %v613 = vpop.f32.mrb[0].mxu0
      %v614 = vpop.f32.mrb[0].mxu0
      %v615 = vadd.f32 %v247, %v614
      %v616 = vpop.f32.mrb[0].mxu0
      %617 = vmatprep.mubr.bf16.mxu0 %v366
      %618 = vmatmul.mubr.bf16.gmra.mrb[0].mxu0 %v365
      %v619 = vpop.f32.mrb[0].mxu0
      %v620 = vadd.f32 %v247, %v619
      %v621 = vpop.f32.mrb[0].mxu0
      %v622 = vpop.f32.mrb[0].mxu0
      %v623 = vadd.f32 %v247, %v622
      %v624 = vpop.f32.mrb[0].mxu0
      %625 = vmatprep.mubr.bf16.mxu0 %v368
      %626 = vmatmul.mubr.bf16.gmra.mrb[0].mxu0 %v367
      %v627 = vpop.f32.mrb[0].mxu0
      %v628 = vadd.f32 %v247, %v627
      %v629 = vpop.f32.mrb[0].mxu0
      %v630 = vpop.f32.mrb[0].mxu0
      %v631 = vadd.f32 %v247, %v630
      %v632 = vpop.f32.mrb[0].mxu0
      %633 = vmatprep.mubr.bf16.mxu0 %v370
      %634 = vmatmul.mubr.bf16.gmra.mrb[0].mxu0 %v369
      %v635 = vpop.f32.mrb[0].mxu0
      %v636 = vadd.f32 %v247, %v635
      %v637 = vpop.f32.mrb[0].mxu0
      %v638 = vpop.f32.mrb[0].mxu0
      %v639 = vadd.f32 %v247, %v638
      %v640 = vpop.f32.mrb[0].mxu0
      %641 = vmatprep.mubr.bf16.mxu0 %v372
      %642 = vmatmul.mubr.bf16.gmra.mrb[0].mxu0 %v371
      %v643 = vpop.f32.mrb[0].mxu0
      %v644 = vadd.f32 %v247, %v643
      %v645 = vpop.f32.mrb[0].mxu0
      %v646 = vpop.f32.mrb[0].mxu0
      %v647 = vadd.f32 %v247, %v646
      %v648 = vpop.f32.mrb[0].mxu0
      %649 = vmatprep.mubr.bf16.mxu0 %v374
      %650 = vmatmul.mubr.bf16.gmra.mrb[0].mxu0 %v373
      %v651 = vpop.f32.mrb[0].mxu0
      %v652 = vadd.f32 %v247, %v651
      %v653 = vpop.f32.mrb[0].mxu0
      %v654 = vpop.f32.mrb[0].mxu0
      %v655 = vadd.f32 %v247, %v654
      %v656 = vpop.f32.mrb[0].mxu0
      %657 = vmatprep.mubr.bf16.mxu0 %v376
      %658 = vmatmul.mubr.bf16.gmra.mrb[0].mxu0 %v375
      %v659 = vpop.f32.mrb[0].mxu0
      %v660 = vadd.f32 %v247, %v659
      %v661 = vpop.f32.mrb[0].mxu0
      %v662 = vpop.f32.mrb[0].mxu0
      %v663 = vadd.f32 %v247, %v662
      %v664 = vpop.f32.mrb[0].mxu0
      %665 = vdwg.mxu0
      %666 = vst [vmem:[%s175] sm:$0xff] %v540
      %667 = vst [vmem:[%s175 + $0x8] sm:$0xff] %v543
      %668 = vst [vmem:[%s175 + $0x10] sm:$0xff] %v548
      %669 = vst [vmem:[%s175 + $0x18] sm:$0xff] %v551
      %670 = vst [vmem:[%s175 + $0x20] sm:$0xff] %v556
      %671 = vst [vmem:[%s175 + $0x28] sm:$0xff] %v559
      %672 = vst [vmem:[%s175 + $0x30] sm:$0xff] %v564
      %673 = vst [vmem:[%s175 + $0x38] sm:$0xff] %v567
      %674 = vst [vmem:[%s175 + $0x40] sm:$0xff] %v572
      %675 = vst [vmem:[%s175 + $0x48] sm:$0xff] %v575
      %676 = vst [vmem:[%s175 + $0x50] sm:$0xff] %v580
      %677 = vst [vmem:[%s175 + $0x58] sm:$0xff] %v583
      %678 = vst [vmem:[%s175 + $0x60] sm:$0xff] %v588
      %679 = vst [vmem:[%s175 + $0x68] sm:$0xff] %v591
      %680 = vst [vmem:[%s175 + $0x70] sm:$0xff] %v596
      %681 = vst [vmem:[%s175 + $0x78] sm:$0xff] %v599
      %682 = vst [vmem:[%s175 + $0x80] sm:$0xff] %v604
      %683 = vst [vmem:[%s175 + $0x88] sm:$0xff] %v607
      %684 = vst [vmem:[%s175 + $0x90] sm:$0xff] %v612
      %685 = vst [vmem:[%s175 + $0x98] sm:$0xff] %v615
      %686 = vst [vmem:[%s175 + $0xa0] sm:$0xff] %v620
      %687 = vst [vmem:[%s175 + $0xa8] sm:$0xff] %v623
      %688 = vst [vmem:[%s175 + $0xb0] sm:$0xff] %v628
      %689 = vst [vmem:[%s175 + $0xb8] sm:$0xff] %v631
      %690 = vst [vmem:[%s175 + $0xc0] sm:$0xff] %v636
      %691 = vst [vmem:[%s175 + $0xc8] sm:$0xff] %v639
      %692 = vst [vmem:[%s175 + $0xd0] sm:$0xff] %v644
      %693 = vst [vmem:[%s175 + $0xd8] sm:$0xff] %v647
      %694 = vst [vmem:[%s175 + $0xe0] sm:$0xff] %v652
      %695 = vst [vmem:[%s175 + $0xe8] sm:$0xff] %v655
      %696 = vst [vmem:[%s175 + $0xf0] sm:$0xff] %v660
      %697 = vst [vmem:[%s175 + $0xf8] sm:$0xff] %v663
      %s698 = smul.u32 32, %s14
      %p699 = scmp.lt.s32.totalorder %s698, 63
      %s700 = scalar_select %p699, %s698, 63
      %s701 = smul.addr %s700, 8
      %s702 = scalar_lea.vmem %s3, %s701
      // Predicated region
      $region33: #{network_forward.31} parent=31 // pred_check
        %p703 = pneg %p100
      $region34: #{network_forward.31} parent=31 // pred_check_branch
        %705 = sbr.rel (%p703) target = $region36
      $region35: #{network_forward.31} parent=31 // pred_region
        %s706 = smul.u32 32, %s14
      $region36: #{network_forward.31} parent=31 // pred_fallthru
        _
    $region32: #{network_forward.31} parent=5 // pred_fallthru
      _
    %p707 = scmp.le.s32.totalorder 2, %s9
    // Predicated region
    $region37: #{network_forward.31} parent=5 // pred_check
      %p708 = pneg %p707
    $region38: #{network_forward.31} parent=5 // pred_check_branch
      %710 = sbr.rel (%p708) target = $region40
    $region39: #{network_forward.31} parent=5 // pred_region
      %s711 = ssub.s32 %s9, 2
      // Predicated region
      $region41: #{network_forward.31} parent=39 // pred_check
        %p712 = pneg %p106
      $region42: #{network_forward.31} parent=39 // pred_check_branch
        %714 = sbr.rel (%p712) target = $region44
      $region43: #{network_forward.31} parent=39 // pred_region
        %s715 = smul.u32 32, %s15
        %p716 = scmp.lt.s32.totalorder %s715, 63
        %s717 = scalar_select %p716, %s715, 63
        %s718 = smul.addr %s717, 8
        %s719 = scalar_lea.vmem %s3, %s718
      $region44: #{network_forward.31} parent=39 // pred_fallthru
        _
    $region40: #{network_forward.31} parent=5 // pred_fallthru
      _
  $region6: #{network_forward.31} parent=0 // loop_footer
    %s13 = sadd.s32 1, %s9
  $region7: #{network_forward.31} parent=0 // loop_footer_branch
    %8 = sbr.rel target = $region3
  $region8: #{network_forward.31} parent=0 // loop_exit
    _

</llo_original>
